<compile_context>
chip_gen: v7x
topology: tpu7x:2x2x1
jax: 0.10.0
libtpu: 0.0.40
codegen_flags: <defaults>
</compile_context>

<pallas_src>
import functools
import math

import jax
import jax.numpy as jnp
from jax.experimental import pallas as pl
from jax.experimental.pallas import tpu as pltpu


# ----------------------------------------------------------------------------
# Fused SPPF kernel
# ----------------------------------------------------------------------------
def _sppf_kernel(x_ref, w1_ref, s1_ref, b1_ref, w2_ref, s2_ref, b2_ref,
                 o_ref, cat_sc, wpad_sc, hpad_sc, *, H, W, c_mid, k):
    """One (batch, c2-tile) grid step.

    Grid invariant: the c2-tile axis (grid axis 1) MUST remain the inner,
    "arbitrary" axis -- the cv1 + pool results written to scratch at j == 0 are
    reused by all j > 0 tiles of the same batch element.
    """
    j = pl.program_id(1)
    pad = k // 2
    hw = H * W

    # ---- cv1 + cascaded 5x5 max pools: computed once per batch element ------
    @pl.when(j == 0)
    def _():
        # -inf borders written once; interiors are overwritten per pool below.
        wpad_sc[...] = jnp.full(wpad_sc.shape, -jnp.inf, wpad_sc.dtype)
        hpad_sc[...] = jnp.full(hpad_sc.shape, -jnp.inf, hpad_sc.dtype)

        # cv1: 1x1 conv == (HW, C1) @ (C1, c_) bf16 MXU matmul, f32 accumulation,
        # folded eval-mode BN affine + ReLU6, stored as bf16.
        t32 = jnp.dot(x_ref[0], w1_ref[...], preferred_element_type=jnp.float32)
        t32 = jnp.minimum(jnp.maximum(t32 * s1_ref[...] + b1_ref[...], 0.0), 6.0)
        t = t32.astype(jnp.bfloat16)                         # (HW, c_)
        cat_sc[:, 0:c_mid] = t

        # Three cascaded 5x5 MaxPool(stride=1, 'same', -inf border), separable:
        # 5-wide running max along W (sublane axis) then along H (leading axis),
        # reading static slices of pre-padded scratch (no concat copies).
        cur = t.reshape(H, W, c_mid)
        for i in range(1, 4):
            wpad_sc[:, pad:pad + W, :] = cur
            m = wpad_sc[:, 0:W, :]
            for d in range(1, k):
                m = jnp.maximum(m, wpad_sc[:, d:d + W, :])
            hpad_sc[pad:pad + H, :, :] = m
            cur = hpad_sc[0:H, :, :]
            for d in range(1, k):
                cur = jnp.maximum(cur, hpad_sc[d:d + H, :, :])
            cat_sc[:, i * c_mid:(i + 1) * c_mid] = cur.reshape(hw, c_mid)

    # ---- cv2 for this c2 tile: ONE wide-K bf16 MXU matmul, f32 accumulation --
    # cat([x, y1, y2, y3], ch) @ W2[:, tile]  ==  (HW, 4*c_) @ (4*c_, tn)
    wj = w2_ref[j]                                           # VMEM-resident weight tile
    acc = jnp.dot(cat_sc[...], wj, preferred_element_type=jnp.float32)
    out = acc * s2_ref[...] + b2_ref[...]                    # folded BN (eval)
    o_ref[0] = jnp.minimum(jnp.maximum(out, 0.0), 6.0).astype(o_ref.dtype)


def sppf_forward(params, x_nchw):
    """Fused SPPF forward (eval semantics). Input/output are NCHW like PyTorch."""
    w1, s1, b1 = params["w1"], params["s1"], params["b1"]   # (c1,c_), (c_,), (c_,)
    w2, s2, b2 = params["w2"], params["s2"], params["b2"]   # (4*c_,c2), (c2,), (c2,)
    k = params["k"]
    N, C1, H, W = x_nchw.shape
    c_mid = w1.shape[1]
    c2 = w2.shape[1]
    hw = H * W

    # bf16 at the kernel boundary (native MXU dtype, half the DMA bytes); the
    # kernel works on NHWC flattened to (N, HW, C) so the per-tile hot path needs
    # no in-kernel reshapes.
    x = jnp.transpose(x_nchw, (0, 2, 3, 1)).reshape(N, hw, C1).astype(jnp.bfloat16)
    w1b = w1.astype(jnp.bfloat16)

    # Lane-dense c2 tiles: 256 fills the 2x256^2 MXU on v6e/v7x; 128 otherwise.
    if c2 % 256 == 0:
        tn = 256
    elif c2 % 128 == 0:
        tn = 128
    else:
        tn = c2   # TODO(synk): pad c2 to a lane multiple for odd output widths.
    nj = c2 // tn
    # Pre-split w2 into (nj, 4*c_, tn) so the kernel selects its c2 tile with a
    # cheap leading-axis index of a single VMEM-resident buffer.
    w2b = jnp.transpose(w2.astype(jnp.bfloat16).reshape(4 * c_mid, nj, tn), (1, 0, 2))

    flops = 2 * N * hw * c_mid * (C1 + 4 * c2)
    bytes_accessed = (N * hw * C1 * 2 + C1 * c_mid * 2 + 4 * c_mid * c2 * 2
                      + (c_mid + c2) * 2 * 4 + N * hw * c2 * 4)

    kern = functools.partial(_sppf_kernel, H=H, W=W, c_mid=c_mid, k=k)
    out = pl.pallas_call(
        kern,
        out_shape=jax.ShapeDtypeStruct((N, hw, c2), jnp.float32),
        grid=(N, nj),
        in_specs=[
            pl.BlockSpec((1, hw, C1), lambda b, j: (b, 0, 0)),
            pl.BlockSpec((C1, c_mid), lambda b, j: (0, 0)),
            pl.BlockSpec((1, c_mid), lambda b, j: (0, 0)),
            pl.BlockSpec((1, c_mid), lambda b, j: (0, 0)),
            # cv2 weight: constant index_map -> fetched from HBM once, VMEM-resident.
            pl.BlockSpec((nj, 4 * c_mid, tn), lambda b, j: (0, 0, 0)),
            pl.BlockSpec((1, tn), lambda b, j: (0, j)),
            pl.BlockSpec((1, tn), lambda b, j: (0, j)),
        ],
        out_specs=pl.BlockSpec((1, hw, tn), lambda b, j: (b, 0, j)),
        scratch_shapes=[
            pltpu.VMEM((hw, 4 * c_mid), jnp.bfloat16),                # cat([x,y1,y2,y3])
            pltpu.VMEM((H, W + 2 * (k // 2), c_mid), jnp.bfloat16),   # W-pass -inf pad
            pltpu.VMEM((H + 2 * (k // 2), W, c_mid), jnp.bfloat16),   # H-pass -inf pad
        ],
        compiler_params=pltpu.CompilerParams(
            dimension_semantics=("parallel", "arbitrary"),
            vmem_limit_bytes=64 * 1024 * 1024),
        cost_estimate=pl.CostEstimate(flops=flops, transcendentals=0,
                                      bytes_accessed=bytes_accessed),
    )(x, w1b, s1.reshape(1, -1), b1.reshape(1, -1),
      w2b, s2.reshape(1, -1), b2.reshape(1, -1))
    # TODO(synk): emit bf16 / keep NHWC when the consumer allows it (halves the
    # output HBM traffic and drops the layout transpose); kept f32 NCHW to match
    # the PyTorch module's output exactly.
    return jnp.transpose(out.reshape(N, H, W, c2), (0, 3, 1, 2))


# ----------------------------------------------------------------------------
# Pure-JAX reference with the SAME bf16 activation quantization as the kernel
# ----------------------------------------------------------------------------
def sppf_reference(params, x_nchw):
    k = params["k"]
    x = jnp.transpose(x_nchw, (0, 2, 3, 1)).astype(jnp.bfloat16)
    N, H, W, _ = x.shape

    def conv_bn_relu6(v, w, s, b):
        y = jnp.dot(v.reshape(-1, v.shape[-1]), w.astype(jnp.bfloat16),
                    preferred_element_type=jnp.float32)
        y = jnp.clip(y * s + b, 0.0, 6.0)
        return y.reshape(v.shape[:-1] + (w.shape[-1],))

    def pool(v):
        pad = k // 2
        vp = jnp.pad(v, ((0, 0), (pad, pad), (pad, pad), (0, 0)),
                     constant_values=-jnp.inf)
        m = jnp.full_like(v, -jnp.inf)
        for dh in range(k):
            for dw in range(k):
                m = jnp.maximum(m, vp[:, dh:dh + H, dw:dw + W, :])
        return m

    # Match the kernel: cv1 output is stored in bf16 before the pools / cv2.
    t = conv_bn_relu6(x, params["w1"], params["s1"], params["b1"]).astype(jnp.bfloat16)
    y1 = pool(t)
    y2 = pool(y1)
    y3 = pool(y2)
    cat = jnp.concatenate([t, y1, y2, y3], axis=-1)
    out = conv_bn_relu6(cat, params["w2"], params["s2"], params["b2"])
    return jnp.transpose(out, (0, 3, 1, 2))


# ----------------------------------------------------------------------------
# Deterministic synthetic parameters (Conv2d(bias=False) + BatchNorm2d eval)
# ----------------------------------------------------------------------------
def init_sppf_params(seed, c1, c2, k=5):
    c_ = c1 // 2

    def conv_bn(key, cin, cout):
        kw, kg, kb, km, kv = jax.random.split(key, 5)
        w = jax.random.normal(kw, (cin, cout), jnp.float32) * (1.0 / math.sqrt(cin))
        gamma = 1.0 + 0.1 * jax.random.normal(kg, (cout,), jnp.float32)
        beta = 0.1 * jax.random.normal(kb, (cout,), jnp.float32)
        rmean = 0.1 * jax.random.normal(km, (cout,), jnp.float32)
        rvar = jax.random.uniform(kv, (cout,), jnp.float32, minval=0.5, maxval=1.5)
        eps = 1e-5                                   # nn.BatchNorm2d default
        scale = gamma / jnp.sqrt(rvar + eps)
        shift = beta - rmean * scale
        return w, scale, shift

    k1, k2 = jax.random.split(jax.random.PRNGKey(seed))
    w1, s1, b1 = conv_bn(k1, c1, c_)
    # cv2 weight kept flat over the [x, y1, y2, y3] concatenated input channels.
    w2, s2, b2 = conv_bn(k2, 4 * c_, c2)
    return {"w1": w1, "s1": s1, "b1": b1, "w2": w2, "s2": s2, "b2": b2, "k": k}


# ----------------------------------------------------------------------------
if __name__ == "__main__":
    N, C1, H, W = 2, 256, 16, 16     # c_ = 128 -> lane-aligned concat slices
    C2 = 384                         # three lane-dense c2 tiles of 128
    K = 5

    params = init_sppf_params(seed=0, c1=C1, c2=C2, k=K)
    x = jax.random.normal(jax.random.PRNGKey(0), (N, C1, H, W), jnp.float32)

    fwd = jax.jit(lambda inp: sppf_forward(params, inp))
    out = fwd(x)
    jax.block_until_ready(out)
    assert out.shape == (N, C2, H, W), out.shape

    ref = jax.jit(lambda inp: sppf_reference(params, inp))(x)
    jax.block_until_ready(ref)
    max_err = float(jnp.max(jnp.abs(out - ref)))
    assert max_err < 1e-2, f"mismatch vs reference: max_err={max_err}"

    print("KERNEL_OK")
</pallas_src>

<mosaic_0001>
module attributes {stable_mosaic.version = 11 : i64} {
  func.func @_sppf_kernel(%arg0: i32, %arg1: i32, %arg2: memref<1x256x256xbf16, #tpu.memory_space<vmem>>, %arg3: memref<256x128xbf16, #tpu.memory_space<vmem>>, %arg4: memref<1x128xf32, #tpu.memory_space<vmem>>, %arg5: memref<1x128xf32, #tpu.memory_space<vmem>>, %arg6: memref<3x512x128xbf16, #tpu.memory_space<vmem>>, %arg7: memref<1x128xf32, #tpu.memory_space<vmem>>, %arg8: memref<1x128xf32, #tpu.memory_space<vmem>>, %arg9: memref<1x256x128xf32, #tpu.memory_space<vmem>>, %arg10: memref<256x512xbf16, #tpu.memory_space<vmem>>, %arg11: memref<16x20x128xbf16, #tpu.memory_space<vmem>>, %arg12: memref<20x16x128xbf16, #tpu.memory_space<vmem>>) attributes {dimension_semantics = [#tpu.dimension_semantics<parallel>, #tpu.dimension_semantics<arbitrary>], iteration_bounds = array<i64: 2, 3>, scalar_prefetch = 0 : i64, scratch_operands = 3 : i64, tpu.core_type = #tpu.core_type<tc>, window_params = [{transform_indices = @transform_0, window_bounds = array<i64: 1, 256, 256>}, {pipeline_mode = #tpu.pipeline_mode<synchronous>, transform_indices = @transform_1, window_bounds = array<i64: 256, 128>}, {pipeline_mode = #tpu.pipeline_mode<synchronous>, transform_indices = @transform_2, window_bounds = array<i64: 1, 128>}, {pipeline_mode = #tpu.pipeline_mode<synchronous>, transform_indices = @transform_3, window_bounds = array<i64: 1, 128>}, {pipeline_mode = #tpu.pipeline_mode<synchronous>, transform_indices = @transform_4, window_bounds = array<i64: 3, 512, 128>}, {transform_indices = @transform_5, window_bounds = array<i64: 1, 128>}, {transform_indices = @transform_6, window_bounds = array<i64: 1, 128>}, {transform_indices = @transform_7, window_bounds = array<i64: 1, 256, 128>}]} {
    %c0_i32 = arith.constant 0 : i32
    %0 = arith.cmpi eq, %arg1, %c0_i32 : i32
    %1 = arith.extui %0 : i1 to i32
    %c0_i32_0 = arith.constant 0 : i32
    %2 = arith.cmpi ne, %1, %c0_i32_0 : i32
    scf.if %2 {
      %cst_13 = arith.constant 0xFF80 : bf16
      %21 = vector.broadcast %cst_13 : bf16 to vector<16x20x128xbf16>
      %c0_14 = arith.constant 0 : index
      %c0_15 = arith.constant 0 : index
      %c0_16 = arith.constant 0 : index
      %22 = vector.load %arg11[%c0_14, %c0_15, %c0_16] : memref<16x20x128xbf16, #tpu.memory_space<vmem>>, vector<16x20x128xbf16>
      tpu.vector_store %arg11[%c0_14, %c0_15, %c0_16], %21 {strides = array<i32>} : memref<16x20x128xbf16, #tpu.memory_space<vmem>>, vector<16x20x128xbf16>,
      %cst_17 = arith.constant 0xFF80 : bf16
      %23 = vector.broadcast %cst_17 : bf16 to vector<20x16x128xbf16>
      %c0_18 = arith.constant 0 : index
      %c0_19 = arith.constant 0 : index
      %c0_20 = arith.constant 0 : index
      %24 = vector.load %arg12[%c0_18, %c0_19, %c0_20] : memref<20x16x128xbf16, #tpu.memory_space<vmem>>, vector<20x16x128xbf16>
      tpu.vector_store %arg12[%c0_18, %c0_19, %c0_20], %23 {strides = array<i32>} : memref<20x16x128xbf16, #tpu.memory_space<vmem>>, vector<20x16x128xbf16>,
      %c0_21 = arith.constant 0 : index
      %c0_22 = arith.constant 0 : index
      %c0_23 = arith.constant 0 : index
      %25 = vector.load %arg2[%c0_21, %c0_22, %c0_23] : memref<1x256x256xbf16, #tpu.memory_space<vmem>>, vector<1x256x256xbf16>
      %26 = vector.shape_cast %25 : vector<1x256x256xbf16> to vector<256x256xbf16>
      %c0_24 = arith.constant 0 : index
      %c0_25 = arith.constant 0 : index
      %27 = vector.load %arg3[%c0_24, %c0_25] : memref<256x128xbf16, #tpu.memory_space<vmem>>, vector<256x128xbf16>
      %cst_26 = arith.constant dense<0.000000e+00> : vector<256x128xf32>
      %28 = tpu.matmul %26, %27, %cst_26 {dimension_numbers = #tpu.dot_dimension_numbers<[1], [0], [0], [1], [0, 0, 1, 1], [], []>} : vector<256x256xbf16>, vector<256x128xbf16>, vector<256x128xf32> -> vector<256x128xf32>
      %c0_27 = arith.constant 0 : index
      %c0_28 = arith.constant 0 : index
      %29 = vector.load %arg4[%c0_27, %c0_28] : memref<1x128xf32, #tpu.memory_space<vmem>>, vector<1x128xf32>
      %30 = vector.broadcast %29 : vector<1x128xf32> to vector<256x128xf32>
      %31 = arith.mulf %28, %30 : vector<256x128xf32>
      %c0_29 = arith.constant 0 : index
      %c0_30 = arith.constant 0 : index
      %32 = vector.load %arg5[%c0_29, %c0_30] : memref<1x128xf32, #tpu.memory_space<vmem>>, vector<1x128xf32>
      %33 = vector.broadcast %32 : vector<1x128xf32> to vector<256x128xf32>
      %34 = arith.addf %31, %33 : vector<256x128xf32>
      %cst_31 = arith.constant 0.000000e+00 : f32
      %35 = vector.broadcast %cst_31 : f32 to vector<256x128xf32>
      %36 = arith.maximumf %34, %35 : vector<256x128xf32>
      %cst_32 = arith.constant 6.000000e+00 : f32
      %37 = vector.broadcast %cst_32 : f32 to vector<256x128xf32>
      %38 = arith.minimumf %36, %37 : vector<256x128xf32>
      %39 = arith.truncf %38 : vector<256x128xf32> to vector<256x128xbf16>
      %c0_33 = arith.constant 0 : index
      %c0_34 = arith.constant 0 : index
      %40 = vector.load %arg10[%c0_33, %c0_34] : memref<256x512xbf16, #tpu.memory_space<vmem>>, vector<256x128xbf16>
      tpu.vector_store %arg10[%c0_33, %c0_34], %39 {strides = array<i32>} : memref<256x512xbf16, #tpu.memory_space<vmem>>, vector<256x128xbf16>,
      %41 = vector.shape_cast %39 : vector<256x128xbf16> to vector<16x16x128xbf16>
      %c0_35 = arith.constant 0 : index
      %c2 = arith.constant 2 : index
      %c0_36 = arith.constant 0 : index
      %42 = vector.load %arg11[%c0_35, %c2, %c0_36] : memref<16x20x128xbf16, #tpu.memory_space<vmem>>, vector<16x16x128xbf16>
      tpu.vector_store %arg11[%c0_35, %c2, %c0_36], %41 {strides = array<i32>} : memref<16x20x128xbf16, #tpu.memory_space<vmem>>, vector<16x16x128xbf16>,
      %c0_37 = arith.constant 0 : index
      %c0_38 = arith.constant 0 : index
      %c0_39 = arith.constant 0 : index
      %43 = vector.load %arg11[%c0_37, %c0_38, %c0_39] : memref<16x20x128xbf16, #tpu.memory_space<vmem>>, vector<16x16x128xbf16>
      %c0_40 = arith.constant 0 : index
      %c1 = arith.constant 1 : index
      %c0_41 = arith.constant 0 : index
      %44 = vector.load %arg11[%c0_40, %c1, %c0_41] : memref<16x20x128xbf16, #tpu.memory_space<vmem>>, vector<16x16x128xbf16>
      %45 = arith.maximumf %43, %44 : vector<16x16x128xbf16>
      %c0_42 = arith.constant 0 : index
      %c2_43 = arith.constant 2 : index
      %c0_44 = arith.constant 0 : index
      %46 = vector.load %arg11[%c0_42, %c2_43, %c0_44] : memref<16x20x128xbf16, #tpu.memory_space<vmem>>, vector<16x16x128xbf16>
      %47 = arith.maximumf %45, %46 : vector<16x16x128xbf16>
      %c0_45 = arith.constant 0 : index
      %c3 = arith.constant 3 : index
      %c0_46 = arith.constant 0 : index
      %48 = vector.load %arg11[%c0_45, %c3, %c0_46] : memref<16x20x128xbf16, #tpu.memory_space<vmem>>, vector<16x16x128xbf16>
      %49 = arith.maximumf %47, %48 : vector<16x16x128xbf16>
      %c0_47 = arith.constant 0 : index
      %c4 = arith.constant 4 : index
      %c0_48 = arith.constant 0 : index
      %50 = vector.load %arg11[%c0_47, %c4, %c0_48] : memref<16x20x128xbf16, #tpu.memory_space<vmem>>, vector<16x16x128xbf16>
      %51 = arith.maximumf %49, %50 : vector<16x16x128xbf16>
      %c2_49 = arith.constant 2 : index
      %c0_50 = arith.constant 0 : index
      %c0_51 = arith.constant 0 : index
      %52 = vector.load %arg12[%c2_49, %c0_50, %c0_51] : memref<20x16x128xbf16, #tpu.memory_space<vmem>>, vector<16x16x128xbf16>
      tpu.vector_store %arg12[%c2_49, %c0_50, %c0_51], %51 {strides = array<i32>} : memref<20x16x128xbf16, #tpu.memory_space<vmem>>, vector<16x16x128xbf16>,
      %c0_52 = arith.constant 0 : index
      %c0_53 = arith.constant 0 : index
      %c0_54 = arith.constant 0 : index
      %53 = vector.load %arg12[%c0_52, %c0_53, %c0_54] : memref<20x16x128xbf16, #tpu.memory_space<vmem>>, vector<16x16x128xbf16>
      %c1_55 = arith.constant 1 : index
      %c0_56 = arith.constant 0 : index
      %c0_57 = arith.constant 0 : index
      %54 = vector.load %arg12[%c1_55, %c0_56, %c0_57] : memref<20x16x128xbf16, #tpu.memory_space<vmem>>, vector<16x16x128xbf16>
      %55 = arith.maximumf %53, %54 : vector<16x16x128xbf16>
      %c2_58 = arith.constant 2 : index
      %c0_59 = arith.constant 0 : index
      %c0_60 = arith.constant 0 : index
      %56 = vector.load %arg12[%c2_58, %c0_59, %c0_60] : memref<20x16x128xbf16, #tpu.memory_space<vmem>>, vector<16x16x128xbf16>
      %57 = arith.maximumf %55, %56 : vector<16x16x128xbf16>
      %c3_61 = arith.constant 3 : index
      %c0_62 = arith.constant 0 : index
      %c0_63 = arith.constant 0 : index
      %58 = vector.load %arg12[%c3_61, %c0_62, %c0_63] : memref<20x16x128xbf16, #tpu.memory_space<vmem>>, vector<16x16x128xbf16>
      %59 = arith.maximumf %57, %58 : vector<16x16x128xbf16>
      %c4_64 = arith.constant 4 : index
      %c0_65 = arith.constant 0 : index
      %c0_66 = arith.constant 0 : index
      %60 = vector.load %arg12[%c4_64, %c0_65, %c0_66] : memref<20x16x128xbf16, #tpu.memory_space<vmem>>, vector<16x16x128xbf16>
      %61 = arith.maximumf %59, %60 : vector<16x16x128xbf16>
      %62 = vector.shape_cast %61 : vector<16x16x128xbf16> to vector<256x128xbf16>
      %c0_67 = arith.constant 0 : index
      %c128 = arith.constant 128 : index
      %63 = vector.load %arg10[%c0_67, %c128] : memref<256x512xbf16, #tpu.memory_space<vmem>>, vector<256x128xbf16>
      tpu.vector_store %arg10[%c0_67, %c128], %62 {strides = array<i32>} : memref<256x512xbf16, #tpu.memory_space<vmem>>, vector<256x128xbf16>,
      %c0_68 = arith.constant 0 : index
      %c2_69 = arith.constant 2 : index
      %c0_70 = arith.constant 0 : index
      %64 = vector.load %arg11[%c0_68, %c2_69, %c0_70] : memref<16x20x128xbf16, #tpu.memory_space<vmem>>, vector<16x16x128xbf16>
      tpu.vector_store %arg11[%c0_68, %c2_69, %c0_70], %61 {strides = array<i32>} : memref<16x20x128xbf16, #tpu.memory_space<vmem>>, vector<16x16x128xbf16>,
      %c0_71 = arith.constant 0 : index
      %c0_72 = arith.constant 0 : index
      %c0_73 = arith.constant 0 : index
      %65 = vector.load %arg11[%c0_71, %c0_72, %c0_73] : memref<16x20x128xbf16, #tpu.memory_space<vmem>>, vector<16x16x128xbf16>
      %c0_74 = arith.constant 0 : index
      %c1_75 = arith.constant 1 : index
      %c0_76 = arith.constant 0 : index
      %66 = vector.load %arg11[%c0_74, %c1_75, %c0_76] : memref<16x20x128xbf16, #tpu.memory_space<vmem>>, vector<16x16x128xbf16>
      %67 = arith.maximumf %65, %66 : vector<16x16x128xbf16>
      %c0_77 = arith.constant 0 : index
      %c2_78 = arith.constant 2 : index
      %c0_79 = arith.constant 0 : index
      %68 = vector.load %arg11[%c0_77, %c2_78, %c0_79] : memref<16x20x128xbf16, #tpu.memory_space<vmem>>, vector<16x16x128xbf16>
      %69 = arith.maximumf %67, %68 : vector<16x16x128xbf16>
      %c0_80 = arith.constant 0 : index
      %c3_81 = arith.constant 3 : index
      %c0_82 = arith.constant 0 : index
      %70 = vector.load %arg11[%c0_80, %c3_81, %c0_82] : memref<16x20x128xbf16, #tpu.memory_space<vmem>>, vector<16x16x128xbf16>
      %71 = arith.maximumf %69, %70 : vector<16x16x128xbf16>
      %c0_83 = arith.constant 0 : index
      %c4_84 = arith.constant 4 : index
      %c0_85 = arith.constant 0 : index
      %72 = vector.load %arg11[%c0_83, %c4_84, %c0_85] : memref<16x20x128xbf16, #tpu.memory_space<vmem>>, vector<16x16x128xbf16>
      %73 = arith.maximumf %71, %72 : vector<16x16x128xbf16>
      %c2_86 = arith.constant 2 : index
      %c0_87 = arith.constant 0 : index
      %c0_88 = arith.constant 0 : index
      %74 = vector.load %arg12[%c2_86, %c0_87, %c0_88] : memref<20x16x128xbf16, #tpu.memory_space<vmem>>, vector<16x16x128xbf16>
      tpu.vector_store %arg12[%c2_86, %c0_87, %c0_88], %73 {strides = array<i32>} : memref<20x16x128xbf16, #tpu.memory_space<vmem>>, vector<16x16x128xbf16>,
      %c0_89 = arith.constant 0 : index
      %c0_90 = arith.constant 0 : index
      %c0_91 = arith.constant 0 : index
      %75 = vector.load %arg12[%c0_89, %c0_90, %c0_91] : memref<20x16x128xbf16, #tpu.memory_space<vmem>>, vector<16x16x128xbf16>
      %c1_92 = arith.constant 1 : index
      %c0_93 = arith.constant 0 : index
      %c0_94 = arith.constant 0 : index
      %76 = vector.load %arg12[%c1_92, %c0_93, %c0_94] : memref<20x16x128xbf16, #tpu.memory_space<vmem>>, vector<16x16x128xbf16>
      %77 = arith.maximumf %75, %76 : vector<16x16x128xbf16>
      %c2_95 = arith.constant 2 : index
      %c0_96 = arith.constant 0 : index
      %c0_97 = arith.constant 0 : index
      %78 = vector.load %arg12[%c2_95, %c0_96, %c0_97] : memref<20x16x128xbf16, #tpu.memory_space<vmem>>, vector<16x16x128xbf16>
      %79 = arith.maximumf %77, %78 : vector<16x16x128xbf16>
      %c3_98 = arith.constant 3 : index
      %c0_99 = arith.constant 0 : index
      %c0_100 = arith.constant 0 : index
      %80 = vector.load %arg12[%c3_98, %c0_99, %c0_100] : memref<20x16x128xbf16, #tpu.memory_space<vmem>>, vector<16x16x128xbf16>
      %81 = arith.maximumf %79, %80 : vector<16x16x128xbf16>
      %c4_101 = arith.constant 4 : index
      %c0_102 = arith.constant 0 : index
      %c0_103 = arith.constant 0 : index
      %82 = vector.load %arg12[%c4_101, %c0_102, %c0_103] : memref<20x16x128xbf16, #tpu.memory_space<vmem>>, vector<16x16x128xbf16>
      %83 = arith.maximumf %81, %82 : vector<16x16x128xbf16>
      %84 = vector.shape_cast %83 : vector<16x16x128xbf16> to vector<256x128xbf16>
      %c0_104 = arith.constant 0 : index
      %c256 = arith.constant 256 : index
      %85 = vector.load %arg10[%c0_104, %c256] : memref<256x512xbf16, #tpu.memory_space<vmem>>, vector<256x128xbf16>
      tpu.vector_store %arg10[%c0_104, %c256], %84 {strides = array<i32>} : memref<256x512xbf16, #tpu.memory_space<vmem>>, vector<256x128xbf16>,
      %c0_105 = arith.constant 0 : index
      %c2_106 = arith.constant 2 : index
      %c0_107 = arith.constant 0 : index
      %86 = vector.load %arg11[%c0_105, %c2_106, %c0_107] : memref<16x20x128xbf16, #tpu.memory_space<vmem>>, vector<16x16x128xbf16>
      tpu.vector_store %arg11[%c0_105, %c2_106, %c0_107], %83 {strides = array<i32>} : memref<16x20x128xbf16, #tpu.memory_space<vmem>>, vector<16x16x128xbf16>,
      %c0_108 = arith.constant 0 : index
      %c0_109 = arith.constant 0 : index
      %c0_110 = arith.constant 0 : index
      %87 = vector.load %arg11[%c0_108, %c0_109, %c0_110] : memref<16x20x128xbf16, #tpu.memory_space<vmem>>, vector<16x16x128xbf16>
      %c0_111 = arith.constant 0 : index
      %c1_112 = arith.constant 1 : index
      %c0_113 = arith.constant 0 : index
      %88 = vector.load %arg11[%c0_111, %c1_112, %c0_113] : memref<16x20x128xbf16, #tpu.memory_space<vmem>>, vector<16x16x128xbf16>
      %89 = arith.maximumf %87, %88 : vector<16x16x128xbf16>
      %c0_114 = arith.constant 0 : index
      %c2_115 = arith.constant 2 : index
      %c0_116 = arith.constant 0 : index
      %90 = vector.load %arg11[%c0_114, %c2_115, %c0_116] : memref<16x20x128xbf16, #tpu.memory_space<vmem>>, vector<16x16x128xbf16>
      %91 = arith.maximumf %89, %90 : vector<16x16x128xbf16>
      %c0_117 = arith.constant 0 : index
      %c3_118 = arith.constant 3 : index
      %c0_119 = arith.constant 0 : index
      %92 = vector.load %arg11[%c0_117, %c3_118, %c0_119] : memref<16x20x128xbf16, #tpu.memory_space<vmem>>, vector<16x16x128xbf16>
      %93 = arith.maximumf %91, %92 : vector<16x16x128xbf16>
      %c0_120 = arith.constant 0 : index
      %c4_121 = arith.constant 4 : index
      %c0_122 = arith.constant 0 : index
      %94 = vector.load %arg11[%c0_120, %c4_121, %c0_122] : memref<16x20x128xbf16, #tpu.memory_space<vmem>>, vector<16x16x128xbf16>
      %95 = arith.maximumf %93, %94 : vector<16x16x128xbf16>
      %c2_123 = arith.constant 2 : index
      %c0_124 = arith.constant 0 : index
      %c0_125 = arith.constant 0 : index
      %96 = vector.load %arg12[%c2_123, %c0_124, %c0_125] : memref<20x16x128xbf16, #tpu.memory_space<vmem>>, vector<16x16x128xbf16>
      tpu.vector_store %arg12[%c2_123, %c0_124, %c0_125], %95 {strides = array<i32>} : memref<20x16x128xbf16, #tpu.memory_space<vmem>>, vector<16x16x128xbf16>,
      %c0_126 = arith.constant 0 : index
      %c0_127 = arith.constant 0 : index
      %c0_128 = arith.constant 0 : index
      %97 = vector.load %arg12[%c0_126, %c0_127, %c0_128] : memref<20x16x128xbf16, #tpu.memory_space<vmem>>, vector<16x16x128xbf16>
      %c1_129 = arith.constant 1 : index
      %c0_130 = arith.constant 0 : index
      %c0_131 = arith.constant 0 : index
      %98 = vector.load %arg12[%c1_129, %c0_130, %c0_131] : memref<20x16x128xbf16, #tpu.memory_space<vmem>>, vector<16x16x128xbf16>
      %99 = arith.maximumf %97, %98 : vector<16x16x128xbf16>
      %c2_132 = arith.constant 2 : index
      %c0_133 = arith.constant 0 : index
      %c0_134 = arith.constant 0 : index
      %100 = vector.load %arg12[%c2_132, %c0_133, %c0_134] : memref<20x16x128xbf16, #tpu.memory_space<vmem>>, vector<16x16x128xbf16>
      %101 = arith.maximumf %99, %100 : vector<16x16x128xbf16>
      %c3_135 = arith.constant 3 : index
      %c0_136 = arith.constant 0 : index
      %c0_137 = arith.constant 0 : index
      %102 = vector.load %arg12[%c3_135, %c0_136, %c0_137] : memref<20x16x128xbf16, #tpu.memory_space<vmem>>, vector<16x16x128xbf16>
      %103 = arith.maximumf %101, %102 : vector<16x16x128xbf16>
      %c4_138 = arith.constant 4 : index
      %c0_139 = arith.constant 0 : index
      %c0_140 = arith.constant 0 : index
      %104 = vector.load %arg12[%c4_138, %c0_139, %c0_140] : memref<20x16x128xbf16, #tpu.memory_space<vmem>>, vector<16x16x128xbf16>
      %105 = arith.maximumf %103, %104 : vector<16x16x128xbf16>
      %106 = vector.shape_cast %105 : vector<16x16x128xbf16> to vector<256x128xbf16>
      %c0_141 = arith.constant 0 : index
      %c384 = arith.constant 384 : index
      %107 = vector.load %arg10[%c0_141, %c384] : memref<256x512xbf16, #tpu.memory_space<vmem>>, vector<256x128xbf16>
      tpu.vector_store %arg10[%c0_141, %c384], %106 {strides = array<i32>} : memref<256x512xbf16, #tpu.memory_space<vmem>>, vector<256x128xbf16>,
    } else {
    }
    %3 = arith.index_cast %arg1 : i32 to index
    %c0 = arith.constant 0 : index
    %c0_1 = arith.constant 0 : index
    %4 = vector.load %arg6[%3, %c0, %c0_1] : memref<3x512x128xbf16, #tpu.memory_space<vmem>>, vector<1x512x128xbf16>
    %5 = vector.shape_cast %4 : vector<1x512x128xbf16> to vector<512x128xbf16>
    %c0_2 = arith.constant 0 : index
    %c0_3 = arith.constant 0 : index
    %6 = vector.load %arg10[%c0_2, %c0_3] : memref<256x512xbf16, #tpu.memory_space<vmem>>, vector<256x512xbf16>
    %cst = arith.constant dense<0.000000e+00> : vector<256x128xf32>
    %7 = tpu.matmul %6, %5, %cst {dimension_numbers = #tpu.dot_dimension_numbers<[1], [0], [0], [1], [0, 0, 1, 1], [], []>} : vector<256x512xbf16>, vector<512x128xbf16>, vector<256x128xf32> -> vector<256x128xf32>
    %c0_4 = arith.constant 0 : index
    %c0_5 = arith.constant 0 : index
    %8 = vector.load %arg7[%c0_4, %c0_5] : memref<1x128xf32, #tpu.memory_space<vmem>>, vector<1x128xf32>
    %9 = vector.broadcast %8 : vector<1x128xf32> to vector<256x128xf32>
    %10 = arith.mulf %7, %9 : vector<256x128xf32>
    %c0_6 = arith.constant 0 : index
    %c0_7 = arith.constant 0 : index
    %11 = vector.load %arg8[%c0_6, %c0_7] : memref<1x128xf32, #tpu.memory_space<vmem>>, vector<1x128xf32>
    %12 = vector.broadcast %11 : vector<1x128xf32> to vector<256x128xf32>
    %13 = arith.addf %10, %12 : vector<256x128xf32>
    %cst_8 = arith.constant 0.000000e+00 : f32
    %14 = vector.broadcast %cst_8 : f32 to vector<256x128xf32>
    %15 = arith.maximumf %13, %14 : vector<256x128xf32>
    %cst_9 = arith.constant 6.000000e+00 : f32
    %16 = vector.broadcast %cst_9 : f32 to vector<256x128xf32>
    %17 = arith.minimumf %15, %16 : vector<256x128xf32>
    %c0_10 = arith.constant 0 : index
    %c0_11 = arith.constant 0 : index
    %c0_12 = arith.constant 0 : index
    %18 = vector.load %arg9[%c0_10, %c0_11, %c0_12] : memref<1x256x128xf32, #tpu.memory_space<vmem>>, vector<1x256x128xf32>
    %19 = vector.shape_cast %18 : vector<1x256x128xf32> to vector<256x128xf32>
    %20 = vector.shape_cast %17 : vector<256x128xf32> to vector<1x256x128xf32>
    tpu.vector_store %arg9[%c0_10, %c0_11, %c0_12], %20 {strides = array<i32>} : memref<1x256x128xf32, #tpu.memory_space<vmem>>, vector<1x256x128xf32>,
    return
  }
  func.func @transform_0(%arg0: i32, %arg1: i32) -> (i32, i32, i32) {
    %c0_i32 = arith.constant 0 : i32
    %c0_i32_0 = arith.constant 0 : i32
    %c0_i32_1 = arith.constant 0 : i32
    return %arg0, %c0_i32, %c0_i32_0 : i32, i32, i32
  }
  func.func @transform_1(%arg0: i32, %arg1: i32) -> (i32, i32) {
    %c0_i32 = arith.constant 0 : i32
    %c0_i32_0 = arith.constant 0 : i32
    %c0_i32_1 = arith.constant 0 : i32
    return %c0_i32, %c0_i32_0 : i32, i32
  }
  func.func @transform_2(%arg0: i32, %arg1: i32) -> (i32, i32) {
    %c0_i32 = arith.constant 0 : i32
    %c0_i32_0 = arith.constant 0 : i32
    %c0_i32_1 = arith.constant 0 : i32
    return %c0_i32, %c0_i32_0 : i32, i32
  }
  func.func @transform_3(%arg0: i32, %arg1: i32) -> (i32, i32) {
    %c0_i32 = arith.constant 0 : i32
    %c0_i32_0 = arith.constant 0 : i32
    %c0_i32_1 = arith.constant 0 : i32
    return %c0_i32, %c0_i32_0 : i32, i32
  }
  func.func @transform_4(%arg0: i32, %arg1: i32) -> (i32, i32, i32) {
    %c0_i32 = arith.constant 0 : i32
    %c0_i32_0 = arith.constant 0 : i32
    %c0_i32_1 = arith.constant 0 : i32
    %c0_i32_2 = arith.constant 0 : i32
    return %c0_i32, %c0_i32_0, %c0_i32_1 : i32, i32, i32
  }
  func.func @transform_5(%arg0: i32, %arg1: i32) -> (i32, i32) {
    %c0_i32 = arith.constant 0 : i32
    %c0_i32_0 = arith.constant 0 : i32
    return %c0_i32, %arg1 : i32, i32
  }
  func.func @transform_6(%arg0: i32, %arg1: i32) -> (i32, i32) {
    %c0_i32 = arith.constant 0 : i32
    %c0_i32_0 = arith.constant 0 : i32
    return %c0_i32, %arg1 : i32, i32
  }
  func.func @transform_7(%arg0: i32, %arg1: i32) -> (i32, i32, i32) {
    %c0_i32 = arith.constant 0 : i32
    %c0_i32_0 = arith.constant 0 : i32
    return %arg0, %c0_i32, %arg1 : i32, i32, i32
  }
}

</mosaic_0001>

<llo_original>
// kernel: _lambda_.1
$region0: #{_lambda_.1}
  #allocation0 [shape = 'u32[]', space=smem, size = 0x4, offset = 0x4, fixed_abs, tag = 'smem constant byte address 0x4 - core index']
  #allocation1 [shape = 'u32[144,128]{1,0:T(1,128)}', space=vmem, size = 0x12000, scoped, tag = 'internal scratch']
  #allocation2 [shape = 'bf16[256,512]{1,0:T(16,128)(2,1)}', space=vmem, size = 0x40000, scoped, tag = 'scratch operand']
  #allocation3 [shape = 'bf16[16,20,128]{2,1,0:T(8,128)(2,1)}', space=vmem, size = 0x18000, scoped, tag = 'scratch operand']
  #allocation4 [shape = 'bf16[20,16,128]{2,1,0:T(16,128)(2,1)}', space=vmem, size = 0x14000, scoped, tag = 'scratch operand']
  %s0 = inlined_call_operand.hbm [shape: bf16[2,256,256], index: 0, kind: input, shape index: {}]
  %s1 = inlined_call_operand.hbm [shape: bf16[256,128], index: 1, kind: input, shape index: {}]
  %s2 = inlined_call_operand.hbm [shape: f32[1,128], index: 2, kind: input, shape index: {}]
  %s3 = inlined_call_operand.hbm [shape: f32[1,128], index: 3, kind: input, shape index: {}]
  %s4 = inlined_call_operand.hbm [shape: bf16[3,512,128], index: 4, kind: input, shape index: {}]
  %s5 = inlined_call_operand.hbm [shape: f32[1,384], index: 5, kind: input, shape index: {}]
  %s6 = inlined_call_operand.hbm [shape: f32[1,384], index: 6, kind: input, shape index: {}]
  %s7 = inlined_call_operand.hbm [shape: f32[2,256,384], index: 7, kind: output, shape index: {}]
  %s8 = sld [smem:[#allocation0]]
  $region93: #{_lambda_.1} parent=0
    _
  %s10 = ssub.s32 1, %s8
  %s11 = scalar_select 0, %s10, %s8
  $region1: #{_lambda_.1} parent=0
    #allocation5 [shape = 'u8[262144]{0}', space=vmem, size = 0x40000, scoped, tag = 'input window, operand 0']
    #allocation6 [shape = 's32[2]{0}', space=sflag, size = 0x8, scoped, tag = 'scoped memory for _lambda_.1']
    #allocation7 [shape = 's32[2]{0}', space=sflag, size = 0x8, scoped, tag = 'scoped memory for _lambda_.1']
    #allocation8 [shape = 'u8[65536]{0}', space=vmem, size = 0x10000, scoped, tag = 'input window, operand 1, single buffered']
    #allocation9 [shape = 's32[1]{0}', space=sflag, size = 0x4, scoped, tag = 'scoped memory for _lambda_.1']
    #allocation10 [shape = 'u8[512]{0}', space=vmem, size = 0x400, scoped, tag = 'input window, operand 2, single buffered']
    #allocation11 [shape = 'u8[512]{0}', space=vmem, size = 0x400, scoped, tag = 'input window, operand 3, single buffered']
    #allocation12 [shape = 's32[1]{0}', space=sflag, size = 0x4, scoped, tag = 'scoped memory for _lambda_.1']
    #allocation13 [shape = 'u8[393216]{0}', space=vmem, size = 0x60000, scoped, tag = 'input window, operand 4, single buffered']
    #allocation14 [shape = 'u8[1024]{0}', space=vmem, size = 0x400, scoped, tag = 'input window, operand 5']
    #allocation15 [shape = 's32[2]{0}', space=sflag, size = 0x8, scoped, tag = 'scoped memory for _lambda_.1']
    #allocation16 [shape = 'u8[1024]{0}', space=vmem, size = 0x400, scoped, tag = 'input window, operand 6']
    #allocation17 [shape = 'u8[262144]{0}', space=vmem, size = 0x40000, scoped, tag = 'output window, operand 0']
    %12 = vsyncpa [#allocation6], 0
    %s13 = scalar_lea.sflag [#allocation6], 1
    %14 = vsyncpa %s13, 0
    %15 = vsyncpa [#allocation9], 0
    %16 = vsyncpa [#allocation12], 0
    %17 = vsyncpa [#allocation15], 0
    %s18 = scalar_lea.sflag [#allocation15], 1
    %19 = vsyncpa %s18, 0
    %20 = vsyncpa [#allocation7], 0
    %s21 = scalar_lea.sflag [#allocation7], 1
    %22 = vsyncpa %s21, 0
    loop: start=0, step=1, limit=8
    $region2: #{_lambda_.1} parent=1 // loop_pre_header
      _
    $region3: #{_lambda_.1} parent=1 // loop_header
      %s24 = sphi 0, %s28
      %p25 = scmp.ge.s32.totalorder %s24, 8
      %s31 = sphi 0, %s43
      %s32 = sphi 0, %s39
      %s33 = sphi 0, %s31
      %s34 = sphi 0, %s32
      %s35 = sphi 0, %s33
      %s36 = sphi 0, %s34
      %s46 = sphi 0, %s48
      %s49 = sphi 0, %s46
      %s50 = sphi 0, %s49
      %s66 = sphi 0, %s50
      %s70 = sphi 0, %s70
      %s72 = sphi 0, %s70
      %s73 = sphi 0, %s72
      %s87 = sphi 0, %s73
      %s91 = sphi 0, %s91
      %s93 = sphi 0, %s91
      %s94 = sphi 0, %s93
      %s108 = sphi 0, %s94
      %s112 = sphi 0, %s112
      %s114 = sphi 0, %s112
      %s115 = sphi 0, %s114
      %s129 = sphi 0, %s115
      %s133 = sphi 0, %s133
      %s135 = sphi 0, %s133
      %s136 = sphi 0, %s135
      %s150 = sphi 0, %s136
      %s156 = sphi 0, %s158
      %s159 = sphi 0, %s156
      %s160 = sphi 0, %s159
      %s176 = sphi 0, %s160
      %s182 = sphi 0, %s184
      %s185 = sphi 0, %s182
      %s186 = sphi 0, %s185
      %s202 = sphi 0, %s186
      %s210 = sphi 0, %s212
      %s213 = sphi 0, %s210
      %s214 = sphi 0, %s213
      %s230 = sphi 0, %s214
    $region4: #{_lambda_.1} parent=1 // loop_header_branch
      %27 = sbr.rel (%p25) target = $region8
    $region5: #{_lambda_.1} parent=1 // loop_body
      %s29 = ssub.s32 %s24, 1
      %s30 = ssub.s32 %s24, 2
      %s37 = sadd.s32 1, %s32
      %p38 = scmp.ge.s32.totalorder %s37, 3
      %s39 = scalar_select %p38, 0, %s37
      %s40 = sadd.s32 1, %s31
      %s41 = scalar_select %p38, %s40, %s31
      %p42 = scmp.ge.s32.totalorder %s41, 2
      %s43 = scalar_select %p42, 0, %s41
      %s44 = ssub.s32 %s31, %s43
      %p45 = scmp.eq.s32.totalorder %s44, 0
      %s47 = sadd.s32 %s46, 1
      %s48 = scalar_select %p45, %s46, %s47
      %p51 = pneg %p45
      %p52 = scmp.eq.s32.totalorder %s24, 5
      %p53 = por %p51, %p52
      %p54 = scmp.ne.s32.totalorder %s46, %s49
      %p55 = scmp.eq.s32.totalorder %s24, 0
      %p56 = por %p54, %p55
      %p57 = scmp.ne.s32.totalorder %s46, %s49
      %p58 = scmp.eq.s32.totalorder %s29, 5
      %p59 = por %p57, %p58
      %p60 = scmp.ne.s32.totalorder %s49, %s50
      %p61 = scmp.eq.s32.totalorder %s29, 0
      %p62 = por %p60, %p61
      %p63 = scmp.ne.s32.totalorder %s49, %s50
      %p64 = scmp.eq.s32.totalorder %s30, 5
      %p65 = por %p63, %p64
      %p67 = scmp.ne.s32.totalorder %s50, %s66
      %p68 = scmp.eq.s32.totalorder %s30, 0
      %p69 = por %p67, %p68
      %s71 = sadd.s32 %s70, 1
      %p74 = scmp.eq.s32.totalorder %s24, 5
      %p75 = scmp.ne.s32.totalorder %s70, %s72
      %p76 = scmp.eq.s32.totalorder %s24, 0
      %p77 = por %p75, %p76
      %p78 = scmp.ne.s32.totalorder %s70, %s72
      %p79 = scmp.eq.s32.totalorder %s29, 5
      %p80 = por %p78, %p79
      %p81 = scmp.ne.s32.totalorder %s72, %s73
      %p82 = scmp.eq.s32.totalorder %s29, 0
      %p83 = por %p81, %p82
      %p84 = scmp.ne.s32.totalorder %s72, %s73
      %p85 = scmp.eq.s32.totalorder %s30, 5
      %p86 = por %p84, %p85
      %p88 = scmp.ne.s32.totalorder %s73, %s87
      %p89 = scmp.eq.s32.totalorder %s30, 0
      %p90 = por %p88, %p89
      %s92 = sadd.s32 %s91, 1
      %p95 = scmp.eq.s32.totalorder %s24, 5
      %p96 = scmp.ne.s32.totalorder %s91, %s93
      %p97 = scmp.eq.s32.totalorder %s24, 0
      %p98 = por %p96, %p97
      %p99 = scmp.ne.s32.totalorder %s91, %s93
      %p100 = scmp.eq.s32.totalorder %s29, 5
      %p101 = por %p99, %p100
      %p102 = scmp.ne.s32.totalorder %s93, %s94
      %p103 = scmp.eq.s32.totalorder %s29, 0
      %p104 = por %p102, %p103
      %p105 = scmp.ne.s32.totalorder %s93, %s94
      %p106 = scmp.eq.s32.totalorder %s30, 5
      %p107 = por %p105, %p106
      %p109 = scmp.ne.s32.totalorder %s94, %s108
      %p110 = scmp.eq.s32.totalorder %s30, 0
      %p111 = por %p109, %p110
      %s113 = sadd.s32 %s112, 1
      %p116 = scmp.eq.s32.totalorder %s24, 5
      %p117 = scmp.ne.s32.totalorder %s112, %s114
      %p118 = scmp.eq.s32.totalorder %s24, 0
      %p119 = por %p117, %p118
      %p120 = scmp.ne.s32.totalorder %s112, %s114
      %p121 = scmp.eq.s32.totalorder %s29, 5
      %p122 = por %p120, %p121
      %p123 = scmp.ne.s32.totalorder %s114, %s115
      %p124 = scmp.eq.s32.totalorder %s29, 0
      %p125 = por %p123, %p124
      %p126 = scmp.ne.s32.totalorder %s114, %s115
      %p127 = scmp.eq.s32.totalorder %s30, 5
      %p128 = por %p126, %p127
      %p130 = scmp.ne.s32.totalorder %s115, %s129
      %p131 = scmp.eq.s32.totalorder %s30, 0
      %p132 = por %p130, %p131
      %s134 = sadd.s32 %s133, 1
      %p137 = scmp.eq.s32.totalorder %s24, 5
      %p138 = scmp.ne.s32.totalorder %s133, %s135
      %p139 = scmp.eq.s32.totalorder %s24, 0
      %p140 = por %p138, %p139
      %p141 = scmp.ne.s32.totalorder %s133, %s135
      %p142 = scmp.eq.s32.totalorder %s29, 5
      %p143 = por %p141, %p142
      %p144 = scmp.ne.s32.totalorder %s135, %s136
      %p145 = scmp.eq.s32.totalorder %s29, 0
      %p146 = por %p144, %p145
      %p147 = scmp.ne.s32.totalorder %s135, %s136
      %p148 = scmp.eq.s32.totalorder %s30, 5
      %p149 = por %p147, %p148
      %p151 = scmp.ne.s32.totalorder %s136, %s150
      %p152 = scmp.eq.s32.totalorder %s30, 0
      %p153 = por %p151, %p152
      %s154 = ssub.s32 %s32, %s39
      %p155 = scmp.eq.s32.totalorder %s154, 0
      %s157 = sadd.s32 %s156, 1
      %s158 = scalar_select %p155, %s156, %s157
      %p161 = pneg %p155
      %p162 = scmp.eq.s32.totalorder %s24, 5
      %p163 = por %p161, %p162
      %p164 = scmp.ne.s32.totalorder %s156, %s159
      %p165 = scmp.eq.s32.totalorder %s24, 0
      %p166 = por %p164, %p165
      %p167 = scmp.ne.s32.totalorder %s156, %s159
      %p168 = scmp.eq.s32.totalorder %s29, 5
      %p169 = por %p167, %p168
      %p170 = scmp.ne.s32.totalorder %s159, %s160
      %p171 = scmp.eq.s32.totalorder %s29, 0
      %p172 = por %p170, %p171
      %p173 = scmp.ne.s32.totalorder %s159, %s160
      %p174 = scmp.eq.s32.totalorder %s30, 5
      %p175 = por %p173, %p174
      %p177 = scmp.ne.s32.totalorder %s160, %s176
      %p178 = scmp.eq.s32.totalorder %s30, 0
      %p179 = por %p177, %p178
      %s180 = ssub.s32 %s32, %s39
      %p181 = scmp.eq.s32.totalorder %s180, 0
      %s183 = sadd.s32 %s182, 1
      %s184 = scalar_select %p181, %s182, %s183
      %p187 = pneg %p181
      %p188 = scmp.eq.s32.totalorder %s24, 5
      %p189 = por %p187, %p188
      %p190 = scmp.ne.s32.totalorder %s182, %s185
      %p191 = scmp.eq.s32.totalorder %s24, 0
      %p192 = por %p190, %p191
      %p193 = scmp.ne.s32.totalorder %s182, %s185
      %p194 = scmp.eq.s32.totalorder %s29, 5
      %p195 = por %p193, %p194
      %p196 = scmp.ne.s32.totalorder %s185, %s186
      %p197 = scmp.eq.s32.totalorder %s29, 0
      %p198 = por %p196, %p197
      %p199 = scmp.ne.s32.totalorder %s185, %s186
      %p200 = scmp.eq.s32.totalorder %s30, 5
      %p201 = por %p199, %p200
      %p203 = scmp.ne.s32.totalorder %s186, %s202
      %p204 = scmp.eq.s32.totalorder %s30, 0
      %p205 = por %p203, %p204
      %s206 = ssub.s32 %s31, %s43
      %s207 = ssub.s32 %s32, %s39
      %s208 = sor.u32 %s206, %s207
      %p209 = scmp.eq.s32.totalorder %s208, 0
      %s211 = sadd.s32 %s210, 1
      %s212 = scalar_select %p209, %s210, %s211
      %p215 = pneg %p209
      %p216 = scmp.eq.s32.totalorder %s24, 5
      %p217 = por %p215, %p216
      %p218 = scmp.ne.s32.totalorder %s210, %s213
      %p219 = scmp.eq.s32.totalorder %s24, 0
      %p220 = por %p218, %p219
      %p221 = scmp.ne.s32.totalorder %s210, %s213
      %p222 = scmp.eq.s32.totalorder %s29, 5
      %p223 = por %p221, %p222
      %p224 = scmp.ne.s32.totalorder %s213, %s214
      %p225 = scmp.eq.s32.totalorder %s29, 0
      %p226 = por %p224, %p225
      %p227 = scmp.ne.s32.totalorder %s213, %s214
      %p228 = scmp.eq.s32.totalorder %s30, 5
      %p229 = por %p227, %p228
      %p231 = scmp.ne.s32.totalorder %s214, %s230
      %p232 = scmp.eq.s32.totalorder %s30, 0
      %p233 = por %p231, %p232
      %p234 = scmp.le.s32.totalorder 1, %s24
      %p235 = scmp.lt.s32.totalorder %s24, 7
      %p236 = pnand %p234, %p235
      %p237 = pneg %p236
      // Predicated region
      $region9: #{_lambda_.1} parent=5 // pred_check
        _
      $region10: #{_lambda_.1} parent=5 // pred_check_branch
        %239 = sbr.rel (%p236) target = $region12
      $region11: #{_lambda_.1} parent=5 // pred_region
        %s240 = ssub.s32 %s24, 1
        // Predicated region
        $region13: #{_lambda_.1} parent=11 // pred_check
          %p241 = pneg %p83
        $region14: #{_lambda_.1} parent=11 // pred_check_branch
          %243 = sbr.rel (%p241) target = $region16
        $region15: #{_lambda_.1} parent=11 // pred_region
          %s245 = ssub.s32 2048, 2048
          %246 = vsyncadd [#allocation9], %s245
          %s247 = sshll.u32 [#allocation8], 4
          %s248 = int_to_ptr.vmem [resolvable:$true] %s247
          %253 = dma.hbm_to_vmem [thread:$0]  %s1, 2048, %s248, [#allocation9], 64, 64, 4
        $region16: #{_lambda_.1} parent=11 // pred_fallthru
          _
        // Predicated region
        $region17: #{_lambda_.1} parent=11 // pred_check
          %p254 = pneg %p104
        $region18: #{_lambda_.1} parent=11 // pred_check_branch
          %256 = sbr.rel (%p254) target = $region20
        $region19: #{_lambda_.1} parent=11 // pred_region
          %s258 = ssub.s32 16, 16
          %259 = vsyncadd [#allocation9], %s258
          %s261 = sshll.u32 [#allocation10], 4
          %s262 = int_to_ptr.vmem [resolvable:$true] %s261
          %264 = dma.hbm_to_vmem [thread:$0]  %s2, 16, %s262, [#allocation9]
        $region20: #{_lambda_.1} parent=11 // pred_fallthru
          _
        // Predicated region
        $region21: #{_lambda_.1} parent=11 // pred_check
          %p265 = pneg %p125
        $region22: #{_lambda_.1} parent=11 // pred_check_branch
          %267 = sbr.rel (%p265) target = $region24
        $region23: #{_lambda_.1} parent=11 // pred_region
          %s269 = ssub.s32 16, 16
          %270 = vsyncadd [#allocation12], %s269
          %s272 = sshll.u32 [#allocation11], 4
          %s273 = int_to_ptr.vmem [resolvable:$true] %s272
          %275 = dma.hbm_to_vmem [thread:$0]  %s3, 16, %s273, [#allocation12]
        $region24: #{_lambda_.1} parent=11 // pred_fallthru
          _
        // Predicated region
        $region25: #{_lambda_.1} parent=11 // pred_check
          %p276 = pneg %p146
        $region26: #{_lambda_.1} parent=11 // pred_check_branch
          %278 = sbr.rel (%p276) target = $region28
        $region27: #{_lambda_.1} parent=11 // pred_region
          %s280 = ssub.s32 12288, 12288
          %281 = vsyncadd [#allocation12], %s280
          %s282 = sshll.u32 [#allocation13], 4
          %s283 = int_to_ptr.vmem [resolvable:$true] %s282
          %288 = dma.hbm_to_vmem [thread:$0]  %s4, 12288, %s283, [#allocation12], 64, 64, 4
        $region28: #{_lambda_.1} parent=11 // pred_fallthru
          _
      $region12: #{_lambda_.1} parent=5 // pred_fallthru
        _
      %p289 = scmp.lt.s32.totalorder %s24, 6
      // Predicated region
      $region29: #{_lambda_.1} parent=5 // pred_check
        %p290 = pneg %p289
      $region30: #{_lambda_.1} parent=5 // pred_check_branch
        %292 = sbr.rel (%p290) target = $region32
      $region31: #{_lambda_.1} parent=5 // pred_region
        // Predicated region
        $region33: #{_lambda_.1} parent=31 // pred_check
          %p293 = pneg %p56
        $region34: #{_lambda_.1} parent=31 // pred_check_branch
          %295 = sbr.rel (%p293) target = $region36
        $region35: #{_lambda_.1} parent=31 // pred_region
          %s296 = sand.u32 %s46, 1
          %s297 = scalar_lea.sflag [#allocation6], %s296
          %s298 = sand.u32 %s46, 1
          %s299 = smul.addr %s298, 256
          %s300 = scalar_lea.vmem [#allocation5], %s299
          %s302 = ssub.s32 4096, 4096
          %303 = vsyncadd %s297, %s302
          %s304 = smul.addr %s31, 64
          %s305 = smul.addr %s304, 64
          %s306 = scalar_lea.hbm %s0, %s305
          %s307 = sshll.u32 %s300, 4
          %s308 = int_to_ptr.vmem [resolvable:$true] %s307
          %313 = dma.hbm_to_vmem [thread:$0]  %s306, 4096, %s308, %s297, 128, 128, 8
        $region36: #{_lambda_.1} parent=31 // pred_fallthru
          _
        // Predicated region
        $region37: #{_lambda_.1} parent=31 // pred_check
          %p314 = pneg %p166
        $region38: #{_lambda_.1} parent=31 // pred_check_branch
          %316 = sbr.rel (%p314) target = $region40
        $region39: #{_lambda_.1} parent=31 // pred_region
          %s317 = sand.u32 %s24, 1
          %s318 = scalar_lea.sflag [#allocation15], %s317
          %s319 = sand.u32 %s156, 1
          %s320 = scalar_lea.vmem [#allocation14], %s319
          %s322 = ssub.s32 16, 16
          %323 = vsyncadd %s318, %s322
          %s324 = smul.addr %s32, 16
          %s325 = scalar_lea.hbm %s5, %s324
          %s327 = sshll.u32 %s320, 4
          %s328 = int_to_ptr.vmem [resolvable:$true] %s327
          %330 = dma.hbm_to_vmem [thread:$0]  %s325, 16, %s328, %s318
        $region40: #{_lambda_.1} parent=31 // pred_fallthru
          _
        // Predicated region
        $region41: #{_lambda_.1} parent=31 // pred_check
          %p331 = pneg %p192
        $region42: #{_lambda_.1} parent=31 // pred_check_branch
          %333 = sbr.rel (%p331) target = $region44
        $region43: #{_lambda_.1} parent=31 // pred_region
          %s334 = sand.u32 %s24, 1
          %s335 = scalar_lea.sflag [#allocation15], %s334
          %s336 = sand.u32 %s182, 1
          %s337 = scalar_lea.vmem [#allocation16], %s336
          %s339 = ssub.s32 16, 16
          %340 = vsyncadd %s335, %s339
          %s341 = smul.addr %s32, 16
          %s342 = scalar_lea.hbm %s6, %s341
          %s344 = sshll.u32 %s337, 4
          %s345 = int_to_ptr.vmem [resolvable:$true] %s344
          %347 = dma.hbm_to_vmem [thread:$0]  %s342, 16, %s345, %s335
        $region44: #{_lambda_.1} parent=31 // pred_fallthru
          _
      $region32: #{_lambda_.1} parent=5 // pred_fallthru
        _
      %p348 = scmp.le.s32.totalorder 1, %s24
      %p349 = scmp.lt.s32.totalorder %s24, 7
      %p350 = pnand %p348, %p349
      %p351 = pneg %p350
      // Predicated region
      $region45: #{_lambda_.1} parent=5 // pred_check
        _
      $region46: #{_lambda_.1} parent=5 // pred_check_branch
        %353 = sbr.rel (%p350) target = $region48
      $region47: #{_lambda_.1} parent=5 // pred_region
        %s354 = ssub.s32 %s24, 1
        %s355 = sand.u32 %s49, 1
        %s356 = scalar_lea.sflag [#allocation6], %s355
        %s357 = sand.u32 %s49, 1
        %s358 = smul.addr %s357, 256
        %s359 = scalar_lea.vmem [#allocation5], %s358
        // Predicated region
        $region49: #{_lambda_.1} parent=47 // pred_check
          %p360 = pneg %p62
        $region50: #{_lambda_.1} parent=47 // pred_check_branch
          %362 = sbr.rel (%p360) target = $region52
        $region51: #{_lambda_.1} parent=47 // pred_region
          %363 = dma.done %s356, 4096
        $region52: #{_lambda_.1} parent=47 // pred_fallthru
          _
        // Predicated region
        $region53: #{_lambda_.1} parent=47 // pred_check
          %p364 = pneg %p83
        $region54: #{_lambda_.1} parent=47 // pred_check_branch
          %366 = sbr.rel (%p364) target = $region56
        $region55: #{_lambda_.1} parent=47 // pred_region
          %367 = dma.done [#allocation9], 2048
        $region56: #{_lambda_.1} parent=47 // pred_fallthru
          _
        // Predicated region
        $region57: #{_lambda_.1} parent=47 // pred_check
          %p368 = pneg %p104
        $region58: #{_lambda_.1} parent=47 // pred_check_branch
          %370 = sbr.rel (%p368) target = $region60
        $region59: #{_lambda_.1} parent=47 // pred_region
          %371 = dma.done [#allocation9], 16
        $region60: #{_lambda_.1} parent=47 // pred_fallthru
          _
        // Predicated region
        $region61: #{_lambda_.1} parent=47 // pred_check
          %p372 = pneg %p125
        $region62: #{_lambda_.1} parent=47 // pred_check_branch
          %374 = sbr.rel (%p372) target = $region64
        $region63: #{_lambda_.1} parent=47 // pred_region
          %375 = dma.done [#allocation12], 16
        $region64: #{_lambda_.1} parent=47 // pred_fallthru
          _
        // Predicated region
        $region65: #{_lambda_.1} parent=47 // pred_check
          %p376 = pneg %p146
        $region66: #{_lambda_.1} parent=47 // pred_check_branch
          %378 = sbr.rel (%p376) target = $region68
        $region67: #{_lambda_.1} parent=47 // pred_region
          %379 = dma.done [#allocation12], 12288
        $region68: #{_lambda_.1} parent=47 // pred_fallthru
          _
        %s380 = sand.u32 %s29, 1
        %s381 = scalar_lea.sflag [#allocation15], %s380
        %s382 = sand.u32 %s159, 1
        %s383 = scalar_lea.vmem [#allocation14], %s382
        // Predicated region
        $region69: #{_lambda_.1} parent=47 // pred_check
          %p384 = pneg %p172
        $region70: #{_lambda_.1} parent=47 // pred_check_branch
          %386 = sbr.rel (%p384) target = $region72
        $region71: #{_lambda_.1} parent=47 // pred_region
          %387 = dma.done %s381, 16
        $region72: #{_lambda_.1} parent=47 // pred_fallthru
          _
        %s388 = sand.u32 %s29, 1
        %s389 = scalar_lea.sflag [#allocation15], %s388
        %s390 = sand.u32 %s185, 1
        %s391 = scalar_lea.vmem [#allocation16], %s390
        // Predicated region
        $region73: #{_lambda_.1} parent=47 // pred_check
          %p392 = pneg %p198
        $region74: #{_lambda_.1} parent=47 // pred_check_branch
          %394 = sbr.rel (%p392) target = $region76
        $region75: #{_lambda_.1} parent=47 // pred_region
          %395 = dma.done %s389, 16
        $region76: #{_lambda_.1} parent=47 // pred_fallthru
          _
        %s396 = sand.u32 %s49, 1
        %s397 = scalar_lea.sflag [#allocation6], %s396
        %s398 = sand.u32 %s49, 1
        %s399 = smul.addr %s398, 256
        %s400 = scalar_lea.vmem [#allocation5], %s399
        %p401 = pneg %p62
        %p402 = pneg %p59
        %p403 = pneg %p83
        %p404 = pneg %p80
        %p405 = pneg %p104
        %p406 = pneg %p101
        %p407 = pneg %p125
        %p408 = pneg %p122
        %p409 = pneg %p146
        %p410 = pneg %p143
        %s411 = sand.u32 %s29, 1
        %s412 = scalar_lea.sflag [#allocation15], %s411
        %s413 = sand.u32 %s159, 1
        %s414 = scalar_lea.vmem [#allocation14], %s413
        %p415 = pneg %p172
        %p416 = pneg %p169
        %s417 = sand.u32 %s29, 1
        %s418 = scalar_lea.sflag [#allocation15], %s417
        %s419 = sand.u32 %s185, 1
        %s420 = scalar_lea.vmem [#allocation16], %s419
        %p421 = pneg %p198
        %p422 = pneg %p195
        %p423 = pneg %p226
        %p424 = pneg %p223
        %s425 = sand.u32 %s213, 1
        %s426 = scalar_lea.sflag [#allocation7], %s425
        %s427 = sand.u32 %s213, 1
        %s428 = smul.addr %s427, 256
        %s429 = scalar_lea.vmem [#allocation17], %s428
        %p432 = scmp.eq.s32.totalorder %s34, 0
        // Predicated region
        $region77: #{_lambda_.1} parent=47 // pred_check
          %p433 = pneg %p432
        $region78: #{_lambda_.1} parent=47 // pred_check_branch
          %435 = sbr.rel (%p433) target = $region80
        $region79: #{_lambda_.1} parent=47 // pred_region
          %436 = vst [vmem:[#allocation3] sm:$0xf] 4286644096
          %437 = vst [vmem:[#allocation3 + $0x4] sm:$0xf] 4286644096
          %438 = vst [vmem:[#allocation3 + $0x8] sm:$0x3] 4286644096
          %439 = vst [vmem:[#allocation3 + $0xc] sm:$0xf] 4286644096
          %440 = vst [vmem:[#allocation3 + $0x10] sm:$0xf] 4286644096
          %441 = vst [vmem:[#allocation3 + $0x14] sm:$0x3] 4286644096
          %442 = vst [vmem:[#allocation3 + $0x18] sm:$0xf] 4286644096
          %443 = vst [vmem:[#allocation3 + $0x1c] sm:$0xf] 4286644096
          %444 = vst [vmem:[#allocation3 + $0x20] sm:$0x3] 4286644096
          %445 = vst [vmem:[#allocation3 + $0x24] sm:$0xf] 4286644096
          %446 = vst [vmem:[#allocation3 + $0x28] sm:$0xf] 4286644096
          %447 = vst [vmem:[#allocation3 + $0x2c] sm:$0x3] 4286644096
          %448 = vst [vmem:[#allocation3 + $0x30] sm:$0xf] 4286644096
          %449 = vst [vmem:[#allocation3 + $0x34] sm:$0xf] 4286644096
          %450 = vst [vmem:[#allocation3 + $0x38] sm:$0x3] 4286644096
          %451 = vst [vmem:[#allocation3 + $0x3c] sm:$0xf] 4286644096
          %452 = vst [vmem:[#allocation3 + $0x40] sm:$0xf] 4286644096
          %453 = vst [vmem:[#allocation3 + $0x44] sm:$0x3] 4286644096
          %454 = vst [vmem:[#allocation3 + $0x48] sm:$0xf] 4286644096
          %455 = vst [vmem:[#allocation3 + $0x4c] sm:$0xf] 4286644096
          %456 = vst [vmem:[#allocation3 + $0x50] sm:$0x3] 4286644096
          %457 = vst [vmem:[#allocation3 + $0x54] sm:$0xf] 4286644096
          %458 = vst [vmem:[#allocation3 + $0x58] sm:$0xf] 4286644096
          %459 = vst [vmem:[#allocation3 + $0x5c] sm:$0x3] 4286644096
          %460 = vst [vmem:[#allocation3 + $0x60] sm:$0xf] 4286644096
          %461 = vst [vmem:[#allocation3 + $0x64] sm:$0xf] 4286644096
          %462 = vst [vmem:[#allocation3 + $0x68] sm:$0x3] 4286644096
          %463 = vst [vmem:[#allocation3 + $0x6c] sm:$0xf] 4286644096
          %464 = vst [vmem:[#allocation3 + $0x70] sm:$0xf] 4286644096
          %465 = vst [vmem:[#allocation3 + $0x74] sm:$0x3] 4286644096
          %466 = vst [vmem:[#allocation3 + $0x78] sm:$0xf] 4286644096
          %467 = vst [vmem:[#allocation3 + $0x7c] sm:$0xf] 4286644096
          %468 = vst [vmem:[#allocation3 + $0x80] sm:$0x3] 4286644096
          %469 = vst [vmem:[#allocation3 + $0x84] sm:$0xf] 4286644096
          %470 = vst [vmem:[#allocation3 + $0x88] sm:$0xf] 4286644096
          %471 = vst [vmem:[#allocation3 + $0x8c] sm:$0x3] 4286644096
          %472 = vst [vmem:[#allocation3 + $0x90] sm:$0xf] 4286644096
          %473 = vst [vmem:[#allocation3 + $0x94] sm:$0xf] 4286644096
          %474 = vst [vmem:[#allocation3 + $0x98] sm:$0x3] 4286644096
          %475 = vst [vmem:[#allocation3 + $0x9c] sm:$0xf] 4286644096
          %476 = vst [vmem:[#allocation3 + $0xa0] sm:$0xf] 4286644096
          %477 = vst [vmem:[#allocation3 + $0xa4] sm:$0x3] 4286644096
          %478 = vst [vmem:[#allocation3 + $0xa8] sm:$0xf] 4286644096
          %479 = vst [vmem:[#allocation3 + $0xac] sm:$0xf] 4286644096
          %480 = vst [vmem:[#allocation3 + $0xb0] sm:$0x3] 4286644096
          %481 = vst [vmem:[#allocation3 + $0xb4] sm:$0xf] 4286644096
          %482 = vst [vmem:[#allocation3 + $0xb8] sm:$0xf] 4286644096
          %483 = vst [vmem:[#allocation3 + $0xbc] sm:$0x3] 4286644096
          %484 = vst [vmem:[#allocation4] sm:$0xff] 4286644096
          %485 = vst [vmem:[#allocation4 + $0x8] sm:$0xff] 4286644096
          %486 = vst [vmem:[#allocation4 + $0x10] sm:$0xff] 4286644096
          %487 = vst [vmem:[#allocation4 + $0x18] sm:$0xff] 4286644096
          %488 = vst [vmem:[#allocation4 + $0x20] sm:$0xff] 4286644096
          %489 = vst [vmem:[#allocation4 + $0x28] sm:$0xff] 4286644096
          %490 = vst [vmem:[#allocation4 + $0x30] sm:$0xff] 4286644096
          %491 = vst [vmem:[#allocation4 + $0x38] sm:$0xff] 4286644096
          %492 = vst [vmem:[#allocation4 + $0x40] sm:$0xff] 4286644096
          %493 = vst [vmem:[#allocation4 + $0x48] sm:$0xff] 4286644096
          %494 = vst [vmem:[#allocation4 + $0x50] sm:$0xff] 4286644096
          %495 = vst [vmem:[#allocation4 + $0x58] sm:$0xff] 4286644096
          %496 = vst [vmem:[#allocation4 + $0x60] sm:$0xff] 4286644096
          %497 = vst [vmem:[#allocation4 + $0x68] sm:$0xff] 4286644096
          %498 = vst [vmem:[#allocation4 + $0x70] sm:$0xff] 4286644096
          %499 = vst [vmem:[#allocation4 + $0x78] sm:$0xff] 4286644096
          %500 = vst [vmem:[#allocation4 + $0x80] sm:$0xff] 4286644096
          %501 = vst [vmem:[#allocation4 + $0x88] sm:$0xff] 4286644096
          %502 = vst [vmem:[#allocation4 + $0x90] sm:$0xff] 4286644096
          %503 = vst [vmem:[#allocation4 + $0x98] sm:$0xff] 4286644096
          %v504 = vld [vmem:[%s359] sm:$0xff]
          %v505 = vld [vmem:[%s359 + $0x8] sm:$0xff]
          %v506 = vld [vmem:[%s359 + $0x10] sm:$0xff]
          %v507 = vld [vmem:[%s359 + $0x18] sm:$0xff]
          %v508 = vld [vmem:[%s359 + $0x20] sm:$0xff]
          %v509 = vld [vmem:[%s359 + $0x28] sm:$0xff]
          %v510 = vld [vmem:[%s359 + $0x30] sm:$0xff]
          %v511 = vld [vmem:[%s359 + $0x38] sm:$0xff]
          %v512 = vld [vmem:[%s359 + $0x40] sm:$0xff]
          %v513 = vld [vmem:[%s359 + $0x48] sm:$0xff]
          %v514 = vld [vmem:[%s359 + $0x50] sm:$0xff]
          %v515 = vld [vmem:[%s359 + $0x58] sm:$0xff]
          %v516 = vld [vmem:[%s359 + $0x60] sm:$0xff]
          %v517 = vld [vmem:[%s359 + $0x68] sm:$0xff]
          %v518 = vld [vmem:[%s359 + $0x70] sm:$0xff]
          %v519 = vld [vmem:[%s359 + $0x78] sm:$0xff]
          %v520 = vld [vmem:[%s359 + $0x80] sm:$0xff]
          %v521 = vld [vmem:[%s359 + $0x88] sm:$0xff]
          %v522 = vld [vmem:[%s359 + $0x90] sm:$0xff]
          %v523 = vld [vmem:[%s359 + $0x98] sm:$0xff]
          %v524 = vld [vmem:[%s359 + $0xa0] sm:$0xff]
          %v525 = vld [vmem:[%s359 + $0xa8] sm:$0xff]
          %v526 = vld [vmem:[%s359 + $0xb0] sm:$0xff]
          %v527 = vld [vmem:[%s359 + $0xb8] sm:$0xff]
          %v528 = vld [vmem:[%s359 + $0xc0] sm:$0xff]
          %v529 = vld [vmem:[%s359 + $0xc8] sm:$0xff]
          %v530 = vld [vmem:[%s359 + $0xd0] sm:$0xff]
          %v531 = vld [vmem:[%s359 + $0xd8] sm:$0xff]
          %v532 = vld [vmem:[%s359 + $0xe0] sm:$0xff]
          %v533 = vld [vmem:[%s359 + $0xe8] sm:$0xff]
          %v534 = vld [vmem:[%s359 + $0xf0] sm:$0xff]
          %v535 = vld [vmem:[%s359 + $0xf8] sm:$0xff]
          %v536 = vld [vmem:[#allocation8] sm:$0xf]
          %v537 = vld [vmem:[#allocation8 + $0x4] sm:$0xf]
          %v538 = vld [vmem:[#allocation8 + $0x8] sm:$0xf]
          %v539 = vld [vmem:[#allocation8 + $0xc] sm:$0xf]
          %v540 = vld [vmem:[#allocation8 + $0x10] sm:$0xf]
          %v541 = vld [vmem:[#allocation8 + $0x14] sm:$0xf]
          %v542 = vld [vmem:[#allocation8 + $0x18] sm:$0xf]
          %v543 = vld [vmem:[#allocation8 + $0x1c] sm:$0xf]
          %v544 = vld [vmem:[#allocation8 + $0x20] sm:$0xf]
          %v545 = vld [vmem:[#allocation8 + $0x24] sm:$0xf]
          %v546 = vld [vmem:[#allocation8 + $0x28] sm:$0xf]
          %v547 = vld [vmem:[#allocation8 + $0x2c] sm:$0xf]
          %v548 = vld [vmem:[#allocation8 + $0x30] sm:$0xf]
          %v549 = vld [vmem:[#allocation8 + $0x34] sm:$0xf]
          %v550 = vld [vmem:[#allocation8 + $0x38] sm:$0xf]
          %v551 = vld [vmem:[#allocation8 + $0x3c] sm:$0xf]
          %v552 = vld [vmem:[#allocation8 + $0x40] sm:$0xf]
          %v553 = vld [vmem:[#allocation8 + $0x44] sm:$0xf]
          %v554 = vld [vmem:[#allocation8 + $0x48] sm:$0xf]
          %v555 = vld [vmem:[#allocation8 + $0x4c] sm:$0xf]
          %v556 = vld [vmem:[#allocation8 + $0x50] sm:$0xf]
          %v557 = vld [vmem:[#allocation8 + $0x54] sm:$0xf]
          %v558 = vld [vmem:[#allocation8 + $0x58] sm:$0xf]
          %v559 = vld [vmem:[#allocation8 + $0x5c] sm:$0xf]
          %v560 = vld [vmem:[#allocation8 + $0x60] sm:$0xf]
          %v561 = vld [vmem:[#allocation8 + $0x64] sm:$0xf]
          %v562 = vld [vmem:[#allocation8 + $0x68] sm:$0xf]
          %v563 = vld [vmem:[#allocation8 + $0x6c] sm:$0xf]
          %v564 = vld [vmem:[#allocation8 + $0x70] sm:$0xf]
          %v565 = vld [vmem:[#allocation8 + $0x74] sm:$0xf]
          %v566 = vld [vmem:[#allocation8 + $0x78] sm:$0xf]
          %v567 = vld [vmem:[#allocation8 + $0x7c] sm:$0xf]
          %v600 = vunpack.c.l.b16 %v504
          %v601 = vunpack.c.h.b16 %v504
          %v602 = vunpack.c.l.b16 %v505
          %v603 = vunpack.c.h.b16 %v505
          %v604 = vunpack.c.l.b16 %v506
          %v605 = vunpack.c.h.b16 %v506
          %v606 = vunpack.c.l.b16 %v507
          %v607 = vunpack.c.h.b16 %v507
          %v608 = vunpack.c.l.b16 %v508
          %v609 = vunpack.c.h.b16 %v508
          %v610 = vunpack.c.l.b16 %v509
          %v611 = vunpack.c.h.b16 %v509
          %v612 = vunpack.c.l.b16 %v510
          %v613 = vunpack.c.h.b16 %v510
          %v614 = vunpack.c.l.b16 %v511
          %v615 = vunpack.c.h.b16 %v511
          %v616 = vunpack.c.l.b16 %v512
          %v617 = vunpack.c.h.b16 %v512
          %v618 = vunpack.c.l.b16 %v513
          %v619 = vunpack.c.h.b16 %v513
          %v620 = vunpack.c.l.b16 %v514
          %v621 = vunpack.c.h.b16 %v514
          %v622 = vunpack.c.l.b16 %v515
          %v623 = vunpack.c.h.b16 %v515
          %v624 = vunpack.c.l.b16 %v516
          %v625 = vunpack.c.h.b16 %v516
          %v626 = vunpack.c.l.b16 %v517
          %v627 = vunpack.c.h.b16 %v517
          %v628 = vunpack.c.l.b16 %v518
          %v629 = vunpack.c.h.b16 %v518
          %v630 = vunpack.c.l.b16 %v519
          %v631 = vunpack.c.h.b16 %v519
          %v632 = vunpack.c.l.b16 %v520
          %v633 = vunpack.c.h.b16 %v520
          %v634 = vunpack.c.l.b16 %v521
          %v635 = vunpack.c.h.b16 %v521
          %v636 = vunpack.c.l.b16 %v522
          %v637 = vunpack.c.h.b16 %v522
          %v638 = vunpack.c.l.b16 %v523
          %v639 = vunpack.c.h.b16 %v523
          %v640 = vunpack.c.l.b16 %v524
          %v641 = vunpack.c.h.b16 %v524
          %v642 = vunpack.c.l.b16 %v525
          %v643 = vunpack.c.h.b16 %v525
          %v644 = vunpack.c.l.b16 %v526
          %v645 = vunpack.c.h.b16 %v526
          %v646 = vunpack.c.l.b16 %v527
          %v647 = vunpack.c.h.b16 %v527
          %v648 = vunpack.c.l.b16 %v528
          %v649 = vunpack.c.h.b16 %v528
          %v650 = vunpack.c.l.b16 %v529
          %v651 = vunpack.c.h.b16 %v529
          %v652 = vunpack.c.l.b16 %v530
          %v653 = vunpack.c.h.b16 %v530
          %v654 = vunpack.c.l.b16 %v531
          %v655 = vunpack.c.h.b16 %v531
          %v656 = vunpack.c.l.b16 %v532
          %v657 = vunpack.c.h.b16 %v532
          %v658 = vunpack.c.l.b16 %v533
          %v659 = vunpack.c.h.b16 %v533
          %v660 = vunpack.c.l.b16 %v534
          %v661 = vunpack.c.h.b16 %v534
          %v662 = vunpack.c.l.b16 %v535
          %v663 = vunpack.c.h.b16 %v535
          %v664 = vpack.c.b16 %v602, %v600
          %v665 = vpack.c.b16 %v603, %v601
          %v666 = vpack.c.b16 %v606, %v604
          %v667 = vpack.c.b16 %v607, %v605
          %v668 = vpack.c.b16 %v610, %v608
          %v669 = vpack.c.b16 %v611, %v609
          %v670 = vpack.c.b16 %v614, %v612
          %v671 = vpack.c.b16 %v615, %v613
          %v672 = vpack.c.b16 %v618, %v616
          %v673 = vpack.c.b16 %v619, %v617
          %v674 = vpack.c.b16 %v622, %v620
          %v675 = vpack.c.b16 %v623, %v621
          %v676 = vpack.c.b16 %v626, %v624
          %v677 = vpack.c.b16 %v627, %v625
          %v678 = vpack.c.b16 %v630, %v628
          %v679 = vpack.c.b16 %v631, %v629
          %v680 = vpack.c.b16 %v634, %v632
          %v681 = vpack.c.b16 %v635, %v633
          %v682 = vpack.c.b16 %v638, %v636
          %v683 = vpack.c.b16 %v639, %v637
          %v684 = vpack.c.b16 %v642, %v640
          %v685 = vpack.c.b16 %v643, %v641
          %v686 = vpack.c.b16 %v646, %v644
          %v687 = vpack.c.b16 %v647, %v645
          %v688 = vpack.c.b16 %v650, %v648
          %v689 = vpack.c.b16 %v651, %v649
          %v690 = vpack.c.b16 %v654, %v652
          %v691 = vpack.c.b16 %v655, %v653
          %v692 = vpack.c.b16 %v658, %v656
          %v693 = vpack.c.b16 %v659, %v657
          %v694 = vpack.c.b16 %v662, %v660
          %v695 = vpack.c.b16 %v663, %v661
          %v760 = vunpack.c.l.b16 %v536
          %v761 = vunpack.c.l.b16 %v537
          %v762 = vunpack.c.l.b16 %v538
          %v763 = vunpack.c.l.b16 %v539
          %v764 = vunpack.c.l.b16 %v540
          %v765 = vunpack.c.l.b16 %v541
          %v766 = vunpack.c.l.b16 %v542
          %v767 = vunpack.c.l.b16 %v543
          %v768 = vunpack.c.l.b16 %v544
          %v769 = vunpack.c.l.b16 %v545
          %v770 = vunpack.c.l.b16 %v546
          %v771 = vunpack.c.l.b16 %v547
          %v772 = vunpack.c.l.b16 %v548
          %v773 = vunpack.c.l.b16 %v549
          %v774 = vunpack.c.l.b16 %v550
          %v775 = vunpack.c.l.b16 %v551
          %v776 = vunpack.c.l.b16 %v552
          %v777 = vunpack.c.l.b16 %v553
          %v778 = vunpack.c.l.b16 %v554
          %v779 = vunpack.c.l.b16 %v555
          %v780 = vunpack.c.l.b16 %v556
          %v781 = vunpack.c.l.b16 %v557
          %v782 = vunpack.c.l.b16 %v558
          %v783 = vunpack.c.l.b16 %v559
          %v784 = vunpack.c.l.b16 %v560
          %v785 = vunpack.c.l.b16 %v561
          %v786 = vunpack.c.l.b16 %v562
          %v787 = vunpack.c.l.b16 %v563
          %v788 = vunpack.c.l.b16 %v564
          %v789 = vunpack.c.l.b16 %v565
          %v790 = vunpack.c.l.b16 %v566
          %v791 = vunpack.c.l.b16 %v567
          %v792 = vpack.c.b16 %v761, %v760
          %v793 = vpack.c.b16 %v763, %v762
          %v794 = vpack.c.b16 %v765, %v764
          %v795 = vpack.c.b16 %v767, %v766
          %v796 = vpack.c.b16 %v769, %v768
          %v797 = vpack.c.b16 %v771, %v770
          %v798 = vpack.c.b16 %v773, %v772
          %v799 = vpack.c.b16 %v775, %v774
          %v800 = vpack.c.b16 %v777, %v776
          %v801 = vpack.c.b16 %v779, %v778
          %v802 = vpack.c.b16 %v781, %v780
          %v803 = vpack.c.b16 %v783, %v782
          %v804 = vpack.c.b16 %v785, %v784
          %v805 = vpack.c.b16 %v787, %v786
          %v806 = vpack.c.b16 %v789, %v788
          %v807 = vpack.c.b16 %v791, %v790
          %824 = vmatprep.subr.bf16.mxu0 0
          %825 = vmatpush1.bf16.msra.mxu0 %v792
          %826 = vmatprep.subr.bf16.mxu0 0
          %827 = vmatpush1.bf16.msra.mxu0 %v793
          %828 = vmatprep.subr.bf16.mxu0 0
          %829 = vmatpush1.bf16.msra.mxu0 %v794
          %830 = vmatprep.subr.bf16.mxu0 0
          %831 = vmatpush1.bf16.msra.mxu0 %v795
          %832 = vmatprep.subr.bf16.mxu0 0
          %833 = vmatpush1.bf16.msra.mxu0 %v796
          %834 = vmatprep.subr.bf16.mxu0 0
          %835 = vmatpush1.bf16.msra.mxu0 %v797
          %836 = vmatprep.subr.bf16.mxu0 0
          %837 = vmatpush1.bf16.msra.mxu0 %v798
          %838 = vmatprep.subr.bf16.mxu0 0
          %839 = vmatpush1.bf16.msra.mxu0 %v799
          %840 = vmatprep.subr.bf16.mxu0 0
          %841 = vmatpush1.bf16.msra.mxu0 %v800
          %842 = vmatprep.subr.bf16.mxu0 0
          %843 = vmatpush1.bf16.msra.mxu0 %v801
          %844 = vmatprep.subr.bf16.mxu0 0
          %845 = vmatpush1.bf16.msra.mxu0 %v802
          %846 = vmatprep.subr.bf16.mxu0 0
          %847 = vmatpush1.bf16.msra.mxu0 %v803
          %848 = vmatprep.subr.bf16.mxu0 0
          %849 = vmatpush1.bf16.msra.mxu0 %v804
          %850 = vmatprep.subr.bf16.mxu0 0
          %851 = vmatpush1.bf16.msra.mxu0 %v805
          %852 = vmatprep.subr.bf16.mxu0 0
          %853 = vmatpush1.bf16.msra.mxu0 %v806
          %854 = vmatprep.subr.bf16.mxu0 0
          %855 = vmatpush1.bf16.msra.mxu0 %v807
          %856 = vmatprep.mubr.bf16.mxu0 %v665
          %857 = vmatmul.mubr.bf16.gmra.mrb[0].mxu0 %v664
          %v858 = vpop.f32.mrb[0].mxu0
          %v859 = vadd.f32 0.0, %v858
          %v860 = vpop.f32.mrb[0].mxu0
          %v861 = vpop.f32.mrb[0].mxu0
          %v862 = vadd.f32 0.0, %v861
          %v863 = vpop.f32.mrb[0].mxu0
          %864 = vmatprep.mubr.bf16.mxu0 %v667
          %865 = vmatmul.mubr.bf16.gmra.mrb[0].mxu0 %v666
          %v866 = vpop.f32.mrb[0].mxu0
          %v867 = vadd.f32 0.0, %v866
          %v868 = vpop.f32.mrb[0].mxu0
          %v869 = vpop.f32.mrb[0].mxu0
          %v870 = vadd.f32 0.0, %v869
          %v871 = vpop.f32.mrb[0].mxu0
          %872 = vmatprep.mubr.bf16.mxu0 %v669
          %873 = vmatmul.mubr.bf16.gmra.mrb[0].mxu0 %v668
          %v874 = vpop.f32.mrb[0].mxu0
          %v875 = vadd.f32 0.0, %v874
          %v876 = vpop.f32.mrb[0].mxu0
          %v877 = vpop.f32.mrb[0].mxu0
          %v878 = vadd.f32 0.0, %v877
          %v879 = vpop.f32.mrb[0].mxu0
          %880 = vmatprep.mubr.bf16.mxu0 %v671
          %881 = vmatmul.mubr.bf16.gmra.mrb[0].mxu0 %v670
          %v882 = vpop.f32.mrb[0].mxu0
          %v883 = vadd.f32 0.0, %v882
          %v884 = vpop.f32.mrb[0].mxu0
          %v885 = vpop.f32.mrb[0].mxu0
          %v886 = vadd.f32 0.0, %v885
          %v887 = vpop.f32.mrb[0].mxu0
          %888 = vmatprep.mubr.bf16.mxu0 %v673
          %889 = vmatmul.mubr.bf16.gmra.mrb[0].mxu0 %v672
          %v890 = vpop.f32.mrb[0].mxu0
          %v891 = vadd.f32 0.0, %v890
          %v892 = vpop.f32.mrb[0].mxu0
          %v893 = vpop.f32.mrb[0].mxu0
          %v894 = vadd.f32 0.0, %v893
          %v895 = vpop.f32.mrb[0].mxu0
          %896 = vmatprep.mubr.bf16.mxu0 %v675
          %897 = vmatmul.mubr.bf16.gmra.mrb[0].mxu0 %v674
          %v898 = vpop.f32.mrb[0].mxu0
          %v899 = vadd.f32 0.0, %v898
          %v900 = vpop.f32.mrb[0].mxu0
          %v901 = vpop.f32.mrb[0].mxu0
          %v902 = vadd.f32 0.0, %v901
          %v903 = vpop.f32.mrb[0].mxu0
          %904 = vmatprep.mubr.bf16.mxu0 %v677
          %905 = vmatmul.mubr.bf16.gmra.mrb[0].mxu0 %v676
          %v906 = vpop.f32.mrb[0].mxu0
          %v907 = vadd.f32 0.0, %v906
          %v908 = vpop.f32.mrb[0].mxu0
          %v909 = vpop.f32.mrb[0].mxu0
          %v910 = vadd.f32 0.0, %v909
          %v911 = vpop.f32.mrb[0].mxu0
          %912 = vmatprep.mubr.bf16.mxu0 %v679
          %913 = vmatmul.mubr.bf16.gmra.mrb[0].mxu0 %v678
          %v914 = vpop.f32.mrb[0].mxu0
          %v915 = vadd.f32 0.0, %v914
          %v916 = vpop.f32.mrb[0].mxu0
          %v917 = vpop.f32.mrb[0].mxu0
          %v918 = vadd.f32 0.0, %v917
          %v919 = vpop.f32.mrb[0].mxu0
          %920 = vmatprep.mubr.bf16.mxu0 %v681
          %921 = vmatmul.mubr.bf16.gmra.mrb[0].mxu0 %v680
          %v922 = vpop.f32.mrb[0].mxu0
          %v923 = vadd.f32 0.0, %v922
          %v924 = vpop.f32.mrb[0].mxu0
          %v925 = vpop.f32.mrb[0].mxu0
          %v926 = vadd.f32 0.0, %v925
          %v927 = vpop.f32.mrb[0].mxu0
          %928 = vmatprep.mubr.bf16.mxu0 %v683
          %929 = vmatmul.mubr.bf16.gmra.mrb[0].mxu0 %v682
          %v930 = vpop.f32.mrb[0].mxu0
          %v931 = vadd.f32 0.0, %v930
          %v932 = vpop.f32.mrb[0].mxu0
          %v933 = vpop.f32.mrb[0].mxu0
          %v934 = vadd.f32 0.0, %v933
          %v935 = vpop.f32.mrb[0].mxu0
          %936 = vmatprep.mubr.bf16.mxu0 %v685
          %937 = vmatmul.mubr.bf16.gmra.mrb[0].mxu0 %v684
          %v938 = vpop.f32.mrb[0].mxu0
          %v939 = vadd.f32 0.0, %v938
          %v940 = vpop.f32.mrb[0].mxu0
          %v941 = vpop.f32.mrb[0].mxu0
          %v942 = vadd.f32 0.0, %v941
          %v943 = vpop.f32.mrb[0].mxu0
          %944 = vmatprep.mubr.bf16.mxu0 %v687
          %945 = vmatmul.mubr.bf16.gmra.mrb[0].mxu0 %v686
          %v946 = vpop.f32.mrb[0].mxu0
          %v947 = vadd.f32 0.0, %v946
          %v948 = vpop.f32.mrb[0].mxu0
          %v949 = vpop.f32.mrb[0].mxu0
          %v950 = vadd.f32 0.0, %v949
          %v951 = vpop.f32.mrb[0].mxu0
          %952 = vmatprep.mubr.bf16.mxu0 %v689
          %953 = vmatmul.mubr.bf16.gmra.mrb[0].mxu0 %v688
          %v954 = vpop.f32.mrb[0].mxu0
          %v955 = vadd.f32 0.0, %v954
          %v956 = vpop.f32.mrb[0].mxu0
          %v957 = vpop.f32.mrb[0].mxu0
          %v958 = vadd.f32 0.0, %v957
          %v959 = vpop.f32.mrb[0].mxu0
          %960 = vmatprep.mubr.bf16.mxu0 %v691
          %961 = vmatmul.mubr.bf16.gmra.mrb[0].mxu0 %v690
          %v962 = vpop.f32.mrb[0].mxu0
          %v963 = vadd.f32 0.0, %v962
          %v964 = vpop.f32.mrb[0].mxu0
          %v965 = vpop.f32.mrb[0].mxu0
          %v966 = vadd.f32 0.0, %v965
          %v967 = vpop.f32.mrb[0].mxu0
          %968 = vmatprep.mubr.bf16.mxu0 %v693
          %969 = vmatmul.mubr.bf16.gmra.mrb[0].mxu0 %v692
          %v970 = vpop.f32.mrb[0].mxu0
          %v971 = vadd.f32 0.0, %v970
          %v972 = vpop.f32.mrb[0].mxu0
          %v973 = vpop.f32.mrb[0].mxu0
          %v974 = vadd.f32 0.0, %v973
          %v975 = vpop.f32.mrb[0].mxu0
          %976 = vmatprep.mubr.bf16.mxu0 %v695
          %977 = vmatmul.mubr.bf16.gmra.mrb[0].mxu0 %v694
          %v978 = vpop.f32.mrb[0].mxu0
          %v979 = vadd.f32 0.0, %v978
          %v980 = vpop.f32.mrb[0].mxu0
          %v981 = vpop.f32.mrb[0].mxu0
          %v982 = vadd.f32 0.0, %v981
          %v983 = vpop.f32.mrb[0].mxu0
          %984 = vdwg.mxu0
          %v985 = vld [vmem:[#allocation10] sm:$0x1]
          %v987 = vlaneseq
          %v988 = vshrl.u32 %v987, 7
          %v989 = vsub.s32 0, %v988
          %v990 = vrot.slane %v985, %v989
          %v992 = vmul.f32 %v859, %v990
          %v993 = vmul.f32 %v862, %v990
          %v994 = vmul.f32 %v867, %v990
          %v995 = vmul.f32 %v870, %v990
          %v996 = vmul.f32 %v875, %v990
          %v997 = vmul.f32 %v878, %v990
          %v998 = vmul.f32 %v883, %v990
          %v999 = vmul.f32 %v886, %v990
          %v1000 = vmul.f32 %v891, %v990
          %v1001 = vmul.f32 %v894, %v990
          %v1002 = vmul.f32 %v899, %v990
          %v1003 = vmul.f32 %v902, %v990
          %v1004 = vmul.f32 %v907, %v990
          %v1005 = vmul.f32 %v910, %v990
          %v1006 = vmul.f32 %v915, %v990
          %v1007 = vmul.f32 %v918, %v990
          %v1008 = vmul.f32 %v923, %v990
          %v1009 = vmul.f32 %v926, %v990
          %v1010 = vmul.f32 %v931, %v990
          %v1011 = vmul.f32 %v934, %v990
          %v1012 = vmul.f32 %v939, %v990
          %v1013 = vmul.f32 %v942, %v990
          %v1014 = vmul.f32 %v947, %v990
          %v1015 = vmul.f32 %v950, %v990
          %v1016 = vmul.f32 %v955, %v990
          %v1017 = vmul.f32 %v958, %v990
          %v1018 = vmul.f32 %v963, %v990
          %v1019 = vmul.f32 %v966, %v990
          %v1020 = vmul.f32 %v971, %v990
          %v1021 = vmul.f32 %v974, %v990
          %v1022 = vmul.f32 %v979, %v990
          %v1023 = vmul.f32 %v982, %v990
          %v1024 = vld [vmem:[#allocation11] sm:$0x1]
          %v1026 = vlaneseq
          %v1027 = vshrl.u32 %v1026, 7
          %v1028 = vsub.s32 0, %v1027
          %v1029 = vrot.slane %v1024, %v1028
          %v1031 = vadd.f32 %v992, %v1029
          %v1032 = vadd.f32 %v993, %v1029
          %v1033 = vadd.f32 %v994, %v1029
          %v1034 = vadd.f32 %v995, %v1029
          %v1035 = vadd.f32 %v996, %v1029
          %v1036 = vadd.f32 %v997, %v1029
          %v1037 = vadd.f32 %v998, %v1029
          %v1038 = vadd.f32 %v999, %v1029
          %v1039 = vadd.f32 %v1000, %v1029
          %v1040 = vadd.f32 %v1001, %v1029
          %v1041 = vadd.f32 %v1002, %v1029
          %v1042 = vadd.f32 %v1003, %v1029
          %v1043 = vadd.f32 %v1004, %v1029
          %v1044 = vadd.f32 %v1005, %v1029
          %v1045 = vadd.f32 %v1006, %v1029
          %v1046 = vadd.f32 %v1007, %v1029
          %v1047 = vadd.f32 %v1008, %v1029
          %v1048 = vadd.f32 %v1009, %v1029
          %v1049 = vadd.f32 %v1010, %v1029
          %v1050 = vadd.f32 %v1011, %v1029
          %v1051 = vadd.f32 %v1012, %v1029
          %v1052 = vadd.f32 %v1013, %v1029
          %v1053 = vadd.f32 %v1014, %v1029
          %v1054 = vadd.f32 %v1015, %v1029
          %v1055 = vadd.f32 %v1016, %v1029
          %v1056 = vadd.f32 %v1017, %v1029
          %v1057 = vadd.f32 %v1018, %v1029
          %v1058 = vadd.f32 %v1019, %v1029
          %v1059 = vadd.f32 %v1020, %v1029
          %v1060 = vadd.f32 %v1021, %v1029
          %v1061 = vadd.f32 %v1022, %v1029
          %v1062 = vadd.f32 %v1023, %v1029
          %v1063 = vmax.f32 %v1031, 0.0
          %v1064 = vmax.f32 %v1032, 0.0
          %v1065 = vmax.f32 %v1033, 0.0
          %v1066 = vmax.f32 %v1034, 0.0
          %v1067 = vmax.f32 %v1035, 0.0
          %v1068 = vmax.f32 %v1036, 0.0
          %v1069 = vmax.f32 %v1037, 0.0
          %v1070 = vmax.f32 %v1038, 0.0
          %v1071 = vmax.f32 %v1039, 0.0
          %v1072 = vmax.f32 %v1040, 0.0
          %v1073 = vmax.f32 %v1041, 0.0
          %v1074 = vmax.f32 %v1042, 0.0
          %v1075 = vmax.f32 %v1043, 0.0
          %v1076 = vmax.f32 %v1044, 0.0
          %v1077 = vmax.f32 %v1045, 0.0
          %v1078 = vmax.f32 %v1046, 0.0
          %v1079 = vmax.f32 %v1047, 0.0
          %v1080 = vmax.f32 %v1048, 0.0
          %v1081 = vmax.f32 %v1049, 0.0
          %v1082 = vmax.f32 %v1050, 0.0
          %v1083 = vmax.f32 %v1051, 0.0
          %v1084 = vmax.f32 %v1052, 0.0
          %v1085 = vmax.f32 %v1053, 0.0
          %v1086 = vmax.f32 %v1054, 0.0
          %v1087 = vmax.f32 %v1055, 0.0
          %v1088 = vmax.f32 %v1056, 0.0
          %v1089 = vmax.f32 %v1057, 0.0
          %v1090 = vmax.f32 %v1058, 0.0
          %v1091 = vmax.f32 %v1059, 0.0
          %v1092 = vmax.f32 %v1060, 0.0
          %v1093 = vmax.f32 %v1061, 0.0
          %v1094 = vmax.f32 %v1062, 0.0
          %v1095 = vmin.f32 %v1063, 6.0
          %v1096 = vmin.f32 %v1064, 6.0
          %v1097 = vmin.f32 %v1065, 6.0
          %v1098 = vmin.f32 %v1066, 6.0
          %v1099 = vmin.f32 %v1067, 6.0
          %v1100 = vmin.f32 %v1068, 6.0
          %v1101 = vmin.f32 %v1069, 6.0
          %v1102 = vmin.f32 %v1070, 6.0
          %v1103 = vmin.f32 %v1071, 6.0
          %v1104 = vmin.f32 %v1072, 6.0
          %v1105 = vmin.f32 %v1073, 6.0
          %v1106 = vmin.f32 %v1074, 6.0
          %v1107 = vmin.f32 %v1075, 6.0
          %v1108 = vmin.f32 %v1076, 6.0
          %v1109 = vmin.f32 %v1077, 6.0
          %v1110 = vmin.f32 %v1078, 6.0
          %v1111 = vmin.f32 %v1079, 6.0
          %v1112 = vmin.f32 %v1080, 6.0
          %v1113 = vmin.f32 %v1081, 6.0
          %v1114 = vmin.f32 %v1082, 6.0
          %v1115 = vmin.f32 %v1083, 6.0
          %v1116 = vmin.f32 %v1084, 6.0
          %v1117 = vmin.f32 %v1085, 6.0
          %v1118 = vmin.f32 %v1086, 6.0
          %v1119 = vmin.f32 %v1087, 6.0
          %v1120 = vmin.f32 %v1088, 6.0
          %v1121 = vmin.f32 %v1089, 6.0
          %v1122 = vmin.f32 %v1090, 6.0
          %v1123 = vmin.f32 %v1091, 6.0
          %v1124 = vmin.f32 %v1092, 6.0
          %v1125 = vmin.f32 %v1093, 6.0
          %v1126 = vmin.f32 %v1094, 6.0
          %v1127 = vpack.c.bf16 %v1096, %v1095
          %v1128 = vpack.c.bf16 %v1098, %v1097
          %v1129 = vpack.c.bf16 %v1100, %v1099
          %v1130 = vpack.c.bf16 %v1102, %v1101
          %v1131 = vpack.c.bf16 %v1104, %v1103
          %v1132 = vpack.c.bf16 %v1106, %v1105
          %v1133 = vpack.c.bf16 %v1108, %v1107
          %v1134 = vpack.c.bf16 %v1110, %v1109
          %v1135 = vpack.c.bf16 %v1112, %v1111
          %v1136 = vpack.c.bf16 %v1114, %v1113
          %v1137 = vpack.c.bf16 %v1116, %v1115
          %v1138 = vpack.c.bf16 %v1118, %v1117
          %v1139 = vpack.c.bf16 %v1120, %v1119
          %v1140 = vpack.c.bf16 %v1122, %v1121
          %v1141 = vpack.c.bf16 %v1124, %v1123
          %v1142 = vpack.c.bf16 %v1126, %v1125
          %1143 = vst [vmem:[#allocation2] sm:$0xff] %v1127
          %1144 = vst [vmem:[#allocation2 + $0x20] sm:$0xff] %v1128
          %1145 = vst [vmem:[#allocation2 + $0x40] sm:$0xff] %v1129
          %1146 = vst [vmem:[#allocation2 + $0x60] sm:$0xff] %v1130
          %1147 = vst [vmem:[#allocation2 + $0x80] sm:$0xff] %v1131
          %1148 = vst [vmem:[#allocation2 + $0xa0] sm:$0xff] %v1132
          %1149 = vst [vmem:[#allocation2 + $0xc0] sm:$0xff] %v1133
          %1150 = vst [vmem:[#allocation2 + $0xe0] sm:$0xff] %v1134
          %1151 = vst [vmem:[#allocation2 + $0x100] sm:$0xff] %v1135
          %1152 = vst [vmem:[#allocation2 + $0x120] sm:$0xff] %v1136
          %1153 = vst [vmem:[#allocation2 + $0x140] sm:$0xff] %v1137
          %1154 = vst [vmem:[#allocation2 + $0x160] sm:$0xff] %v1138
          %1155 = vst [vmem:[#allocation2 + $0x180] sm:$0xff] %v1139
          %1156 = vst [vmem:[#allocation2 + $0x1a0] sm:$0xff] %v1140
          %1157 = vst [vmem:[#allocation2 + $0x1c0] sm:$0xff] %v1141
          %1158 = vst [vmem:[#allocation2 + $0x1e0] sm:$0xff] %v1142
          %v1175 = vunpack.c.l.b16 %v1127
          %v1176 = vunpack.c.h.b16 %v1127
          %v1177 = vunpack.c.l.b16 %v1128
          %v1178 = vunpack.c.h.b16 %v1128
          %v1179 = vunpack.c.l.b16 %v1129
          %v1180 = vunpack.c.h.b16 %v1129
          %v1181 = vunpack.c.l.b16 %v1130
          %v1182 = vunpack.c.h.b16 %v1130
          %v1183 = vunpack.c.l.b16 %v1131
          %v1184 = vunpack.c.h.b16 %v1131
          %v1185 = vunpack.c.l.b16 %v1132
          %v1186 = vunpack.c.h.b16 %v1132
          %v1187 = vunpack.c.l.b16 %v1133
          %v1188 = vunpack.c.h.b16 %v1133
          %v1189 = vunpack.c.l.b16 %v1134
          %v1190 = vunpack.c.h.b16 %v1134
          %v1191 = vunpack.c.l.b16 %v1135
          %v1192 = vunpack.c.h.b16 %v1135
          %v1193 = vunpack.c.l.b16 %v1136
          %v1194 = vunpack.c.h.b16 %v1136
          %v1195 = vunpack.c.l.b16 %v1137
          %v1196 = vunpack.c.h.b16 %v1137
          %v1197 = vunpack.c.l.b16 %v1138
          %v1198 = vunpack.c.h.b16 %v1138
          %v1199 = vunpack.c.l.b16 %v1139
          %v1200 = vunpack.c.h.b16 %v1139
          %v1201 = vunpack.c.l.b16 %v1140
          %v1202 = vunpack.c.h.b16 %v1140
          %v1203 = vunpack.c.l.b16 %v1141
          %v1204 = vunpack.c.h.b16 %v1141
          %v1205 = vunpack.c.l.b16 %v1142
          %v1206 = vunpack.c.h.b16 %v1142
          %v1207 = vpack.c.b16 %v1175, %v1175
          %v1208 = vpack.c.b16 %v1176, %v1176
          %v1209 = vpack.c.b16 %v1177, %v1177
          %v1210 = vpack.c.b16 %v1178, %v1178
          %v1211 = vpack.c.b16 %v1179, %v1179
          %v1212 = vpack.c.b16 %v1180, %v1180
          %v1213 = vpack.c.b16 %v1181, %v1181
          %v1214 = vpack.c.b16 %v1182, %v1182
          %v1215 = vpack.c.b16 %v1183, %v1183
          %v1216 = vpack.c.b16 %v1184, %v1184
          %v1217 = vpack.c.b16 %v1185, %v1185
          %v1218 = vpack.c.b16 %v1186, %v1186
          %v1219 = vpack.c.b16 %v1187, %v1187
          %v1220 = vpack.c.b16 %v1188, %v1188
          %v1221 = vpack.c.b16 %v1189, %v1189
          %v1222 = vpack.c.b16 %v1190, %v1190
          %v1223 = vpack.c.b16 %v1191, %v1191
          %v1224 = vpack.c.b16 %v1192, %v1192
          %v1225 = vpack.c.b16 %v1193, %v1193
          %v1226 = vpack.c.b16 %v1194, %v1194
          %v1227 = vpack.c.b16 %v1195, %v1195
          %v1228 = vpack.c.b16 %v1196, %v1196
          %v1229 = vpack.c.b16 %v1197, %v1197
          %v1230 = vpack.c.b16 %v1198, %v1198
          %v1231 = vpack.c.b16 %v1199, %v1199
          %v1232 = vpack.c.b16 %v1200, %v1200
          %v1233 = vpack.c.b16 %v1201, %v1201
          %v1234 = vpack.c.b16 %v1202, %v1202
          %v1235 = vpack.c.b16 %v1203, %v1203
          %v1236 = vpack.c.b16 %v1204, %v1204
          %v1237 = vpack.c.b16 %v1205, %v1205
          %v1238 = vpack.c.b16 %v1206, %v1206
          %vm1239 = vcmask 1040384
          %vm1240 = vcmask 1044484
          %vm1241 = vmor %vm1239, %vm1240
          %v1242 = vrot.slane %v1207, 7
          %v1243 = vrot.slane %v1242, 4
          %v1244 = vrot.slane %v1208, 7
          %v1245 = vsel %vm1241, %v1243, %v1244
          %v1246 = vrot.slane %v1244, 4
          %v1247 = vrot.slane %v1209, 7
          %v1248 = vrot.slane %v1247, 4
          %v1249 = vrot.slane %v1210, 7
          %v1250 = vsel %vm1241, %v1248, %v1249
          %v1251 = vrot.slane %v1249, 4
          %v1252 = vrot.slane %v1211, 7
          %v1253 = vrot.slane %v1252, 4
          %v1254 = vrot.slane %v1212, 7
          %v1255 = vsel %vm1241, %v1253, %v1254
          %v1256 = vrot.slane %v1254, 4
          %v1257 = vrot.slane %v1213, 7
          %v1258 = vrot.slane %v1257, 4
          %v1259 = vrot.slane %v1214, 7
          %v1260 = vsel %vm1241, %v1258, %v1259
          %v1261 = vrot.slane %v1259, 4
          %v1262 = vrot.slane %v1215, 7
          %v1263 = vrot.slane %v1262, 4
          %v1264 = vrot.slane %v1216, 7
          %v1265 = vsel %vm1241, %v1263, %v1264
          %v1266 = vrot.slane %v1264, 4
          %v1267 = vrot.slane %v1217, 7
          %v1268 = vrot.slane %v1267, 4
          %v1269 = vrot.slane %v1218, 7
          %v1270 = vsel %vm1241, %v1268, %v1269
          %v1271 = vrot.slane %v1269, 4
          %v1272 = vrot.slane %v1219, 7
          %v1273 = vrot.slane %v1272, 4
          %v1274 = vrot.slane %v1220, 7
          %v1275 = vsel %vm1241, %v1273, %v1274
          %v1276 = vrot.slane %v1274, 4
          %v1277 = vrot.slane %v1221, 7
          %v1278 = vrot.slane %v1277, 4
          %v1279 = vrot.slane %v1222, 7
          %v1280 = vsel %vm1241, %v1278, %v1279
          %v1281 = vrot.slane %v1279, 4
          %v1282 = vrot.slane %v1223, 7
          %v1283 = vrot.slane %v1282, 4
          %v1284 = vrot.slane %v1224, 7
          %v1285 = vsel %vm1241, %v1283, %v1284
          %v1286 = vrot.slane %v1284, 4
          %v1287 = vrot.slane %v1225, 7
          %v1288 = vrot.slane %v1287, 4
          %v1289 = vrot.slane %v1226, 7
          %v1290 = vsel %vm1241, %v1288, %v1289
          %v1291 = vrot.slane %v1289, 4
          %v1292 = vrot.slane %v1227, 7
          %v1293 = vrot.slane %v1292, 4
          %v1294 = vrot.slane %v1228, 7
          %v1295 = vsel %vm1241, %v1293, %v1294
          %v1296 = vrot.slane %v1294, 4
          %v1297 = vrot.slane %v1229, 7
          %v1298 = vrot.slane %v1297, 4
          %v1299 = vrot.slane %v1230, 7
          %v1300 = vsel %vm1241, %v1298, %v1299
          %v1301 = vrot.slane %v1299, 4
          %v1302 = vrot.slane %v1231, 7
          %v1303 = vrot.slane %v1302, 4
          %v1304 = vrot.slane %v1232, 7
          %v1305 = vsel %vm1241, %v1303, %v1304
          %v1306 = vrot.slane %v1304, 4
          %v1307 = vrot.slane %v1233, 7
          %v1308 = vrot.slane %v1307, 4
          %v1309 = vrot.slane %v1234, 7
          %v1310 = vsel %vm1241, %v1308, %v1309
          %v1311 = vrot.slane %v1309, 4
          %v1312 = vrot.slane %v1235, 7
          %v1313 = vrot.slane %v1312, 4
          %v1314 = vrot.slane %v1236, 7
          %v1315 = vsel %vm1241, %v1313, %v1314
          %v1316 = vrot.slane %v1314, 4
          %v1317 = vrot.slane %v1237, 7
          %v1318 = vrot.slane %v1317, 4
          %v1319 = vrot.slane %v1238, 7
          %v1320 = vsel %vm1241, %v1318, %v1319
          %v1321 = vrot.slane %v1319, 4
          %1370 = vst [vmem:[#allocation3] sm:$0xe] %v1242
          %1371 = vst [vmem:[#allocation3 + $0x4] sm:$0xf] %v1245
          %1372 = vst [vmem:[#allocation3 + $0x8] sm:$0x1] %v1246
          %1373 = vst [vmem:[#allocation3 + $0xc] sm:$0xe] %v1247
          %1374 = vst [vmem:[#allocation3 + $0x10] sm:$0xf] %v1250
          %1375 = vst [vmem:[#allocation3 + $0x14] sm:$0x1] %v1251
          %1376 = vst [vmem:[#allocation3 + $0x18] sm:$0xe] %v1252
          %1377 = vst [vmem:[#allocation3 + $0x1c] sm:$0xf] %v1255
          %1378 = vst [vmem:[#allocation3 + $0x20] sm:$0x1] %v1256
          %1379 = vst [vmem:[#allocation3 + $0x24] sm:$0xe] %v1257
          %1380 = vst [vmem:[#allocation3 + $0x28] sm:$0xf] %v1260
          %1381 = vst [vmem:[#allocation3 + $0x2c] sm:$0x1] %v1261
          %1382 = vst [vmem:[#allocation3 + $0x30] sm:$0xe] %v1262
          %1383 = vst [vmem:[#allocation3 + $0x34] sm:$0xf] %v1265
          %1384 = vst [vmem:[#allocation3 + $0x38] sm:$0x1] %v1266
          %1385 = vst [vmem:[#allocation3 + $0x3c] sm:$0xe] %v1267
          %1386 = vst [vmem:[#allocation3 + $0x40] sm:$0xf] %v1270
          %1387 = vst [vmem:[#allocation3 + $0x44] sm:$0x1] %v1271
          %1388 = vst [vmem:[#allocation3 + $0x48] sm:$0xe] %v1272
          %1389 = vst [vmem:[#allocation3 + $0x4c] sm:$0xf] %v1275
          %1390 = vst [vmem:[#allocation3 + $0x50] sm:$0x1] %v1276
          %1391 = vst [vmem:[#allocation3 + $0x54] sm:$0xe] %v1277
          %1392 = vst [vmem:[#allocation3 + $0x58] sm:$0xf] %v1280
          %1393 = vst [vmem:[#allocation3 + $0x5c] sm:$0x1] %v1281
          %1394 = vst [vmem:[#allocation3 + $0x60] sm:$0xe] %v1282
          %1395 = vst [vmem:[#allocation3 + $0x64] sm:$0xf] %v1285
          %1396 = vst [vmem:[#allocation3 + $0x68] sm:$0x1] %v1286
          %1397 = vst [vmem:[#allocation3 + $0x6c] sm:$0xe] %v1287
          %1398 = vst [vmem:[#allocation3 + $0x70] sm:$0xf] %v1290
          %1399 = vst [vmem:[#allocation3 + $0x74] sm:$0x1] %v1291
          %1400 = vst [vmem:[#allocation3 + $0x78] sm:$0xe] %v1292
          %1401 = vst [vmem:[#allocation3 + $0x7c] sm:$0xf] %v1295
          %1402 = vst [vmem:[#allocation3 + $0x80] sm:$0x1] %v1296
          %1403 = vst [vmem:[#allocation3 + $0x84] sm:$0xe] %v1297
          %1404 = vst [vmem:[#allocation3 + $0x88] sm:$0xf] %v1300
          %1405 = vst [vmem:[#allocation3 + $0x8c] sm:$0x1] %v1301
          %1406 = vst [vmem:[#allocation3 + $0x90] sm:$0xe] %v1302
          %1407 = vst [vmem:[#allocation3 + $0x94] sm:$0xf] %v1305
          %1408 = vst [vmem:[#allocation3 + $0x98] sm:$0x1] %v1306
          %1409 = vst [vmem:[#allocation3 + $0x9c] sm:$0xe] %v1307
          %1410 = vst [vmem:[#allocation3 + $0xa0] sm:$0xf] %v1310
          %1411 = vst [vmem:[#allocation3 + $0xa4] sm:$0x1] %v1311
          %1412 = vst [vmem:[#allocation3 + $0xa8] sm:$0xe] %v1312
          %1413 = vst [vmem:[#allocation3 + $0xac] sm:$0xf] %v1315
          %1414 = vst [vmem:[#allocation3 + $0xb0] sm:$0x1] %v1316
          %1415 = vst [vmem:[#allocation3 + $0xb4] sm:$0xe] %v1317
          %1416 = vst [vmem:[#allocation3 + $0xb8] sm:$0xf] %v1320
          %1417 = vst [vmem:[#allocation3 + $0xbc] sm:$0x1] %v1321
          %v1418 = vld [vmem:[#allocation3] sm:$0xf]
          %v1419 = vld [vmem:[#allocation3 + $0x4] sm:$0xf]
          %v1420 = vld [vmem:[#allocation3 + $0xc] sm:$0xf]
          %v1421 = vld [vmem:[#allocation3 + $0x10] sm:$0xf]
          %v1422 = vld [vmem:[#allocation3 + $0x18] sm:$0xf]
          %v1423 = vld [vmem:[#allocation3 + $0x1c] sm:$0xf]
          %v1424 = vld [vmem:[#allocation3 + $0x24] sm:$0xf]
          %v1425 = vld [vmem:[#allocation3 + $0x28] sm:$0xf]
          %v1426 = vld [vmem:[#allocation3 + $0x30] sm:$0xf]
          %v1427 = vld [vmem:[#allocation3 + $0x34] sm:$0xf]
          %v1428 = vld [vmem:[#allocation3 + $0x3c] sm:$0xf]
          %v1429 = vld [vmem:[#allocation3 + $0x40] sm:$0xf]
          %v1430 = vld [vmem:[#allocation3 + $0x48] sm:$0xf]
          %v1431 = vld [vmem:[#allocation3 + $0x4c] sm:$0xf]
          %v1432 = vld [vmem:[#allocation3 + $0x54] sm:$0xf]
          %v1433 = vld [vmem:[#allocation3 + $0x58] sm:$0xf]
          %v1434 = vld [vmem:[#allocation3 + $0x60] sm:$0xf]
          %v1435 = vld [vmem:[#allocation3 + $0x64] sm:$0xf]
          %v1436 = vld [vmem:[#allocation3 + $0x6c] sm:$0xf]
          %v1437 = vld [vmem:[#allocation3 + $0x70] sm:$0xf]
          %v1438 = vld [vmem:[#allocation3 + $0x78] sm:$0xf]
          %v1439 = vld [vmem:[#allocation3 + $0x7c] sm:$0xf]
          %v1440 = vld [vmem:[#allocation3 + $0x84] sm:$0xf]
          %v1441 = vld [vmem:[#allocation3 + $0x88] sm:$0xf]
          %v1442 = vld [vmem:[#allocation3 + $0x90] sm:$0xf]
          %v1443 = vld [vmem:[#allocation3 + $0x94] sm:$0xf]
          %v1444 = vld [vmem:[#allocation3 + $0x9c] sm:$0xf]
          %v1445 = vld [vmem:[#allocation3 + $0xa0] sm:$0xf]
          %v1446 = vld [vmem:[#allocation3 + $0xa8] sm:$0xf]
          %v1447 = vld [vmem:[#allocation3 + $0xac] sm:$0xf]
          %v1448 = vld [vmem:[#allocation3 + $0xb4] sm:$0xf]
          %v1449 = vld [vmem:[#allocation3 + $0xb8] sm:$0xf]
          %v1450 = vld [vmem:[#allocation3 + $0x8] sm:$0x1]
          %v1451 = vld [vmem:[#allocation3 + $0x14] sm:$0x1]
          %v1452 = vld [vmem:[#allocation3 + $0x20] sm:$0x1]
          %v1453 = vld [vmem:[#allocation3 + $0x2c] sm:$0x1]
          %v1454 = vld [vmem:[#allocation3 + $0x38] sm:$0x1]
          %v1455 = vld [vmem:[#allocation3 + $0x44] sm:$0x1]
          %v1456 = vld [vmem:[#allocation3 + $0x50] sm:$0x1]
          %v1457 = vld [vmem:[#allocation3 + $0x5c] sm:$0x1]
          %v1458 = vld [vmem:[#allocation3 + $0x68] sm:$0x1]
          %v1459 = vld [vmem:[#allocation3 + $0x74] sm:$0x1]
          %v1460 = vld [vmem:[#allocation3 + $0x80] sm:$0x1]
          %v1461 = vld [vmem:[#allocation3 + $0x8c] sm:$0x1]
          %v1462 = vld [vmem:[#allocation3 + $0x98] sm:$0x1]
          %v1463 = vld [vmem:[#allocation3 + $0xa4] sm:$0x1]
          %v1464 = vld [vmem:[#allocation3 + $0xb0] sm:$0x1]
          %v1465 = vld [vmem:[#allocation3 + $0xbc] sm:$0x1]
          %vm1466 = vsmask.f32 3328
          %vm1467 = vsmask.f32 7440
          %vm1468 = vmor %vm1466, %vm1467
          %v1470 = vshrl.u32 %v1418, 16
          %v1472 = vrot.slane %v1470, 4
          %v1473 = vshll.u32 %v1418, 16
          %v1475 = vrot.slane %v1473, 5
          %v1476 = vor.u32 %v1472, %v1475
          %v1477 = vrot.slane %v1476, 4
          %v1479 = vshll.u32 %v1419, 16
          %v1481 = vrot.slane %v1479, 5
          %v1482 = vsel %vm1468, %v1477, %v1481
          %v1483 = vshrl.u32 %v1419, 16
          %v1485 = vrot.slane %v1483, 4
          %v1486 = vor.u32 %v1485, %v1481
          %v1487 = vrot.slane %v1486, 4
          %v1489 = vshll.u32 %v1450, 16
          %v1491 = vrot.slane %v1489, 5
          %v1492 = vsel %vm1468, %v1487, %v1491
          %v1494 = vshrl.u32 %v1420, 16
          %v1496 = vrot.slane %v1494, 4
          %v1497 = vshll.u32 %v1420, 16
          %v1499 = vrot.slane %v1497, 5
          %v1500 = vor.u32 %v1496, %v1499
          %v1501 = vrot.slane %v1500, 4
          %v1503 = vshll.u32 %v1421, 16
          %v1505 = vrot.slane %v1503, 5
          %v1506 = vsel %vm1468, %v1501, %v1505
          %v1507 = vshrl.u32 %v1421, 16
          %v1509 = vrot.slane %v1507, 4
          %v1510 = vor.u32 %v1509, %v1505
          %v1511 = vrot.slane %v1510, 4
          %v1513 = vshll.u32 %v1451, 16
          %v1515 = vrot.slane %v1513, 5
          %v1516 = vsel %vm1468, %v1511, %v1515
          %v1518 = vshrl.u32 %v1422, 16
          %v1520 = vrot.slane %v1518, 4
          %v1521 = vshll.u32 %v1422, 16
          %v1523 = vrot.slane %v1521, 5
          %v1524 = vor.u32 %v1520, %v1523
          %v1525 = vrot.slane %v1524, 4
          %v1527 = vshll.u32 %v1423, 16
          %v1529 = vrot.slane %v1527, 5
          %v1530 = vsel %vm1468, %v1525, %v1529
          %v1531 = vshrl.u32 %v1423, 16
          %v1533 = vrot.slane %v1531, 4
          %v1534 = vor.u32 %v1533, %v1529
          %v1535 = vrot.slane %v1534, 4
          %v1537 = vshll.u32 %v1452, 16
          %v1539 = vrot.slane %v1537, 5
          %v1540 = vsel %vm1468, %v1535, %v1539
          %v1542 = vshrl.u32 %v1424, 16
          %v1544 = vrot.slane %v1542, 4
          %v1545 = vshll.u32 %v1424, 16
          %v1547 = vrot.slane %v1545, 5
          %v1548 = vor.u32 %v1544, %v1547
          %v1549 = vrot.slane %v1548, 4
          %v1551 = vshll.u32 %v1425, 16
          %v1553 = vrot.slane %v1551, 5
          %v1554 = vsel %vm1468, %v1549, %v1553
          %v1555 = vshrl.u32 %v1425, 16
          %v1557 = vrot.slane %v1555, 4
          %v1558 = vor.u32 %v1557, %v1553
          %v1559 = vrot.slane %v1558, 4
          %v1561 = vshll.u32 %v1453, 16
          %v1563 = vrot.slane %v1561, 5
          %v1564 = vsel %vm1468, %v1559, %v1563
          %v1566 = vshrl.u32 %v1426, 16
          %v1568 = vrot.slane %v1566, 4
          %v1569 = vshll.u32 %v1426, 16
          %v1571 = vrot.slane %v1569, 5
          %v1572 = vor.u32 %v1568, %v1571
          %v1573 = vrot.slane %v1572, 4
          %v1575 = vshll.u32 %v1427, 16
          %v1577 = vrot.slane %v1575, 5
          %v1578 = vsel %vm1468, %v1573, %v1577
          %v1579 = vshrl.u32 %v1427, 16
          %v1581 = vrot.slane %v1579, 4
          %v1582 = vor.u32 %v1581, %v1577
          %v1583 = vrot.slane %v1582, 4
          %v1585 = vshll.u32 %v1454, 16
          %v1587 = vrot.slane %v1585, 5
          %v1588 = vsel %vm1468, %v1583, %v1587
          %v1590 = vshrl.u32 %v1428, 16
          %v1592 = vrot.slane %v1590, 4
          %v1593 = vshll.u32 %v1428, 16
          %v1595 = vrot.slane %v1593, 5
          %v1596 = vor.u32 %v1592, %v1595
          %v1597 = vrot.slane %v1596, 4
          %v1599 = vshll.u32 %v1429, 16
          %v1601 = vrot.slane %v1599, 5
          %v1602 = vsel %vm1468, %v1597, %v1601
          %v1603 = vshrl.u32 %v1429, 16
          %v1605 = vrot.slane %v1603, 4
          %v1606 = vor.u32 %v1605, %v1601
          %v1607 = vrot.slane %v1606, 4
          %v1609 = vshll.u32 %v1455, 16
          %v1611 = vrot.slane %v1609, 5
          %v1612 = vsel %vm1468, %v1607, %v1611
          %v1614 = vshrl.u32 %v1430, 16
          %v1616 = vrot.slane %v1614, 4
          %v1617 = vshll.u32 %v1430, 16
          %v1619 = vrot.slane %v1617, 5
          %v1620 = vor.u32 %v1616, %v1619
          %v1621 = vrot.slane %v1620, 4
          %v1623 = vshll.u32 %v1431, 16
          %v1625 = vrot.slane %v1623, 5
          %v1626 = vsel %vm1468, %v1621, %v1625
          %v1627 = vshrl.u32 %v1431, 16
          %v1629 = vrot.slane %v1627, 4
          %v1630 = vor.u32 %v1629, %v1625
          %v1631 = vrot.slane %v1630, 4
          %v1633 = vshll.u32 %v1456, 16
          %v1635 = vrot.slane %v1633, 5
          %v1636 = vsel %vm1468, %v1631, %v1635
          %v1638 = vshrl.u32 %v1432, 16
          %v1640 = vrot.slane %v1638, 4
          %v1641 = vshll.u32 %v1432, 16
          %v1643 = vrot.slane %v1641, 5
          %v1644 = vor.u32 %v1640, %v1643
          %v1645 = vrot.slane %v1644, 4
          %v1647 = vshll.u32 %v1433, 16
          %v1649 = vrot.slane %v1647, 5
          %v1650 = vsel %vm1468, %v1645, %v1649
          %v1651 = vshrl.u32 %v1433, 16
          %v1653 = vrot.slane %v1651, 4
          %v1654 = vor.u32 %v1653, %v1649
          %v1655 = vrot.slane %v1654, 4
          %v1657 = vshll.u32 %v1457, 16
          %v1659 = vrot.slane %v1657, 5
          %v1660 = vsel %vm1468, %v1655, %v1659
          %v1662 = vshrl.u32 %v1434, 16
          %v1664 = vrot.slane %v1662, 4
          %v1665 = vshll.u32 %v1434, 16
          %v1667 = vrot.slane %v1665, 5
          %v1668 = vor.u32 %v1664, %v1667
          %v1669 = vrot.slane %v1668, 4
          %v1671 = vshll.u32 %v1435, 16
          %v1673 = vrot.slane %v1671, 5
          %v1674 = vsel %vm1468, %v1669, %v1673
          %v1675 = vshrl.u32 %v1435, 16
          %v1677 = vrot.slane %v1675, 4
          %v1678 = vor.u32 %v1677, %v1673
          %v1679 = vrot.slane %v1678, 4
          %v1681 = vshll.u32 %v1458, 16
          %v1683 = vrot.slane %v1681, 5
          %v1684 = vsel %vm1468, %v1679, %v1683
          %v1686 = vshrl.u32 %v1436, 16
          %v1688 = vrot.slane %v1686, 4
          %v1689 = vshll.u32 %v1436, 16
          %v1691 = vrot.slane %v1689, 5
          %v1692 = vor.u32 %v1688, %v1691
          %v1693 = vrot.slane %v1692, 4
          %v1695 = vshll.u32 %v1437, 16
          %v1697 = vrot.slane %v1695, 5
          %v1698 = vsel %vm1468, %v1693, %v1697
          %v1699 = vshrl.u32 %v1437, 16
          %v1701 = vrot.slane %v1699, 4
          %v1702 = vor.u32 %v1701, %v1697
          %v1703 = vrot.slane %v1702, 4
          %v1705 = vshll.u32 %v1459, 16
          %v1707 = vrot.slane %v1705, 5
          %v1708 = vsel %vm1468, %v1703, %v1707
          %v1710 = vshrl.u32 %v1438, 16
          %v1712 = vrot.slane %v1710, 4
          %v1713 = vshll.u32 %v1438, 16
          %v1715 = vrot.slane %v1713, 5
          %v1716 = vor.u32 %v1712, %v1715
          %v1717 = vrot.slane %v1716, 4
          %v1719 = vshll.u32 %v1439, 16
          %v1721 = vrot.slane %v1719, 5
          %v1722 = vsel %vm1468, %v1717, %v1721
          %v1723 = vshrl.u32 %v1439, 16
          %v1725 = vrot.slane %v1723, 4
          %v1726 = vor.u32 %v1725, %v1721
          %v1727 = vrot.slane %v1726, 4
          %v1729 = vshll.u32 %v1460, 16
          %v1731 = vrot.slane %v1729, 5
          %v1732 = vsel %vm1468, %v1727, %v1731
          %v1734 = vshrl.u32 %v1440, 16
          %v1736 = vrot.slane %v1734, 4
          %v1737 = vshll.u32 %v1440, 16
          %v1739 = vrot.slane %v1737, 5
          %v1740 = vor.u32 %v1736, %v1739
          %v1741 = vrot.slane %v1740, 4
          %v1743 = vshll.u32 %v1441, 16
          %v1745 = vrot.slane %v1743, 5
          %v1746 = vsel %vm1468, %v1741, %v1745
          %v1747 = vshrl.u32 %v1441, 16
          %v1749 = vrot.slane %v1747, 4
          %v1750 = vor.u32 %v1749, %v1745
          %v1751 = vrot.slane %v1750, 4
          %v1753 = vshll.u32 %v1461, 16
          %v1755 = vrot.slane %v1753, 5
          %v1756 = vsel %vm1468, %v1751, %v1755
          %v1758 = vshrl.u32 %v1442, 16
          %v1760 = vrot.slane %v1758, 4
          %v1761 = vshll.u32 %v1442, 16
          %v1763 = vrot.slane %v1761, 5
          %v1764 = vor.u32 %v1760, %v1763
          %v1765 = vrot.slane %v1764, 4
          %v1767 = vshll.u32 %v1443, 16
          %v1769 = vrot.slane %v1767, 5
          %v1770 = vsel %vm1468, %v1765, %v1769
          %v1771 = vshrl.u32 %v1443, 16
          %v1773 = vrot.slane %v1771, 4
          %v1774 = vor.u32 %v1773, %v1769
          %v1775 = vrot.slane %v1774, 4
          %v1777 = vshll.u32 %v1462, 16
          %v1779 = vrot.slane %v1777, 5
          %v1780 = vsel %vm1468, %v1775, %v1779
          %v1782 = vshrl.u32 %v1444, 16
          %v1784 = vrot.slane %v1782, 4
          %v1785 = vshll.u32 %v1444, 16
          %v1787 = vrot.slane %v1785, 5
          %v1788 = vor.u32 %v1784, %v1787
          %v1789 = vrot.slane %v1788, 4
          %v1791 = vshll.u32 %v1445, 16
          %v1793 = vrot.slane %v1791, 5
          %v1794 = vsel %vm1468, %v1789, %v1793
          %v1795 = vshrl.u32 %v1445, 16
          %v1797 = vrot.slane %v1795, 4
          %v1798 = vor.u32 %v1797, %v1793
          %v1799 = vrot.slane %v1798, 4
          %v1801 = vshll.u32 %v1463, 16
          %v1803 = vrot.slane %v1801, 5
          %v1804 = vsel %vm1468, %v1799, %v1803
          %v1806 = vshrl.u32 %v1446, 16
          %v1808 = vrot.slane %v1806, 4
          %v1809 = vshll.u32 %v1446, 16
          %v1811 = vrot.slane %v1809, 5
          %v1812 = vor.u32 %v1808, %v1811
          %v1813 = vrot.slane %v1812, 4
          %v1815 = vshll.u32 %v1447, 16
          %v1817 = vrot.slane %v1815, 5
          %v1818 = vsel %vm1468, %v1813, %v1817
          %v1819 = vshrl.u32 %v1447, 16
          %v1821 = vrot.slane %v1819, 4
          %v1822 = vor.u32 %v1821, %v1817
          %v1823 = vrot.slane %v1822, 4
          %v1825 = vshll.u32 %v1464, 16
          %v1827 = vrot.slane %v1825, 5
          %v1828 = vsel %vm1468, %v1823, %v1827
          %v1830 = vshrl.u32 %v1448, 16
          %v1832 = vrot.slane %v1830, 4
          %v1833 = vshll.u32 %v1448, 16
          %v1835 = vrot.slane %v1833, 5
          %v1836 = vor.u32 %v1832, %v1835
          %v1837 = vrot.slane %v1836, 4
          %v1839 = vshll.u32 %v1449, 16
          %v1841 = vrot.slane %v1839, 5
          %v1842 = vsel %vm1468, %v1837, %v1841
          %v1843 = vshrl.u32 %v1449, 16
          %v1845 = vrot.slane %v1843, 4
          %v1846 = vor.u32 %v1845, %v1841
          %v1847 = vrot.slane %v1846, 4
          %v1849 = vshll.u32 %v1465, 16
          %v1851 = vrot.slane %v1849, 5
          %v1852 = vsel %vm1468, %v1847, %v1851
          %v1885 = vmax.bf16 %v1418, %v1482
          %v1886 = vmax.bf16 %v1419, %v1492
          %v1887 = vmax.bf16 %v1420, %v1506
          %v1888 = vmax.bf16 %v1421, %v1516
          %v1889 = vmax.bf16 %v1422, %v1530
          %v1890 = vmax.bf16 %v1423, %v1540
          %v1891 = vmax.bf16 %v1424, %v1554
          %v1892 = vmax.bf16 %v1425, %v1564
          %v1893 = vmax.bf16 %v1426, %v1578
          %v1894 = vmax.bf16 %v1427, %v1588
          %v1895 = vmax.bf16 %v1428, %v1602
          %v1896 = vmax.bf16 %v1429, %v1612
          %v1897 = vmax.bf16 %v1430, %v1626
          %v1898 = vmax.bf16 %v1431, %v1636
          %v1899 = vmax.bf16 %v1432, %v1650
          %v1900 = vmax.bf16 %v1433, %v1660
          %v1901 = vmax.bf16 %v1434, %v1674
          %v1902 = vmax.bf16 %v1435, %v1684
          %v1903 = vmax.bf16 %v1436, %v1698
          %v1904 = vmax.bf16 %v1437, %v1708
          %v1905 = vmax.bf16 %v1438, %v1722
          %v1906 = vmax.bf16 %v1439, %v1732
          %v1907 = vmax.bf16 %v1440, %v1746
          %v1908 = vmax.bf16 %v1441, %v1756
          %v1909 = vmax.bf16 %v1442, %v1770
          %v1910 = vmax.bf16 %v1443, %v1780
          %v1911 = vmax.bf16 %v1444, %v1794
          %v1912 = vmax.bf16 %v1445, %v1804
          %v1913 = vmax.bf16 %v1446, %v1818
          %v1914 = vmax.bf16 %v1447, %v1828
          %v1915 = vmax.bf16 %v1448, %v1842
          %v1916 = vmax.bf16 %v1449, %v1852
          %v1917 = vld [vmem:[#allocation3] sm:$0xe]
          %v1918 = vld [vmem:[#allocation3 + $0xc] sm:$0xe]
          %v1919 = vld [vmem:[#allocation3 + $0x18] sm:$0xe]
          %v1920 = vld [vmem:[#allocation3 + $0x24] sm:$0xe]
          %v1921 = vld [vmem:[#allocation3 + $0x30] sm:$0xe]
          %v1922 = vld [vmem:[#allocation3 + $0x3c] sm:$0xe]
          %v1923 = vld [vmem:[#allocation3 + $0x48] sm:$0xe]
          %v1924 = vld [vmem:[#allocation3 + $0x54] sm:$0xe]
          %v1925 = vld [vmem:[#allocation3 + $0x60] sm:$0xe]
          %v1926 = vld [vmem:[#allocation3 + $0x6c] sm:$0xe]
          %v1927 = vld [vmem:[#allocation3 + $0x78] sm:$0xe]
          %v1928 = vld [vmem:[#allocation3 + $0x84] sm:$0xe]
          %v1929 = vld [vmem:[#allocation3 + $0x90] sm:$0xe]
          %v1930 = vld [vmem:[#allocation3 + $0x9c] sm:$0xe]
          %v1931 = vld [vmem:[#allocation3 + $0xa8] sm:$0xe]
          %v1932 = vld [vmem:[#allocation3 + $0xb4] sm:$0xe]
          %vm1981 = vcmask 1042432
          %vm1982 = vcmask 1046532
          %vm1983 = vmor %vm1981, %vm1982
          %v1984 = vrot.slane %v1917, 5
          %v1985 = vrot.slane %v1984, 4
          %v1986 = vrot.slane %v1419, 5
          %v1987 = vsel %vm1983, %v1985, %v1986
          %v1988 = vrot.slane %v1986, 4
          %v1989 = vrot.slane %v1450, 5
          %v1990 = vsel %vm1983, %v1988, %v1989
          %v1991 = vrot.slane %v1918, 5
          %v1992 = vrot.slane %v1991, 4
          %v1993 = vrot.slane %v1421, 5
          %v1994 = vsel %vm1983, %v1992, %v1993
          %v1995 = vrot.slane %v1993, 4
          %v1996 = vrot.slane %v1451, 5
          %v1997 = vsel %vm1983, %v1995, %v1996
          %v1998 = vrot.slane %v1919, 5
          %v1999 = vrot.slane %v1998, 4
          %v2000 = vrot.slane %v1423, 5
          %v2001 = vsel %vm1983, %v1999, %v2000
          %v2002 = vrot.slane %v2000, 4
          %v2003 = vrot.slane %v1452, 5
          %v2004 = vsel %vm1983, %v2002, %v2003
          %v2005 = vrot.slane %v1920, 5
          %v2006 = vrot.slane %v2005, 4
          %v2007 = vrot.slane %v1425, 5
          %v2008 = vsel %vm1983, %v2006, %v2007
          %v2009 = vrot.slane %v2007, 4
          %v2010 = vrot.slane %v1453, 5
          %v2011 = vsel %vm1983, %v2009, %v2010
          %v2012 = vrot.slane %v1921, 5
          %v2013 = vrot.slane %v2012, 4
          %v2014 = vrot.slane %v1427, 5
          %v2015 = vsel %vm1983, %v2013, %v2014
          %v2016 = vrot.slane %v2014, 4
          %v2017 = vrot.slane %v1454, 5
          %v2018 = vsel %vm1983, %v2016, %v2017
          %v2019 = vrot.slane %v1922, 5
          %v2020 = vrot.slane %v2019, 4
          %v2021 = vrot.slane %v1429, 5
          %v2022 = vsel %vm1983, %v2020, %v2021
          %v2023 = vrot.slane %v2021, 4
          %v2024 = vrot.slane %v1455, 5
          %v2025 = vsel %vm1983, %v2023, %v2024
          %v2026 = vrot.slane %v1923, 5
          %v2027 = vrot.slane %v2026, 4
          %v2028 = vrot.slane %v1431, 5
          %v2029 = vsel %vm1983, %v2027, %v2028
          %v2030 = vrot.slane %v2028, 4
          %v2031 = vrot.slane %v1456, 5
          %v2032 = vsel %vm1983, %v2030, %v2031
          %v2033 = vrot.slane %v1924, 5
          %v2034 = vrot.slane %v2033, 4
          %v2035 = vrot.slane %v1433, 5
          %v2036 = vsel %vm1983, %v2034, %v2035
          %v2037 = vrot.slane %v2035, 4
          %v2038 = vrot.slane %v1457, 5
          %v2039 = vsel %vm1983, %v2037, %v2038
          %v2040 = vrot.slane %v1925, 5
          %v2041 = vrot.slane %v2040, 4
          %v2042 = vrot.slane %v1435, 5
          %v2043 = vsel %vm1983, %v2041, %v2042
          %v2044 = vrot.slane %v2042, 4
          %v2045 = vrot.slane %v1458, 5
          %v2046 = vsel %vm1983, %v2044, %v2045
          %v2047 = vrot.slane %v1926, 5
          %v2048 = vrot.slane %v2047, 4
          %v2049 = vrot.slane %v1437, 5
          %v2050 = vsel %vm1983, %v2048, %v2049
          %v2051 = vrot.slane %v2049, 4
          %v2052 = vrot.slane %v1459, 5
          %v2053 = vsel %vm1983, %v2051, %v2052
          %v2054 = vrot.slane %v1927, 5
          %v2055 = vrot.slane %v2054, 4
          %v2056 = vrot.slane %v1439, 5
          %v2057 = vsel %vm1983, %v2055, %v2056
          %v2058 = vrot.slane %v2056, 4
          %v2059 = vrot.slane %v1460, 5
          %v2060 = vsel %vm1983, %v2058, %v2059
          %v2061 = vrot.slane %v1928, 5
          %v2062 = vrot.slane %v2061, 4
          %v2063 = vrot.slane %v1441, 5
          %v2064 = vsel %vm1983, %v2062, %v2063
          %v2065 = vrot.slane %v2063, 4
          %v2066 = vrot.slane %v1461, 5
          %v2067 = vsel %vm1983, %v2065, %v2066
          %v2068 = vrot.slane %v1929, 5
          %v2069 = vrot.slane %v2068, 4
          %v2070 = vrot.slane %v1443, 5
          %v2071 = vsel %vm1983, %v2069, %v2070
          %v2072 = vrot.slane %v2070, 4
          %v2073 = vrot.slane %v1462, 5
          %v2074 = vsel %vm1983, %v2072, %v2073
          %v2075 = vrot.slane %v1930, 5
          %v2076 = vrot.slane %v2075, 4
          %v2077 = vrot.slane %v1445, 5
          %v2078 = vsel %vm1983, %v2076, %v2077
          %v2079 = vrot.slane %v2077, 4
          %v2080 = vrot.slane %v1463, 5
          %v2081 = vsel %vm1983, %v2079, %v2080
          %v2082 = vrot.slane %v1931, 5
          %v2083 = vrot.slane %v2082, 4
          %v2084 = vrot.slane %v1447, 5
          %v2085 = vsel %vm1983, %v2083, %v2084
          %v2086 = vrot.slane %v2084, 4
          %v2087 = vrot.slane %v1464, 5
          %v2088 = vsel %vm1983, %v2086, %v2087
          %v2089 = vrot.slane %v1932, 5
          %v2090 = vrot.slane %v2089, 4
          %v2091 = vrot.slane %v1449, 5
          %v2092 = vsel %vm1983, %v2090, %v2091
          %v2093 = vrot.slane %v2091, 4
          %v2094 = vrot.slane %v1465, 5
          %v2095 = vsel %vm1983, %v2093, %v2094
          %v2128 = vmax.bf16 %v1885, %v1987
          %v2129 = vmax.bf16 %v1886, %v1990
          %v2130 = vmax.bf16 %v1887, %v1994
          %v2131 = vmax.bf16 %v1888, %v1997
          %v2132 = vmax.bf16 %v1889, %v2001
          %v2133 = vmax.bf16 %v1890, %v2004
          %v2134 = vmax.bf16 %v1891, %v2008
          %v2135 = vmax.bf16 %v1892, %v2011
          %v2136 = vmax.bf16 %v1893, %v2015
          %v2137 = vmax.bf16 %v1894, %v2018
          %v2138 = vmax.bf16 %v1895, %v2022
          %v2139 = vmax.bf16 %v1896, %v2025
          %v2140 = vmax.bf16 %v1897, %v2029
          %v2141 = vmax.bf16 %v1898, %v2032
          %v2142 = vmax.bf16 %v1899, %v2036
          %v2143 = vmax.bf16 %v1900, %v2039
          %v2144 = vmax.bf16 %v1901, %v2043
          %v2145 = vmax.bf16 %v1902, %v2046
          %v2146 = vmax.bf16 %v1903, %v2050
          %v2147 = vmax.bf16 %v1904, %v2053
          %v2148 = vmax.bf16 %v1905, %v2057
          %v2149 = vmax.bf16 %v1906, %v2060
          %v2150 = vmax.bf16 %v1907, %v2064
          %v2151 = vmax.bf16 %v1908, %v2067
          %v2152 = vmax.bf16 %v1909, %v2071
          %v2153 = vmax.bf16 %v1910, %v2074
          %v2154 = vmax.bf16 %v1911, %v2078
          %v2155 = vmax.bf16 %v1912, %v2081
          %v2156 = vmax.bf16 %v1913, %v2085
          %v2157 = vmax.bf16 %v1914, %v2088
          %v2158 = vmax.bf16 %v1915, %v2092
          %v2159 = vmax.bf16 %v1916, %v2095
          %v2160 = vld [vmem:[#allocation3 + $0x8] sm:$0x3]
          %v2161 = vld [vmem:[#allocation3 + $0x14] sm:$0x3]
          %v2162 = vld [vmem:[#allocation3 + $0x20] sm:$0x3]
          %v2163 = vld [vmem:[#allocation3 + $0x2c] sm:$0x3]
          %v2164 = vld [vmem:[#allocation3 + $0x38] sm:$0x3]
          %v2165 = vld [vmem:[#allocation3 + $0x44] sm:$0x3]
          %v2166 = vld [vmem:[#allocation3 + $0x50] sm:$0x3]
          %v2167 = vld [vmem:[#allocation3 + $0x5c] sm:$0x3]
          %v2168 = vld [vmem:[#allocation3 + $0x68] sm:$0x3]
          %v2169 = vld [vmem:[#allocation3 + $0x74] sm:$0x3]
          %v2170 = vld [vmem:[#allocation3 + $0x80] sm:$0x3]
          %v2171 = vld [vmem:[#allocation3 + $0x8c] sm:$0x3]
          %v2172 = vld [vmem:[#allocation3 + $0x98] sm:$0x3]
          %v2173 = vld [vmem:[#allocation3 + $0xa4] sm:$0x3]
          %v2174 = vld [vmem:[#allocation3 + $0xb0] sm:$0x3]
          %v2175 = vld [vmem:[#allocation3 + $0xbc] sm:$0x3]
          %vm2176 = vsmask.f32 2304
          %vm2177 = vsmask.f32 6416
          %vm2178 = vmor %vm2176, %vm2177
          %v2180 = vshrl.u32 %v1917, 16
          %v2182 = vrot.slane %v2180, 5
          %v2183 = vshll.u32 %v1917, 16
          %v2185 = vrot.slane %v2183, 6
          %v2186 = vor.u32 %v2182, %v2185
          %v2187 = vrot.slane %v2186, 4
          %v2188 = vrot.slane %v1483, 5
          %v2189 = vrot.slane %v1479, 6
          %v2190 = vor.u32 %v2188, %v2189
          %v2191 = vsel %vm2178, %v2187, %v2190
          %v2192 = vrot.slane %v2190, 4
          %v2194 = vshrl.u32 %v2160, 16
          %v2196 = vrot.slane %v2194, 5
          %v2197 = vshll.u32 %v2160, 16
          %v2199 = vrot.slane %v2197, 6
          %v2200 = vor.u32 %v2196, %v2199
          %v2201 = vsel %vm2178, %v2192, %v2200
          %v2203 = vshrl.u32 %v1918, 16
          %v2205 = vrot.slane %v2203, 5
          %v2206 = vshll.u32 %v1918, 16
          %v2208 = vrot.slane %v2206, 6
          %v2209 = vor.u32 %v2205, %v2208
          %v2210 = vrot.slane %v2209, 4
          %v2211 = vrot.slane %v1507, 5
          %v2212 = vrot.slane %v1503, 6
          %v2213 = vor.u32 %v2211, %v2212
          %v2214 = vsel %vm2178, %v2210, %v2213
          %v2215 = vrot.slane %v2213, 4
          %v2217 = vshrl.u32 %v2161, 16
          %v2219 = vrot.slane %v2217, 5
          %v2220 = vshll.u32 %v2161, 16
          %v2222 = vrot.slane %v2220, 6
          %v2223 = vor.u32 %v2219, %v2222
          %v2224 = vsel %vm2178, %v2215, %v2223
          %v2226 = vshrl.u32 %v1919, 16
          %v2228 = vrot.slane %v2226, 5
          %v2229 = vshll.u32 %v1919, 16
          %v2231 = vrot.slane %v2229, 6
          %v2232 = vor.u32 %v2228, %v2231
          %v2233 = vrot.slane %v2232, 4
          %v2234 = vrot.slane %v1531, 5
          %v2235 = vrot.slane %v1527, 6
          %v2236 = vor.u32 %v2234, %v2235
          %v2237 = vsel %vm2178, %v2233, %v2236
          %v2238 = vrot.slane %v2236, 4
          %v2240 = vshrl.u32 %v2162, 16
          %v2242 = vrot.slane %v2240, 5
          %v2243 = vshll.u32 %v2162, 16
          %v2245 = vrot.slane %v2243, 6
          %v2246 = vor.u32 %v2242, %v2245
          %v2247 = vsel %vm2178, %v2238, %v2246
          %v2249 = vshrl.u32 %v1920, 16
          %v2251 = vrot.slane %v2249, 5
          %v2252 = vshll.u32 %v1920, 16
          %v2254 = vrot.slane %v2252, 6
          %v2255 = vor.u32 %v2251, %v2254
          %v2256 = vrot.slane %v2255, 4
          %v2257 = vrot.slane %v1555, 5
          %v2258 = vrot.slane %v1551, 6
          %v2259 = vor.u32 %v2257, %v2258
          %v2260 = vsel %vm2178, %v2256, %v2259
          %v2261 = vrot.slane %v2259, 4
          %v2263 = vshrl.u32 %v2163, 16
          %v2265 = vrot.slane %v2263, 5
          %v2266 = vshll.u32 %v2163, 16
          %v2268 = vrot.slane %v2266, 6
          %v2269 = vor.u32 %v2265, %v2268
          %v2270 = vsel %vm2178, %v2261, %v2269
          %v2272 = vshrl.u32 %v1921, 16
          %v2274 = vrot.slane %v2272, 5
          %v2275 = vshll.u32 %v1921, 16
          %v2277 = vrot.slane %v2275, 6
          %v2278 = vor.u32 %v2274, %v2277
          %v2279 = vrot.slane %v2278, 4
          %v2280 = vrot.slane %v1579, 5
          %v2281 = vrot.slane %v1575, 6
          %v2282 = vor.u32 %v2280, %v2281
          %v2283 = vsel %vm2178, %v2279, %v2282
          %v2284 = vrot.slane %v2282, 4
          %v2286 = vshrl.u32 %v2164, 16
          %v2288 = vrot.slane %v2286, 5
          %v2289 = vshll.u32 %v2164, 16
          %v2291 = vrot.slane %v2289, 6
          %v2292 = vor.u32 %v2288, %v2291
          %v2293 = vsel %vm2178, %v2284, %v2292
          %v2295 = vshrl.u32 %v1922, 16
          %v2297 = vrot.slane %v2295, 5
          %v2298 = vshll.u32 %v1922, 16
          %v2300 = vrot.slane %v2298, 6
          %v2301 = vor.u32 %v2297, %v2300
          %v2302 = vrot.slane %v2301, 4
          %v2303 = vrot.slane %v1603, 5
          %v2304 = vrot.slane %v1599, 6
          %v2305 = vor.u32 %v2303, %v2304
          %v2306 = vsel %vm2178, %v2302, %v2305
          %v2307 = vrot.slane %v2305, 4
          %v2309 = vshrl.u32 %v2165, 16
          %v2311 = vrot.slane %v2309, 5
          %v2312 = vshll.u32 %v2165, 16
          %v2314 = vrot.slane %v2312, 6
          %v2315 = vor.u32 %v2311, %v2314
          %v2316 = vsel %vm2178, %v2307, %v2315
          %v2318 = vshrl.u32 %v1923, 16
          %v2320 = vrot.slane %v2318, 5
          %v2321 = vshll.u32 %v1923, 16
          %v2323 = vrot.slane %v2321, 6
          %v2324 = vor.u32 %v2320, %v2323
          %v2325 = vrot.slane %v2324, 4
          %v2326 = vrot.slane %v1627, 5
          %v2327 = vrot.slane %v1623, 6
          %v2328 = vor.u32 %v2326, %v2327
          %v2329 = vsel %vm2178, %v2325, %v2328
          %v2330 = vrot.slane %v2328, 4
          %v2332 = vshrl.u32 %v2166, 16
          %v2334 = vrot.slane %v2332, 5
          %v2335 = vshll.u32 %v2166, 16
          %v2337 = vrot.slane %v2335, 6
          %v2338 = vor.u32 %v2334, %v2337
          %v2339 = vsel %vm2178, %v2330, %v2338
          %v2341 = vshrl.u32 %v1924, 16
          %v2343 = vrot.slane %v2341, 5
          %v2344 = vshll.u32 %v1924, 16
          %v2346 = vrot.slane %v2344, 6
          %v2347 = vor.u32 %v2343, %v2346
          %v2348 = vrot.slane %v2347, 4
          %v2349 = vrot.slane %v1651, 5
          %v2350 = vrot.slane %v1647, 6
          %v2351 = vor.u32 %v2349, %v2350
          %v2352 = vsel %vm2178, %v2348, %v2351
          %v2353 = vrot.slane %v2351, 4
          %v2355 = vshrl.u32 %v2167, 16
          %v2357 = vrot.slane %v2355, 5
          %v2358 = vshll.u32 %v2167, 16
          %v2360 = vrot.slane %v2358, 6
          %v2361 = vor.u32 %v2357, %v2360
          %v2362 = vsel %vm2178, %v2353, %v2361
          %v2364 = vshrl.u32 %v1925, 16
          %v2366 = vrot.slane %v2364, 5
          %v2367 = vshll.u32 %v1925, 16
          %v2369 = vrot.slane %v2367, 6
          %v2370 = vor.u32 %v2366, %v2369
          %v2371 = vrot.slane %v2370, 4
          %v2372 = vrot.slane %v1675, 5
          %v2373 = vrot.slane %v1671, 6
          %v2374 = vor.u32 %v2372, %v2373
          %v2375 = vsel %vm2178, %v2371, %v2374
          %v2376 = vrot.slane %v2374, 4
          %v2378 = vshrl.u32 %v2168, 16
          %v2380 = vrot.slane %v2378, 5
          %v2381 = vshll.u32 %v2168, 16
          %v2383 = vrot.slane %v2381, 6
          %v2384 = vor.u32 %v2380, %v2383
          %v2385 = vsel %vm2178, %v2376, %v2384
          %v2387 = vshrl.u32 %v1926, 16
          %v2389 = vrot.slane %v2387, 5
          %v2390 = vshll.u32 %v1926, 16
          %v2392 = vrot.slane %v2390, 6
          %v2393 = vor.u32 %v2389, %v2392
          %v2394 = vrot.slane %v2393, 4
          %v2395 = vrot.slane %v1699, 5
          %v2396 = vrot.slane %v1695, 6
          %v2397 = vor.u32 %v2395, %v2396
          %v2398 = vsel %vm2178, %v2394, %v2397
          %v2399 = vrot.slane %v2397, 4
          %v2401 = vshrl.u32 %v2169, 16
          %v2403 = vrot.slane %v2401, 5
          %v2404 = vshll.u32 %v2169, 16
          %v2406 = vrot.slane %v2404, 6
          %v2407 = vor.u32 %v2403, %v2406
          %v2408 = vsel %vm2178, %v2399, %v2407
          %v2410 = vshrl.u32 %v1927, 16
          %v2412 = vrot.slane %v2410, 5
          %v2413 = vshll.u32 %v1927, 16
          %v2415 = vrot.slane %v2413, 6
          %v2416 = vor.u32 %v2412, %v2415
          %v2417 = vrot.slane %v2416, 4
          %v2418 = vrot.slane %v1723, 5
          %v2419 = vrot.slane %v1719, 6
          %v2420 = vor.u32 %v2418, %v2419
          %v2421 = vsel %vm2178, %v2417, %v2420
          %v2422 = vrot.slane %v2420, 4
          %v2424 = vshrl.u32 %v2170, 16
          %v2426 = vrot.slane %v2424, 5
          %v2427 = vshll.u32 %v2170, 16
          %v2429 = vrot.slane %v2427, 6
          %v2430 = vor.u32 %v2426, %v2429
          %v2431 = vsel %vm2178, %v2422, %v2430
          %v2433 = vshrl.u32 %v1928, 16
          %v2435 = vrot.slane %v2433, 5
          %v2436 = vshll.u32 %v1928, 16
          %v2438 = vrot.slane %v2436, 6
          %v2439 = vor.u32 %v2435, %v2438
          %v2440 = vrot.slane %v2439, 4
          %v2441 = vrot.slane %v1747, 5
          %v2442 = vrot.slane %v1743, 6
          %v2443 = vor.u32 %v2441, %v2442
          %v2444 = vsel %vm2178, %v2440, %v2443
          %v2445 = vrot.slane %v2443, 4
          %v2447 = vshrl.u32 %v2171, 16
          %v2449 = vrot.slane %v2447, 5
          %v2450 = vshll.u32 %v2171, 16
          %v2452 = vrot.slane %v2450, 6
          %v2453 = vor.u32 %v2449, %v2452
          %v2454 = vsel %vm2178, %v2445, %v2453
          %v2456 = vshrl.u32 %v1929, 16
          %v2458 = vrot.slane %v2456, 5
          %v2459 = vshll.u32 %v1929, 16
          %v2461 = vrot.slane %v2459, 6
          %v2462 = vor.u32 %v2458, %v2461
          %v2463 = vrot.slane %v2462, 4
          %v2464 = vrot.slane %v1771, 5
          %v2465 = vrot.slane %v1767, 6
          %v2466 = vor.u32 %v2464, %v2465
          %v2467 = vsel %vm2178, %v2463, %v2466
          %v2468 = vrot.slane %v2466, 4
          %v2470 = vshrl.u32 %v2172, 16
          %v2472 = vrot.slane %v2470, 5
          %v2473 = vshll.u32 %v2172, 16
          %v2475 = vrot.slane %v2473, 6
          %v2476 = vor.u32 %v2472, %v2475
          %v2477 = vsel %vm2178, %v2468, %v2476
          %v2479 = vshrl.u32 %v1930, 16
          %v2481 = vrot.slane %v2479, 5
          %v2482 = vshll.u32 %v1930, 16
          %v2484 = vrot.slane %v2482, 6
          %v2485 = vor.u32 %v2481, %v2484
          %v2486 = vrot.slane %v2485, 4
          %v2487 = vrot.slane %v1795, 5
          %v2488 = vrot.slane %v1791, 6
          %v2489 = vor.u32 %v2487, %v2488
          %v2490 = vsel %vm2178, %v2486, %v2489
          %v2491 = vrot.slane %v2489, 4
          %v2493 = vshrl.u32 %v2173, 16
          %v2495 = vrot.slane %v2493, 5
          %v2496 = vshll.u32 %v2173, 16
          %v2498 = vrot.slane %v2496, 6
          %v2499 = vor.u32 %v2495, %v2498
          %v2500 = vsel %vm2178, %v2491, %v2499
          %v2502 = vshrl.u32 %v1931, 16
          %v2504 = vrot.slane %v2502, 5
          %v2505 = vshll.u32 %v1931, 16
          %v2507 = vrot.slane %v2505, 6
          %v2508 = vor.u32 %v2504, %v2507
          %v2509 = vrot.slane %v2508, 4
          %v2510 = vrot.slane %v1819, 5
          %v2511 = vrot.slane %v1815, 6
          %v2512 = vor.u32 %v2510, %v2511
          %v2513 = vsel %vm2178, %v2509, %v2512
          %v2514 = vrot.slane %v2512, 4
          %v2516 = vshrl.u32 %v2174, 16
          %v2518 = vrot.slane %v2516, 5
          %v2519 = vshll.u32 %v2174, 16
          %v2521 = vrot.slane %v2519, 6
          %v2522 = vor.u32 %v2518, %v2521
          %v2523 = vsel %vm2178, %v2514, %v2522
          %v2525 = vshrl.u32 %v1932, 16
          %v2527 = vrot.slane %v2525, 5
          %v2528 = vshll.u32 %v1932, 16
          %v2530 = vrot.slane %v2528, 6
          %v2531 = vor.u32 %v2527, %v2530
          %v2532 = vrot.slane %v2531, 4
          %v2533 = vrot.slane %v1843, 5
          %v2534 = vrot.slane %v1839, 6
          %v2535 = vor.u32 %v2533, %v2534
          %v2536 = vsel %vm2178, %v2532, %v2535
          %v2537 = vrot.slane %v2535, 4
          %v2539 = vshrl.u32 %v2175, 16
          %v2541 = vrot.slane %v2539, 5
          %v2542 = vshll.u32 %v2175, 16
          %v2544 = vrot.slane %v2542, 6
          %v2545 = vor.u32 %v2541, %v2544
          %v2546 = vsel %vm2178, %v2537, %v2545
          %v2579 = vmax.bf16 %v2128, %v2191
          %v2580 = vmax.bf16 %v2129, %v2201
          %v2581 = vmax.bf16 %v2130, %v2214
          %v2582 = vmax.bf16 %v2131, %v2224
          %v2583 = vmax.bf16 %v2132, %v2237
          %v2584 = vmax.bf16 %v2133, %v2247
          %v2585 = vmax.bf16 %v2134, %v2260
          %v2586 = vmax.bf16 %v2135, %v2270
          %v2587 = vmax.bf16 %v2136, %v2283
          %v2588 = vmax.bf16 %v2137, %v2293
          %v2589 = vmax.bf16 %v2138, %v2306
          %v2590 = vmax.bf16 %v2139, %v2316
          %v2591 = vmax.bf16 %v2140, %v2329
          %v2592 = vmax.bf16 %v2141, %v2339
          %v2593 = vmax.bf16 %v2142, %v2352
          %v2594 = vmax.bf16 %v2143, %v2362
          %v2595 = vmax.bf16 %v2144, %v2375
          %v2596 = vmax.bf16 %v2145, %v2385
          %v2597 = vmax.bf16 %v2146, %v2398
          %v2598 = vmax.bf16 %v2147, %v2408
          %v2599 = vmax.bf16 %v2148, %v2421
          %v2600 = vmax.bf16 %v2149, %v2431
          %v2601 = vmax.bf16 %v2150, %v2444
          %v2602 = vmax.bf16 %v2151, %v2454
          %v2603 = vmax.bf16 %v2152, %v2467
          %v2604 = vmax.bf16 %v2153, %v2477
          %v2605 = vmax.bf16 %v2154, %v2490
          %v2606 = vmax.bf16 %v2155, %v2500
          %v2607 = vmax.bf16 %v2156, %v2513
          %v2608 = vmax.bf16 %v2157, %v2523
          %v2609 = vmax.bf16 %v2158, %v2536
          %v2610 = vmax.bf16 %v2159, %v2546
          %v2611 = vld [vmem:[#allocation3] sm:$0xc]
          %v2612 = vld [vmem:[#allocation3 + $0xc] sm:$0xc]
          %v2613 = vld [vmem:[#allocation3 + $0x18] sm:$0xc]
          %v2614 = vld [vmem:[#allocation3 + $0x24] sm:$0xc]
          %v2615 = vld [vmem:[#allocation3 + $0x30] sm:$0xc]
          %v2616 = vld [vmem:[#allocation3 + $0x3c] sm:$0xc]
          %v2617 = vld [vmem:[#allocation3 + $0x48] sm:$0xc]
          %v2618 = vld [vmem:[#allocation3 + $0x54] sm:$0xc]
          %v2619 = vld [vmem:[#allocation3 + $0x60] sm:$0xc]
          %v2620 = vld [vmem:[#allocation3 + $0x6c] sm:$0xc]
          %v2621 = vld [vmem:[#allocation3 + $0x78] sm:$0xc]
          %v2622 = vld [vmem:[#allocation3 + $0x84] sm:$0xc]
          %v2623 = vld [vmem:[#allocation3 + $0x90] sm:$0xc]
          %v2624 = vld [vmem:[#allocation3 + $0x9c] sm:$0xc]
          %v2625 = vld [vmem:[#allocation3 + $0xa8] sm:$0xc]
          %v2626 = vld [vmem:[#allocation3 + $0xb4] sm:$0xc]
          %vm2659 = vcmask 1041408
          %vm2660 = vcmask 1045508
          %vm2661 = vmor %vm2659, %vm2660
          %v2662 = vrot.slane %v2611, 6
          %v2663 = vrot.slane %v2662, 4
          %v2664 = vrot.slane %v1419, 6
          %v2665 = vsel %vm2661, %v2663, %v2664
          %v2666 = vrot.slane %v2664, 4
          %v2667 = vrot.slane %v2160, 6
          %v2668 = vsel %vm2661, %v2666, %v2667
          %v2669 = vrot.slane %v2612, 6
          %v2670 = vrot.slane %v2669, 4
          %v2671 = vrot.slane %v1421, 6
          %v2672 = vsel %vm2661, %v2670, %v2671
          %v2673 = vrot.slane %v2671, 4
          %v2674 = vrot.slane %v2161, 6
          %v2675 = vsel %vm2661, %v2673, %v2674
          %v2676 = vrot.slane %v2613, 6
          %v2677 = vrot.slane %v2676, 4
          %v2678 = vrot.slane %v1423, 6
          %v2679 = vsel %vm2661, %v2677, %v2678
          %v2680 = vrot.slane %v2678, 4
          %v2681 = vrot.slane %v2162, 6
          %v2682 = vsel %vm2661, %v2680, %v2681
          %v2683 = vrot.slane %v2614, 6
          %v2684 = vrot.slane %v2683, 4
          %v2685 = vrot.slane %v1425, 6
          %v2686 = vsel %vm2661, %v2684, %v2685
          %v2687 = vrot.slane %v2685, 4
          %v2688 = vrot.slane %v2163, 6
          %v2689 = vsel %vm2661, %v2687, %v2688
          %v2690 = vrot.slane %v2615, 6
          %v2691 = vrot.slane %v2690, 4
          %v2692 = vrot.slane %v1427, 6
          %v2693 = vsel %vm2661, %v2691, %v2692
          %v2694 = vrot.slane %v2692, 4
          %v2695 = vrot.slane %v2164, 6
          %v2696 = vsel %vm2661, %v2694, %v2695
          %v2697 = vrot.slane %v2616, 6
          %v2698 = vrot.slane %v2697, 4
          %v2699 = vrot.slane %v1429, 6
          %v2700 = vsel %vm2661, %v2698, %v2699
          %v2701 = vrot.slane %v2699, 4
          %v2702 = vrot.slane %v2165, 6
          %v2703 = vsel %vm2661, %v2701, %v2702
          %v2704 = vrot.slane %v2617, 6
          %v2705 = vrot.slane %v2704, 4
          %v2706 = vrot.slane %v1431, 6
          %v2707 = vsel %vm2661, %v2705, %v2706
          %v2708 = vrot.slane %v2706, 4
          %v2709 = vrot.slane %v2166, 6
          %v2710 = vsel %vm2661, %v2708, %v2709
          %v2711 = vrot.slane %v2618, 6
          %v2712 = vrot.slane %v2711, 4
          %v2713 = vrot.slane %v1433, 6
          %v2714 = vsel %vm2661, %v2712, %v2713
          %v2715 = vrot.slane %v2713, 4
          %v2716 = vrot.slane %v2167, 6
          %v2717 = vsel %vm2661, %v2715, %v2716
          %v2718 = vrot.slane %v2619, 6
          %v2719 = vrot.slane %v2718, 4
          %v2720 = vrot.slane %v1435, 6
          %v2721 = vsel %vm2661, %v2719, %v2720
          %v2722 = vrot.slane %v2720, 4
          %v2723 = vrot.slane %v2168, 6
          %v2724 = vsel %vm2661, %v2722, %v2723
          %v2725 = vrot.slane %v2620, 6
          %v2726 = vrot.slane %v2725, 4
          %v2727 = vrot.slane %v1437, 6
          %v2728 = vsel %vm2661, %v2726, %v2727
          %v2729 = vrot.slane %v2727, 4
          %v2730 = vrot.slane %v2169, 6
          %v2731 = vsel %vm2661, %v2729, %v2730
          %v2732 = vrot.slane %v2621, 6
          %v2733 = vrot.slane %v2732, 4
          %v2734 = vrot.slane %v1439, 6
          %v2735 = vsel %vm2661, %v2733, %v2734
          %v2736 = vrot.slane %v2734, 4
          %v2737 = vrot.slane %v2170, 6
          %v2738 = vsel %vm2661, %v2736, %v2737
          %v2739 = vrot.slane %v2622, 6
          %v2740 = vrot.slane %v2739, 4
          %v2741 = vrot.slane %v1441, 6
          %v2742 = vsel %vm2661, %v2740, %v2741
          %v2743 = vrot.slane %v2741, 4
          %v2744 = vrot.slane %v2171, 6
          %v2745 = vsel %vm2661, %v2743, %v2744
          %v2746 = vrot.slane %v2623, 6
          %v2747 = vrot.slane %v2746, 4
          %v2748 = vrot.slane %v1443, 6
          %v2749 = vsel %vm2661, %v2747, %v2748
          %v2750 = vrot.slane %v2748, 4
          %v2751 = vrot.slane %v2172, 6
          %v2752 = vsel %vm2661, %v2750, %v2751
          %v2753 = vrot.slane %v2624, 6
          %v2754 = vrot.slane %v2753, 4
          %v2755 = vrot.slane %v1445, 6
          %v2756 = vsel %vm2661, %v2754, %v2755
          %v2757 = vrot.slane %v2755, 4
          %v2758 = vrot.slane %v2173, 6
          %v2759 = vsel %vm2661, %v2757, %v2758
          %v2760 = vrot.slane %v2625, 6
          %v2761 = vrot.slane %v2760, 4
          %v2762 = vrot.slane %v1447, 6
          %v2763 = vsel %vm2661, %v2761, %v2762
          %v2764 = vrot.slane %v2762, 4
          %v2765 = vrot.slane %v2174, 6
          %v2766 = vsel %vm2661, %v2764, %v2765
          %v2767 = vrot.slane %v2626, 6
          %v2768 = vrot.slane %v2767, 4
          %v2769 = vrot.slane %v1449, 6
          %v2770 = vsel %vm2661, %v2768, %v2769
          %v2771 = vrot.slane %v2769, 4
          %v2772 = vrot.slane %v2175, 6
          %v2773 = vsel %vm2661, %v2771, %v2772
          %v2806 = vmax.bf16 %v2579, %v2665
          %v2807 = vmax.bf16 %v2580, %v2668
          %v2808 = vmax.bf16 %v2581, %v2672
          %v2809 = vmax.bf16 %v2582, %v2675
          %v2810 = vmax.bf16 %v2583, %v2679
          %v2811 = vmax.bf16 %v2584, %v2682
          %v2812 = vmax.bf16 %v2585, %v2686
          %v2813 = vmax.bf16 %v2586, %v2689
          %v2814 = vmax.bf16 %v2587, %v2693
          %v2815 = vmax.bf16 %v2588, %v2696
          %v2816 = vmax.bf16 %v2589, %v2700
          %v2817 = vmax.bf16 %v2590, %v2703
          %v2818 = vmax.bf16 %v2591, %v2707
          %v2819 = vmax.bf16 %v2592, %v2710
          %v2820 = vmax.bf16 %v2593, %v2714
          %v2821 = vmax.bf16 %v2594, %v2717
          %v2822 = vmax.bf16 %v2595, %v2721
          %v2823 = vmax.bf16 %v2596, %v2724
          %v2824 = vmax.bf16 %v2597, %v2728
          %v2825 = vmax.bf16 %v2598, %v2731
          %v2826 = vmax.bf16 %v2599, %v2735
          %v2827 = vmax.bf16 %v2600, %v2738
          %v2828 = vmax.bf16 %v2601, %v2742
          %v2829 = vmax.bf16 %v2602, %v2745
          %v2830 = vmax.bf16 %v2603, %v2749
          %v2831 = vmax.bf16 %v2604, %v2752
          %v2832 = vmax.bf16 %v2605, %v2756
          %v2833 = vmax.bf16 %v2606, %v2759
          %v2834 = vmax.bf16 %v2607, %v2763
          %v2835 = vmax.bf16 %v2608, %v2766
          %v2836 = vmax.bf16 %v2609, %v2770
          %v2837 = vmax.bf16 %v2610, %v2773
          %v2870 = vunpack.c.l.b16 %v2806
          %v2871 = vunpack.c.l.b16 %v2807
          %v2872 = vunpack.c.l.b16 %v2808
          %v2873 = vunpack.c.l.b16 %v2809
          %v2874 = vunpack.c.l.b16 %v2810
          %v2875 = vunpack.c.l.b16 %v2811
          %v2876 = vunpack.c.l.b16 %v2812
          %v2877 = vunpack.c.l.b16 %v2813
          %v2878 = vunpack.c.l.b16 %v2814
          %v2879 = vunpack.c.l.b16 %v2815
          %v2880 = vunpack.c.l.b16 %v2816
          %v2881 = vunpack.c.l.b16 %v2817
          %v2882 = vunpack.c.l.b16 %v2818
          %v2883 = vunpack.c.l.b16 %v2819
          %v2884 = vunpack.c.l.b16 %v2820
          %v2885 = vunpack.c.l.b16 %v2821
          %v2886 = vunpack.c.l.b16 %v2822
          %v2887 = vunpack.c.l.b16 %v2823
          %v2888 = vunpack.c.l.b16 %v2824
          %v2889 = vunpack.c.l.b16 %v2825
          %v2890 = vunpack.c.l.b16 %v2826
          %v2891 = vunpack.c.l.b16 %v2827
          %v2892 = vunpack.c.l.b16 %v2828
          %v2893 = vunpack.c.l.b16 %v2829
          %v2894 = vunpack.c.l.b16 %v2830
          %v2895 = vunpack.c.l.b16 %v2831
          %v2896 = vunpack.c.l.b16 %v2832
          %v2897 = vunpack.c.l.b16 %v2833
          %v2898 = vunpack.c.l.b16 %v2834
          %v2899 = vunpack.c.l.b16 %v2835
          %v2900 = vunpack.c.l.b16 %v2836
          %v2901 = vunpack.c.l.b16 %v2837
          %v2902 = vpack.c.b16 %v2871, %v2870
          %v2903 = vpack.c.b16 %v2873, %v2872
          %v2904 = vpack.c.b16 %v2875, %v2874
          %v2905 = vpack.c.b16 %v2877, %v2876
          %v2906 = vpack.c.b16 %v2879, %v2878
          %v2907 = vpack.c.b16 %v2881, %v2880
          %v2908 = vpack.c.b16 %v2883, %v2882
          %v2909 = vpack.c.b16 %v2885, %v2884
          %v2910 = vpack.c.b16 %v2887, %v2886
          %v2911 = vpack.c.b16 %v2889, %v2888
          %v2912 = vpack.c.b16 %v2891, %v2890
          %v2913 = vpack.c.b16 %v2893, %v2892
          %v2914 = vpack.c.b16 %v2895, %v2894
          %v2915 = vpack.c.b16 %v2897, %v2896
          %v2916 = vpack.c.b16 %v2899, %v2898
          %v2917 = vpack.c.b16 %v2901, %v2900
          %s2934 = scalar_lea.vmem [#allocation4], 16
          %2935 = vst [vmem:[%s2934] sm:$0xff] %v2902
          %2936 = vst [vmem:[%s2934 + $0x8] sm:$0xff] %v2903
          %2937 = vst [vmem:[%s2934 + $0x10] sm:$0xff] %v2904
          %2938 = vst [vmem:[%s2934 + $0x18] sm:$0xff] %v2905
          %2939 = vst [vmem:[%s2934 + $0x20] sm:$0xff] %v2906
          %2940 = vst [vmem:[%s2934 + $0x28] sm:$0xff] %v2907
          %2941 = vst [vmem:[%s2934 + $0x30] sm:$0xff] %v2908
          %2942 = vst [vmem:[%s2934 + $0x38] sm:$0xff] %v2909
          %2943 = vst [vmem:[%s2934 + $0x40] sm:$0xff] %v2910
          %2944 = vst [vmem:[%s2934 + $0x48] sm:$0xff] %v2911
          %2945 = vst [vmem:[%s2934 + $0x50] sm:$0xff] %v2912
          %2946 = vst [vmem:[%s2934 + $0x58] sm:$0xff] %v2913
          %2947 = vst [vmem:[%s2934 + $0x60] sm:$0xff] %v2914
          %2948 = vst [vmem:[%s2934 + $0x68] sm:$0xff] %v2915
          %2949 = vst [vmem:[%s2934 + $0x70] sm:$0xff] %v2916
          %2950 = vst [vmem:[%s2934 + $0x78] sm:$0xff] %v2917
          %v2951 = vld [vmem:[#allocation4] sm:$0xff]
          %v2952 = vld [vmem:[#allocation4 + $0x8] sm:$0xff]
          %v2953 = vld [vmem:[#allocation4 + $0x10] sm:$0xff]
          %v2954 = vld [vmem:[#allocation4 + $0x18] sm:$0xff]
          %v2955 = vld [vmem:[#allocation4 + $0x20] sm:$0xff]
          %v2956 = vld [vmem:[#allocation4 + $0x28] sm:$0xff]
          %v2957 = vld [vmem:[#allocation4 + $0x30] sm:$0xff]
          %v2958 = vld [vmem:[#allocation4 + $0x38] sm:$0xff]
          %v2959 = vld [vmem:[#allocation4 + $0x40] sm:$0xff]
          %v2960 = vld [vmem:[#allocation4 + $0x48] sm:$0xff]
          %v2961 = vld [vmem:[#allocation4 + $0x50] sm:$0xff]
          %v2962 = vld [vmem:[#allocation4 + $0x58] sm:$0xff]
          %v2963 = vld [vmem:[#allocation4 + $0x60] sm:$0xff]
          %v2964 = vld [vmem:[#allocation4 + $0x68] sm:$0xff]
          %v2965 = vld [vmem:[#allocation4 + $0x70] sm:$0xff]
          %v2966 = vld [vmem:[#allocation4 + $0x78] sm:$0xff]
          %s2967 = scalar_lea.vmem [#allocation4], 8
          %v2968 = vld [vmem:[%s2967] sm:$0xff]
          %v2969 = vld [vmem:[%s2967 + $0x8] sm:$0xff]
          %v2970 = vld [vmem:[%s2967 + $0x10] sm:$0xff]
          %v2971 = vld [vmem:[%s2967 + $0x18] sm:$0xff]
          %v2972 = vld [vmem:[%s2967 + $0x20] sm:$0xff]
          %v2973 = vld [vmem:[%s2967 + $0x28] sm:$0xff]
          %v2974 = vld [vmem:[%s2967 + $0x30] sm:$0xff]
          %v2975 = vld [vmem:[%s2967 + $0x38] sm:$0xff]
          %v2976 = vld [vmem:[%s2967 + $0x40] sm:$0xff]
          %v2977 = vld [vmem:[%s2967 + $0x48] sm:$0xff]
          %v2978 = vld [vmem:[%s2967 + $0x50] sm:$0xff]
          %v2979 = vld [vmem:[%s2967 + $0x58] sm:$0xff]
          %v2980 = vld [vmem:[%s2967 + $0x60] sm:$0xff]
          %v2981 = vld [vmem:[%s2967 + $0x68] sm:$0xff]
          %v2982 = vld [vmem:[%s2967 + $0x70] sm:$0xff]
          %v2983 = vld [vmem:[%s2967 + $0x78] sm:$0xff]
          %v2984 = vmax.bf16 %v2951, %v2968
          %v2985 = vmax.bf16 %v2952, %v2969
          %v2986 = vmax.bf16 %v2953, %v2970
          %v2987 = vmax.bf16 %v2954, %v2971
          %v2988 = vmax.bf16 %v2955, %v2972
          %v2989 = vmax.bf16 %v2956, %v2973
          %v2990 = vmax.bf16 %v2957, %v2974
          %v2991 = vmax.bf16 %v2958, %v2975
          %v2992 = vmax.bf16 %v2959, %v2976
          %v2993 = vmax.bf16 %v2960, %v2977
          %v2994 = vmax.bf16 %v2961, %v2978
          %v2995 = vmax.bf16 %v2962, %v2979
          %v2996 = vmax.bf16 %v2963, %v2980
          %v2997 = vmax.bf16 %v2964, %v2981
          %v2998 = vmax.bf16 %v2965, %v2982
          %v2999 = vmax.bf16 %v2966, %v2983
          %v3000 = vld [vmem:[%s2934] sm:$0xff]
          %v3001 = vld [vmem:[%s2934 + $0x8] sm:$0xff]
          %v3002 = vld [vmem:[%s2934 + $0x10] sm:$0xff]
          %v3003 = vld [vmem:[%s2934 + $0x18] sm:$0xff]
          %v3004 = vld [vmem:[%s2934 + $0x20] sm:$0xff]
          %v3005 = vld [vmem:[%s2934 + $0x28] sm:$0xff]
          %v3006 = vld [vmem:[%s2934 + $0x30] sm:$0xff]
          %v3007 = vld [vmem:[%s2934 + $0x38] sm:$0xff]
          %v3008 = vld [vmem:[%s2934 + $0x40] sm:$0xff]
          %v3009 = vld [vmem:[%s2934 + $0x48] sm:$0xff]
          %v3010 = vld [vmem:[%s2934 + $0x50] sm:$0xff]
          %v3011 = vld [vmem:[%s2934 + $0x58] sm:$0xff]
          %v3012 = vld [vmem:[%s2934 + $0x60] sm:$0xff]
          %v3013 = vld [vmem:[%s2934 + $0x68] sm:$0xff]
          %v3014 = vld [vmem:[%s2934 + $0x70] sm:$0xff]
          %v3015 = vld [vmem:[%s2934 + $0x78] sm:$0xff]
          %v3016 = vmax.bf16 %v2984, %v3000
          %v3017 = vmax.bf16 %v2985, %v3001
          %v3018 = vmax.bf16 %v2986, %v3002
          %v3019 = vmax.bf16 %v2987, %v3003
          %v3020 = vmax.bf16 %v2988, %v3004
          %v3021 = vmax.bf16 %v2989, %v3005
          %v3022 = vmax.bf16 %v2990, %v3006
          %v3023 = vmax.bf16 %v2991, %v3007
          %v3024 = vmax.bf16 %v2992, %v3008
          %v3025 = vmax.bf16 %v2993, %v3009
          %v3026 = vmax.bf16 %v2994, %v3010
          %v3027 = vmax.bf16 %v2995, %v3011
          %v3028 = vmax.bf16 %v2996, %v3012
          %v3029 = vmax.bf16 %v2997, %v3013
          %v3030 = vmax.bf16 %v2998, %v3014
          %v3031 = vmax.bf16 %v2999, %v3015
          %s3032 = scalar_lea.vmem [#allocation4], 24
          %v3033 = vld [vmem:[%s3032] sm:$0xff]
          %v3034 = vld [vmem:[%s3032 + $0x8] sm:$0xff]
          %v3035 = vld [vmem:[%s3032 + $0x10] sm:$0xff]
          %v3036 = vld [vmem:[%s3032 + $0x18] sm:$0xff]
          %v3037 = vld [vmem:[%s3032 + $0x20] sm:$0xff]
          %v3038 = vld [vmem:[%s3032 + $0x28] sm:$0xff]
          %v3039 = vld [vmem:[%s3032 + $0x30] sm:$0xff]
          %v3040 = vld [vmem:[%s3032 + $0x38] sm:$0xff]
          %v3041 = vld [vmem:[%s3032 + $0x40] sm:$0xff]
          %v3042 = vld [vmem:[%s3032 + $0x48] sm:$0xff]
          %v3043 = vld [vmem:[%s3032 + $0x50] sm:$0xff]
          %v3044 = vld [vmem:[%s3032 + $0x58] sm:$0xff]
          %v3045 = vld [vmem:[%s3032 + $0x60] sm:$0xff]
          %v3046 = vld [vmem:[%s3032 + $0x68] sm:$0xff]
          %v3047 = vld [vmem:[%s3032 + $0x70] sm:$0xff]
          %v3048 = vld [vmem:[%s3032 + $0x78] sm:$0xff]
          %v3049 = vmax.bf16 %v3016, %v3033
          %v3050 = vmax.bf16 %v3017, %v3034
          %v3051 = vmax.bf16 %v3018, %v3035
          %v3052 = vmax.bf16 %v3019, %v3036
          %v3053 = vmax.bf16 %v3020, %v3037
          %v3054 = vmax.bf16 %v3021, %v3038
          %v3055 = vmax.bf16 %v3022, %v3039
          %v3056 = vmax.bf16 %v3023, %v3040
          %v3057 = vmax.bf16 %v3024, %v3041
          %v3058 = vmax.bf16 %v3025, %v3042
          %v3059 = vmax.bf16 %v3026, %v3043
          %v3060 = vmax.bf16 %v3027, %v3044
          %v3061 = vmax.bf16 %v3028, %v3045
          %v3062 = vmax.bf16 %v3029, %v3046
          %v3063 = vmax.bf16 %v3030, %v3047
          %v3064 = vmax.bf16 %v3031, %v3048
          %s3065 = scalar_lea.vmem [#allocation4], 32
          %v3066 = vld [vmem:[%s3065] sm:$0xff]
          %v3067 = vld [vmem:[%s3065 + $0x8] sm:$0xff]
          %v3068 = vld [vmem:[%s3065 + $0x10] sm:$0xff]
          %v3069 = vld [vmem:[%s3065 + $0x18] sm:$0xff]
          %v3070 = vld [vmem:[%s3065 + $0x20] sm:$0xff]
          %v3071 = vld [vmem:[%s3065 + $0x28] sm:$0xff]
          %v3072 = vld [vmem:[%s3065 + $0x30] sm:$0xff]
          %v3073 = vld [vmem:[%s3065 + $0x38] sm:$0xff]
          %v3074 = vld [vmem:[%s3065 + $0x40] sm:$0xff]
          %v3075 = vld [vmem:[%s3065 + $0x48] sm:$0xff]
          %v3076 = vld [vmem:[%s3065 + $0x50] sm:$0xff]
          %v3077 = vld [vmem:[%s3065 + $0x58] sm:$0xff]
          %v3078 = vld [vmem:[%s3065 + $0x60] sm:$0xff]
          %v3079 = vld [vmem:[%s3065 + $0x68] sm:$0xff]
          %v3080 = vld [vmem:[%s3065 + $0x70] sm:$0xff]
          %v3081 = vld [vmem:[%s3065 + $0x78] sm:$0xff]
          %v3082 = vmax.bf16 %v3049, %v3066
          %v3083 = vmax.bf16 %v3050, %v3067
          %v3084 = vmax.bf16 %v3051, %v3068
          %v3085 = vmax.bf16 %v3052, %v3069
          %v3086 = vmax.bf16 %v3053, %v3070
          %v3087 = vmax.bf16 %v3054, %v3071
          %v3088 = vmax.bf16 %v3055, %v3072
          %v3089 = vmax.bf16 %v3056, %v3073
          %v3090 = vmax.bf16 %v3057, %v3074
          %v3091 = vmax.bf16 %v3058, %v3075
          %v3092 = vmax.bf16 %v3059, %v3076
          %v3093 = vmax.bf16 %v3060, %v3077
          %v3094 = vmax.bf16 %v3061, %v3078
          %v3095 = vmax.bf16 %v3062, %v3079
          %v3096 = vmax.bf16 %v3063, %v3080
          %v3097 = vmax.bf16 %v3064, %v3081
          %3098 = vst [vmem:[#allocation2 + $0x8] sm:$0xff] %v3082
          %3099 = vst [vmem:[#allocation2 + $0x28] sm:$0xff] %v3083
          %3100 = vst [vmem:[#allocation2 + $0x48] sm:$0xff] %v3084
          %3101 = vst [vmem:[#allocation2 + $0x68] sm:$0xff] %v3085
          %3102 = vst [vmem:[#allocation2 + $0x88] sm:$0xff] %v3086
          %3103 = vst [vmem:[#allocation2 + $0xa8] sm:$0xff] %v3087
          %3104 = vst [vmem:[#allocation2 + $0xc8] sm:$0xff] %v3088
          %3105 = vst [vmem:[#allocation2 + $0xe8] sm:$0xff] %v3089
          %3106 = vst [vmem:[#allocation2 + $0x108] sm:$0xff] %v3090
          %3107 = vst [vmem:[#allocation2 + $0x128] sm:$0xff] %v3091
          %3108 = vst [vmem:[#allocation2 + $0x148] sm:$0xff] %v3092
          %3109 = vst [vmem:[#allocation2 + $0x168] sm:$0xff] %v3093
          %3110 = vst [vmem:[#allocation2 + $0x188] sm:$0xff] %v3094
          %3111 = vst [vmem:[#allocation2 + $0x1a8] sm:$0xff] %v3095
          %3112 = vst [vmem:[#allocation2 + $0x1c8] sm:$0xff] %v3096
          %3113 = vst [vmem:[#allocation2 + $0x1e8] sm:$0xff] %v3097
          %v3130 = vunpack.c.l.b16 %v3082
          %v3131 = vunpack.c.h.b16 %v3082
          %v3132 = vunpack.c.l.b16 %v3083
          %v3133 = vunpack.c.h.b16 %v3083
          %v3134 = vunpack.c.l.b16 %v3084
          %v3135 = vunpack.c.h.b16 %v3084
          %v3136 = vunpack.c.l.b16 %v3085
          %v3137 = vunpack.c.h.b16 %v3085
          %v3138 = vunpack.c.l.b16 %v3086
          %v3139 = vunpack.c.h.b16 %v3086
          %v3140 = vunpack.c.l.b16 %v3087
          %v3141 = vunpack.c.h.b16 %v3087
          %v3142 = vunpack.c.l.b16 %v3088
          %v3143 = vunpack.c.h.b16 %v3088
          %v3144 = vunpack.c.l.b16 %v3089
          %v3145 = vunpack.c.h.b16 %v3089
          %v3146 = vunpack.c.l.b16 %v3090
          %v3147 = vunpack.c.h.b16 %v3090
          %v3148 = vunpack.c.l.b16 %v3091
          %v3149 = vunpack.c.h.b16 %v3091
          %v3150 = vunpack.c.l.b16 %v3092
          %v3151 = vunpack.c.h.b16 %v3092
          %v3152 = vunpack.c.l.b16 %v3093
          %v3153 = vunpack.c.h.b16 %v3093
          %v3154 = vunpack.c.l.b16 %v3094
          %v3155 = vunpack.c.h.b16 %v3094
          %v3156 = vunpack.c.l.b16 %v3095
          %v3157 = vunpack.c.h.b16 %v3095
          %v3158 = vunpack.c.l.b16 %v3096
          %v3159 = vunpack.c.h.b16 %v3096
          %v3160 = vunpack.c.l.b16 %v3097
          %v3161 = vunpack.c.h.b16 %v3097
          %v3162 = vpack.c.b16 %v3130, %v3130
          %v3163 = vpack.c.b16 %v3131, %v3131
          %v3164 = vpack.c.b16 %v3132, %v3132
          %v3165 = vpack.c.b16 %v3133, %v3133
          %v3166 = vpack.c.b16 %v3134, %v3134
          %v3167 = vpack.c.b16 %v3135, %v3135
          %v3168 = vpack.c.b16 %v3136, %v3136
          %v3169 = vpack.c.b16 %v3137, %v3137
          %v3170 = vpack.c.b16 %v3138, %v3138
          %v3171 = vpack.c.b16 %v3139, %v3139
          %v3172 = vpack.c.b16 %v3140, %v3140
          %v3173 = vpack.c.b16 %v3141, %v3141
          %v3174 = vpack.c.b16 %v3142, %v3142
          %v3175 = vpack.c.b16 %v3143, %v3143
          %v3176 = vpack.c.b16 %v3144, %v3144
          %v3177 = vpack.c.b16 %v3145, %v3145
          %v3178 = vpack.c.b16 %v3146, %v3146
          %v3179 = vpack.c.b16 %v3147, %v3147
          %v3180 = vpack.c.b16 %v3148, %v3148
          %v3181 = vpack.c.b16 %v3149, %v3149
          %v3182 = vpack.c.b16 %v3150, %v3150
          %v3183 = vpack.c.b16 %v3151, %v3151
          %v3184 = vpack.c.b16 %v3152, %v3152
          %v3185 = vpack.c.b16 %v3153, %v3153
          %v3186 = vpack.c.b16 %v3154, %v3154
          %v3187 = vpack.c.b16 %v3155, %v3155
          %v3188 = vpack.c.b16 %v3156, %v3156
          %v3189 = vpack.c.b16 %v3157, %v3157
          %v3190 = vpack.c.b16 %v3158, %v3158
          %v3191 = vpack.c.b16 %v3159, %v3159
          %v3192 = vpack.c.b16 %v3160, %v3160
          %v3193 = vpack.c.b16 %v3161, %v3161
          %v3194 = vrot.slane %v3162, 7
          %v3195 = vrot.slane %v3194, 4
          %v3196 = vrot.slane %v3163, 7
          %v3197 = vsel %vm1241, %v3195, %v3196
          %v3198 = vrot.slane %v3196, 4
          %v3199 = vrot.slane %v3164, 7
          %v3200 = vrot.slane %v3199, 4
          %v3201 = vrot.slane %v3165, 7
          %v3202 = vsel %vm1241, %v3200, %v3201
          %v3203 = vrot.slane %v3201, 4
          %v3204 = vrot.slane %v3166, 7
          %v3205 = vrot.slane %v3204, 4
          %v3206 = vrot.slane %v3167, 7
          %v3207 = vsel %vm1241, %v3205, %v3206
          %v3208 = vrot.slane %v3206, 4
          %v3209 = vrot.slane %v3168, 7
          %v3210 = vrot.slane %v3209, 4
          %v3211 = vrot.slane %v3169, 7
          %v3212 = vsel %vm1241, %v3210, %v3211
          %v3213 = vrot.slane %v3211, 4
          %v3214 = vrot.slane %v3170, 7
          %v3215 = vrot.slane %v3214, 4
          %v3216 = vrot.slane %v3171, 7
          %v3217 = vsel %vm1241, %v3215, %v3216
          %v3218 = vrot.slane %v3216, 4
          %v3219 = vrot.slane %v3172, 7
          %v3220 = vrot.slane %v3219, 4
          %v3221 = vrot.slane %v3173, 7
          %v3222 = vsel %vm1241, %v3220, %v3221
          %v3223 = vrot.slane %v3221, 4
          %v3224 = vrot.slane %v3174, 7
          %v3225 = vrot.slane %v3224, 4
          %v3226 = vrot.slane %v3175, 7
          %v3227 = vsel %vm1241, %v3225, %v3226
          %v3228 = vrot.slane %v3226, 4
          %v3229 = vrot.slane %v3176, 7
          %v3230 = vrot.slane %v3229, 4
          %v3231 = vrot.slane %v3177, 7
          %v3232 = vsel %vm1241, %v3230, %v3231
          %v3233 = vrot.slane %v3231, 4
          %v3234 = vrot.slane %v3178, 7
          %v3235 = vrot.slane %v3234, 4
          %v3236 = vrot.slane %v3179, 7
          %v3237 = vsel %vm1241, %v3235, %v3236
          %v3238 = vrot.slane %v3236, 4
          %v3239 = vrot.slane %v3180, 7
          %v3240 = vrot.slane %v3239, 4
          %v3241 = vrot.slane %v3181, 7
          %v3242 = vsel %vm1241, %v3240, %v3241
          %v3243 = vrot.slane %v3241, 4
          %v3244 = vrot.slane %v3182, 7
          %v3245 = vrot.slane %v3244, 4
          %v3246 = vrot.slane %v3183, 7
          %v3247 = vsel %vm1241, %v3245, %v3246
          %v3248 = vrot.slane %v3246, 4
          %v3249 = vrot.slane %v3184, 7
          %v3250 = vrot.slane %v3249, 4
          %v3251 = vrot.slane %v3185, 7
          %v3252 = vsel %vm1241, %v3250, %v3251
          %v3253 = vrot.slane %v3251, 4
          %v3254 = vrot.slane %v3186, 7
          %v3255 = vrot.slane %v3254, 4
          %v3256 = vrot.slane %v3187, 7
          %v3257 = vsel %vm1241, %v3255, %v3256
          %v3258 = vrot.slane %v3256, 4
          %v3259 = vrot.slane %v3188, 7
          %v3260 = vrot.slane %v3259, 4
          %v3261 = vrot.slane %v3189, 7
          %v3262 = vsel %vm1241, %v3260, %v3261
          %v3263 = vrot.slane %v3261, 4
          %v3264 = vrot.slane %v3190, 7
          %v3265 = vrot.slane %v3264, 4
          %v3266 = vrot.slane %v3191, 7
          %v3267 = vsel %vm1241, %v3265, %v3266
          %v3268 = vrot.slane %v3266, 4
          %v3269 = vrot.slane %v3192, 7
          %v3270 = vrot.slane %v3269, 4
          %v3271 = vrot.slane %v3193, 7
          %v3272 = vsel %vm1241, %v3270, %v3271
          %v3273 = vrot.slane %v3271, 4
          %3322 = vst [vmem:[#allocation3] sm:$0xe] %v3194
          %3323 = vst [vmem:[#allocation3 + $0x4] sm:$0xf] %v3197
          %3324 = vst [vmem:[#allocation3 + $0x8] sm:$0x1] %v3198
          %3325 = vst [vmem:[#allocation3 + $0xc] sm:$0xe] %v3199
          %3326 = vst [vmem:[#allocation3 + $0x10] sm:$0xf] %v3202
          %3327 = vst [vmem:[#allocation3 + $0x14] sm:$0x1] %v3203
          %3328 = vst [vmem:[#allocation3 + $0x18] sm:$0xe] %v3204
          %3329 = vst [vmem:[#allocation3 + $0x1c] sm:$0xf] %v3207
          %3330 = vst [vmem:[#allocation3 + $0x20] sm:$0x1] %v3208
          %3331 = vst [vmem:[#allocation3 + $0x24] sm:$0xe] %v3209
          %3332 = vst [vmem:[#allocation3 + $0x28] sm:$0xf] %v3212
          %3333 = vst [vmem:[#allocation3 + $0x2c] sm:$0x1] %v3213
          %3334 = vst [vmem:[#allocation3 + $0x30] sm:$0xe] %v3214
          %3335 = vst [vmem:[#allocation3 + $0x34] sm:$0xf] %v3217
          %3336 = vst [vmem:[#allocation3 + $0x38] sm:$0x1] %v3218
          %3337 = vst [vmem:[#allocation3 + $0x3c] sm:$0xe] %v3219
          %3338 = vst [vmem:[#allocation3 + $0x40] sm:$0xf] %v3222
          %3339 = vst [vmem:[#allocation3 + $0x44] sm:$0x1] %v3223
          %3340 = vst [vmem:[#allocation3 + $0x48] sm:$0xe] %v3224
          %3341 = vst [vmem:[#allocation3 + $0x4c] sm:$0xf] %v3227
          %3342 = vst [vmem:[#allocation3 + $0x50] sm:$0x1] %v3228
          %3343 = vst [vmem:[#allocation3 + $0x54] sm:$0xe] %v3229
          %3344 = vst [vmem:[#allocation3 + $0x58] sm:$0xf] %v3232
          %3345 = vst [vmem:[#allocation3 + $0x5c] sm:$0x1] %v3233
          %3346 = vst [vmem:[#allocation3 + $0x60] sm:$0xe] %v3234
          %3347 = vst [vmem:[#allocation3 + $0x64] sm:$0xf] %v3237
          %3348 = vst [vmem:[#allocation3 + $0x68] sm:$0x1] %v3238
          %3349 = vst [vmem:[#allocation3 + $0x6c] sm:$0xe] %v3239
          %3350 = vst [vmem:[#allocation3 + $0x70] sm:$0xf] %v3242
          %3351 = vst [vmem:[#allocation3 + $0x74] sm:$0x1] %v3243
          %3352 = vst [vmem:[#allocation3 + $0x78] sm:$0xe] %v3244
          %3353 = vst [vmem:[#allocation3 + $0x7c] sm:$0xf] %v3247
          %3354 = vst [vmem:[#allocation3 + $0x80] sm:$0x1] %v3248
          %3355 = vst [vmem:[#allocation3 + $0x84] sm:$0xe] %v3249
          %3356 = vst [vmem:[#allocation3 + $0x88] sm:$0xf] %v3252
          %3357 = vst [vmem:[#allocation3 + $0x8c] sm:$0x1] %v3253
          %3358 = vst [vmem:[#allocation3 + $0x90] sm:$0xe] %v3254
          %3359 = vst [vmem:[#allocation3 + $0x94] sm:$0xf] %v3257
          %3360 = vst [vmem:[#allocation3 + $0x98] sm:$0x1] %v3258
          %3361 = vst [vmem:[#allocation3 + $0x9c] sm:$0xe] %v3259
          %3362 = vst [vmem:[#allocation3 + $0xa0] sm:$0xf] %v3262
          %3363 = vst [vmem:[#allocation3 + $0xa4] sm:$0x1] %v3263
          %3364 = vst [vmem:[#allocation3 + $0xa8] sm:$0xe] %v3264
          %3365 = vst [vmem:[#allocation3 + $0xac] sm:$0xf] %v3267
          %3366 = vst [vmem:[#allocation3 + $0xb0] sm:$0x1] %v3268
          %3367 = vst [vmem:[#allocation3 + $0xb4] sm:$0xe] %v3269
          %3368 = vst [vmem:[#allocation3 + $0xb8] sm:$0xf] %v3272
          %3369 = vst [vmem:[#allocation3 + $0xbc] sm:$0x1] %v3273
          %v3370 = vld [vmem:[#allocation3] sm:$0xf]
          %v3371 = vld [vmem:[#allocation3 + $0x4] sm:$0xf]
          %v3372 = vld [vmem:[#allocation3 + $0xc] sm:$0xf]
          %v3373 = vld [vmem:[#allocation3 + $0x10] sm:$0xf]
          %v3374 = vld [vmem:[#allocation3 + $0x18] sm:$0xf]
          %v3375 = vld [vmem:[#allocation3 + $0x1c] sm:$0xf]
          %v3376 = vld [vmem:[#allocation3 + $0x24] sm:$0xf]
          %v3377 = vld [vmem:[#allocation3 + $0x28] sm:$0xf]
          %v3378 = vld [vmem:[#allocation3 + $0x30] sm:$0xf]
          %v3379 = vld [vmem:[#allocation3 + $0x34] sm:$0xf]
          %v3380 = vld [vmem:[#allocation3 + $0x3c] sm:$0xf]
          %v3381 = vld [vmem:[#allocation3 + $0x40] sm:$0xf]
          %v3382 = vld [vmem:[#allocation3 + $0x48] sm:$0xf]
          %v3383 = vld [vmem:[#allocation3 + $0x4c] sm:$0xf]
          %v3384 = vld [vmem:[#allocation3 + $0x54] sm:$0xf]
          %v3385 = vld [vmem:[#allocation3 + $0x58] sm:$0xf]
          %v3386 = vld [vmem:[#allocation3 + $0x60] sm:$0xf]
          %v3387 = vld [vmem:[#allocation3 + $0x64] sm:$0xf]
          %v3388 = vld [vmem:[#allocation3 + $0x6c] sm:$0xf]
          %v3389 = vld [vmem:[#allocation3 + $0x70] sm:$0xf]
          %v3390 = vld [vmem:[#allocation3 + $0x78] sm:$0xf]
          %v3391 = vld [vmem:[#allocation3 + $0x7c] sm:$0xf]
          %v3392 = vld [vmem:[#allocation3 + $0x84] sm:$0xf]
          %v3393 = vld [vmem:[#allocation3 + $0x88] sm:$0xf]
          %v3394 = vld [vmem:[#allocation3 + $0x90] sm:$0xf]
          %v3395 = vld [vmem:[#allocation3 + $0x94] sm:$0xf]
          %v3396 = vld [vmem:[#allocation3 + $0x9c] sm:$0xf]
          %v3397 = vld [vmem:[#allocation3 + $0xa0] sm:$0xf]
          %v3398 = vld [vmem:[#allocation3 + $0xa8] sm:$0xf]
          %v3399 = vld [vmem:[#allocation3 + $0xac] sm:$0xf]
          %v3400 = vld [vmem:[#allocation3 + $0xb4] sm:$0xf]
          %v3401 = vld [vmem:[#allocation3 + $0xb8] sm:$0xf]
          %v3402 = vld [vmem:[#allocation3 + $0x8] sm:$0x1]
          %v3403 = vld [vmem:[#allocation3 + $0x14] sm:$0x1]
          %v3404 = vld [vmem:[#allocation3 + $0x20] sm:$0x1]
          %v3405 = vld [vmem:[#allocation3 + $0x2c] sm:$0x1]
          %v3406 = vld [vmem:[#allocation3 + $0x38] sm:$0x1]
          %v3407 = vld [vmem:[#allocation3 + $0x44] sm:$0x1]
          %v3408 = vld [vmem:[#allocation3 + $0x50] sm:$0x1]
          %v3409 = vld [vmem:[#allocation3 + $0x5c] sm:$0x1]
          %v3410 = vld [vmem:[#allocation3 + $0x68] sm:$0x1]
          %v3411 = vld [vmem:[#allocation3 + $0x74] sm:$0x1]
          %v3412 = vld [vmem:[#allocation3 + $0x80] sm:$0x1]
          %v3413 = vld [vmem:[#allocation3 + $0x8c] sm:$0x1]
          %v3414 = vld [vmem:[#allocation3 + $0x98] sm:$0x1]
          %v3415 = vld [vmem:[#allocation3 + $0xa4] sm:$0x1]
          %v3416 = vld [vmem:[#allocation3 + $0xb0] sm:$0x1]
          %v3417 = vld [vmem:[#allocation3 + $0xbc] sm:$0x1]
          %v3419 = vshrl.u32 %v3370, 16
          %v3421 = vrot.slane %v3419, 4
          %v3422 = vshll.u32 %v3370, 16
          %v3424 = vrot.slane %v3422, 5
          %v3425 = vor.u32 %v3421, %v3424
          %v3426 = vrot.slane %v3425, 4
          %v3428 = vshll.u32 %v3371, 16
          %v3430 = vrot.slane %v3428, 5
          %v3431 = vsel %vm1468, %v3426, %v3430
          %v3432 = vshrl.u32 %v3371, 16
          %v3434 = vrot.slane %v3432, 4
          %v3435 = vor.u32 %v3434, %v3430
          %v3436 = vrot.slane %v3435, 4
          %v3438 = vshll.u32 %v3402, 16
          %v3440 = vrot.slane %v3438, 5
          %v3441 = vsel %vm1468, %v3436, %v3440
          %v3443 = vshrl.u32 %v3372, 16
          %v3445 = vrot.slane %v3443, 4
          %v3446 = vshll.u32 %v3372, 16
          %v3448 = vrot.slane %v3446, 5
          %v3449 = vor.u32 %v3445, %v3448
          %v3450 = vrot.slane %v3449, 4
          %v3452 = vshll.u32 %v3373, 16
          %v3454 = vrot.slane %v3452, 5
          %v3455 = vsel %vm1468, %v3450, %v3454
          %v3456 = vshrl.u32 %v3373, 16
          %v3458 = vrot.slane %v3456, 4
          %v3459 = vor.u32 %v3458, %v3454
          %v3460 = vrot.slane %v3459, 4
          %v3462 = vshll.u32 %v3403, 16
          %v3464 = vrot.slane %v3462, 5
          %v3465 = vsel %vm1468, %v3460, %v3464
          %v3467 = vshrl.u32 %v3374, 16
          %v3469 = vrot.slane %v3467, 4
          %v3470 = vshll.u32 %v3374, 16
          %v3472 = vrot.slane %v3470, 5
          %v3473 = vor.u32 %v3469, %v3472
          %v3474 = vrot.slane %v3473, 4
          %v3476 = vshll.u32 %v3375, 16
          %v3478 = vrot.slane %v3476, 5
          %v3479 = vsel %vm1468, %v3474, %v3478
          %v3480 = vshrl.u32 %v3375, 16
          %v3482 = vrot.slane %v3480, 4
          %v3483 = vor.u32 %v3482, %v3478
          %v3484 = vrot.slane %v3483, 4
          %v3486 = vshll.u32 %v3404, 16
          %v3488 = vrot.slane %v3486, 5
          %v3489 = vsel %vm1468, %v3484, %v3488
          %v3491 = vshrl.u32 %v3376, 16
          %v3493 = vrot.slane %v3491, 4
          %v3494 = vshll.u32 %v3376, 16
          %v3496 = vrot.slane %v3494, 5
          %v3497 = vor.u32 %v3493, %v3496
          %v3498 = vrot.slane %v3497, 4
          %v3500 = vshll.u32 %v3377, 16
          %v3502 = vrot.slane %v3500, 5
          %v3503 = vsel %vm1468, %v3498, %v3502
          %v3504 = vshrl.u32 %v3377, 16
          %v3506 = vrot.slane %v3504, 4
          %v3507 = vor.u32 %v3506, %v3502
          %v3508 = vrot.slane %v3507, 4
          %v3510 = vshll.u32 %v3405, 16
          %v3512 = vrot.slane %v3510, 5
          %v3513 = vsel %vm1468, %v3508, %v3512
          %v3515 = vshrl.u32 %v3378, 16
          %v3517 = vrot.slane %v3515, 4
          %v3518 = vshll.u32 %v3378, 16
          %v3520 = vrot.slane %v3518, 5
          %v3521 = vor.u32 %v3517, %v3520
          %v3522 = vrot.slane %v3521, 4
          %v3524 = vshll.u32 %v3379, 16
          %v3526 = vrot.slane %v3524, 5
          %v3527 = vsel %vm1468, %v3522, %v3526
          %v3528 = vshrl.u32 %v3379, 16
          %v3530 = vrot.slane %v3528, 4
          %v3531 = vor.u32 %v3530, %v3526
          %v3532 = vrot.slane %v3531, 4
          %v3534 = vshll.u32 %v3406, 16
          %v3536 = vrot.slane %v3534, 5
          %v3537 = vsel %vm1468, %v3532, %v3536
          %v3539 = vshrl.u32 %v3380, 16
          %v3541 = vrot.slane %v3539, 4
          %v3542 = vshll.u32 %v3380, 16
          %v3544 = vrot.slane %v3542, 5
          %v3545 = vor.u32 %v3541, %v3544
          %v3546 = vrot.slane %v3545, 4
          %v3548 = vshll.u32 %v3381, 16
          %v3550 = vrot.slane %v3548, 5
          %v3551 = vsel %vm1468, %v3546, %v3550
          %v3552 = vshrl.u32 %v3381, 16
          %v3554 = vrot.slane %v3552, 4
          %v3555 = vor.u32 %v3554, %v3550
          %v3556 = vrot.slane %v3555, 4
          %v3558 = vshll.u32 %v3407, 16
          %v3560 = vrot.slane %v3558, 5
          %v3561 = vsel %vm1468, %v3556, %v3560
          %v3563 = vshrl.u32 %v3382, 16
          %v3565 = vrot.slane %v3563, 4
          %v3566 = vshll.u32 %v3382, 16
          %v3568 = vrot.slane %v3566, 5
          %v3569 = vor.u32 %v3565, %v3568
          %v3570 = vrot.slane %v3569, 4
          %v3572 = vshll.u32 %v3383, 16
          %v3574 = vrot.slane %v3572, 5
          %v3575 = vsel %vm1468, %v3570, %v3574
          %v3576 = vshrl.u32 %v3383, 16
          %v3578 = vrot.slane %v3576, 4
          %v3579 = vor.u32 %v3578, %v3574
          %v3580 = vrot.slane %v3579, 4
          %v3582 = vshll.u32 %v3408, 16
          %v3584 = vrot.slane %v3582, 5
          %v3585 = vsel %vm1468, %v3580, %v3584
          %v3587 = vshrl.u32 %v3384, 16
          %v3589 = vrot.slane %v3587, 4
          %v3590 = vshll.u32 %v3384, 16
          %v3592 = vrot.slane %v3590, 5
          %v3593 = vor.u32 %v3589, %v3592
          %v3594 = vrot.slane %v3593, 4
          %v3596 = vshll.u32 %v3385, 16
          %v3598 = vrot.slane %v3596, 5
          %v3599 = vsel %vm1468, %v3594, %v3598
          %v3600 = vshrl.u32 %v3385, 16
          %v3602 = vrot.slane %v3600, 4
          %v3603 = vor.u32 %v3602, %v3598
          %v3604 = vrot.slane %v3603, 4
          %v3606 = vshll.u32 %v3409, 16
          %v3608 = vrot.slane %v3606, 5
          %v3609 = vsel %vm1468, %v3604, %v3608
          %v3611 = vshrl.u32 %v3386, 16
          %v3613 = vrot.slane %v3611, 4
          %v3614 = vshll.u32 %v3386, 16
          %v3616 = vrot.slane %v3614, 5
          %v3617 = vor.u32 %v3613, %v3616
          %v3618 = vrot.slane %v3617, 4
          %v3620 = vshll.u32 %v3387, 16
          %v3622 = vrot.slane %v3620, 5
          %v3623 = vsel %vm1468, %v3618, %v3622
          %v3624 = vshrl.u32 %v3387, 16
          %v3626 = vrot.slane %v3624, 4
          %v3627 = vor.u32 %v3626, %v3622
          %v3628 = vrot.slane %v3627, 4
          %v3630 = vshll.u32 %v3410, 16
          %v3632 = vrot.slane %v3630, 5
          %v3633 = vsel %vm1468, %v3628, %v3632
          %v3635 = vshrl.u32 %v3388, 16
          %v3637 = vrot.slane %v3635, 4
          %v3638 = vshll.u32 %v3388, 16
          %v3640 = vrot.slane %v3638, 5
          %v3641 = vor.u32 %v3637, %v3640
          %v3642 = vrot.slane %v3641, 4
          %v3644 = vshll.u32 %v3389, 16
          %v3646 = vrot.slane %v3644, 5
          %v3647 = vsel %vm1468, %v3642, %v3646
          %v3648 = vshrl.u32 %v3389, 16
          %v3650 = vrot.slane %v3648, 4
          %v3651 = vor.u32 %v3650, %v3646
          %v3652 = vrot.slane %v3651, 4
          %v3654 = vshll.u32 %v3411, 16
          %v3656 = vrot.slane %v3654, 5
          %v3657 = vsel %vm1468, %v3652, %v3656
          %v3659 = vshrl.u32 %v3390, 16
          %v3661 = vrot.slane %v3659, 4
          %v3662 = vshll.u32 %v3390, 16
          %v3664 = vrot.slane %v3662, 5
          %v3665 = vor.u32 %v3661, %v3664
          %v3666 = vrot.slane %v3665, 4
          %v3668 = vshll.u32 %v3391, 16
          %v3670 = vrot.slane %v3668, 5
          %v3671 = vsel %vm1468, %v3666, %v3670
          %v3672 = vshrl.u32 %v3391, 16
          %v3674 = vrot.slane %v3672, 4
          %v3675 = vor.u32 %v3674, %v3670
          %v3676 = vrot.slane %v3675, 4
          %v3678 = vshll.u32 %v3412, 16
          %v3680 = vrot.slane %v3678, 5
          %v3681 = vsel %vm1468, %v3676, %v3680
          %v3683 = vshrl.u32 %v3392, 16
          %v3685 = vrot.slane %v3683, 4
          %v3686 = vshll.u32 %v3392, 16
          %v3688 = vrot.slane %v3686, 5
          %v3689 = vor.u32 %v3685, %v3688
          %v3690 = vrot.slane %v3689, 4
          %v3692 = vshll.u32 %v3393, 16
          %v3694 = vrot.slane %v3692, 5
          %v3695 = vsel %vm1468, %v3690, %v3694
          %v3696 = vshrl.u32 %v3393, 16
          %v3698 = vrot.slane %v3696, 4
          %v3699 = vor.u32 %v3698, %v3694
          %v3700 = vrot.slane %v3699, 4
          %v3702 = vshll.u32 %v3413, 16
          %v3704 = vrot.slane %v3702, 5
          %v3705 = vsel %vm1468, %v3700, %v3704
          %v3707 = vshrl.u32 %v3394, 16
          %v3709 = vrot.slane %v3707, 4
          %v3710 = vshll.u32 %v3394, 16
          %v3712 = vrot.slane %v3710, 5
          %v3713 = vor.u32 %v3709, %v3712
          %v3714 = vrot.slane %v3713, 4
          %v3716 = vshll.u32 %v3395, 16
          %v3718 = vrot.slane %v3716, 5
          %v3719 = vsel %vm1468, %v3714, %v3718
          %v3720 = vshrl.u32 %v3395, 16
          %v3722 = vrot.slane %v3720, 4
          %v3723 = vor.u32 %v3722, %v3718
          %v3724 = vrot.slane %v3723, 4
          %v3726 = vshll.u32 %v3414, 16
          %v3728 = vrot.slane %v3726, 5
          %v3729 = vsel %vm1468, %v3724, %v3728
          %v3731 = vshrl.u32 %v3396, 16
          %v3733 = vrot.slane %v3731, 4
          %v3734 = vshll.u32 %v3396, 16
          %v3736 = vrot.slane %v3734, 5
          %v3737 = vor.u32 %v3733, %v3736
          %v3738 = vrot.slane %v3737, 4
          %v3740 = vshll.u32 %v3397, 16
          %v3742 = vrot.slane %v3740, 5
          %v3743 = vsel %vm1468, %v3738, %v3742
          %v3744 = vshrl.u32 %v3397, 16
          %v3746 = vrot.slane %v3744, 4
          %v3747 = vor.u32 %v3746, %v3742
          %v3748 = vrot.slane %v3747, 4
          %v3750 = vshll.u32 %v3415, 16
          %v3752 = vrot.slane %v3750, 5
          %v3753 = vsel %vm1468, %v3748, %v3752
          %v3755 = vshrl.u32 %v3398, 16
          %v3757 = vrot.slane %v3755, 4
          %v3758 = vshll.u32 %v3398, 16
          %v3760 = vrot.slane %v3758, 5
          %v3761 = vor.u32 %v3757, %v3760
          %v3762 = vrot.slane %v3761, 4
          %v3764 = vshll.u32 %v3399, 16
          %v3766 = vrot.slane %v3764, 5
          %v3767 = vsel %vm1468, %v3762, %v3766
          %v3768 = vshrl.u32 %v3399, 16
          %v3770 = vrot.slane %v3768, 4
          %v3771 = vor.u32 %v3770, %v3766
          %v3772 = vrot.slane %v3771, 4
          %v3774 = vshll.u32 %v3416, 16
          %v3776 = vrot.slane %v3774, 5
          %v3777 = vsel %vm1468, %v3772, %v3776
          %v3779 = vshrl.u32 %v3400, 16
          %v3781 = vrot.slane %v3779, 4
          %v3782 = vshll.u32 %v3400, 16
          %v3784 = vrot.slane %v3782, 5
          %v3785 = vor.u32 %v3781, %v3784
          %v3786 = vrot.slane %v3785, 4
          %v3788 = vshll.u32 %v3401, 16
          %v3790 = vrot.slane %v3788, 5
          %v3791 = vsel %vm1468, %v3786, %v3790
          %v3792 = vshrl.u32 %v3401, 16
          %v3794 = vrot.slane %v3792, 4
          %v3795 = vor.u32 %v3794, %v3790
          %v3796 = vrot.slane %v3795, 4
          %v3798 = vshll.u32 %v3417, 16
          %v3800 = vrot.slane %v3798, 5
          %v3801 = vsel %vm1468, %v3796, %v3800
          %v3834 = vmax.bf16 %v3370, %v3431
          %v3835 = vmax.bf16 %v3371, %v3441
          %v3836 = vmax.bf16 %v3372, %v3455
          %v3837 = vmax.bf16 %v3373, %v3465
          %v3838 = vmax.bf16 %v3374, %v3479
          %v3839 = vmax.bf16 %v3375, %v3489
          %v3840 = vmax.bf16 %v3376, %v3503
          %v3841 = vmax.bf16 %v3377, %v3513
          %v3842 = vmax.bf16 %v3378, %v3527
          %v3843 = vmax.bf16 %v3379, %v3537
          %v3844 = vmax.bf16 %v3380, %v3551
          %v3845 = vmax.bf16 %v3381, %v3561
          %v3846 = vmax.bf16 %v3382, %v3575
          %v3847 = vmax.bf16 %v3383, %v3585
          %v3848 = vmax.bf16 %v3384, %v3599
          %v3849 = vmax.bf16 %v3385, %v3609
          %v3850 = vmax.bf16 %v3386, %v3623
          %v3851 = vmax.bf16 %v3387, %v3633
          %v3852 = vmax.bf16 %v3388, %v3647
          %v3853 = vmax.bf16 %v3389, %v3657
          %v3854 = vmax.bf16 %v3390, %v3671
          %v3855 = vmax.bf16 %v3391, %v3681
          %v3856 = vmax.bf16 %v3392, %v3695
          %v3857 = vmax.bf16 %v3393, %v3705
          %v3858 = vmax.bf16 %v3394, %v3719
          %v3859 = vmax.bf16 %v3395, %v3729
          %v3860 = vmax.bf16 %v3396, %v3743
          %v3861 = vmax.bf16 %v3397, %v3753
          %v3862 = vmax.bf16 %v3398, %v3767
          %v3863 = vmax.bf16 %v3399, %v3777
          %v3864 = vmax.bf16 %v3400, %v3791
          %v3865 = vmax.bf16 %v3401, %v3801
          %v3866 = vld [vmem:[#allocation3] sm:$0xe]
          %v3867 = vld [vmem:[#allocation3 + $0xc] sm:$0xe]
          %v3868 = vld [vmem:[#allocation3 + $0x18] sm:$0xe]
          %v3869 = vld [vmem:[#allocation3 + $0x24] sm:$0xe]
          %v3870 = vld [vmem:[#allocation3 + $0x30] sm:$0xe]
          %v3871 = vld [vmem:[#allocation3 + $0x3c] sm:$0xe]
          %v3872 = vld [vmem:[#allocation3 + $0x48] sm:$0xe]
          %v3873 = vld [vmem:[#allocation3 + $0x54] sm:$0xe]
          %v3874 = vld [vmem:[#allocation3 + $0x60] sm:$0xe]
          %v3875 = vld [vmem:[#allocation3 + $0x6c] sm:$0xe]
          %v3876 = vld [vmem:[#allocation3 + $0x78] sm:$0xe]
          %v3877 = vld [vmem:[#allocation3 + $0x84] sm:$0xe]
          %v3878 = vld [vmem:[#allocation3 + $0x90] sm:$0xe]
          %v3879 = vld [vmem:[#allocation3 + $0x9c] sm:$0xe]
          %v3880 = vld [vmem:[#allocation3 + $0xa8] sm:$0xe]
          %v3881 = vld [vmem:[#allocation3 + $0xb4] sm:$0xe]
          %v3930 = vrot.slane %v3866, 5
          %v3931 = vrot.slane %v3930, 4
          %v3932 = vrot.slane %v3371, 5
          %v3933 = vsel %vm1983, %v3931, %v3932
          %v3934 = vrot.slane %v3932, 4
          %v3935 = vrot.slane %v3402, 5
          %v3936 = vsel %vm1983, %v3934, %v3935
          %v3937 = vrot.slane %v3867, 5
          %v3938 = vrot.slane %v3937, 4
          %v3939 = vrot.slane %v3373, 5
          %v3940 = vsel %vm1983, %v3938, %v3939
          %v3941 = vrot.slane %v3939, 4
          %v3942 = vrot.slane %v3403, 5
          %v3943 = vsel %vm1983, %v3941, %v3942
          %v3944 = vrot.slane %v3868, 5
          %v3945 = vrot.slane %v3944, 4
          %v3946 = vrot.slane %v3375, 5
          %v3947 = vsel %vm1983, %v3945, %v3946
          %v3948 = vrot.slane %v3946, 4
          %v3949 = vrot.slane %v3404, 5
          %v3950 = vsel %vm1983, %v3948, %v3949
          %v3951 = vrot.slane %v3869, 5
          %v3952 = vrot.slane %v3951, 4
          %v3953 = vrot.slane %v3377, 5
          %v3954 = vsel %vm1983, %v3952, %v3953
          %v3955 = vrot.slane %v3953, 4
          %v3956 = vrot.slane %v3405, 5
          %v3957 = vsel %vm1983, %v3955, %v3956
          %v3958 = vrot.slane %v3870, 5
          %v3959 = vrot.slane %v3958, 4
          %v3960 = vrot.slane %v3379, 5
          %v3961 = vsel %vm1983, %v3959, %v3960
          %v3962 = vrot.slane %v3960, 4
          %v3963 = vrot.slane %v3406, 5
          %v3964 = vsel %vm1983, %v3962, %v3963
          %v3965 = vrot.slane %v3871, 5
          %v3966 = vrot.slane %v3965, 4
          %v3967 = vrot.slane %v3381, 5
          %v3968 = vsel %vm1983, %v3966, %v3967
          %v3969 = vrot.slane %v3967, 4
          %v3970 = vrot.slane %v3407, 5
          %v3971 = vsel %vm1983, %v3969, %v3970
          %v3972 = vrot.slane %v3872, 5
          %v3973 = vrot.slane %v3972, 4
          %v3974 = vrot.slane %v3383, 5
          %v3975 = vsel %vm1983, %v3973, %v3974
          %v3976 = vrot.slane %v3974, 4
          %v3977 = vrot.slane %v3408, 5
          %v3978 = vsel %vm1983, %v3976, %v3977
          %v3979 = vrot.slane %v3873, 5
          %v3980 = vrot.slane %v3979, 4
          %v3981 = vrot.slane %v3385, 5
          %v3982 = vsel %vm1983, %v3980, %v3981
          %v3983 = vrot.slane %v3981, 4
          %v3984 = vrot.slane %v3409, 5
          %v3985 = vsel %vm1983, %v3983, %v3984
          %v3986 = vrot.slane %v3874, 5
          %v3987 = vrot.slane %v3986, 4
          %v3988 = vrot.slane %v3387, 5
          %v3989 = vsel %vm1983, %v3987, %v3988
          %v3990 = vrot.slane %v3988, 4
          %v3991 = vrot.slane %v3410, 5
          %v3992 = vsel %vm1983, %v3990, %v3991
          %v3993 = vrot.slane %v3875, 5
          %v3994 = vrot.slane %v3993, 4
          %v3995 = vrot.slane %v3389, 5
          %v3996 = vsel %vm1983, %v3994, %v3995
          %v3997 = vrot.slane %v3995, 4
          %v3998 = vrot.slane %v3411, 5
          %v3999 = vsel %vm1983, %v3997, %v3998
          %v4000 = vrot.slane %v3876, 5
          %v4001 = vrot.slane %v4000, 4
          %v4002 = vrot.slane %v3391, 5
          %v4003 = vsel %vm1983, %v4001, %v4002
          %v4004 = vrot.slane %v4002, 4
          %v4005 = vrot.slane %v3412, 5
          %v4006 = vsel %vm1983, %v4004, %v4005
          %v4007 = vrot.slane %v3877, 5
          %v4008 = vrot.slane %v4007, 4
          %v4009 = vrot.slane %v3393, 5
          %v4010 = vsel %vm1983, %v4008, %v4009
          %v4011 = vrot.slane %v4009, 4
          %v4012 = vrot.slane %v3413, 5
          %v4013 = vsel %vm1983, %v4011, %v4012
          %v4014 = vrot.slane %v3878, 5
          %v4015 = vrot.slane %v4014, 4
          %v4016 = vrot.slane %v3395, 5
          %v4017 = vsel %vm1983, %v4015, %v4016
          %v4018 = vrot.slane %v4016, 4
          %v4019 = vrot.slane %v3414, 5
          %v4020 = vsel %vm1983, %v4018, %v4019
          %v4021 = vrot.slane %v3879, 5
          %v4022 = vrot.slane %v4021, 4
          %v4023 = vrot.slane %v3397, 5
          %v4024 = vsel %vm1983, %v4022, %v4023
          %v4025 = vrot.slane %v4023, 4
          %v4026 = vrot.slane %v3415, 5
          %v4027 = vsel %vm1983, %v4025, %v4026
          %v4028 = vrot.slane %v3880, 5
          %v4029 = vrot.slane %v4028, 4
          %v4030 = vrot.slane %v3399, 5
          %v4031 = vsel %vm1983, %v4029, %v4030
          %v4032 = vrot.slane %v4030, 4
          %v4033 = vrot.slane %v3416, 5
          %v4034 = vsel %vm1983, %v4032, %v4033
          %v4035 = vrot.slane %v3881, 5
          %v4036 = vrot.slane %v4035, 4
          %v4037 = vrot.slane %v3401, 5
          %v4038 = vsel %vm1983, %v4036, %v4037
          %v4039 = vrot.slane %v4037, 4
          %v4040 = vrot.slane %v3417, 5
          %v4041 = vsel %vm1983, %v4039, %v4040
          %v4074 = vmax.bf16 %v3834, %v3933
          %v4075 = vmax.bf16 %v3835, %v3936
          %v4076 = vmax.bf16 %v3836, %v3940
          %v4077 = vmax.bf16 %v3837, %v3943
          %v4078 = vmax.bf16 %v3838, %v3947
          %v4079 = vmax.bf16 %v3839, %v3950
          %v4080 = vmax.bf16 %v3840, %v3954
          %v4081 = vmax.bf16 %v3841, %v3957
          %v4082 = vmax.bf16 %v3842, %v3961
          %v4083 = vmax.bf16 %v3843, %v3964
          %v4084 = vmax.bf16 %v3844, %v3968
          %v4085 = vmax.bf16 %v3845, %v3971
          %v4086 = vmax.bf16 %v3846, %v3975
          %v4087 = vmax.bf16 %v3847, %v3978
          %v4088 = vmax.bf16 %v3848, %v3982
          %v4089 = vmax.bf16 %v3849, %v3985
          %v4090 = vmax.bf16 %v3850, %v3989
          %v4091 = vmax.bf16 %v3851, %v3992
          %v4092 = vmax.bf16 %v3852, %v3996
          %v4093 = vmax.bf16 %v3853, %v3999
          %v4094 = vmax.bf16 %v3854, %v4003
          %v4095 = vmax.bf16 %v3855, %v4006
          %v4096 = vmax.bf16 %v3856, %v4010
          %v4097 = vmax.bf16 %v3857, %v4013
          %v4098 = vmax.bf16 %v3858, %v4017
          %v4099 = vmax.bf16 %v3859, %v4020
          %v4100 = vmax.bf16 %v3860, %v4024
          %v4101 = vmax.bf16 %v3861, %v4027
          %v4102 = vmax.bf16 %v3862, %v4031
          %v4103 = vmax.bf16 %v3863, %v4034
          %v4104 = vmax.bf16 %v3864, %v4038
          %v4105 = vmax.bf16 %v3865, %v4041
          %v4106 = vld [vmem:[#allocation3 + $0x8] sm:$0x3]
          %v4107 = vld [vmem:[#allocation3 + $0x14] sm:$0x3]
          %v4108 = vld [vmem:[#allocation3 + $0x20] sm:$0x3]
          %v4109 = vld [vmem:[#allocation3 + $0x2c] sm:$0x3]
          %v4110 = vld [vmem:[#allocation3 + $0x38] sm:$0x3]
          %v4111 = vld [vmem:[#allocation3 + $0x44] sm:$0x3]
          %v4112 = vld [vmem:[#allocation3 + $0x50] sm:$0x3]
          %v4113 = vld [vmem:[#allocation3 + $0x5c] sm:$0x3]
          %v4114 = vld [vmem:[#allocation3 + $0x68] sm:$0x3]
          %v4115 = vld [vmem:[#allocation3 + $0x74] sm:$0x3]
          %v4116 = vld [vmem:[#allocation3 + $0x80] sm:$0x3]
          %v4117 = vld [vmem:[#allocation3 + $0x8c] sm:$0x3]
          %v4118 = vld [vmem:[#allocation3 + $0x98] sm:$0x3]
          %v4119 = vld [vmem:[#allocation3 + $0xa4] sm:$0x3]
          %v4120 = vld [vmem:[#allocation3 + $0xb0] sm:$0x3]
          %v4121 = vld [vmem:[#allocation3 + $0xbc] sm:$0x3]
          %v4123 = vshrl.u32 %v3866, 16
          %v4125 = vrot.slane %v4123, 5
          %v4126 = vshll.u32 %v3866, 16
          %v4128 = vrot.slane %v4126, 6
          %v4129 = vor.u32 %v4125, %v4128
          %v4130 = vrot.slane %v4129, 4
          %v4131 = vrot.slane %v3432, 5
          %v4132 = vrot.slane %v3428, 6
          %v4133 = vor.u32 %v4131, %v4132
          %v4134 = vsel %vm2178, %v4130, %v4133
          %v4135 = vrot.slane %v4133, 4
          %v4137 = vshrl.u32 %v4106, 16
          %v4139 = vrot.slane %v4137, 5
          %v4140 = vshll.u32 %v4106, 16
          %v4142 = vrot.slane %v4140, 6
          %v4143 = vor.u32 %v4139, %v4142
          %v4144 = vsel %vm2178, %v4135, %v4143
          %v4146 = vshrl.u32 %v3867, 16
          %v4148 = vrot.slane %v4146, 5
          %v4149 = vshll.u32 %v3867, 16
          %v4151 = vrot.slane %v4149, 6
          %v4152 = vor.u32 %v4148, %v4151
          %v4153 = vrot.slane %v4152, 4
          %v4154 = vrot.slane %v3456, 5
          %v4155 = vrot.slane %v3452, 6
          %v4156 = vor.u32 %v4154, %v4155
          %v4157 = vsel %vm2178, %v4153, %v4156
          %v4158 = vrot.slane %v4156, 4
          %v4160 = vshrl.u32 %v4107, 16
          %v4162 = vrot.slane %v4160, 5
          %v4163 = vshll.u32 %v4107, 16
          %v4165 = vrot.slane %v4163, 6
          %v4166 = vor.u32 %v4162, %v4165
          %v4167 = vsel %vm2178, %v4158, %v4166
          %v4169 = vshrl.u32 %v3868, 16
          %v4171 = vrot.slane %v4169, 5
          %v4172 = vshll.u32 %v3868, 16
          %v4174 = vrot.slane %v4172, 6
          %v4175 = vor.u32 %v4171, %v4174
          %v4176 = vrot.slane %v4175, 4
          %v4177 = vrot.slane %v3480, 5
          %v4178 = vrot.slane %v3476, 6
          %v4179 = vor.u32 %v4177, %v4178
          %v4180 = vsel %vm2178, %v4176, %v4179
          %v4181 = vrot.slane %v4179, 4
          %v4183 = vshrl.u32 %v4108, 16
          %v4185 = vrot.slane %v4183, 5
          %v4186 = vshll.u32 %v4108, 16
          %v4188 = vrot.slane %v4186, 6
          %v4189 = vor.u32 %v4185, %v4188
          %v4190 = vsel %vm2178, %v4181, %v4189
          %v4192 = vshrl.u32 %v3869, 16
          %v4194 = vrot.slane %v4192, 5
          %v4195 = vshll.u32 %v3869, 16
          %v4197 = vrot.slane %v4195, 6
          %v4198 = vor.u32 %v4194, %v4197
          %v4199 = vrot.slane %v4198, 4
          %v4200 = vrot.slane %v3504, 5
          %v4201 = vrot.slane %v3500, 6
          %v4202 = vor.u32 %v4200, %v4201
          %v4203 = vsel %vm2178, %v4199, %v4202
          %v4204 = vrot.slane %v4202, 4
          %v4206 = vshrl.u32 %v4109, 16
          %v4208 = vrot.slane %v4206, 5
          %v4209 = vshll.u32 %v4109, 16
          %v4211 = vrot.slane %v4209, 6
          %v4212 = vor.u32 %v4208, %v4211
          %v4213 = vsel %vm2178, %v4204, %v4212
          %v4215 = vshrl.u32 %v3870, 16
          %v4217 = vrot.slane %v4215, 5
          %v4218 = vshll.u32 %v3870, 16
          %v4220 = vrot.slane %v4218, 6
          %v4221 = vor.u32 %v4217, %v4220
          %v4222 = vrot.slane %v4221, 4
          %v4223 = vrot.slane %v3528, 5
          %v4224 = vrot.slane %v3524, 6
          %v4225 = vor.u32 %v4223, %v4224
          %v4226 = vsel %vm2178, %v4222, %v4225
          %v4227 = vrot.slane %v4225, 4
          %v4229 = vshrl.u32 %v4110, 16
          %v4231 = vrot.slane %v4229, 5
          %v4232 = vshll.u32 %v4110, 16
          %v4234 = vrot.slane %v4232, 6
          %v4235 = vor.u32 %v4231, %v4234
          %v4236 = vsel %vm2178, %v4227, %v4235
          %v4238 = vshrl.u32 %v3871, 16
          %v4240 = vrot.slane %v4238, 5
          %v4241 = vshll.u32 %v3871, 16
          %v4243 = vrot.slane %v4241, 6
          %v4244 = vor.u32 %v4240, %v4243
          %v4245 = vrot.slane %v4244, 4
          %v4246 = vrot.slane %v3552, 5
          %v4247 = vrot.slane %v3548, 6
          %v4248 = vor.u32 %v4246, %v4247
          %v4249 = vsel %vm2178, %v4245, %v4248
          %v4250 = vrot.slane %v4248, 4
          %v4252 = vshrl.u32 %v4111, 16
          %v4254 = vrot.slane %v4252, 5
          %v4255 = vshll.u32 %v4111, 16
          %v4257 = vrot.slane %v4255, 6
          %v4258 = vor.u32 %v4254, %v4257
          %v4259 = vsel %vm2178, %v4250, %v4258
          %v4261 = vshrl.u32 %v3872, 16
          %v4263 = vrot.slane %v4261, 5
          %v4264 = vshll.u32 %v3872, 16
          %v4266 = vrot.slane %v4264, 6
          %v4267 = vor.u32 %v4263, %v4266
          %v4268 = vrot.slane %v4267, 4
          %v4269 = vrot.slane %v3576, 5
          %v4270 = vrot.slane %v3572, 6
          %v4271 = vor.u32 %v4269, %v4270
          %v4272 = vsel %vm2178, %v4268, %v4271
          %v4273 = vrot.slane %v4271, 4
          %v4275 = vshrl.u32 %v4112, 16
          %v4277 = vrot.slane %v4275, 5
          %v4278 = vshll.u32 %v4112, 16
          %v4280 = vrot.slane %v4278, 6
          %v4281 = vor.u32 %v4277, %v4280
          %v4282 = vsel %vm2178, %v4273, %v4281
          %v4284 = vshrl.u32 %v3873, 16
          %v4286 = vrot.slane %v4284, 5
          %v4287 = vshll.u32 %v3873, 16
          %v4289 = vrot.slane %v4287, 6
          %v4290 = vor.u32 %v4286, %v4289
          %v4291 = vrot.slane %v4290, 4
          %v4292 = vrot.slane %v3600, 5
          %v4293 = vrot.slane %v3596, 6
          %v4294 = vor.u32 %v4292, %v4293
          %v4295 = vsel %vm2178, %v4291, %v4294
          %v4296 = vrot.slane %v4294, 4
          %v4298 = vshrl.u32 %v4113, 16
          %v4300 = vrot.slane %v4298, 5
          %v4301 = vshll.u32 %v4113, 16
          %v4303 = vrot.slane %v4301, 6
          %v4304 = vor.u32 %v4300, %v4303
          %v4305 = vsel %vm2178, %v4296, %v4304
          %v4307 = vshrl.u32 %v3874, 16
          %v4309 = vrot.slane %v4307, 5
          %v4310 = vshll.u32 %v3874, 16
          %v4312 = vrot.slane %v4310, 6
          %v4313 = vor.u32 %v4309, %v4312
          %v4314 = vrot.slane %v4313, 4
          %v4315 = vrot.slane %v3624, 5
          %v4316 = vrot.slane %v3620, 6
          %v4317 = vor.u32 %v4315, %v4316
          %v4318 = vsel %vm2178, %v4314, %v4317
          %v4319 = vrot.slane %v4317, 4
          %v4321 = vshrl.u32 %v4114, 16
          %v4323 = vrot.slane %v4321, 5
          %v4324 = vshll.u32 %v4114, 16
          %v4326 = vrot.slane %v4324, 6
          %v4327 = vor.u32 %v4323, %v4326
          %v4328 = vsel %vm2178, %v4319, %v4327
          %v4330 = vshrl.u32 %v3875, 16
          %v4332 = vrot.slane %v4330, 5
          %v4333 = vshll.u32 %v3875, 16
          %v4335 = vrot.slane %v4333, 6
          %v4336 = vor.u32 %v4332, %v4335
          %v4337 = vrot.slane %v4336, 4
          %v4338 = vrot.slane %v3648, 5
          %v4339 = vrot.slane %v3644, 6
          %v4340 = vor.u32 %v4338, %v4339
          %v4341 = vsel %vm2178, %v4337, %v4340
          %v4342 = vrot.slane %v4340, 4
          %v4344 = vshrl.u32 %v4115, 16
          %v4346 = vrot.slane %v4344, 5
          %v4347 = vshll.u32 %v4115, 16
          %v4349 = vrot.slane %v4347, 6
          %v4350 = vor.u32 %v4346, %v4349
          %v4351 = vsel %vm2178, %v4342, %v4350
          %v4353 = vshrl.u32 %v3876, 16
          %v4355 = vrot.slane %v4353, 5
          %v4356 = vshll.u32 %v3876, 16
          %v4358 = vrot.slane %v4356, 6
          %v4359 = vor.u32 %v4355, %v4358
          %v4360 = vrot.slane %v4359, 4
          %v4361 = vrot.slane %v3672, 5
          %v4362 = vrot.slane %v3668, 6
          %v4363 = vor.u32 %v4361, %v4362
          %v4364 = vsel %vm2178, %v4360, %v4363
          %v4365 = vrot.slane %v4363, 4
          %v4367 = vshrl.u32 %v4116, 16
          %v4369 = vrot.slane %v4367, 5
          %v4370 = vshll.u32 %v4116, 16
          %v4372 = vrot.slane %v4370, 6
          %v4373 = vor.u32 %v4369, %v4372
          %v4374 = vsel %vm2178, %v4365, %v4373
          %v4376 = vshrl.u32 %v3877, 16
          %v4378 = vrot.slane %v4376, 5
          %v4379 = vshll.u32 %v3877, 16
          %v4381 = vrot.slane %v4379, 6
          %v4382 = vor.u32 %v4378, %v4381
          %v4383 = vrot.slane %v4382, 4
          %v4384 = vrot.slane %v3696, 5
          %v4385 = vrot.slane %v3692, 6
          %v4386 = vor.u32 %v4384, %v4385
          %v4387 = vsel %vm2178, %v4383, %v4386
          %v4388 = vrot.slane %v4386, 4
          %v4390 = vshrl.u32 %v4117, 16
          %v4392 = vrot.slane %v4390, 5
          %v4393 = vshll.u32 %v4117, 16
          %v4395 = vrot.slane %v4393, 6
          %v4396 = vor.u32 %v4392, %v4395
          %v4397 = vsel %vm2178, %v4388, %v4396
          %v4399 = vshrl.u32 %v3878, 16
          %v4401 = vrot.slane %v4399, 5
          %v4402 = vshll.u32 %v3878, 16
          %v4404 = vrot.slane %v4402, 6
          %v4405 = vor.u32 %v4401, %v4404
          %v4406 = vrot.slane %v4405, 4
          %v4407 = vrot.slane %v3720, 5
          %v4408 = vrot.slane %v3716, 6
          %v4409 = vor.u32 %v4407, %v4408
          %v4410 = vsel %vm2178, %v4406, %v4409
          %v4411 = vrot.slane %v4409, 4
          %v4413 = vshrl.u32 %v4118, 16
          %v4415 = vrot.slane %v4413, 5
          %v4416 = vshll.u32 %v4118, 16
          %v4418 = vrot.slane %v4416, 6
          %v4419 = vor.u32 %v4415, %v4418
          %v4420 = vsel %vm2178, %v4411, %v4419
          %v4422 = vshrl.u32 %v3879, 16
          %v4424 = vrot.slane %v4422, 5
          %v4425 = vshll.u32 %v3879, 16
          %v4427 = vrot.slane %v4425, 6
          %v4428 = vor.u32 %v4424, %v4427
          %v4429 = vrot.slane %v4428, 4
          %v4430 = vrot.slane %v3744, 5
          %v4431 = vrot.slane %v3740, 6
          %v4432 = vor.u32 %v4430, %v4431
          %v4433 = vsel %vm2178, %v4429, %v4432
          %v4434 = vrot.slane %v4432, 4
          %v4436 = vshrl.u32 %v4119, 16
          %v4438 = vrot.slane %v4436, 5
          %v4439 = vshll.u32 %v4119, 16
          %v4441 = vrot.slane %v4439, 6
          %v4442 = vor.u32 %v4438, %v4441
          %v4443 = vsel %vm2178, %v4434, %v4442
          %v4445 = vshrl.u32 %v3880, 16
          %v4447 = vrot.slane %v4445, 5
          %v4448 = vshll.u32 %v3880, 16
          %v4450 = vrot.slane %v4448, 6
          %v4451 = vor.u32 %v4447, %v4450
          %v4452 = vrot.slane %v4451, 4
          %v4453 = vrot.slane %v3768, 5
          %v4454 = vrot.slane %v3764, 6
          %v4455 = vor.u32 %v4453, %v4454
          %v4456 = vsel %vm2178, %v4452, %v4455
          %v4457 = vrot.slane %v4455, 4
          %v4459 = vshrl.u32 %v4120, 16
          %v4461 = vrot.slane %v4459, 5
          %v4462 = vshll.u32 %v4120, 16
          %v4464 = vrot.slane %v4462, 6
          %v4465 = vor.u32 %v4461, %v4464
          %v4466 = vsel %vm2178, %v4457, %v4465
          %v4468 = vshrl.u32 %v3881, 16
          %v4470 = vrot.slane %v4468, 5
          %v4471 = vshll.u32 %v3881, 16
          %v4473 = vrot.slane %v4471, 6
          %v4474 = vor.u32 %v4470, %v4473
          %v4475 = vrot.slane %v4474, 4
          %v4476 = vrot.slane %v3792, 5
          %v4477 = vrot.slane %v3788, 6
          %v4478 = vor.u32 %v4476, %v4477
          %v4479 = vsel %vm2178, %v4475, %v4478
          %v4480 = vrot.slane %v4478, 4
          %v4482 = vshrl.u32 %v4121, 16
          %v4484 = vrot.slane %v4482, 5
          %v4485 = vshll.u32 %v4121, 16
          %v4487 = vrot.slane %v4485, 6
          %v4488 = vor.u32 %v4484, %v4487
          %v4489 = vsel %vm2178, %v4480, %v4488
          %v4522 = vmax.bf16 %v4074, %v4134
          %v4523 = vmax.bf16 %v4075, %v4144
          %v4524 = vmax.bf16 %v4076, %v4157
          %v4525 = vmax.bf16 %v4077, %v4167
          %v4526 = vmax.bf16 %v4078, %v4180
          %v4527 = vmax.bf16 %v4079, %v4190
          %v4528 = vmax.bf16 %v4080, %v4203
          %v4529 = vmax.bf16 %v4081, %v4213
          %v4530 = vmax.bf16 %v4082, %v4226
          %v4531 = vmax.bf16 %v4083, %v4236
          %v4532 = vmax.bf16 %v4084, %v4249
          %v4533 = vmax.bf16 %v4085, %v4259
          %v4534 = vmax.bf16 %v4086, %v4272
          %v4535 = vmax.bf16 %v4087, %v4282
          %v4536 = vmax.bf16 %v4088, %v4295
          %v4537 = vmax.bf16 %v4089, %v4305
          %v4538 = vmax.bf16 %v4090, %v4318
          %v4539 = vmax.bf16 %v4091, %v4328
          %v4540 = vmax.bf16 %v4092, %v4341
          %v4541 = vmax.bf16 %v4093, %v4351
          %v4542 = vmax.bf16 %v4094, %v4364
          %v4543 = vmax.bf16 %v4095, %v4374
          %v4544 = vmax.bf16 %v4096, %v4387
          %v4545 = vmax.bf16 %v4097, %v4397
          %v4546 = vmax.bf16 %v4098, %v4410
          %v4547 = vmax.bf16 %v4099, %v4420
          %v4548 = vmax.bf16 %v4100, %v4433
          %v4549 = vmax.bf16 %v4101, %v4443
          %v4550 = vmax.bf16 %v4102, %v4456
          %v4551 = vmax.bf16 %v4103, %v4466
          %v4552 = vmax.bf16 %v4104, %v4479
          %v4553 = vmax.bf16 %v4105, %v4489
          %v4554 = vld [vmem:[#allocation3] sm:$0xc]
          %v4555 = vld [vmem:[#allocation3 + $0xc] sm:$0xc]
          %v4556 = vld [vmem:[#allocation3 + $0x18] sm:$0xc]
          %v4557 = vld [vmem:[#allocation3 + $0x24] sm:$0xc]
          %v4558 = vld [vmem:[#allocation3 + $0x30] sm:$0xc]
          %v4559 = vld [vmem:[#allocation3 + $0x3c] sm:$0xc]
          %v4560 = vld [vmem:[#allocation3 + $0x48] sm:$0xc]
          %v4561 = vld [vmem:[#allocation3 + $0x54] sm:$0xc]
          %v4562 = vld [vmem:[#allocation3 + $0x60] sm:$0xc]
          %v4563 = vld [vmem:[#allocation3 + $0x6c] sm:$0xc]
          %v4564 = vld [vmem:[#allocation3 + $0x78] sm:$0xc]
          %v4565 = vld [vmem:[#allocation3 + $0x84] sm:$0xc]
          %v4566 = vld [vmem:[#allocation3 + $0x90] sm:$0xc]
          %v4567 = vld [vmem:[#allocation3 + $0x9c] sm:$0xc]
          %v4568 = vld [vmem:[#allocation3 + $0xa8] sm:$0xc]
          %v4569 = vld [vmem:[#allocation3 + $0xb4] sm:$0xc]
          %v4602 = vrot.slane %v4554, 6
          %v4603 = vrot.slane %v4602, 4
          %v4604 = vrot.slane %v3371, 6
          %v4605 = vsel %vm2661, %v4603, %v4604
          %v4606 = vrot.slane %v4604, 4
          %v4607 = vrot.slane %v4106, 6
          %v4608 = vsel %vm2661, %v4606, %v4607
          %v4609 = vrot.slane %v4555, 6
          %v4610 = vrot.slane %v4609, 4
          %v4611 = vrot.slane %v3373, 6
          %v4612 = vsel %vm2661, %v4610, %v4611
          %v4613 = vrot.slane %v4611, 4
          %v4614 = vrot.slane %v4107, 6
          %v4615 = vsel %vm2661, %v4613, %v4614
          %v4616 = vrot.slane %v4556, 6
          %v4617 = vrot.slane %v4616, 4
          %v4618 = vrot.slane %v3375, 6
          %v4619 = vsel %vm2661, %v4617, %v4618
          %v4620 = vrot.slane %v4618, 4
          %v4621 = vrot.slane %v4108, 6
          %v4622 = vsel %vm2661, %v4620, %v4621
          %v4623 = vrot.slane %v4557, 6
          %v4624 = vrot.slane %v4623, 4
          %v4625 = vrot.slane %v3377, 6
          %v4626 = vsel %vm2661, %v4624, %v4625
          %v4627 = vrot.slane %v4625, 4
          %v4628 = vrot.slane %v4109, 6
          %v4629 = vsel %vm2661, %v4627, %v4628
          %v4630 = vrot.slane %v4558, 6
          %v4631 = vrot.slane %v4630, 4
          %v4632 = vrot.slane %v3379, 6
          %v4633 = vsel %vm2661, %v4631, %v4632
          %v4634 = vrot.slane %v4632, 4
          %v4635 = vrot.slane %v4110, 6
          %v4636 = vsel %vm2661, %v4634, %v4635
          %v4637 = vrot.slane %v4559, 6
          %v4638 = vrot.slane %v4637, 4
          %v4639 = vrot.slane %v3381, 6
          %v4640 = vsel %vm2661, %v4638, %v4639
          %v4641 = vrot.slane %v4639, 4
          %v4642 = vrot.slane %v4111, 6
          %v4643 = vsel %vm2661, %v4641, %v4642
          %v4644 = vrot.slane %v4560, 6
          %v4645 = vrot.slane %v4644, 4
          %v4646 = vrot.slane %v3383, 6
          %v4647 = vsel %vm2661, %v4645, %v4646
          %v4648 = vrot.slane %v4646, 4
          %v4649 = vrot.slane %v4112, 6
          %v4650 = vsel %vm2661, %v4648, %v4649
          %v4651 = vrot.slane %v4561, 6
          %v4652 = vrot.slane %v4651, 4
          %v4653 = vrot.slane %v3385, 6
          %v4654 = vsel %vm2661, %v4652, %v4653
          %v4655 = vrot.slane %v4653, 4
          %v4656 = vrot.slane %v4113, 6
          %v4657 = vsel %vm2661, %v4655, %v4656
          %v4658 = vrot.slane %v4562, 6
          %v4659 = vrot.slane %v4658, 4
          %v4660 = vrot.slane %v3387, 6
          %v4661 = vsel %vm2661, %v4659, %v4660
          %v4662 = vrot.slane %v4660, 4
          %v4663 = vrot.slane %v4114, 6
          %v4664 = vsel %vm2661, %v4662, %v4663
          %v4665 = vrot.slane %v4563, 6
          %v4666 = vrot.slane %v4665, 4
          %v4667 = vrot.slane %v3389, 6
          %v4668 = vsel %vm2661, %v4666, %v4667
          %v4669 = vrot.slane %v4667, 4
          %v4670 = vrot.slane %v4115, 6
          %v4671 = vsel %vm2661, %v4669, %v4670
          %v4672 = vrot.slane %v4564, 6
          %v4673 = vrot.slane %v4672, 4
          %v4674 = vrot.slane %v3391, 6
          %v4675 = vsel %vm2661, %v4673, %v4674
          %v4676 = vrot.slane %v4674, 4
          %v4677 = vrot.slane %v4116, 6
          %v4678 = vsel %vm2661, %v4676, %v4677
          %v4679 = vrot.slane %v4565, 6
          %v4680 = vrot.slane %v4679, 4
          %v4681 = vrot.slane %v3393, 6
          %v4682 = vsel %vm2661, %v4680, %v4681
          %v4683 = vrot.slane %v4681, 4
          %v4684 = vrot.slane %v4117, 6
          %v4685 = vsel %vm2661, %v4683, %v4684
          %v4686 = vrot.slane %v4566, 6
          %v4687 = vrot.slane %v4686, 4
          %v4688 = vrot.slane %v3395, 6
          %v4689 = vsel %vm2661, %v4687, %v4688
          %v4690 = vrot.slane %v4688, 4
          %v4691 = vrot.slane %v4118, 6
          %v4692 = vsel %vm2661, %v4690, %v4691
          %v4693 = vrot.slane %v4567, 6
          %v4694 = vrot.slane %v4693, 4
          %v4695 = vrot.slane %v3397, 6
          %v4696 = vsel %vm2661, %v4694, %v4695
          %v4697 = vrot.slane %v4695, 4
          %v4698 = vrot.slane %v4119, 6
          %v4699 = vsel %vm2661, %v4697, %v4698
          %v4700 = vrot.slane %v4568, 6
          %v4701 = vrot.slane %v4700, 4
          %v4702 = vrot.slane %v3399, 6
          %v4703 = vsel %vm2661, %v4701, %v4702
          %v4704 = vrot.slane %v4702, 4
          %v4705 = vrot.slane %v4120, 6
          %v4706 = vsel %vm2661, %v4704, %v4705
          %v4707 = vrot.slane %v4569, 6
          %v4708 = vrot.slane %v4707, 4
          %v4709 = vrot.slane %v3401, 6
          %v4710 = vsel %vm2661, %v4708, %v4709
          %v4711 = vrot.slane %v4709, 4
          %v4712 = vrot.slane %v4121, 6
          %v4713 = vsel %vm2661, %v4711, %v4712
          %v4746 = vmax.bf16 %v4522, %v4605
          %v4747 = vmax.bf16 %v4523, %v4608
          %v4748 = vmax.bf16 %v4524, %v4612
          %v4749 = vmax.bf16 %v4525, %v4615
          %v4750 = vmax.bf16 %v4526, %v4619
          %v4751 = vmax.bf16 %v4527, %v4622
          %v4752 = vmax.bf16 %v4528, %v4626
          %v4753 = vmax.bf16 %v4529, %v4629
          %v4754 = vmax.bf16 %v4530, %v4633
          %v4755 = vmax.bf16 %v4531, %v4636
          %v4756 = vmax.bf16 %v4532, %v4640
          %v4757 = vmax.bf16 %v4533, %v4643
          %v4758 = vmax.bf16 %v4534, %v4647
          %v4759 = vmax.bf16 %v4535, %v4650
          %v4760 = vmax.bf16 %v4536, %v4654
          %v4761 = vmax.bf16 %v4537, %v4657
          %v4762 = vmax.bf16 %v4538, %v4661
          %v4763 = vmax.bf16 %v4539, %v4664
          %v4764 = vmax.bf16 %v4540, %v4668
          %v4765 = vmax.bf16 %v4541, %v4671
          %v4766 = vmax.bf16 %v4542, %v4675
          %v4767 = vmax.bf16 %v4543, %v4678
          %v4768 = vmax.bf16 %v4544, %v4682
          %v4769 = vmax.bf16 %v4545, %v4685
          %v4770 = vmax.bf16 %v4546, %v4689
          %v4771 = vmax.bf16 %v4547, %v4692
          %v4772 = vmax.bf16 %v4548, %v4696
          %v4773 = vmax.bf16 %v4549, %v4699
          %v4774 = vmax.bf16 %v4550, %v4703
          %v4775 = vmax.bf16 %v4551, %v4706
          %v4776 = vmax.bf16 %v4552, %v4710
          %v4777 = vmax.bf16 %v4553, %v4713
          %v4810 = vunpack.c.l.b16 %v4746
          %v4811 = vunpack.c.l.b16 %v4747
          %v4812 = vunpack.c.l.b16 %v4748
          %v4813 = vunpack.c.l.b16 %v4749
          %v4814 = vunpack.c.l.b16 %v4750
          %v4815 = vunpack.c.l.b16 %v4751
          %v4816 = vunpack.c.l.b16 %v4752
          %v4817 = vunpack.c.l.b16 %v4753
          %v4818 = vunpack.c.l.b16 %v4754
          %v4819 = vunpack.c.l.b16 %v4755
          %v4820 = vunpack.c.l.b16 %v4756
          %v4821 = vunpack.c.l.b16 %v4757
          %v4822 = vunpack.c.l.b16 %v4758
          %v4823 = vunpack.c.l.b16 %v4759
          %v4824 = vunpack.c.l.b16 %v4760
          %v4825 = vunpack.c.l.b16 %v4761
          %v4826 = vunpack.c.l.b16 %v4762
          %v4827 = vunpack.c.l.b16 %v4763
          %v4828 = vunpack.c.l.b16 %v4764
          %v4829 = vunpack.c.l.b16 %v4765
          %v4830 = vunpack.c.l.b16 %v4766
          %v4831 = vunpack.c.l.b16 %v4767
          %v4832 = vunpack.c.l.b16 %v4768
          %v4833 = vunpack.c.l.b16 %v4769
          %v4834 = vunpack.c.l.b16 %v4770
          %v4835 = vunpack.c.l.b16 %v4771
          %v4836 = vunpack.c.l.b16 %v4772
          %v4837 = vunpack.c.l.b16 %v4773
          %v4838 = vunpack.c.l.b16 %v4774
          %v4839 = vunpack.c.l.b16 %v4775
          %v4840 = vunpack.c.l.b16 %v4776
          %v4841 = vunpack.c.l.b16 %v4777
          %v4842 = vpack.c.b16 %v4811, %v4810
          %v4843 = vpack.c.b16 %v4813, %v4812
          %v4844 = vpack.c.b16 %v4815, %v4814
          %v4845 = vpack.c.b16 %v4817, %v4816
          %v4846 = vpack.c.b16 %v4819, %v4818
          %v4847 = vpack.c.b16 %v4821, %v4820
          %v4848 = vpack.c.b16 %v4823, %v4822
          %v4849 = vpack.c.b16 %v4825, %v4824
          %v4850 = vpack.c.b16 %v4827, %v4826
          %v4851 = vpack.c.b16 %v4829, %v4828
          %v4852 = vpack.c.b16 %v4831, %v4830
          %v4853 = vpack.c.b16 %v4833, %v4832
          %v4854 = vpack.c.b16 %v4835, %v4834
          %v4855 = vpack.c.b16 %v4837, %v4836
          %v4856 = vpack.c.b16 %v4839, %v4838
          %v4857 = vpack.c.b16 %v4841, %v4840
          %4874 = vst [vmem:[%s2934] sm:$0xff] %v4842
          %4875 = vst [vmem:[%s2934 + $0x8] sm:$0xff] %v4843
          %4876 = vst [vmem:[%s2934 + $0x10] sm:$0xff] %v4844
          %4877 = vst [vmem:[%s2934 + $0x18] sm:$0xff] %v4845
          %4878 = vst [vmem:[%s2934 + $0x20] sm:$0xff] %v4846
          %4879 = vst [vmem:[%s2934 + $0x28] sm:$0xff] %v4847
          %4880 = vst [vmem:[%s2934 + $0x30] sm:$0xff] %v4848
          %4881 = vst [vmem:[%s2934 + $0x38] sm:$0xff] %v4849
          %4882 = vst [vmem:[%s2934 + $0x40] sm:$0xff] %v4850
          %4883 = vst [vmem:[%s2934 + $0x48] sm:$0xff] %v4851
          %4884 = vst [vmem:[%s2934 + $0x50] sm:$0xff] %v4852
          %4885 = vst [vmem:[%s2934 + $0x58] sm:$0xff] %v4853
          %4886 = vst [vmem:[%s2934 + $0x60] sm:$0xff] %v4854
          %4887 = vst [vmem:[%s2934 + $0x68] sm:$0xff] %v4855
          %4888 = vst [vmem:[%s2934 + $0x70] sm:$0xff] %v4856
          %4889 = vst [vmem:[%s2934 + $0x78] sm:$0xff] %v4857
          %v4890 = vld [vmem:[#allocation4] sm:$0xff]
          %v4891 = vld [vmem:[#allocation4 + $0x8] sm:$0xff]
          %v4892 = vld [vmem:[#allocation4 + $0x10] sm:$0xff]
          %v4893 = vld [vmem:[#allocation4 + $0x18] sm:$0xff]
          %v4894 = vld [vmem:[#allocation4 + $0x20] sm:$0xff]
          %v4895 = vld [vmem:[#allocation4 + $0x28] sm:$0xff]
          %v4896 = vld [vmem:[#allocation4 + $0x30] sm:$0xff]
          %v4897 = vld [vmem:[#allocation4 + $0x38] sm:$0xff]
          %v4898 = vld [vmem:[#allocation4 + $0x40] sm:$0xff]
          %v4899 = vld [vmem:[#allocation4 + $0x48] sm:$0xff]
          %v4900 = vld [vmem:[#allocation4 + $0x50] sm:$0xff]
          %v4901 = vld [vmem:[#allocation4 + $0x58] sm:$0xff]
          %v4902 = vld [vmem:[#allocation4 + $0x60] sm:$0xff]
          %v4903 = vld [vmem:[#allocation4 + $0x68] sm:$0xff]
          %v4904 = vld [vmem:[#allocation4 + $0x70] sm:$0xff]
          %v4905 = vld [vmem:[#allocation4 + $0x78] sm:$0xff]
          %v4906 = vld [vmem:[%s2967] sm:$0xff]
          %v4907 = vld [vmem:[%s2967 + $0x8] sm:$0xff]
          %v4908 = vld [vmem:[%s2967 + $0x10] sm:$0xff]
          %v4909 = vld [vmem:[%s2967 + $0x18] sm:$0xff]
          %v4910 = vld [vmem:[%s2967 + $0x20] sm:$0xff]
          %v4911 = vld [vmem:[%s2967 + $0x28] sm:$0xff]
          %v4912 = vld [vmem:[%s2967 + $0x30] sm:$0xff]
          %v4913 = vld [vmem:[%s2967 + $0x38] sm:$0xff]
          %v4914 = vld [vmem:[%s2967 + $0x40] sm:$0xff]
          %v4915 = vld [vmem:[%s2967 + $0x48] sm:$0xff]
          %v4916 = vld [vmem:[%s2967 + $0x50] sm:$0xff]
          %v4917 = vld [vmem:[%s2967 + $0x58] sm:$0xff]
          %v4918 = vld [vmem:[%s2967 + $0x60] sm:$0xff]
          %v4919 = vld [vmem:[%s2967 + $0x68] sm:$0xff]
          %v4920 = vld [vmem:[%s2967 + $0x70] sm:$0xff]
          %v4921 = vld [vmem:[%s2967 + $0x78] sm:$0xff]
          %v4922 = vmax.bf16 %v4890, %v4906
          %v4923 = vmax.bf16 %v4891, %v4907
          %v4924 = vmax.bf16 %v4892, %v4908
          %v4925 = vmax.bf16 %v4893, %v4909
          %v4926 = vmax.bf16 %v4894, %v4910
          %v4927 = vmax.bf16 %v4895, %v4911
          %v4928 = vmax.bf16 %v4896, %v4912
          %v4929 = vmax.bf16 %v4897, %v4913
          %v4930 = vmax.bf16 %v4898, %v4914
          %v4931 = vmax.bf16 %v4899, %v4915
          %v4932 = vmax.bf16 %v4900, %v4916
          %v4933 = vmax.bf16 %v4901, %v4917
          %v4934 = vmax.bf16 %v4902, %v4918
          %v4935 = vmax.bf16 %v4903, %v4919
          %v4936 = vmax.bf16 %v4904, %v4920
          %v4937 = vmax.bf16 %v4905, %v4921
          %v4938 = vld [vmem:[%s2934] sm:$0xff]
          %v4939 = vld [vmem:[%s2934 + $0x8] sm:$0xff]
          %v4940 = vld [vmem:[%s2934 + $0x10] sm:$0xff]
          %v4941 = vld [vmem:[%s2934 + $0x18] sm:$0xff]
          %v4942 = vld [vmem:[%s2934 + $0x20] sm:$0xff]
          %v4943 = vld [vmem:[%s2934 + $0x28] sm:$0xff]
          %v4944 = vld [vmem:[%s2934 + $0x30] sm:$0xff]
          %v4945 = vld [vmem:[%s2934 + $0x38] sm:$0xff]
          %v4946 = vld [vmem:[%s2934 + $0x40] sm:$0xff]
          %v4947 = vld [vmem:[%s2934 + $0x48] sm:$0xff]
          %v4948 = vld [vmem:[%s2934 + $0x50] sm:$0xff]
          %v4949 = vld [vmem:[%s2934 + $0x58] sm:$0xff]
          %v4950 = vld [vmem:[%s2934 + $0x60] sm:$0xff]
          %v4951 = vld [vmem:[%s2934 + $0x68] sm:$0xff]
          %v4952 = vld [vmem:[%s2934 + $0x70] sm:$0xff]
          %v4953 = vld [vmem:[%s2934 + $0x78] sm:$0xff]
          %v4954 = vmax.bf16 %v4922, %v4938
          %v4955 = vmax.bf16 %v4923, %v4939
          %v4956 = vmax.bf16 %v4924, %v4940
          %v4957 = vmax.bf16 %v4925, %v4941
          %v4958 = vmax.bf16 %v4926, %v4942
          %v4959 = vmax.bf16 %v4927, %v4943
          %v4960 = vmax.bf16 %v4928, %v4944
          %v4961 = vmax.bf16 %v4929, %v4945
          %v4962 = vmax.bf16 %v4930, %v4946
          %v4963 = vmax.bf16 %v4931, %v4947
          %v4964 = vmax.bf16 %v4932, %v4948
          %v4965 = vmax.bf16 %v4933, %v4949
          %v4966 = vmax.bf16 %v4934, %v4950
          %v4967 = vmax.bf16 %v4935, %v4951
          %v4968 = vmax.bf16 %v4936, %v4952
          %v4969 = vmax.bf16 %v4937, %v4953
          %v4970 = vld [vmem:[%s3032] sm:$0xff]
          %v4971 = vld [vmem:[%s3032 + $0x8] sm:$0xff]
          %v4972 = vld [vmem:[%s3032 + $0x10] sm:$0xff]
          %v4973 = vld [vmem:[%s3032 + $0x18] sm:$0xff]
          %v4974 = vld [vmem:[%s3032 + $0x20] sm:$0xff]
          %v4975 = vld [vmem:[%s3032 + $0x28] sm:$0xff]
          %v4976 = vld [vmem:[%s3032 + $0x30] sm:$0xff]
          %v4977 = vld [vmem:[%s3032 + $0x38] sm:$0xff]
          %v4978 = vld [vmem:[%s3032 + $0x40] sm:$0xff]
          %v4979 = vld [vmem:[%s3032 + $0x48] sm:$0xff]
          %v4980 = vld [vmem:[%s3032 + $0x50] sm:$0xff]
          %v4981 = vld [vmem:[%s3032 + $0x58] sm:$0xff]
          %v4982 = vld [vmem:[%s3032 + $0x60] sm:$0xff]
          %v4983 = vld [vmem:[%s3032 + $0x68] sm:$0xff]
          %v4984 = vld [vmem:[%s3032 + $0x70] sm:$0xff]
          %v4985 = vld [vmem:[%s3032 + $0x78] sm:$0xff]
          %v4986 = vmax.bf16 %v4954, %v4970
          %v4987 = vmax.bf16 %v4955, %v4971
          %v4988 = vmax.bf16 %v4956, %v4972
          %v4989 = vmax.bf16 %v4957, %v4973
          %v4990 = vmax.bf16 %v4958, %v4974
          %v4991 = vmax.bf16 %v4959, %v4975
          %v4992 = vmax.bf16 %v4960, %v4976
          %v4993 = vmax.bf16 %v4961, %v4977
          %v4994 = vmax.bf16 %v4962, %v4978
          %v4995 = vmax.bf16 %v4963, %v4979
          %v4996 = vmax.bf16 %v4964, %v4980
          %v4997 = vmax.bf16 %v4965, %v4981
          %v4998 = vmax.bf16 %v4966, %v4982
          %v4999 = vmax.bf16 %v4967, %v4983
          %v5000 = vmax.bf16 %v4968, %v4984
          %v5001 = vmax.bf16 %v4969, %v4985
          %v5002 = vld [vmem:[%s3065] sm:$0xff]
          %v5003 = vld [vmem:[%s3065 + $0x8] sm:$0xff]
          %v5004 = vld [vmem:[%s3065 + $0x10] sm:$0xff]
          %v5005 = vld [vmem:[%s3065 + $0x18] sm:$0xff]
          %v5006 = vld [vmem:[%s3065 + $0x20] sm:$0xff]
          %v5007 = vld [vmem:[%s3065 + $0x28] sm:$0xff]
          %v5008 = vld [vmem:[%s3065 + $0x30] sm:$0xff]
          %v5009 = vld [vmem:[%s3065 + $0x38] sm:$0xff]
          %v5010 = vld [vmem:[%s3065 + $0x40] sm:$0xff]
          %v5011 = vld [vmem:[%s3065 + $0x48] sm:$0xff]
          %v5012 = vld [vmem:[%s3065 + $0x50] sm:$0xff]
          %v5013 = vld [vmem:[%s3065 + $0x58] sm:$0xff]
          %v5014 = vld [vmem:[%s3065 + $0x60] sm:$0xff]
          %v5015 = vld [vmem:[%s3065 + $0x68] sm:$0xff]
          %v5016 = vld [vmem:[%s3065 + $0x70] sm:$0xff]
          %v5017 = vld [vmem:[%s3065 + $0x78] sm:$0xff]
          %v5018 = vmax.bf16 %v4986, %v5002
          %v5019 = vmax.bf16 %v4987, %v5003
          %v5020 = vmax.bf16 %v4988, %v5004
          %v5021 = vmax.bf16 %v4989, %v5005
          %v5022 = vmax.bf16 %v4990, %v5006
          %v5023 = vmax.bf16 %v4991, %v5007
          %v5024 = vmax.bf16 %v4992, %v5008
          %v5025 = vmax.bf16 %v4993, %v5009
          %v5026 = vmax.bf16 %v4994, %v5010
          %v5027 = vmax.bf16 %v4995, %v5011
          %v5028 = vmax.bf16 %v4996, %v5012
          %v5029 = vmax.bf16 %v4997, %v5013
          %v5030 = vmax.bf16 %v4998, %v5014
          %v5031 = vmax.bf16 %v4999, %v5015
          %v5032 = vmax.bf16 %v5000, %v5016
          %v5033 = vmax.bf16 %v5001, %v5017
          %5034 = vst [vmem:[#allocation2 + $0x10] sm:$0xff] %v5018
          %5035 = vst [vmem:[#allocation2 + $0x30] sm:$0xff] %v5019
          %5036 = vst [vmem:[#allocation2 + $0x50] sm:$0xff] %v5020
          %5037 = vst [vmem:[#allocation2 + $0x70] sm:$0xff] %v5021
          %5038 = vst [vmem:[#allocation2 + $0x90] sm:$0xff] %v5022
          %5039 = vst [vmem:[#allocation2 + $0xb0] sm:$0xff] %v5023
          %5040 = vst [vmem:[#allocation2 + $0xd0] sm:$0xff] %v5024
          %5041 = vst [vmem:[#allocation2 + $0xf0] sm:$0xff] %v5025
          %5042 = vst [vmem:[#allocation2 + $0x110] sm:$0xff] %v5026
          %5043 = vst [vmem:[#allocation2 + $0x130] sm:$0xff] %v5027
          %5044 = vst [vmem:[#allocation2 + $0x150] sm:$0xff] %v5028
          %5045 = vst [vmem:[#allocation2 + $0x170] sm:$0xff] %v5029
          %5046 = vst [vmem:[#allocation2 + $0x190] sm:$0xff] %v5030
          %5047 = vst [vmem:[#allocation2 + $0x1b0] sm:$0xff] %v5031
          %5048 = vst [vmem:[#allocation2 + $0x1d0] sm:$0xff] %v5032
          %5049 = vst [vmem:[#allocation2 + $0x1f0] sm:$0xff] %v5033
          %v5066 = vunpack.c.l.b16 %v5018
          %v5067 = vunpack.c.h.b16 %v5018
          %v5068 = vunpack.c.l.b16 %v5019
          %v5069 = vunpack.c.h.b16 %v5019
          %v5070 = vunpack.c.l.b16 %v5020
          %v5071 = vunpack.c.h.b16 %v5020
          %v5072 = vunpack.c.l.b16 %v5021
          %v5073 = vunpack.c.h.b16 %v5021
          %v5074 = vunpack.c.l.b16 %v5022
          %v5075 = vunpack.c.h.b16 %v5022
          %v5076 = vunpack.c.l.b16 %v5023
          %v5077 = vunpack.c.h.b16 %v5023
          %v5078 = vunpack.c.l.b16 %v5024
          %v5079 = vunpack.c.h.b16 %v5024
          %v5080 = vunpack.c.l.b16 %v5025
          %v5081 = vunpack.c.h.b16 %v5025
          %v5082 = vunpack.c.l.b16 %v5026
          %v5083 = vunpack.c.h.b16 %v5026
          %v5084 = vunpack.c.l.b16 %v5027
          %v5085 = vunpack.c.h.b16 %v5027
          %v5086 = vunpack.c.l.b16 %v5028
          %v5087 = vunpack.c.h.b16 %v5028
          %v5088 = vunpack.c.l.b16 %v5029
          %v5089 = vunpack.c.h.b16 %v5029
          %v5090 = vunpack.c.l.b16 %v5030
          %v5091 = vunpack.c.h.b16 %v5030
          %v5092 = vunpack.c.l.b16 %v5031
          %v5093 = vunpack.c.h.b16 %v5031
          %v5094 = vunpack.c.l.b16 %v5032
          %v5095 = vunpack.c.h.b16 %v5032
          %v5096 = vunpack.c.l.b16 %v5033
          %v5097 = vunpack.c.h.b16 %v5033
          %v5098 = vpack.c.b16 %v5066, %v5066
          %v5099 = vpack.c.b16 %v5067, %v5067
          %v5100 = vpack.c.b16 %v5068, %v5068
          %v5101 = vpack.c.b16 %v5069, %v5069
          %v5102 = vpack.c.b16 %v5070, %v5070
          %v5103 = vpack.c.b16 %v5071, %v5071
          %v5104 = vpack.c.b16 %v5072, %v5072
          %v5105 = vpack.c.b16 %v5073, %v5073
          %v5106 = vpack.c.b16 %v5074, %v5074
          %v5107 = vpack.c.b16 %v5075, %v5075
          %v5108 = vpack.c.b16 %v5076, %v5076
          %v5109 = vpack.c.b16 %v5077, %v5077
          %v5110 = vpack.c.b16 %v5078, %v5078
          %v5111 = vpack.c.b16 %v5079, %v5079
          %v5112 = vpack.c.b16 %v5080, %v5080
          %v5113 = vpack.c.b16 %v5081, %v5081
          %v5114 = vpack.c.b16 %v5082, %v5082
          %v5115 = vpack.c.b16 %v5083, %v5083
          %v5116 = vpack.c.b16 %v5084, %v5084
          %v5117 = vpack.c.b16 %v5085, %v5085
          %v5118 = vpack.c.b16 %v5086, %v5086
          %v5119 = vpack.c.b16 %v5087, %v5087
          %v5120 = vpack.c.b16 %v5088, %v5088
          %v5121 = vpack.c.b16 %v5089, %v5089
          %v5122 = vpack.c.b16 %v5090, %v5090
          %v5123 = vpack.c.b16 %v5091, %v5091
          %v5124 = vpack.c.b16 %v5092, %v5092
          %v5125 = vpack.c.b16 %v5093, %v5093
          %v5126 = vpack.c.b16 %v5094, %v5094
          %v5127 = vpack.c.b16 %v5095, %v5095
          %v5128 = vpack.c.b16 %v5096, %v5096
          %v5129 = vpack.c.b16 %v5097, %v5097
          %v5130 = vrot.slane %v5098, 7
          %v5131 = vrot.slane %v5130, 4
          %v5132 = vrot.slane %v5099, 7
          %v5133 = vsel %vm1241, %v5131, %v5132
          %v5134 = vrot.slane %v5132, 4
          %v5135 = vrot.slane %v5100, 7
          %v5136 = vrot.slane %v5135, 4
          %v5137 = vrot.slane %v5101, 7
          %v5138 = vsel %vm1241, %v5136, %v5137
          %v5139 = vrot.slane %v5137, 4
          %v5140 = vrot.slane %v5102, 7
          %v5141 = vrot.slane %v5140, 4
          %v5142 = vrot.slane %v5103, 7
          %v5143 = vsel %vm1241, %v5141, %v5142
          %v5144 = vrot.slane %v5142, 4
          %v5145 = vrot.slane %v5104, 7
          %v5146 = vrot.slane %v5145, 4
          %v5147 = vrot.slane %v5105, 7
          %v5148 = vsel %vm1241, %v5146, %v5147
          %v5149 = vrot.slane %v5147, 4
          %v5150 = vrot.slane %v5106, 7
          %v5151 = vrot.slane %v5150, 4
          %v5152 = vrot.slane %v5107, 7
          %v5153 = vsel %vm1241, %v5151, %v5152
          %v5154 = vrot.slane %v5152, 4
          %v5155 = vrot.slane %v5108, 7
          %v5156 = vrot.slane %v5155, 4
          %v5157 = vrot.slane %v5109, 7
          %v5158 = vsel %vm1241, %v5156, %v5157
          %v5159 = vrot.slane %v5157, 4
          %v5160 = vrot.slane %v5110, 7
          %v5161 = vrot.slane %v5160, 4
          %v5162 = vrot.slane %v5111, 7
          %v5163 = vsel %vm1241, %v5161, %v5162
          %v5164 = vrot.slane %v5162, 4
          %v5165 = vrot.slane %v5112, 7
          %v5166 = vrot.slane %v5165, 4
          %v5167 = vrot.slane %v5113, 7
          %v5168 = vsel %vm1241, %v5166, %v5167
          %v5169 = vrot.slane %v5167, 4
          %v5170 = vrot.slane %v5114, 7
          %v5171 = vrot.slane %v5170, 4
          %v5172 = vrot.slane %v5115, 7
          %v5173 = vsel %vm1241, %v5171, %v5172
          %v5174 = vrot.slane %v5172, 4
          %v5175 = vrot.slane %v5116, 7
          %v5176 = vrot.slane %v5175, 4
          %v5177 = vrot.slane %v5117, 7
          %v5178 = vsel %vm1241, %v5176, %v5177
          %v5179 = vrot.slane %v5177, 4
          %v5180 = vrot.slane %v5118, 7
          %v5181 = vrot.slane %v5180, 4
          %v5182 = vrot.slane %v5119, 7
          %v5183 = vsel %vm1241, %v5181, %v5182
          %v5184 = vrot.slane %v5182, 4
          %v5185 = vrot.slane %v5120, 7
          %v5186 = vrot.slane %v5185, 4
          %v5187 = vrot.slane %v5121, 7
          %v5188 = vsel %vm1241, %v5186, %v5187
          %v5189 = vrot.slane %v5187, 4
          %v5190 = vrot.slane %v5122, 7
          %v5191 = vrot.slane %v5190, 4
          %v5192 = vrot.slane %v5123, 7
          %v5193 = vsel %vm1241, %v5191, %v5192
          %v5194 = vrot.slane %v5192, 4
          %v5195 = vrot.slane %v5124, 7
          %v5196 = vrot.slane %v5195, 4
          %v5197 = vrot.slane %v5125, 7
          %v5198 = vsel %vm1241, %v5196, %v5197
          %v5199 = vrot.slane %v5197, 4
          %v5200 = vrot.slane %v5126, 7
          %v5201 = vrot.slane %v5200, 4
          %v5202 = vrot.slane %v5127, 7
          %v5203 = vsel %vm1241, %v5201, %v5202
          %v5204 = vrot.slane %v5202, 4
          %v5205 = vrot.slane %v5128, 7
          %v5206 = vrot.slane %v5205, 4
          %v5207 = vrot.slane %v5129, 7
          %v5208 = vsel %vm1241, %v5206, %v5207
          %v5209 = vrot.slane %v5207, 4
          %5258 = vst [vmem:[#allocation3] sm:$0xe] %v5130
          %5259 = vst [vmem:[#allocation3 + $0x4] sm:$0xf] %v5133
          %5260 = vst [vmem:[#allocation3 + $0x8] sm:$0x1] %v5134
          %5261 = vst [vmem:[#allocation3 + $0xc] sm:$0xe] %v5135
          %5262 = vst [vmem:[#allocation3 + $0x10] sm:$0xf] %v5138
          %5263 = vst [vmem:[#allocation3 + $0x14] sm:$0x1] %v5139
          %5264 = vst [vmem:[#allocation3 + $0x18] sm:$0xe] %v5140
          %5265 = vst [vmem:[#allocation3 + $0x1c] sm:$0xf] %v5143
          %5266 = vst [vmem:[#allocation3 + $0x20] sm:$0x1] %v5144
          %5267 = vst [vmem:[#allocation3 + $0x24] sm:$0xe] %v5145
          %5268 = vst [vmem:[#allocation3 + $0x28] sm:$0xf] %v5148
          %5269 = vst [vmem:[#allocation3 + $0x2c] sm:$0x1] %v5149
          %5270 = vst [vmem:[#allocation3 + $0x30] sm:$0xe] %v5150
          %5271 = vst [vmem:[#allocation3 + $0x34] sm:$0xf] %v5153
          %5272 = vst [vmem:[#allocation3 + $0x38] sm:$0x1] %v5154
          %5273 = vst [vmem:[#allocation3 + $0x3c] sm:$0xe] %v5155
          %5274 = vst [vmem:[#allocation3 + $0x40] sm:$0xf] %v5158
          %5275 = vst [vmem:[#allocation3 + $0x44] sm:$0x1] %v5159
          %5276 = vst [vmem:[#allocation3 + $0x48] sm:$0xe] %v5160
          %5277 = vst [vmem:[#allocation3 + $0x4c] sm:$0xf] %v5163
          %5278 = vst [vmem:[#allocation3 + $0x50] sm:$0x1] %v5164
          %5279 = vst [vmem:[#allocation3 + $0x54] sm:$0xe] %v5165
          %5280 = vst [vmem:[#allocation3 + $0x58] sm:$0xf] %v5168
          %5281 = vst [vmem:[#allocation3 + $0x5c] sm:$0x1] %v5169
          %5282 = vst [vmem:[#allocation3 + $0x60] sm:$0xe] %v5170
          %5283 = vst [vmem:[#allocation3 + $0x64] sm:$0xf] %v5173
          %5284 = vst [vmem:[#allocation3 + $0x68] sm:$0x1] %v5174
          %5285 = vst [vmem:[#allocation3 + $0x6c] sm:$0xe] %v5175
          %5286 = vst [vmem:[#allocation3 + $0x70] sm:$0xf] %v5178
          %5287 = vst [vmem:[#allocation3 + $0x74] sm:$0x1] %v5179
          %5288 = vst [vmem:[#allocation3 + $0x78] sm:$0xe] %v5180
          %5289 = vst [vmem:[#allocation3 + $0x7c] sm:$0xf] %v5183
          %5290 = vst [vmem:[#allocation3 + $0x80] sm:$0x1] %v5184
          %5291 = vst [vmem:[#allocation3 + $0x84] sm:$0xe] %v5185
          %5292 = vst [vmem:[#allocation3 + $0x88] sm:$0xf] %v5188
          %5293 = vst [vmem:[#allocation3 + $0x8c] sm:$0x1] %v5189
          %5294 = vst [vmem:[#allocation3 + $0x90] sm:$0xe] %v5190
          %5295 = vst [vmem:[#allocation3 + $0x94] sm:$0xf] %v5193
          %5296 = vst [vmem:[#allocation3 + $0x98] sm:$0x1] %v5194
          %5297 = vst [vmem:[#allocation3 + $0x9c] sm:$0xe] %v5195
          %5298 = vst [vmem:[#allocation3 + $0xa0] sm:$0xf] %v5198
          %5299 = vst [vmem:[#allocation3 + $0xa4] sm:$0x1] %v5199
          %5300 = vst [vmem:[#allocation3 + $0xa8] sm:$0xe] %v5200
          %5301 = vst [vmem:[#allocation3 + $0xac] sm:$0xf] %v5203
          %5302 = vst [vmem:[#allocation3 + $0xb0] sm:$0x1] %v5204
          %5303 = vst [vmem:[#allocation3 + $0xb4] sm:$0xe] %v5205
          %5304 = vst [vmem:[#allocation3 + $0xb8] sm:$0xf] %v5208
          %5305 = vst [vmem:[#allocation3 + $0xbc] sm:$0x1] %v5209
          %v5306 = vld [vmem:[#allocation3] sm:$0xf]
          %v5307 = vld [vmem:[#allocation3 + $0x4] sm:$0xf]
          %v5308 = vld [vmem:[#allocation3 + $0xc] sm:$0xf]
          %v5309 = vld [vmem:[#allocation3 + $0x10] sm:$0xf]
          %v5310 = vld [vmem:[#allocation3 + $0x18] sm:$0xf]
          %v5311 = vld [vmem:[#allocation3 + $0x1c] sm:$0xf]
          %v5312 = vld [vmem:[#allocation3 + $0x24] sm:$0xf]
          %v5313 = vld [vmem:[#allocation3 + $0x28] sm:$0xf]
          %v5314 = vld [vmem:[#allocation3 + $0x30] sm:$0xf]
          %v5315 = vld [vmem:[#allocation3 + $0x34] sm:$0xf]
          %v5316 = vld [vmem:[#allocation3 + $0x3c] sm:$0xf]
          %v5317 = vld [vmem:[#allocation3 + $0x40] sm:$0xf]
          %v5318 = vld [vmem:[#allocation3 + $0x48] sm:$0xf]
          %v5319 = vld [vmem:[#allocation3 + $0x4c] sm:$0xf]
          %v5320 = vld [vmem:[#allocation3 + $0x54] sm:$0xf]
          %v5321 = vld [vmem:[#allocation3 + $0x58] sm:$0xf]
          %v5322 = vld [vmem:[#allocation3 + $0x60] sm:$0xf]
          %v5323 = vld [vmem:[#allocation3 + $0x64] sm:$0xf]
          %v5324 = vld [vmem:[#allocation3 + $0x6c] sm:$0xf]
          %v5325 = vld [vmem:[#allocation3 + $0x70] sm:$0xf]
          %v5326 = vld [vmem:[#allocation3 + $0x78] sm:$0xf]
          %v5327 = vld [vmem:[#allocation3 + $0x7c] sm:$0xf]
          %v5328 = vld [vmem:[#allocation3 + $0x84] sm:$0xf]
          %v5329 = vld [vmem:[#allocation3 + $0x88] sm:$0xf]
          %v5330 = vld [vmem:[#allocation3 + $0x90] sm:$0xf]
          %v5331 = vld [vmem:[#allocation3 + $0x94] sm:$0xf]
          %v5332 = vld [vmem:[#allocation3 + $0x9c] sm:$0xf]
          %v5333 = vld [vmem:[#allocation3 + $0xa0] sm:$0xf]
          %v5334 = vld [vmem:[#allocation3 + $0xa8] sm:$0xf]
          %v5335 = vld [vmem:[#allocation3 + $0xac] sm:$0xf]
          %v5336 = vld [vmem:[#allocation3 + $0xb4] sm:$0xf]
          %v5337 = vld [vmem:[#allocation3 + $0xb8] sm:$0xf]
          %v5338 = vld [vmem:[#allocation3 + $0x8] sm:$0x1]
          %v5339 = vld [vmem:[#allocation3 + $0x14] sm:$0x1]
          %v5340 = vld [vmem:[#allocation3 + $0x20] sm:$0x1]
          %v5341 = vld [vmem:[#allocation3 + $0x2c] sm:$0x1]
          %v5342 = vld [vmem:[#allocation3 + $0x38] sm:$0x1]
          %v5343 = vld [vmem:[#allocation3 + $0x44] sm:$0x1]
          %v5344 = vld [vmem:[#allocation3 + $0x50] sm:$0x1]
          %v5345 = vld [vmem:[#allocation3 + $0x5c] sm:$0x1]
          %v5346 = vld [vmem:[#allocation3 + $0x68] sm:$0x1]
          %v5347 = vld [vmem:[#allocation3 + $0x74] sm:$0x1]
          %v5348 = vld [vmem:[#allocation3 + $0x80] sm:$0x1]
          %v5349 = vld [vmem:[#allocation3 + $0x8c] sm:$0x1]
          %v5350 = vld [vmem:[#allocation3 + $0x98] sm:$0x1]
          %v5351 = vld [vmem:[#allocation3 + $0xa4] sm:$0x1]
          %v5352 = vld [vmem:[#allocation3 + $0xb0] sm:$0x1]
          %v5353 = vld [vmem:[#allocation3 + $0xbc] sm:$0x1]
          %v5355 = vshrl.u32 %v5306, 16
          %v5357 = vrot.slane %v5355, 4
          %v5358 = vshll.u32 %v5306, 16
          %v5360 = vrot.slane %v5358, 5
          %v5361 = vor.u32 %v5357, %v5360
          %v5362 = vrot.slane %v5361, 4
          %v5364 = vshll.u32 %v5307, 16
          %v5366 = vrot.slane %v5364, 5
          %v5367 = vsel %vm1468, %v5362, %v5366
          %v5368 = vshrl.u32 %v5307, 16
          %v5370 = vrot.slane %v5368, 4
          %v5371 = vor.u32 %v5370, %v5366
          %v5372 = vrot.slane %v5371, 4
          %v5374 = vshll.u32 %v5338, 16
          %v5376 = vrot.slane %v5374, 5
          %v5377 = vsel %vm1468, %v5372, %v5376
          %v5379 = vshrl.u32 %v5308, 16
          %v5381 = vrot.slane %v5379, 4
          %v5382 = vshll.u32 %v5308, 16
          %v5384 = vrot.slane %v5382, 5
          %v5385 = vor.u32 %v5381, %v5384
          %v5386 = vrot.slane %v5385, 4
          %v5388 = vshll.u32 %v5309, 16
          %v5390 = vrot.slane %v5388, 5
          %v5391 = vsel %vm1468, %v5386, %v5390
          %v5392 = vshrl.u32 %v5309, 16
          %v5394 = vrot.slane %v5392, 4
          %v5395 = vor.u32 %v5394, %v5390
          %v5396 = vrot.slane %v5395, 4
          %v5398 = vshll.u32 %v5339, 16
          %v5400 = vrot.slane %v5398, 5
          %v5401 = vsel %vm1468, %v5396, %v5400
          %v5403 = vshrl.u32 %v5310, 16
          %v5405 = vrot.slane %v5403, 4
          %v5406 = vshll.u32 %v5310, 16
          %v5408 = vrot.slane %v5406, 5
          %v5409 = vor.u32 %v5405, %v5408
          %v5410 = vrot.slane %v5409, 4
          %v5412 = vshll.u32 %v5311, 16
          %v5414 = vrot.slane %v5412, 5
          %v5415 = vsel %vm1468, %v5410, %v5414
          %v5416 = vshrl.u32 %v5311, 16
          %v5418 = vrot.slane %v5416, 4
          %v5419 = vor.u32 %v5418, %v5414
          %v5420 = vrot.slane %v5419, 4
          %v5422 = vshll.u32 %v5340, 16
          %v5424 = vrot.slane %v5422, 5
          %v5425 = vsel %vm1468, %v5420, %v5424
          %v5427 = vshrl.u32 %v5312, 16
          %v5429 = vrot.slane %v5427, 4
          %v5430 = vshll.u32 %v5312, 16
          %v5432 = vrot.slane %v5430, 5
          %v5433 = vor.u32 %v5429, %v5432
          %v5434 = vrot.slane %v5433, 4
          %v5436 = vshll.u32 %v5313, 16
          %v5438 = vrot.slane %v5436, 5
          %v5439 = vsel %vm1468, %v5434, %v5438
          %v5440 = vshrl.u32 %v5313, 16
          %v5442 = vrot.slane %v5440, 4
          %v5443 = vor.u32 %v5442, %v5438
          %v5444 = vrot.slane %v5443, 4
          %v5446 = vshll.u32 %v5341, 16
          %v5448 = vrot.slane %v5446, 5
          %v5449 = vsel %vm1468, %v5444, %v5448
          %v5451 = vshrl.u32 %v5314, 16
          %v5453 = vrot.slane %v5451, 4
          %v5454 = vshll.u32 %v5314, 16
          %v5456 = vrot.slane %v5454, 5
          %v5457 = vor.u32 %v5453, %v5456
          %v5458 = vrot.slane %v5457, 4
          %v5460 = vshll.u32 %v5315, 16
          %v5462 = vrot.slane %v5460, 5
          %v5463 = vsel %vm1468, %v5458, %v5462
          %v5464 = vshrl.u32 %v5315, 16
          %v5466 = vrot.slane %v5464, 4
          %v5467 = vor.u32 %v5466, %v5462
          %v5468 = vrot.slane %v5467, 4
          %v5470 = vshll.u32 %v5342, 16
          %v5472 = vrot.slane %v5470, 5
          %v5473 = vsel %vm1468, %v5468, %v5472
          %v5475 = vshrl.u32 %v5316, 16
          %v5477 = vrot.slane %v5475, 4
          %v5478 = vshll.u32 %v5316, 16
          %v5480 = vrot.slane %v5478, 5
          %v5481 = vor.u32 %v5477, %v5480
          %v5482 = vrot.slane %v5481, 4
          %v5484 = vshll.u32 %v5317, 16
          %v5486 = vrot.slane %v5484, 5
          %v5487 = vsel %vm1468, %v5482, %v5486
          %v5488 = vshrl.u32 %v5317, 16
          %v5490 = vrot.slane %v5488, 4
          %v5491 = vor.u32 %v5490, %v5486
          %v5492 = vrot.slane %v5491, 4
          %v5494 = vshll.u32 %v5343, 16
          %v5496 = vrot.slane %v5494, 5
          %v5497 = vsel %vm1468, %v5492, %v5496
          %v5499 = vshrl.u32 %v5318, 16
          %v5501 = vrot.slane %v5499, 4
          %v5502 = vshll.u32 %v5318, 16
          %v5504 = vrot.slane %v5502, 5
          %v5505 = vor.u32 %v5501, %v5504
          %v5506 = vrot.slane %v5505, 4
          %v5508 = vshll.u32 %v5319, 16
          %v5510 = vrot.slane %v5508, 5
          %v5511 = vsel %vm1468, %v5506, %v5510
          %v5512 = vshrl.u32 %v5319, 16
          %v5514 = vrot.slane %v5512, 4
          %v5515 = vor.u32 %v5514, %v5510
          %v5516 = vrot.slane %v5515, 4
          %v5518 = vshll.u32 %v5344, 16
          %v5520 = vrot.slane %v5518, 5
          %v5521 = vsel %vm1468, %v5516, %v5520
          %v5523 = vshrl.u32 %v5320, 16
          %v5525 = vrot.slane %v5523, 4
          %v5526 = vshll.u32 %v5320, 16
          %v5528 = vrot.slane %v5526, 5
          %v5529 = vor.u32 %v5525, %v5528
          %v5530 = vrot.slane %v5529, 4
          %v5532 = vshll.u32 %v5321, 16
          %v5534 = vrot.slane %v5532, 5
          %v5535 = vsel %vm1468, %v5530, %v5534
          %v5536 = vshrl.u32 %v5321, 16
          %v5538 = vrot.slane %v5536, 4
          %v5539 = vor.u32 %v5538, %v5534
          %v5540 = vrot.slane %v5539, 4
          %v5542 = vshll.u32 %v5345, 16
          %v5544 = vrot.slane %v5542, 5
          %v5545 = vsel %vm1468, %v5540, %v5544
          %v5547 = vshrl.u32 %v5322, 16
          %v5549 = vrot.slane %v5547, 4
          %v5550 = vshll.u32 %v5322, 16
          %v5552 = vrot.slane %v5550, 5
          %v5553 = vor.u32 %v5549, %v5552
          %v5554 = vrot.slane %v5553, 4
          %v5556 = vshll.u32 %v5323, 16
          %v5558 = vrot.slane %v5556, 5
          %v5559 = vsel %vm1468, %v5554, %v5558
          %v5560 = vshrl.u32 %v5323, 16
          %v5562 = vrot.slane %v5560, 4
          %v5563 = vor.u32 %v5562, %v5558
          %v5564 = vrot.slane %v5563, 4
          %v5566 = vshll.u32 %v5346, 16
          %v5568 = vrot.slane %v5566, 5
          %v5569 = vsel %vm1468, %v5564, %v5568
          %v5571 = vshrl.u32 %v5324, 16
          %v5573 = vrot.slane %v5571, 4
          %v5574 = vshll.u32 %v5324, 16
          %v5576 = vrot.slane %v5574, 5
          %v5577 = vor.u32 %v5573, %v5576
          %v5578 = vrot.slane %v5577, 4
          %v5580 = vshll.u32 %v5325, 16
          %v5582 = vrot.slane %v5580, 5
          %v5583 = vsel %vm1468, %v5578, %v5582
          %v5584 = vshrl.u32 %v5325, 16
          %v5586 = vrot.slane %v5584, 4
          %v5587 = vor.u32 %v5586, %v5582
          %v5588 = vrot.slane %v5587, 4
          %v5590 = vshll.u32 %v5347, 16
          %v5592 = vrot.slane %v5590, 5
          %v5593 = vsel %vm1468, %v5588, %v5592
          %v5595 = vshrl.u32 %v5326, 16
          %v5597 = vrot.slane %v5595, 4
          %v5598 = vshll.u32 %v5326, 16
          %v5600 = vrot.slane %v5598, 5
          %v5601 = vor.u32 %v5597, %v5600
          %v5602 = vrot.slane %v5601, 4
          %v5604 = vshll.u32 %v5327, 16
          %v5606 = vrot.slane %v5604, 5
          %v5607 = vsel %vm1468, %v5602, %v5606
          %v5608 = vshrl.u32 %v5327, 16
          %v5610 = vrot.slane %v5608, 4
          %v5611 = vor.u32 %v5610, %v5606
          %v5612 = vrot.slane %v5611, 4
          %v5614 = vshll.u32 %v5348, 16
          %v5616 = vrot.slane %v5614, 5
          %v5617 = vsel %vm1468, %v5612, %v5616
          %v5619 = vshrl.u32 %v5328, 16
          %v5621 = vrot.slane %v5619, 4
          %v5622 = vshll.u32 %v5328, 16
          %v5624 = vrot.slane %v5622, 5
          %v5625 = vor.u32 %v5621, %v5624
          %v5626 = vrot.slane %v5625, 4
          %v5628 = vshll.u32 %v5329, 16
          %v5630 = vrot.slane %v5628, 5
          %v5631 = vsel %vm1468, %v5626, %v5630
          %v5632 = vshrl.u32 %v5329, 16
          %v5634 = vrot.slane %v5632, 4
          %v5635 = vor.u32 %v5634, %v5630
          %v5636 = vrot.slane %v5635, 4
          %v5638 = vshll.u32 %v5349, 16
          %v5640 = vrot.slane %v5638, 5
          %v5641 = vsel %vm1468, %v5636, %v5640
          %v5643 = vshrl.u32 %v5330, 16
          %v5645 = vrot.slane %v5643, 4
          %v5646 = vshll.u32 %v5330, 16
          %v5648 = vrot.slane %v5646, 5
          %v5649 = vor.u32 %v5645, %v5648
          %v5650 = vrot.slane %v5649, 4
          %v5652 = vshll.u32 %v5331, 16
          %v5654 = vrot.slane %v5652, 5
          %v5655 = vsel %vm1468, %v5650, %v5654
          %v5656 = vshrl.u32 %v5331, 16
          %v5658 = vrot.slane %v5656, 4
          %v5659 = vor.u32 %v5658, %v5654
          %v5660 = vrot.slane %v5659, 4
          %v5662 = vshll.u32 %v5350, 16
          %v5664 = vrot.slane %v5662, 5
          %v5665 = vsel %vm1468, %v5660, %v5664
          %v5667 = vshrl.u32 %v5332, 16
          %v5669 = vrot.slane %v5667, 4
          %v5670 = vshll.u32 %v5332, 16
          %v5672 = vrot.slane %v5670, 5
          %v5673 = vor.u32 %v5669, %v5672
          %v5674 = vrot.slane %v5673, 4
          %v5676 = vshll.u32 %v5333, 16
          %v5678 = vrot.slane %v5676, 5
          %v5679 = vsel %vm1468, %v5674, %v5678
          %v5680 = vshrl.u32 %v5333, 16
          %v5682 = vrot.slane %v5680, 4
          %v5683 = vor.u32 %v5682, %v5678
          %v5684 = vrot.slane %v5683, 4
          %v5686 = vshll.u32 %v5351, 16
          %v5688 = vrot.slane %v5686, 5
          %v5689 = vsel %vm1468, %v5684, %v5688
          %v5691 = vshrl.u32 %v5334, 16
          %v5693 = vrot.slane %v5691, 4
          %v5694 = vshll.u32 %v5334, 16
          %v5696 = vrot.slane %v5694, 5
          %v5697 = vor.u32 %v5693, %v5696
          %v5698 = vrot.slane %v5697, 4
          %v5700 = vshll.u32 %v5335, 16
          %v5702 = vrot.slane %v5700, 5
          %v5703 = vsel %vm1468, %v5698, %v5702
          %v5704 = vshrl.u32 %v5335, 16
          %v5706 = vrot.slane %v5704, 4
          %v5707 = vor.u32 %v5706, %v5702
          %v5708 = vrot.slane %v5707, 4
          %v5710 = vshll.u32 %v5352, 16
          %v5712 = vrot.slane %v5710, 5
          %v5713 = vsel %vm1468, %v5708, %v5712
          %v5715 = vshrl.u32 %v5336, 16
          %v5717 = vrot.slane %v5715, 4
          %v5718 = vshll.u32 %v5336, 16
          %v5720 = vrot.slane %v5718, 5
          %v5721 = vor.u32 %v5717, %v5720
          %v5722 = vrot.slane %v5721, 4
          %v5724 = vshll.u32 %v5337, 16
          %v5726 = vrot.slane %v5724, 5
          %v5727 = vsel %vm1468, %v5722, %v5726
          %v5728 = vshrl.u32 %v5337, 16
          %v5730 = vrot.slane %v5728, 4
          %v5731 = vor.u32 %v5730, %v5726
          %v5732 = vrot.slane %v5731, 4
          %v5734 = vshll.u32 %v5353, 16
          %v5736 = vrot.slane %v5734, 5
          %v5737 = vsel %vm1468, %v5732, %v5736
          %v5770 = vmax.bf16 %v5306, %v5367
          %v5771 = vmax.bf16 %v5307, %v5377
          %v5772 = vmax.bf16 %v5308, %v5391
          %v5773 = vmax.bf16 %v5309, %v5401
          %v5774 = vmax.bf16 %v5310, %v5415
          %v5775 = vmax.bf16 %v5311, %v5425
          %v5776 = vmax.bf16 %v5312, %v5439
          %v5777 = vmax.bf16 %v5313, %v5449
          %v5778 = vmax.bf16 %v5314, %v5463
          %v5779 = vmax.bf16 %v5315, %v5473
          %v5780 = vmax.bf16 %v5316, %v5487
          %v5781 = vmax.bf16 %v5317, %v5497
          %v5782 = vmax.bf16 %v5318, %v5511
          %v5783 = vmax.bf16 %v5319, %v5521
          %v5784 = vmax.bf16 %v5320, %v5535
          %v5785 = vmax.bf16 %v5321, %v5545
          %v5786 = vmax.bf16 %v5322, %v5559
          %v5787 = vmax.bf16 %v5323, %v5569
          %v5788 = vmax.bf16 %v5324, %v5583
          %v5789 = vmax.bf16 %v5325, %v5593
          %v5790 = vmax.bf16 %v5326, %v5607
          %v5791 = vmax.bf16 %v5327, %v5617
          %v5792 = vmax.bf16 %v5328, %v5631
          %v5793 = vmax.bf16 %v5329, %v5641
          %v5794 = vmax.bf16 %v5330, %v5655
          %v5795 = vmax.bf16 %v5331, %v5665
          %v5796 = vmax.bf16 %v5332, %v5679
          %v5797 = vmax.bf16 %v5333, %v5689
          %v5798 = vmax.bf16 %v5334, %v5703
          %v5799 = vmax.bf16 %v5335, %v5713
          %v5800 = vmax.bf16 %v5336, %v5727
          %v5801 = vmax.bf16 %v5337, %v5737
          %v5802 = vld [vmem:[#allocation3] sm:$0xe]
          %v5803 = vld [vmem:[#allocation3 + $0xc] sm:$0xe]
          %v5804 = vld [vmem:[#allocation3 + $0x18] sm:$0xe]
          %v5805 = vld [vmem:[#allocation3 + $0x24] sm:$0xe]
          %v5806 = vld [vmem:[#allocation3 + $0x30] sm:$0xe]
          %v5807 = vld [vmem:[#allocation3 + $0x3c] sm:$0xe]
          %v5808 = vld [vmem:[#allocation3 + $0x48] sm:$0xe]
          %v5809 = vld [vmem:[#allocation3 + $0x54] sm:$0xe]
          %v5810 = vld [vmem:[#allocation3 + $0x60] sm:$0xe]
          %v5811 = vld [vmem:[#allocation3 + $0x6c] sm:$0xe]
          %v5812 = vld [vmem:[#allocation3 + $0x78] sm:$0xe]
          %v5813 = vld [vmem:[#allocation3 + $0x84] sm:$0xe]
          %v5814 = vld [vmem:[#allocation3 + $0x90] sm:$0xe]
          %v5815 = vld [vmem:[#allocation3 + $0x9c] sm:$0xe]
          %v5816 = vld [vmem:[#allocation3 + $0xa8] sm:$0xe]
          %v5817 = vld [vmem:[#allocation3 + $0xb4] sm:$0xe]
          %v5866 = vrot.slane %v5802, 5
          %v5867 = vrot.slane %v5866, 4
          %v5868 = vrot.slane %v5307, 5
          %v5869 = vsel %vm1983, %v5867, %v5868
          %v5870 = vrot.slane %v5868, 4
          %v5871 = vrot.slane %v5338, 5
          %v5872 = vsel %vm1983, %v5870, %v5871
          %v5873 = vrot.slane %v5803, 5
          %v5874 = vrot.slane %v5873, 4
          %v5875 = vrot.slane %v5309, 5
          %v5876 = vsel %vm1983, %v5874, %v5875
          %v5877 = vrot.slane %v5875, 4
          %v5878 = vrot.slane %v5339, 5
          %v5879 = vsel %vm1983, %v5877, %v5878
          %v5880 = vrot.slane %v5804, 5
          %v5881 = vrot.slane %v5880, 4
          %v5882 = vrot.slane %v5311, 5
          %v5883 = vsel %vm1983, %v5881, %v5882
          %v5884 = vrot.slane %v5882, 4
          %v5885 = vrot.slane %v5340, 5
          %v5886 = vsel %vm1983, %v5884, %v5885
          %v5887 = vrot.slane %v5805, 5
          %v5888 = vrot.slane %v5887, 4
          %v5889 = vrot.slane %v5313, 5
          %v5890 = vsel %vm1983, %v5888, %v5889
          %v5891 = vrot.slane %v5889, 4
          %v5892 = vrot.slane %v5341, 5
          %v5893 = vsel %vm1983, %v5891, %v5892
          %v5894 = vrot.slane %v5806, 5
          %v5895 = vrot.slane %v5894, 4
          %v5896 = vrot.slane %v5315, 5
          %v5897 = vsel %vm1983, %v5895, %v5896
          %v5898 = vrot.slane %v5896, 4
          %v5899 = vrot.slane %v5342, 5
          %v5900 = vsel %vm1983, %v5898, %v5899
          %v5901 = vrot.slane %v5807, 5
          %v5902 = vrot.slane %v5901, 4
          %v5903 = vrot.slane %v5317, 5
          %v5904 = vsel %vm1983, %v5902, %v5903
          %v5905 = vrot.slane %v5903, 4
          %v5906 = vrot.slane %v5343, 5
          %v5907 = vsel %vm1983, %v5905, %v5906
          %v5908 = vrot.slane %v5808, 5
          %v5909 = vrot.slane %v5908, 4
          %v5910 = vrot.slane %v5319, 5
          %v5911 = vsel %vm1983, %v5909, %v5910
          %v5912 = vrot.slane %v5910, 4
          %v5913 = vrot.slane %v5344, 5
          %v5914 = vsel %vm1983, %v5912, %v5913
          %v5915 = vrot.slane %v5809, 5
          %v5916 = vrot.slane %v5915, 4
          %v5917 = vrot.slane %v5321, 5
          %v5918 = vsel %vm1983, %v5916, %v5917
          %v5919 = vrot.slane %v5917, 4
          %v5920 = vrot.slane %v5345, 5
          %v5921 = vsel %vm1983, %v5919, %v5920
          %v5922 = vrot.slane %v5810, 5
          %v5923 = vrot.slane %v5922, 4
          %v5924 = vrot.slane %v5323, 5
          %v5925 = vsel %vm1983, %v5923, %v5924
          %v5926 = vrot.slane %v5924, 4
          %v5927 = vrot.slane %v5346, 5
          %v5928 = vsel %vm1983, %v5926, %v5927
          %v5929 = vrot.slane %v5811, 5
          %v5930 = vrot.slane %v5929, 4
          %v5931 = vrot.slane %v5325, 5
          %v5932 = vsel %vm1983, %v5930, %v5931
          %v5933 = vrot.slane %v5931, 4
          %v5934 = vrot.slane %v5347, 5
          %v5935 = vsel %vm1983, %v5933, %v5934
          %v5936 = vrot.slane %v5812, 5
          %v5937 = vrot.slane %v5936, 4
          %v5938 = vrot.slane %v5327, 5
          %v5939 = vsel %vm1983, %v5937, %v5938
          %v5940 = vrot.slane %v5938, 4
          %v5941 = vrot.slane %v5348, 5
          %v5942 = vsel %vm1983, %v5940, %v5941
          %v5943 = vrot.slane %v5813, 5
          %v5944 = vrot.slane %v5943, 4
          %v5945 = vrot.slane %v5329, 5
          %v5946 = vsel %vm1983, %v5944, %v5945
          %v5947 = vrot.slane %v5945, 4
          %v5948 = vrot.slane %v5349, 5
          %v5949 = vsel %vm1983, %v5947, %v5948
          %v5950 = vrot.slane %v5814, 5
          %v5951 = vrot.slane %v5950, 4
          %v5952 = vrot.slane %v5331, 5
          %v5953 = vsel %vm1983, %v5951, %v5952
          %v5954 = vrot.slane %v5952, 4
          %v5955 = vrot.slane %v5350, 5
          %v5956 = vsel %vm1983, %v5954, %v5955
          %v5957 = vrot.slane %v5815, 5
          %v5958 = vrot.slane %v5957, 4
          %v5959 = vrot.slane %v5333, 5
          %v5960 = vsel %vm1983, %v5958, %v5959
          %v5961 = vrot.slane %v5959, 4
          %v5962 = vrot.slane %v5351, 5
          %v5963 = vsel %vm1983, %v5961, %v5962
          %v5964 = vrot.slane %v5816, 5
          %v5965 = vrot.slane %v5964, 4
          %v5966 = vrot.slane %v5335, 5
          %v5967 = vsel %vm1983, %v5965, %v5966
          %v5968 = vrot.slane %v5966, 4
          %v5969 = vrot.slane %v5352, 5
          %v5970 = vsel %vm1983, %v5968, %v5969
          %v5971 = vrot.slane %v5817, 5
          %v5972 = vrot.slane %v5971, 4
          %v5973 = vrot.slane %v5337, 5
          %v5974 = vsel %vm1983, %v5972, %v5973
          %v5975 = vrot.slane %v5973, 4
          %v5976 = vrot.slane %v5353, 5
          %v5977 = vsel %vm1983, %v5975, %v5976
          %v6010 = vmax.bf16 %v5770, %v5869
          %v6011 = vmax.bf16 %v5771, %v5872
          %v6012 = vmax.bf16 %v5772, %v5876
          %v6013 = vmax.bf16 %v5773, %v5879
          %v6014 = vmax.bf16 %v5774, %v5883
          %v6015 = vmax.bf16 %v5775, %v5886
          %v6016 = vmax.bf16 %v5776, %v5890
          %v6017 = vmax.bf16 %v5777, %v5893
          %v6018 = vmax.bf16 %v5778, %v5897
          %v6019 = vmax.bf16 %v5779, %v5900
          %v6020 = vmax.bf16 %v5780, %v5904
          %v6021 = vmax.bf16 %v5781, %v5907
          %v6022 = vmax.bf16 %v5782, %v5911
          %v6023 = vmax.bf16 %v5783, %v5914
          %v6024 = vmax.bf16 %v5784, %v5918
          %v6025 = vmax.bf16 %v5785, %v5921
          %v6026 = vmax.bf16 %v5786, %v5925
          %v6027 = vmax.bf16 %v5787, %v5928
          %v6028 = vmax.bf16 %v5788, %v5932
          %v6029 = vmax.bf16 %v5789, %v5935
          %v6030 = vmax.bf16 %v5790, %v5939
          %v6031 = vmax.bf16 %v5791, %v5942
          %v6032 = vmax.bf16 %v5792, %v5946
          %v6033 = vmax.bf16 %v5793, %v5949
          %v6034 = vmax.bf16 %v5794, %v5953
          %v6035 = vmax.bf16 %v5795, %v5956
          %v6036 = vmax.bf16 %v5796, %v5960
          %v6037 = vmax.bf16 %v5797, %v5963
          %v6038 = vmax.bf16 %v5798, %v5967
          %v6039 = vmax.bf16 %v5799, %v5970
          %v6040 = vmax.bf16 %v5800, %v5974
          %v6041 = vmax.bf16 %v5801, %v5977
          %v6042 = vld [vmem:[#allocation3 + $0x8] sm:$0x3]
          %v6043 = vld [vmem:[#allocation3 + $0x14] sm:$0x3]
          %v6044 = vld [vmem:[#allocation3 + $0x20] sm:$0x3]
          %v6045 = vld [vmem:[#allocation3 + $0x2c] sm:$0x3]
          %v6046 = vld [vmem:[#allocation3 + $0x38] sm:$0x3]
          %v6047 = vld [vmem:[#allocation3 + $0x44] sm:$0x3]
          %v6048 = vld [vmem:[#allocation3 + $0x50] sm:$0x3]
          %v6049 = vld [vmem:[#allocation3 + $0x5c] sm:$0x3]
          %v6050 = vld [vmem:[#allocation3 + $0x68] sm:$0x3]
          %v6051 = vld [vmem:[#allocation3 + $0x74] sm:$0x3]
          %v6052 = vld [vmem:[#allocation3 + $0x80] sm:$0x3]
          %v6053 = vld [vmem:[#allocation3 + $0x8c] sm:$0x3]
          %v6054 = vld [vmem:[#allocation3 + $0x98] sm:$0x3]
          %v6055 = vld [vmem:[#allocation3 + $0xa4] sm:$0x3]
          %v6056 = vld [vmem:[#allocation3 + $0xb0] sm:$0x3]
          %v6057 = vld [vmem:[#allocation3 + $0xbc] sm:$0x3]
          %v6059 = vshrl.u32 %v5802, 16
          %v6061 = vrot.slane %v6059, 5
          %v6062 = vshll.u32 %v5802, 16
          %v6064 = vrot.slane %v6062, 6
          %v6065 = vor.u32 %v6061, %v6064
          %v6066 = vrot.slane %v6065, 4
          %v6067 = vrot.slane %v5368, 5
          %v6068 = vrot.slane %v5364, 6
          %v6069 = vor.u32 %v6067, %v6068
          %v6070 = vsel %vm2178, %v6066, %v6069
          %v6071 = vrot.slane %v6069, 4
          %v6073 = vshrl.u32 %v6042, 16
          %v6075 = vrot.slane %v6073, 5
          %v6076 = vshll.u32 %v6042, 16
          %v6078 = vrot.slane %v6076, 6
          %v6079 = vor.u32 %v6075, %v6078
          %v6080 = vsel %vm2178, %v6071, %v6079
          %v6082 = vshrl.u32 %v5803, 16
          %v6084 = vrot.slane %v6082, 5
          %v6085 = vshll.u32 %v5803, 16
          %v6087 = vrot.slane %v6085, 6
          %v6088 = vor.u32 %v6084, %v6087
          %v6089 = vrot.slane %v6088, 4
          %v6090 = vrot.slane %v5392, 5
          %v6091 = vrot.slane %v5388, 6
          %v6092 = vor.u32 %v6090, %v6091
          %v6093 = vsel %vm2178, %v6089, %v6092
          %v6094 = vrot.slane %v6092, 4
          %v6096 = vshrl.u32 %v6043, 16
          %v6098 = vrot.slane %v6096, 5
          %v6099 = vshll.u32 %v6043, 16
          %v6101 = vrot.slane %v6099, 6
          %v6102 = vor.u32 %v6098, %v6101
          %v6103 = vsel %vm2178, %v6094, %v6102
          %v6105 = vshrl.u32 %v5804, 16
          %v6107 = vrot.slane %v6105, 5
          %v6108 = vshll.u32 %v5804, 16
          %v6110 = vrot.slane %v6108, 6
          %v6111 = vor.u32 %v6107, %v6110
          %v6112 = vrot.slane %v6111, 4
          %v6113 = vrot.slane %v5416, 5
          %v6114 = vrot.slane %v5412, 6
          %v6115 = vor.u32 %v6113, %v6114
          %v6116 = vsel %vm2178, %v6112, %v6115
          %v6117 = vrot.slane %v6115, 4
          %v6119 = vshrl.u32 %v6044, 16
          %v6121 = vrot.slane %v6119, 5
          %v6122 = vshll.u32 %v6044, 16
          %v6124 = vrot.slane %v6122, 6
          %v6125 = vor.u32 %v6121, %v6124
          %v6126 = vsel %vm2178, %v6117, %v6125
          %v6128 = vshrl.u32 %v5805, 16
          %v6130 = vrot.slane %v6128, 5
          %v6131 = vshll.u32 %v5805, 16
          %v6133 = vrot.slane %v6131, 6
          %v6134 = vor.u32 %v6130, %v6133
          %v6135 = vrot.slane %v6134, 4
          %v6136 = vrot.slane %v5440, 5
          %v6137 = vrot.slane %v5436, 6
          %v6138 = vor.u32 %v6136, %v6137
          %v6139 = vsel %vm2178, %v6135, %v6138
          %v6140 = vrot.slane %v6138, 4
          %v6142 = vshrl.u32 %v6045, 16
          %v6144 = vrot.slane %v6142, 5
          %v6145 = vshll.u32 %v6045, 16
          %v6147 = vrot.slane %v6145, 6
          %v6148 = vor.u32 %v6144, %v6147
          %v6149 = vsel %vm2178, %v6140, %v6148
          %v6151 = vshrl.u32 %v5806, 16
          %v6153 = vrot.slane %v6151, 5
          %v6154 = vshll.u32 %v5806, 16
          %v6156 = vrot.slane %v6154, 6
          %v6157 = vor.u32 %v6153, %v6156
          %v6158 = vrot.slane %v6157, 4
          %v6159 = vrot.slane %v5464, 5
          %v6160 = vrot.slane %v5460, 6
          %v6161 = vor.u32 %v6159, %v6160
          %v6162 = vsel %vm2178, %v6158, %v6161
          %v6163 = vrot.slane %v6161, 4
          %v6165 = vshrl.u32 %v6046, 16
          %v6167 = vrot.slane %v6165, 5
          %v6168 = vshll.u32 %v6046, 16
          %v6170 = vrot.slane %v6168, 6
          %v6171 = vor.u32 %v6167, %v6170
          %v6172 = vsel %vm2178, %v6163, %v6171
          %v6174 = vshrl.u32 %v5807, 16
          %v6176 = vrot.slane %v6174, 5
          %v6177 = vshll.u32 %v5807, 16
          %v6179 = vrot.slane %v6177, 6
          %v6180 = vor.u32 %v6176, %v6179
          %v6181 = vrot.slane %v6180, 4
          %v6182 = vrot.slane %v5488, 5
          %v6183 = vrot.slane %v5484, 6
          %v6184 = vor.u32 %v6182, %v6183
          %v6185 = vsel %vm2178, %v6181, %v6184
          %v6186 = vrot.slane %v6184, 4
          %v6188 = vshrl.u32 %v6047, 16
          %v6190 = vrot.slane %v6188, 5
          %v6191 = vshll.u32 %v6047, 16
          %v6193 = vrot.slane %v6191, 6
          %v6194 = vor.u32 %v6190, %v6193
          %v6195 = vsel %vm2178, %v6186, %v6194
          %v6197 = vshrl.u32 %v5808, 16
          %v6199 = vrot.slane %v6197, 5
          %v6200 = vshll.u32 %v5808, 16
          %v6202 = vrot.slane %v6200, 6
          %v6203 = vor.u32 %v6199, %v6202
          %v6204 = vrot.slane %v6203, 4
          %v6205 = vrot.slane %v5512, 5
          %v6206 = vrot.slane %v5508, 6
          %v6207 = vor.u32 %v6205, %v6206
          %v6208 = vsel %vm2178, %v6204, %v6207
          %v6209 = vrot.slane %v6207, 4
          %v6211 = vshrl.u32 %v6048, 16
          %v6213 = vrot.slane %v6211, 5
          %v6214 = vshll.u32 %v6048, 16
          %v6216 = vrot.slane %v6214, 6
          %v6217 = vor.u32 %v6213, %v6216
          %v6218 = vsel %vm2178, %v6209, %v6217
          %v6220 = vshrl.u32 %v5809, 16
          %v6222 = vrot.slane %v6220, 5
          %v6223 = vshll.u32 %v5809, 16
          %v6225 = vrot.slane %v6223, 6
          %v6226 = vor.u32 %v6222, %v6225
          %v6227 = vrot.slane %v6226, 4
          %v6228 = vrot.slane %v5536, 5
          %v6229 = vrot.slane %v5532, 6
          %v6230 = vor.u32 %v6228, %v6229
          %v6231 = vsel %vm2178, %v6227, %v6230
          %v6232 = vrot.slane %v6230, 4
          %v6234 = vshrl.u32 %v6049, 16
          %v6236 = vrot.slane %v6234, 5
          %v6237 = vshll.u32 %v6049, 16
          %v6239 = vrot.slane %v6237, 6
          %v6240 = vor.u32 %v6236, %v6239
          %v6241 = vsel %vm2178, %v6232, %v6240
          %v6243 = vshrl.u32 %v5810, 16
          %v6245 = vrot.slane %v6243, 5
          %v6246 = vshll.u32 %v5810, 16
          %v6248 = vrot.slane %v6246, 6
          %v6249 = vor.u32 %v6245, %v6248
          %v6250 = vrot.slane %v6249, 4
          %v6251 = vrot.slane %v5560, 5
          %v6252 = vrot.slane %v5556, 6
          %v6253 = vor.u32 %v6251, %v6252
          %v6254 = vsel %vm2178, %v6250, %v6253
          %v6255 = vrot.slane %v6253, 4
          %v6257 = vshrl.u32 %v6050, 16
          %v6259 = vrot.slane %v6257, 5
          %v6260 = vshll.u32 %v6050, 16
          %v6262 = vrot.slane %v6260, 6
          %v6263 = vor.u32 %v6259, %v6262
          %v6264 = vsel %vm2178, %v6255, %v6263
          %v6266 = vshrl.u32 %v5811, 16
          %v6268 = vrot.slane %v6266, 5
          %v6269 = vshll.u32 %v5811, 16
          %v6271 = vrot.slane %v6269, 6
          %v6272 = vor.u32 %v6268, %v6271
          %v6273 = vrot.slane %v6272, 4
          %v6274 = vrot.slane %v5584, 5
          %v6275 = vrot.slane %v5580, 6
          %v6276 = vor.u32 %v6274, %v6275
          %v6277 = vsel %vm2178, %v6273, %v6276
          %v6278 = vrot.slane %v6276, 4
          %v6280 = vshrl.u32 %v6051, 16
          %v6282 = vrot.slane %v6280, 5
          %v6283 = vshll.u32 %v6051, 16
          %v6285 = vrot.slane %v6283, 6
          %v6286 = vor.u32 %v6282, %v6285
          %v6287 = vsel %vm2178, %v6278, %v6286
          %v6289 = vshrl.u32 %v5812, 16
          %v6291 = vrot.slane %v6289, 5
          %v6292 = vshll.u32 %v5812, 16
          %v6294 = vrot.slane %v6292, 6
          %v6295 = vor.u32 %v6291, %v6294
          %v6296 = vrot.slane %v6295, 4
          %v6297 = vrot.slane %v5608, 5
          %v6298 = vrot.slane %v5604, 6
          %v6299 = vor.u32 %v6297, %v6298
          %v6300 = vsel %vm2178, %v6296, %v6299
          %v6301 = vrot.slane %v6299, 4
          %v6303 = vshrl.u32 %v6052, 16
          %v6305 = vrot.slane %v6303, 5
          %v6306 = vshll.u32 %v6052, 16
          %v6308 = vrot.slane %v6306, 6
          %v6309 = vor.u32 %v6305, %v6308
          %v6310 = vsel %vm2178, %v6301, %v6309
          %v6312 = vshrl.u32 %v5813, 16
          %v6314 = vrot.slane %v6312, 5
          %v6315 = vshll.u32 %v5813, 16
          %v6317 = vrot.slane %v6315, 6
          %v6318 = vor.u32 %v6314, %v6317
          %v6319 = vrot.slane %v6318, 4
          %v6320 = vrot.slane %v5632, 5
          %v6321 = vrot.slane %v5628, 6
          %v6322 = vor.u32 %v6320, %v6321
          %v6323 = vsel %vm2178, %v6319, %v6322
          %v6324 = vrot.slane %v6322, 4
          %v6326 = vshrl.u32 %v6053, 16
          %v6328 = vrot.slane %v6326, 5
          %v6329 = vshll.u32 %v6053, 16
          %v6331 = vrot.slane %v6329, 6
          %v6332 = vor.u32 %v6328, %v6331
          %v6333 = vsel %vm2178, %v6324, %v6332
          %v6335 = vshrl.u32 %v5814, 16
          %v6337 = vrot.slane %v6335, 5
          %v6338 = vshll.u32 %v5814, 16
          %v6340 = vrot.slane %v6338, 6
          %v6341 = vor.u32 %v6337, %v6340
          %v6342 = vrot.slane %v6341, 4
          %v6343 = vrot.slane %v5656, 5
          %v6344 = vrot.slane %v5652, 6
          %v6345 = vor.u32 %v6343, %v6344
          %v6346 = vsel %vm2178, %v6342, %v6345
          %v6347 = vrot.slane %v6345, 4
          %v6349 = vshrl.u32 %v6054, 16
          %v6351 = vrot.slane %v6349, 5
          %v6352 = vshll.u32 %v6054, 16
          %v6354 = vrot.slane %v6352, 6
          %v6355 = vor.u32 %v6351, %v6354
          %v6356 = vsel %vm2178, %v6347, %v6355
          %v6358 = vshrl.u32 %v5815, 16
          %v6360 = vrot.slane %v6358, 5
          %v6361 = vshll.u32 %v5815, 16
          %v6363 = vrot.slane %v6361, 6
          %v6364 = vor.u32 %v6360, %v6363
          %v6365 = vrot.slane %v6364, 4
          %v6366 = vrot.slane %v5680, 5
          %v6367 = vrot.slane %v5676, 6
          %v6368 = vor.u32 %v6366, %v6367
          %v6369 = vsel %vm2178, %v6365, %v6368
          %v6370 = vrot.slane %v6368, 4
          %v6372 = vshrl.u32 %v6055, 16
          %v6374 = vrot.slane %v6372, 5
          %v6375 = vshll.u32 %v6055, 16
          %v6377 = vrot.slane %v6375, 6
          %v6378 = vor.u32 %v6374, %v6377
          %v6379 = vsel %vm2178, %v6370, %v6378
          %v6381 = vshrl.u32 %v5816, 16
          %v6383 = vrot.slane %v6381, 5
          %v6384 = vshll.u32 %v5816, 16
          %v6386 = vrot.slane %v6384, 6
          %v6387 = vor.u32 %v6383, %v6386
          %v6388 = vrot.slane %v6387, 4
          %v6389 = vrot.slane %v5704, 5
          %v6390 = vrot.slane %v5700, 6
          %v6391 = vor.u32 %v6389, %v6390
          %v6392 = vsel %vm2178, %v6388, %v6391
          %v6393 = vrot.slane %v6391, 4
          %v6395 = vshrl.u32 %v6056, 16
          %v6397 = vrot.slane %v6395, 5
          %v6398 = vshll.u32 %v6056, 16
          %v6400 = vrot.slane %v6398, 6
          %v6401 = vor.u32 %v6397, %v6400
          %v6402 = vsel %vm2178, %v6393, %v6401
          %v6404 = vshrl.u32 %v5817, 16
          %v6406 = vrot.slane %v6404, 5
          %v6407 = vshll.u32 %v5817, 16
          %v6409 = vrot.slane %v6407, 6
          %v6410 = vor.u32 %v6406, %v6409
          %v6411 = vrot.slane %v6410, 4
          %v6412 = vrot.slane %v5728, 5
          %v6413 = vrot.slane %v5724, 6
          %v6414 = vor.u32 %v6412, %v6413
          %v6415 = vsel %vm2178, %v6411, %v6414
          %v6416 = vrot.slane %v6414, 4
          %v6418 = vshrl.u32 %v6057, 16
          %v6420 = vrot.slane %v6418, 5
          %v6421 = vshll.u32 %v6057, 16
          %v6423 = vrot.slane %v6421, 6
          %v6424 = vor.u32 %v6420, %v6423
          %v6425 = vsel %vm2178, %v6416, %v6424
          %v6458 = vmax.bf16 %v6010, %v6070
          %v6459 = vmax.bf16 %v6011, %v6080
          %v6460 = vmax.bf16 %v6012, %v6093
          %v6461 = vmax.bf16 %v6013, %v6103
          %v6462 = vmax.bf16 %v6014, %v6116
          %v6463 = vmax.bf16 %v6015, %v6126
          %v6464 = vmax.bf16 %v6016, %v6139
          %v6465 = vmax.bf16 %v6017, %v6149
          %v6466 = vmax.bf16 %v6018, %v6162
          %v6467 = vmax.bf16 %v6019, %v6172
          %v6468 = vmax.bf16 %v6020, %v6185
          %v6469 = vmax.bf16 %v6021, %v6195
          %v6470 = vmax.bf16 %v6022, %v6208
          %v6471 = vmax.bf16 %v6023, %v6218
          %v6472 = vmax.bf16 %v6024, %v6231
          %v6473 = vmax.bf16 %v6025, %v6241
          %v6474 = vmax.bf16 %v6026, %v6254
          %v6475 = vmax.bf16 %v6027, %v6264
          %v6476 = vmax.bf16 %v6028, %v6277
          %v6477 = vmax.bf16 %v6029, %v6287
          %v6478 = vmax.bf16 %v6030, %v6300
          %v6479 = vmax.bf16 %v6031, %v6310
          %v6480 = vmax.bf16 %v6032, %v6323
          %v6481 = vmax.bf16 %v6033, %v6333
          %v6482 = vmax.bf16 %v6034, %v6346
          %v6483 = vmax.bf16 %v6035, %v6356
          %v6484 = vmax.bf16 %v6036, %v6369
          %v6485 = vmax.bf16 %v6037, %v6379
          %v6486 = vmax.bf16 %v6038, %v6392
          %v6487 = vmax.bf16 %v6039, %v6402
          %v6488 = vmax.bf16 %v6040, %v6415
          %v6489 = vmax.bf16 %v6041, %v6425
          %v6490 = vld [vmem:[#allocation3] sm:$0xc]
          %v6491 = vld [vmem:[#allocation3 + $0xc] sm:$0xc]
          %v6492 = vld [vmem:[#allocation3 + $0x18] sm:$0xc]
          %v6493 = vld [vmem:[#allocation3 + $0x24] sm:$0xc]
          %v6494 = vld [vmem:[#allocation3 + $0x30] sm:$0xc]
          %v6495 = vld [vmem:[#allocation3 + $0x3c] sm:$0xc]
          %v6496 = vld [vmem:[#allocation3 + $0x48] sm:$0xc]
          %v6497 = vld [vmem:[#allocation3 + $0x54] sm:$0xc]
          %v6498 = vld [vmem:[#allocation3 + $0x60] sm:$0xc]
          %v6499 = vld [vmem:[#allocation3 + $0x6c] sm:$0xc]
          %v6500 = vld [vmem:[#allocation3 + $0x78] sm:$0xc]
          %v6501 = vld [vmem:[#allocation3 + $0x84] sm:$0xc]
          %v6502 = vld [vmem:[#allocation3 + $0x90] sm:$0xc]
          %v6503 = vld [vmem:[#allocation3 + $0x9c] sm:$0xc]
          %v6504 = vld [vmem:[#allocation3 + $0xa8] sm:$0xc]
          %v6505 = vld [vmem:[#allocation3 + $0xb4] sm:$0xc]
          %v6538 = vrot.slane %v6490, 6
          %v6539 = vrot.slane %v6538, 4
          %v6540 = vrot.slane %v5307, 6
          %v6541 = vsel %vm2661, %v6539, %v6540
          %v6542 = vrot.slane %v6540, 4
          %v6543 = vrot.slane %v6042, 6
          %v6544 = vsel %vm2661, %v6542, %v6543
          %v6545 = vrot.slane %v6491, 6
          %v6546 = vrot.slane %v6545, 4
          %v6547 = vrot.slane %v5309, 6
          %v6548 = vsel %vm2661, %v6546, %v6547
          %v6549 = vrot.slane %v6547, 4
          %v6550 = vrot.slane %v6043, 6
          %v6551 = vsel %vm2661, %v6549, %v6550
          %v6552 = vrot.slane %v6492, 6
          %v6553 = vrot.slane %v6552, 4
          %v6554 = vrot.slane %v5311, 6
          %v6555 = vsel %vm2661, %v6553, %v6554
          %v6556 = vrot.slane %v6554, 4
          %v6557 = vrot.slane %v6044, 6
          %v6558 = vsel %vm2661, %v6556, %v6557
          %v6559 = vrot.slane %v6493, 6
          %v6560 = vrot.slane %v6559, 4
          %v6561 = vrot.slane %v5313, 6
          %v6562 = vsel %vm2661, %v6560, %v6561
          %v6563 = vrot.slane %v6561, 4
          %v6564 = vrot.slane %v6045, 6
          %v6565 = vsel %vm2661, %v6563, %v6564
          %v6566 = vrot.slane %v6494, 6
          %v6567 = vrot.slane %v6566, 4
          %v6568 = vrot.slane %v5315, 6
          %v6569 = vsel %vm2661, %v6567, %v6568
          %v6570 = vrot.slane %v6568, 4
          %v6571 = vrot.slane %v6046, 6
          %v6572 = vsel %vm2661, %v6570, %v6571
          %v6573 = vrot.slane %v6495, 6
          %v6574 = vrot.slane %v6573, 4
          %v6575 = vrot.slane %v5317, 6
          %v6576 = vsel %vm2661, %v6574, %v6575
          %v6577 = vrot.slane %v6575, 4
          %v6578 = vrot.slane %v6047, 6
          %v6579 = vsel %vm2661, %v6577, %v6578
          %v6580 = vrot.slane %v6496, 6
          %v6581 = vrot.slane %v6580, 4
          %v6582 = vrot.slane %v5319, 6
          %v6583 = vsel %vm2661, %v6581, %v6582
          %v6584 = vrot.slane %v6582, 4
          %v6585 = vrot.slane %v6048, 6
          %v6586 = vsel %vm2661, %v6584, %v6585
          %v6587 = vrot.slane %v6497, 6
          %v6588 = vrot.slane %v6587, 4
          %v6589 = vrot.slane %v5321, 6
          %v6590 = vsel %vm2661, %v6588, %v6589
          %v6591 = vrot.slane %v6589, 4
          %v6592 = vrot.slane %v6049, 6
          %v6593 = vsel %vm2661, %v6591, %v6592
          %v6594 = vrot.slane %v6498, 6
          %v6595 = vrot.slane %v6594, 4
          %v6596 = vrot.slane %v5323, 6
          %v6597 = vsel %vm2661, %v6595, %v6596
          %v6598 = vrot.slane %v6596, 4
          %v6599 = vrot.slane %v6050, 6
          %v6600 = vsel %vm2661, %v6598, %v6599
          %v6601 = vrot.slane %v6499, 6
          %v6602 = vrot.slane %v6601, 4
          %v6603 = vrot.slane %v5325, 6
          %v6604 = vsel %vm2661, %v6602, %v6603
          %v6605 = vrot.slane %v6603, 4
          %v6606 = vrot.slane %v6051, 6
          %v6607 = vsel %vm2661, %v6605, %v6606
          %v6608 = vrot.slane %v6500, 6
          %v6609 = vrot.slane %v6608, 4
          %v6610 = vrot.slane %v5327, 6
          %v6611 = vsel %vm2661, %v6609, %v6610
          %v6612 = vrot.slane %v6610, 4
          %v6613 = vrot.slane %v6052, 6
          %v6614 = vsel %vm2661, %v6612, %v6613
          %v6615 = vrot.slane %v6501, 6
          %v6616 = vrot.slane %v6615, 4
          %v6617 = vrot.slane %v5329, 6
          %v6618 = vsel %vm2661, %v6616, %v6617
          %v6619 = vrot.slane %v6617, 4
          %v6620 = vrot.slane %v6053, 6
          %v6621 = vsel %vm2661, %v6619, %v6620
          %v6622 = vrot.slane %v6502, 6
          %v6623 = vrot.slane %v6622, 4
          %v6624 = vrot.slane %v5331, 6
          %v6625 = vsel %vm2661, %v6623, %v6624
          %v6626 = vrot.slane %v6624, 4
          %v6627 = vrot.slane %v6054, 6
          %v6628 = vsel %vm2661, %v6626, %v6627
          %v6629 = vrot.slane %v6503, 6
          %v6630 = vrot.slane %v6629, 4
          %v6631 = vrot.slane %v5333, 6
          %v6632 = vsel %vm2661, %v6630, %v6631
          %v6633 = vrot.slane %v6631, 4
          %v6634 = vrot.slane %v6055, 6
          %v6635 = vsel %vm2661, %v6633, %v6634
          %v6636 = vrot.slane %v6504, 6
          %v6637 = vrot.slane %v6636, 4
          %v6638 = vrot.slane %v5335, 6
          %v6639 = vsel %vm2661, %v6637, %v6638
          %v6640 = vrot.slane %v6638, 4
          %v6641 = vrot.slane %v6056, 6
          %v6642 = vsel %vm2661, %v6640, %v6641
          %v6643 = vrot.slane %v6505, 6
          %v6644 = vrot.slane %v6643, 4
          %v6645 = vrot.slane %v5337, 6
          %v6646 = vsel %vm2661, %v6644, %v6645
          %v6647 = vrot.slane %v6645, 4
          %v6648 = vrot.slane %v6057, 6
          %v6649 = vsel %vm2661, %v6647, %v6648
          %v6682 = vmax.bf16 %v6458, %v6541
          %v6683 = vmax.bf16 %v6459, %v6544
          %v6684 = vmax.bf16 %v6460, %v6548
          %v6685 = vmax.bf16 %v6461, %v6551
          %v6686 = vmax.bf16 %v6462, %v6555
          %v6687 = vmax.bf16 %v6463, %v6558
          %v6688 = vmax.bf16 %v6464, %v6562
          %v6689 = vmax.bf16 %v6465, %v6565
          %v6690 = vmax.bf16 %v6466, %v6569
          %v6691 = vmax.bf16 %v6467, %v6572
          %v6692 = vmax.bf16 %v6468, %v6576
          %v6693 = vmax.bf16 %v6469, %v6579
          %v6694 = vmax.bf16 %v6470, %v6583
          %v6695 = vmax.bf16 %v6471, %v6586
          %v6696 = vmax.bf16 %v6472, %v6590
          %v6697 = vmax.bf16 %v6473, %v6593
          %v6698 = vmax.bf16 %v6474, %v6597
          %v6699 = vmax.bf16 %v6475, %v6600
          %v6700 = vmax.bf16 %v6476, %v6604
          %v6701 = vmax.bf16 %v6477, %v6607
          %v6702 = vmax.bf16 %v6478, %v6611
          %v6703 = vmax.bf16 %v6479, %v6614
          %v6704 = vmax.bf16 %v6480, %v6618
          %v6705 = vmax.bf16 %v6481, %v6621
          %v6706 = vmax.bf16 %v6482, %v6625
          %v6707 = vmax.bf16 %v6483, %v6628
          %v6708 = vmax.bf16 %v6484, %v6632
          %v6709 = vmax.bf16 %v6485, %v6635
          %v6710 = vmax.bf16 %v6486, %v6639
          %v6711 = vmax.bf16 %v6487, %v6642
          %v6712 = vmax.bf16 %v6488, %v6646
          %v6713 = vmax.bf16 %v6489, %v6649
          %v6746 = vunpack.c.l.b16 %v6682
          %v6747 = vunpack.c.l.b16 %v6683
          %v6748 = vunpack.c.l.b16 %v6684
          %v6749 = vunpack.c.l.b16 %v6685
          %v6750 = vunpack.c.l.b16 %v6686
          %v6751 = vunpack.c.l.b16 %v6687
          %v6752 = vunpack.c.l.b16 %v6688
          %v6753 = vunpack.c.l.b16 %v6689
          %v6754 = vunpack.c.l.b16 %v6690
          %v6755 = vunpack.c.l.b16 %v6691
          %v6756 = vunpack.c.l.b16 %v6692
          %v6757 = vunpack.c.l.b16 %v6693
          %v6758 = vunpack.c.l.b16 %v6694
          %v6759 = vunpack.c.l.b16 %v6695
          %v6760 = vunpack.c.l.b16 %v6696
          %v6761 = vunpack.c.l.b16 %v6697
          %v6762 = vunpack.c.l.b16 %v6698
          %v6763 = vunpack.c.l.b16 %v6699
          %v6764 = vunpack.c.l.b16 %v6700
          %v6765 = vunpack.c.l.b16 %v6701
          %v6766 = vunpack.c.l.b16 %v6702
          %v6767 = vunpack.c.l.b16 %v6703
          %v6768 = vunpack.c.l.b16 %v6704
          %v6769 = vunpack.c.l.b16 %v6705
          %v6770 = vunpack.c.l.b16 %v6706
          %v6771 = vunpack.c.l.b16 %v6707
          %v6772 = vunpack.c.l.b16 %v6708
          %v6773 = vunpack.c.l.b16 %v6709
          %v6774 = vunpack.c.l.b16 %v6710
          %v6775 = vunpack.c.l.b16 %v6711
          %v6776 = vunpack.c.l.b16 %v6712
          %v6777 = vunpack.c.l.b16 %v6713
          %v6778 = vpack.c.b16 %v6747, %v6746
          %v6779 = vpack.c.b16 %v6749, %v6748
          %v6780 = vpack.c.b16 %v6751, %v6750
          %v6781 = vpack.c.b16 %v6753, %v6752
          %v6782 = vpack.c.b16 %v6755, %v6754
          %v6783 = vpack.c.b16 %v6757, %v6756
          %v6784 = vpack.c.b16 %v6759, %v6758
          %v6785 = vpack.c.b16 %v6761, %v6760
          %v6786 = vpack.c.b16 %v6763, %v6762
          %v6787 = vpack.c.b16 %v6765, %v6764
          %v6788 = vpack.c.b16 %v6767, %v6766
          %v6789 = vpack.c.b16 %v6769, %v6768
          %v6790 = vpack.c.b16 %v6771, %v6770
          %v6791 = vpack.c.b16 %v6773, %v6772
          %v6792 = vpack.c.b16 %v6775, %v6774
          %v6793 = vpack.c.b16 %v6777, %v6776
          %6810 = vst [vmem:[%s2934] sm:$0xff] %v6778
          %6811 = vst [vmem:[%s2934 + $0x8] sm:$0xff] %v6779
          %6812 = vst [vmem:[%s2934 + $0x10] sm:$0xff] %v6780
          %6813 = vst [vmem:[%s2934 + $0x18] sm:$0xff] %v6781
          %6814 = vst [vmem:[%s2934 + $0x20] sm:$0xff] %v6782
          %6815 = vst [vmem:[%s2934 + $0x28] sm:$0xff] %v6783
          %6816 = vst [vmem:[%s2934 + $0x30] sm:$0xff] %v6784
          %6817 = vst [vmem:[%s2934 + $0x38] sm:$0xff] %v6785
          %6818 = vst [vmem:[%s2934 + $0x40] sm:$0xff] %v6786
          %6819 = vst [vmem:[%s2934 + $0x48] sm:$0xff] %v6787
          %6820 = vst [vmem:[%s2934 + $0x50] sm:$0xff] %v6788
          %6821 = vst [vmem:[%s2934 + $0x58] sm:$0xff] %v6789
          %6822 = vst [vmem:[%s2934 + $0x60] sm:$0xff] %v6790
          %6823 = vst [vmem:[%s2934 + $0x68] sm:$0xff] %v6791
          %6824 = vst [vmem:[%s2934 + $0x70] sm:$0xff] %v6792
          %6825 = vst [vmem:[%s2934 + $0x78] sm:$0xff] %v6793
          %v6826 = vld [vmem:[#allocation4] sm:$0xff]
          %v6827 = vld [vmem:[#allocation4 + $0x8] sm:$0xff]
          %v6828 = vld [vmem:[#allocation4 + $0x10] sm:$0xff]
          %v6829 = vld [vmem:[#allocation4 + $0x18] sm:$0xff]
          %v6830 = vld [vmem:[#allocation4 + $0x20] sm:$0xff]
          %v6831 = vld [vmem:[#allocation4 + $0x28] sm:$0xff]
          %v6832 = vld [vmem:[#allocation4 + $0x30] sm:$0xff]
          %v6833 = vld [vmem:[#allocation4 + $0x38] sm:$0xff]
          %v6834 = vld [vmem:[#allocation4 + $0x40] sm:$0xff]
          %v6835 = vld [vmem:[#allocation4 + $0x48] sm:$0xff]
          %v6836 = vld [vmem:[#allocation4 + $0x50] sm:$0xff]
          %v6837 = vld [vmem:[#allocation4 + $0x58] sm:$0xff]
          %v6838 = vld [vmem:[#allocation4 + $0x60] sm:$0xff]
          %v6839 = vld [vmem:[#allocation4 + $0x68] sm:$0xff]
          %v6840 = vld [vmem:[#allocation4 + $0x70] sm:$0xff]
          %v6841 = vld [vmem:[#allocation4 + $0x78] sm:$0xff]
          %v6842 = vld [vmem:[%s2967] sm:$0xff]
          %v6843 = vld [vmem:[%s2967 + $0x8] sm:$0xff]
          %v6844 = vld [vmem:[%s2967 + $0x10] sm:$0xff]
          %v6845 = vld [vmem:[%s2967 + $0x18] sm:$0xff]
          %v6846 = vld [vmem:[%s2967 + $0x20] sm:$0xff]
          %v6847 = vld [vmem:[%s2967 + $0x28] sm:$0xff]
          %v6848 = vld [vmem:[%s2967 + $0x30] sm:$0xff]
          %v6849 = vld [vmem:[%s2967 + $0x38] sm:$0xff]
          %v6850 = vld [vmem:[%s2967 + $0x40] sm:$0xff]
          %v6851 = vld [vmem:[%s2967 + $0x48] sm:$0xff]
          %v6852 = vld [vmem:[%s2967 + $0x50] sm:$0xff]
          %v6853 = vld [vmem:[%s2967 + $0x58] sm:$0xff]
          %v6854 = vld [vmem:[%s2967 + $0x60] sm:$0xff]
          %v6855 = vld [vmem:[%s2967 + $0x68] sm:$0xff]
          %v6856 = vld [vmem:[%s2967 + $0x70] sm:$0xff]
          %v6857 = vld [vmem:[%s2967 + $0x78] sm:$0xff]
          %v6858 = vmax.bf16 %v6826, %v6842
          %v6859 = vmax.bf16 %v6827, %v6843
          %v6860 = vmax.bf16 %v6828, %v6844
          %v6861 = vmax.bf16 %v6829, %v6845
          %v6862 = vmax.bf16 %v6830, %v6846
          %v6863 = vmax.bf16 %v6831, %v6847
          %v6864 = vmax.bf16 %v6832, %v6848
          %v6865 = vmax.bf16 %v6833, %v6849
          %v6866 = vmax.bf16 %v6834, %v6850
          %v6867 = vmax.bf16 %v6835, %v6851
          %v6868 = vmax.bf16 %v6836, %v6852
          %v6869 = vmax.bf16 %v6837, %v6853
          %v6870 = vmax.bf16 %v6838, %v6854
          %v6871 = vmax.bf16 %v6839, %v6855
          %v6872 = vmax.bf16 %v6840, %v6856
          %v6873 = vmax.bf16 %v6841, %v6857
          %v6874 = vld [vmem:[%s2934] sm:$0xff]
          %v6875 = vld [vmem:[%s2934 + $0x8] sm:$0xff]
          %v6876 = vld [vmem:[%s2934 + $0x10] sm:$0xff]
          %v6877 = vld [vmem:[%s2934 + $0x18] sm:$0xff]
          %v6878 = vld [vmem:[%s2934 + $0x20] sm:$0xff]
          %v6879 = vld [vmem:[%s2934 + $0x28] sm:$0xff]
          %v6880 = vld [vmem:[%s2934 + $0x30] sm:$0xff]
          %v6881 = vld [vmem:[%s2934 + $0x38] sm:$0xff]
          %v6882 = vld [vmem:[%s2934 + $0x40] sm:$0xff]
          %v6883 = vld [vmem:[%s2934 + $0x48] sm:$0xff]
          %v6884 = vld [vmem:[%s2934 + $0x50] sm:$0xff]
          %v6885 = vld [vmem:[%s2934 + $0x58] sm:$0xff]
          %v6886 = vld [vmem:[%s2934 + $0x60] sm:$0xff]
          %v6887 = vld [vmem:[%s2934 + $0x68] sm:$0xff]
          %v6888 = vld [vmem:[%s2934 + $0x70] sm:$0xff]
          %v6889 = vld [vmem:[%s2934 + $0x78] sm:$0xff]
          %v6890 = vmax.bf16 %v6858, %v6874
          %v6891 = vmax.bf16 %v6859, %v6875
          %v6892 = vmax.bf16 %v6860, %v6876
          %v6893 = vmax.bf16 %v6861, %v6877
          %v6894 = vmax.bf16 %v6862, %v6878
          %v6895 = vmax.bf16 %v6863, %v6879
          %v6896 = vmax.bf16 %v6864, %v6880
          %v6897 = vmax.bf16 %v6865, %v6881
          %v6898 = vmax.bf16 %v6866, %v6882
          %v6899 = vmax.bf16 %v6867, %v6883
          %v6900 = vmax.bf16 %v6868, %v6884
          %v6901 = vmax.bf16 %v6869, %v6885
          %v6902 = vmax.bf16 %v6870, %v6886
          %v6903 = vmax.bf16 %v6871, %v6887
          %v6904 = vmax.bf16 %v6872, %v6888
          %v6905 = vmax.bf16 %v6873, %v6889
          %v6906 = vld [vmem:[%s3032] sm:$0xff]
          %v6907 = vld [vmem:[%s3032 + $0x8] sm:$0xff]
          %v6908 = vld [vmem:[%s3032 + $0x10] sm:$0xff]
          %v6909 = vld [vmem:[%s3032 + $0x18] sm:$0xff]
          %v6910 = vld [vmem:[%s3032 + $0x20] sm:$0xff]
          %v6911 = vld [vmem:[%s3032 + $0x28] sm:$0xff]
          %v6912 = vld [vmem:[%s3032 + $0x30] sm:$0xff]
          %v6913 = vld [vmem:[%s3032 + $0x38] sm:$0xff]
          %v6914 = vld [vmem:[%s3032 + $0x40] sm:$0xff]
          %v6915 = vld [vmem:[%s3032 + $0x48] sm:$0xff]
          %v6916 = vld [vmem:[%s3032 + $0x50] sm:$0xff]
          %v6917 = vld [vmem:[%s3032 + $0x58] sm:$0xff]
          %v6918 = vld [vmem:[%s3032 + $0x60] sm:$0xff]
          %v6919 = vld [vmem:[%s3032 + $0x68] sm:$0xff]
          %v6920 = vld [vmem:[%s3032 + $0x70] sm:$0xff]
          %v6921 = vld [vmem:[%s3032 + $0x78] sm:$0xff]
          %v6922 = vmax.bf16 %v6890, %v6906
          %v6923 = vmax.bf16 %v6891, %v6907
          %v6924 = vmax.bf16 %v6892, %v6908
          %v6925 = vmax.bf16 %v6893, %v6909
          %v6926 = vmax.bf16 %v6894, %v6910
          %v6927 = vmax.bf16 %v6895, %v6911
          %v6928 = vmax.bf16 %v6896, %v6912
          %v6929 = vmax.bf16 %v6897, %v6913
          %v6930 = vmax.bf16 %v6898, %v6914
          %v6931 = vmax.bf16 %v6899, %v6915
          %v6932 = vmax.bf16 %v6900, %v6916
          %v6933 = vmax.bf16 %v6901, %v6917
          %v6934 = vmax.bf16 %v6902, %v6918
          %v6935 = vmax.bf16 %v6903, %v6919
          %v6936 = vmax.bf16 %v6904, %v6920
          %v6937 = vmax.bf16 %v6905, %v6921
          %v6938 = vld [vmem:[%s3065] sm:$0xff]
          %v6939 = vld [vmem:[%s3065 + $0x8] sm:$0xff]
          %v6940 = vld [vmem:[%s3065 + $0x10] sm:$0xff]
          %v6941 = vld [vmem:[%s3065 + $0x18] sm:$0xff]
          %v6942 = vld [vmem:[%s3065 + $0x20] sm:$0xff]
          %v6943 = vld [vmem:[%s3065 + $0x28] sm:$0xff]
          %v6944 = vld [vmem:[%s3065 + $0x30] sm:$0xff]
          %v6945 = vld [vmem:[%s3065 + $0x38] sm:$0xff]
          %v6946 = vld [vmem:[%s3065 + $0x40] sm:$0xff]
          %v6947 = vld [vmem:[%s3065 + $0x48] sm:$0xff]
          %v6948 = vld [vmem:[%s3065 + $0x50] sm:$0xff]
          %v6949 = vld [vmem:[%s3065 + $0x58] sm:$0xff]
          %v6950 = vld [vmem:[%s3065 + $0x60] sm:$0xff]
          %v6951 = vld [vmem:[%s3065 + $0x68] sm:$0xff]
          %v6952 = vld [vmem:[%s3065 + $0x70] sm:$0xff]
          %v6953 = vld [vmem:[%s3065 + $0x78] sm:$0xff]
          %v6954 = vmax.bf16 %v6922, %v6938
          %v6955 = vmax.bf16 %v6923, %v6939
          %v6956 = vmax.bf16 %v6924, %v6940
          %v6957 = vmax.bf16 %v6925, %v6941
          %v6958 = vmax.bf16 %v6926, %v6942
          %v6959 = vmax.bf16 %v6927, %v6943
          %v6960 = vmax.bf16 %v6928, %v6944
          %v6961 = vmax.bf16 %v6929, %v6945
          %v6962 = vmax.bf16 %v6930, %v6946
          %v6963 = vmax.bf16 %v6931, %v6947
          %v6964 = vmax.bf16 %v6932, %v6948
          %v6965 = vmax.bf16 %v6933, %v6949
          %v6966 = vmax.bf16 %v6934, %v6950
          %v6967 = vmax.bf16 %v6935, %v6951
          %v6968 = vmax.bf16 %v6936, %v6952
          %v6969 = vmax.bf16 %v6937, %v6953
          %6970 = vst [vmem:[#allocation2 + $0x18] sm:$0xff] %v6954
          %6971 = vst [vmem:[#allocation2 + $0x38] sm:$0xff] %v6955
          %6972 = vst [vmem:[#allocation2 + $0x58] sm:$0xff] %v6956
          %6973 = vst [vmem:[#allocation2 + $0x78] sm:$0xff] %v6957
          %6974 = vst [vmem:[#allocation2 + $0x98] sm:$0xff] %v6958
          %6975 = vst [vmem:[#allocation2 + $0xb8] sm:$0xff] %v6959
          %6976 = vst [vmem:[#allocation2 + $0xd8] sm:$0xff] %v6960
          %6977 = vst [vmem:[#allocation2 + $0xf8] sm:$0xff] %v6961
          %6978 = vst [vmem:[#allocation2 + $0x118] sm:$0xff] %v6962
          %6979 = vst [vmem:[#allocation2 + $0x138] sm:$0xff] %v6963
          %6980 = vst [vmem:[#allocation2 + $0x158] sm:$0xff] %v6964
          %6981 = vst [vmem:[#allocation2 + $0x178] sm:$0xff] %v6965
          %6982 = vst [vmem:[#allocation2 + $0x198] sm:$0xff] %v6966
          %6983 = vst [vmem:[#allocation2 + $0x1b8] sm:$0xff] %v6967
          %6984 = vst [vmem:[#allocation2 + $0x1d8] sm:$0xff] %v6968
          %6985 = vst [vmem:[#allocation2 + $0x1f8] sm:$0xff] %v6969
        $region80: #{_lambda_.1} parent=47 // pred_fallthru
          _
        %s6986 = smul.u32 %s34, 64
        %s6987 = smul.addr %s6986, 4
        %s6988 = scalar_lea.vmem [#allocation13], %s6987
        %v6989 = vld [vmem:[%s6988] sm:$0xf]
        %v6990 = vld [vmem:[%s6988 + $0x4] sm:$0xf]
        %v6991 = vld [vmem:[%s6988 + $0x8] sm:$0xf]
        %v6992 = vld [vmem:[%s6988 + $0xc] sm:$0xf]
        %v6993 = vld [vmem:[%s6988 + $0x10] sm:$0xf]
        %v6994 = vld [vmem:[%s6988 + $0x14] sm:$0xf]
        %v6995 = vld [vmem:[%s6988 + $0x18] sm:$0xf]
        %v6996 = vld [vmem:[%s6988 + $0x1c] sm:$0xf]
        %v6997 = vld [vmem:[%s6988 + $0x20] sm:$0xf]
        %v6998 = vld [vmem:[%s6988 + $0x24] sm:$0xf]
        %v6999 = vld [vmem:[%s6988 + $0x28] sm:$0xf]
        %v7000 = vld [vmem:[%s6988 + $0x2c] sm:$0xf]
        %v7001 = vld [vmem:[%s6988 + $0x30] sm:$0xf]
        %v7002 = vld [vmem:[%s6988 + $0x34] sm:$0xf]
        %v7003 = vld [vmem:[%s6988 + $0x38] sm:$0xf]
        %v7004 = vld [vmem:[%s6988 + $0x3c] sm:$0xf]
        %v7005 = vld [vmem:[%s6988 + $0x40] sm:$0xf]
        %v7006 = vld [vmem:[%s6988 + $0x44] sm:$0xf]
        %v7007 = vld [vmem:[%s6988 + $0x48] sm:$0xf]
        %v7008 = vld [vmem:[%s6988 + $0x4c] sm:$0xf]
        %v7009 = vld [vmem:[%s6988 + $0x50] sm:$0xf]
        %v7010 = vld [vmem:[%s6988 + $0x54] sm:$0xf]
        %v7011 = vld [vmem:[%s6988 + $0x58] sm:$0xf]
        %v7012 = vld [vmem:[%s6988 + $0x5c] sm:$0xf]
        %v7013 = vld [vmem:[%s6988 + $0x60] sm:$0xf]
        %v7014 = vld [vmem:[%s6988 + $0x64] sm:$0xf]
        %v7015 = vld [vmem:[%s6988 + $0x68] sm:$0xf]
        %v7016 = vld [vmem:[%s6988 + $0x6c] sm:$0xf]
        %v7017 = vld [vmem:[%s6988 + $0x70] sm:$0xf]
        %v7018 = vld [vmem:[%s6988 + $0x74] sm:$0xf]
        %v7019 = vld [vmem:[%s6988 + $0x78] sm:$0xf]
        %v7020 = vld [vmem:[%s6988 + $0x7c] sm:$0xf]
        %v7021 = vld [vmem:[%s6988 + $0x80] sm:$0xf]
        %v7022 = vld [vmem:[%s6988 + $0x84] sm:$0xf]
        %v7023 = vld [vmem:[%s6988 + $0x88] sm:$0xf]
        %v7024 = vld [vmem:[%s6988 + $0x8c] sm:$0xf]
        %v7025 = vld [vmem:[%s6988 + $0x90] sm:$0xf]
        %v7026 = vld [vmem:[%s6988 + $0x94] sm:$0xf]
        %v7027 = vld [vmem:[%s6988 + $0x98] sm:$0xf]
        %v7028 = vld [vmem:[%s6988 + $0x9c] sm:$0xf]
        %v7029 = vld [vmem:[%s6988 + $0xa0] sm:$0xf]
        %v7030 = vld [vmem:[%s6988 + $0xa4] sm:$0xf]
        %v7031 = vld [vmem:[%s6988 + $0xa8] sm:$0xf]
        %v7032 = vld [vmem:[%s6988 + $0xac] sm:$0xf]
        %v7033 = vld [vmem:[%s6988 + $0xb0] sm:$0xf]
        %v7034 = vld [vmem:[%s6988 + $0xb4] sm:$0xf]
        %v7035 = vld [vmem:[%s6988 + $0xb8] sm:$0xf]
        %v7036 = vld [vmem:[%s6988 + $0xbc] sm:$0xf]
        %v7037 = vld [vmem:[%s6988 + $0xc0] sm:$0xf]
        %v7038 = vld [vmem:[%s6988 + $0xc4] sm:$0xf]
        %v7039 = vld [vmem:[%s6988 + $0xc8] sm:$0xf]
        %v7040 = vld [vmem:[%s6988 + $0xcc] sm:$0xf]
        %v7041 = vld [vmem:[%s6988 + $0xd0] sm:$0xf]
        %v7042 = vld [vmem:[%s6988 + $0xd4] sm:$0xf]
        %v7043 = vld [vmem:[%s6988 + $0xd8] sm:$0xf]
        %v7044 = vld [vmem:[%s6988 + $0xdc] sm:$0xf]
        %v7045 = vld [vmem:[%s6988 + $0xe0] sm:$0xf]
        %v7046 = vld [vmem:[%s6988 + $0xe4] sm:$0xf]
        %v7047 = vld [vmem:[%s6988 + $0xe8] sm:$0xf]
        %v7048 = vld [vmem:[%s6988 + $0xec] sm:$0xf]
        %v7049 = vld [vmem:[%s6988 + $0xf0] sm:$0xf]
        %v7050 = vld [vmem:[%s6988 + $0xf4] sm:$0xf]
        %v7051 = vld [vmem:[%s6988 + $0xf8] sm:$0xf]
        %v7052 = vld [vmem:[%s6988 + $0xfc] sm:$0xf]
        %v7053 = vld [vmem:[#allocation2] sm:$0xff]
        %v7054 = vld [vmem:[#allocation2 + $0x8] sm:$0xff]
        %v7055 = vld [vmem:[#allocation2 + $0x10] sm:$0xff]
        %v7056 = vld [vmem:[#allocation2 + $0x18] sm:$0xff]
        %v7057 = vld [vmem:[#allocation2 + $0x20] sm:$0xff]
        %v7058 = vld [vmem:[#allocation2 + $0x28] sm:$0xff]
        %v7059 = vld [vmem:[#allocation2 + $0x30] sm:$0xff]
        %v7060 = vld [vmem:[#allocation2 + $0x38] sm:$0xff]
        %v7061 = vld [vmem:[#allocation2 + $0x40] sm:$0xff]
        %v7062 = vld [vmem:[#allocation2 + $0x48] sm:$0xff]
        %v7063 = vld [vmem:[#allocation2 + $0x50] sm:$0xff]
        %v7064 = vld [vmem:[#allocation2 + $0x58] sm:$0xff]
        %v7065 = vld [vmem:[#allocation2 + $0x60] sm:$0xff]
        %v7066 = vld [vmem:[#allocation2 + $0x68] sm:$0xff]
        %v7067 = vld [vmem:[#allocation2 + $0x70] sm:$0xff]
        %v7068 = vld [vmem:[#allocation2 + $0x78] sm:$0xff]
        %v7069 = vld [vmem:[#allocation2 + $0x80] sm:$0xff]
        %v7070 = vld [vmem:[#allocation2 + $0x88] sm:$0xff]
        %v7071 = vld [vmem:[#allocation2 + $0x90] sm:$0xff]
        %v7072 = vld [vmem:[#allocation2 + $0x98] sm:$0xff]
        %v7073 = vld [vmem:[#allocation2 + $0xa0] sm:$0xff]
        %v7074 = vld [vmem:[#allocation2 + $0xa8] sm:$0xff]
        %v7075 = vld [vmem:[#allocation2 + $0xb0] sm:$0xff]
        %v7076 = vld [vmem:[#allocation2 + $0xb8] sm:$0xff]
        %v7077 = vld [vmem:[#allocation2 + $0xc0] sm:$0xff]
        %v7078 = vld [vmem:[#allocation2 + $0xc8] sm:$0xff]
        %v7079 = vld [vmem:[#allocation2 + $0xd0] sm:$0xff]
        %v7080 = vld [vmem:[#allocation2 + $0xd8] sm:$0xff]
        %v7081 = vld [vmem:[#allocation2 + $0xe0] sm:$0xff]
        %v7082 = vld [vmem:[#allocation2 + $0xe8] sm:$0xff]
        %v7083 = vld [vmem:[#allocation2 + $0xf0] sm:$0xff]
        %v7084 = vld [vmem:[#allocation2 + $0xf8] sm:$0xff]
        %v7085 = vld [vmem:[#allocation2 + $0x100] sm:$0xff]
        %v7086 = vld [vmem:[#allocation2 + $0x108] sm:$0xff]
        %v7087 = vld [vmem:[#allocation2 + $0x110] sm:$0xff]
        %v7088 = vld [vmem:[#allocation2 + $0x118] sm:$0xff]
        %v7089 = vld [vmem:[#allocation2 + $0x120] sm:$0xff]
        %v7090 = vld [vmem:[#allocation2 + $0x128] sm:$0xff]
        %v7091 = vld [vmem:[#allocation2 + $0x130] sm:$0xff]
        %v7092 = vld [vmem:[#allocation2 + $0x138] sm:$0xff]
        %v7093 = vld [vmem:[#allocation2 + $0x140] sm:$0xff]
        %v7094 = vld [vmem:[#allocation2 + $0x148] sm:$0xff]
        %v7095 = vld [vmem:[#allocation2 + $0x150] sm:$0xff]
        %v7096 = vld [vmem:[#allocation2 + $0x158] sm:$0xff]
        %v7097 = vld [vmem:[#allocation2 + $0x160] sm:$0xff]
        %v7098 = vld [vmem:[#allocation2 + $0x168] sm:$0xff]
        %v7099 = vld [vmem:[#allocation2 + $0x170] sm:$0xff]
        %v7100 = vld [vmem:[#allocation2 + $0x178] sm:$0xff]
        %v7101 = vld [vmem:[#allocation2 + $0x180] sm:$0xff]
        %v7102 = vld [vmem:[#allocation2 + $0x188] sm:$0xff]
        %v7103 = vld [vmem:[#allocation2 + $0x190] sm:$0xff]
        %v7104 = vld [vmem:[#allocation2 + $0x198] sm:$0xff]
        %v7105 = vld [vmem:[#allocation2 + $0x1a0] sm:$0xff]
        %v7106 = vld [vmem:[#allocation2 + $0x1a8] sm:$0xff]
        %v7107 = vld [vmem:[#allocation2 + $0x1b0] sm:$0xff]
        %v7108 = vld [vmem:[#allocation2 + $0x1b8] sm:$0xff]
        %v7109 = vld [vmem:[#allocation2 + $0x1c0] sm:$0xff]
        %v7110 = vld [vmem:[#allocation2 + $0x1c8] sm:$0xff]
        %v7111 = vld [vmem:[#allocation2 + $0x1d0] sm:$0xff]
        %v7112 = vld [vmem:[#allocation2 + $0x1d8] sm:$0xff]
        %v7113 = vld [vmem:[#allocation2 + $0x1e0] sm:$0xff]
        %v7114 = vld [vmem:[#allocation2 + $0x1e8] sm:$0xff]
        %v7115 = vld [vmem:[#allocation2 + $0x1f0] sm:$0xff]
        %v7116 = vld [vmem:[#allocation2 + $0x1f8] sm:$0xff]
        %v7181 = vunpack.c.l.b16 %v6989
        %v7182 = vunpack.c.l.b16 %v6990
        %v7183 = vunpack.c.l.b16 %v6991
        %v7184 = vunpack.c.l.b16 %v6992
        %v7185 = vunpack.c.l.b16 %v6993
        %v7186 = vunpack.c.l.b16 %v6994
        %v7187 = vunpack.c.l.b16 %v6995
        %v7188 = vunpack.c.l.b16 %v6996
        %v7189 = vunpack.c.l.b16 %v6997
        %v7190 = vunpack.c.l.b16 %v6998
        %v7191 = vunpack.c.l.b16 %v6999
        %v7192 = vunpack.c.l.b16 %v7000
        %v7193 = vunpack.c.l.b16 %v7001
        %v7194 = vunpack.c.l.b16 %v7002
        %v7195 = vunpack.c.l.b16 %v7003
        %v7196 = vunpack.c.l.b16 %v7004
        %v7197 = vunpack.c.l.b16 %v7005
        %v7198 = vunpack.c.l.b16 %v7006
        %v7199 = vunpack.c.l.b16 %v7007
        %v7200 = vunpack.c.l.b16 %v7008
        %v7201 = vunpack.c.l.b16 %v7009
        %v7202 = vunpack.c.l.b16 %v7010
        %v7203 = vunpack.c.l.b16 %v7011
        %v7204 = vunpack.c.l.b16 %v7012
        %v7205 = vunpack.c.l.b16 %v7013
        %v7206 = vunpack.c.l.b16 %v7014
        %v7207 = vunpack.c.l.b16 %v7015
        %v7208 = vunpack.c.l.b16 %v7016
        %v7209 = vunpack.c.l.b16 %v7017
        %v7210 = vunpack.c.l.b16 %v7018
        %v7211 = vunpack.c.l.b16 %v7019
        %v7212 = vunpack.c.l.b16 %v7020
        %v7213 = vunpack.c.l.b16 %v7021
        %v7214 = vunpack.c.l.b16 %v7022
        %v7215 = vunpack.c.l.b16 %v7023
        %v7216 = vunpack.c.l.b16 %v7024
        %v7217 = vunpack.c.l.b16 %v7025
        %v7218 = vunpack.c.l.b16 %v7026
        %v7219 = vunpack.c.l.b16 %v7027
        %v7220 = vunpack.c.l.b16 %v7028
        %v7221 = vunpack.c.l.b16 %v7029
        %v7222 = vunpack.c.l.b16 %v7030
        %v7223 = vunpack.c.l.b16 %v7031
        %v7224 = vunpack.c.l.b16 %v7032
        %v7225 = vunpack.c.l.b16 %v7033
        %v7226 = vunpack.c.l.b16 %v7034
        %v7227 = vunpack.c.l.b16 %v7035
        %v7228 = vunpack.c.l.b16 %v7036
        %v7229 = vunpack.c.l.b16 %v7037
        %v7230 = vunpack.c.l.b16 %v7038
        %v7231 = vunpack.c.l.b16 %v7039
        %v7232 = vunpack.c.l.b16 %v7040
        %v7233 = vunpack.c.l.b16 %v7041
        %v7234 = vunpack.c.l.b16 %v7042
        %v7235 = vunpack.c.l.b16 %v7043
        %v7236 = vunpack.c.l.b16 %v7044
        %v7237 = vunpack.c.l.b16 %v7045
        %v7238 = vunpack.c.l.b16 %v7046
        %v7239 = vunpack.c.l.b16 %v7047
        %v7240 = vunpack.c.l.b16 %v7048
        %v7241 = vunpack.c.l.b16 %v7049
        %v7242 = vunpack.c.l.b16 %v7050
        %v7243 = vunpack.c.l.b16 %v7051
        %v7244 = vunpack.c.l.b16 %v7052
        %v7245 = vpack.c.b16 %v7182, %v7181
        %v7246 = vpack.c.b16 %v7184, %v7183
        %v7247 = vpack.c.b16 %v7186, %v7185
        %v7248 = vpack.c.b16 %v7188, %v7187
        %v7249 = vpack.c.b16 %v7190, %v7189
        %v7250 = vpack.c.b16 %v7192, %v7191
        %v7251 = vpack.c.b16 %v7194, %v7193
        %v7252 = vpack.c.b16 %v7196, %v7195
        %v7253 = vpack.c.b16 %v7198, %v7197
        %v7254 = vpack.c.b16 %v7200, %v7199
        %v7255 = vpack.c.b16 %v7202, %v7201
        %v7256 = vpack.c.b16 %v7204, %v7203
        %v7257 = vpack.c.b16 %v7206, %v7205
        %v7258 = vpack.c.b16 %v7208, %v7207
        %v7259 = vpack.c.b16 %v7210, %v7209
        %v7260 = vpack.c.b16 %v7212, %v7211
        %v7261 = vpack.c.b16 %v7214, %v7213
        %v7262 = vpack.c.b16 %v7216, %v7215
        %v7263 = vpack.c.b16 %v7218, %v7217
        %v7264 = vpack.c.b16 %v7220, %v7219
        %v7265 = vpack.c.b16 %v7222, %v7221
        %v7266 = vpack.c.b16 %v7224, %v7223
        %v7267 = vpack.c.b16 %v7226, %v7225
        %v7268 = vpack.c.b16 %v7228, %v7227
        %v7269 = vpack.c.b16 %v7230, %v7229
        %v7270 = vpack.c.b16 %v7232, %v7231
        %v7271 = vpack.c.b16 %v7234, %v7233
        %v7272 = vpack.c.b16 %v7236, %v7235
        %v7273 = vpack.c.b16 %v7238, %v7237
        %v7274 = vpack.c.b16 %v7240, %v7239
        %v7275 = vpack.c.b16 %v7242, %v7241
        %v7276 = vpack.c.b16 %v7244, %v7243
        %7309 = vmatprep.subr.bf16.mxu0 0
        %7310 = vmatpush1.bf16.msra.mxu0 %v7245
        %7311 = vmatprep.subr.bf16.mxu0 0
        %7312 = vmatpush1.bf16.msra.mxu0 %v7246
        %7313 = vmatprep.subr.bf16.mxu0 0
        %7314 = vmatpush1.bf16.msra.mxu0 %v7247
        %7315 = vmatprep.subr.bf16.mxu0 0
        %7316 = vmatpush1.bf16.msra.mxu0 %v7248
        %7317 = vmatprep.subr.bf16.mxu0 0
        %7318 = vmatpush1.bf16.msra.mxu0 %v7249
        %7319 = vmatprep.subr.bf16.mxu0 0
        %7320 = vmatpush1.bf16.msra.mxu0 %v7250
        %7321 = vmatprep.subr.bf16.mxu0 0
        %7322 = vmatpush1.bf16.msra.mxu0 %v7251
        %7323 = vmatprep.subr.bf16.mxu0 0
        %7324 = vmatpush1.bf16.msra.mxu0 %v7252
        %7325 = vmatprep.subr.bf16.mxu0 0
        %7326 = vmatpush1.bf16.msra.mxu0 %v7253
        %7327 = vmatprep.subr.bf16.mxu0 0
        %7328 = vmatpush1.bf16.msra.mxu0 %v7254
        %7329 = vmatprep.subr.bf16.mxu0 0
        %7330 = vmatpush1.bf16.msra.mxu0 %v7255
        %7331 = vmatprep.subr.bf16.mxu0 0
        %7332 = vmatpush1.bf16.msra.mxu0 %v7256
        %7333 = vmatprep.subr.bf16.mxu0 0
        %7334 = vmatpush1.bf16.msra.mxu0 %v7257
        %7335 = vmatprep.subr.bf16.mxu0 0
        %7336 = vmatpush1.bf16.msra.mxu0 %v7258
        %7337 = vmatprep.subr.bf16.mxu0 0
        %7338 = vmatpush1.bf16.msra.mxu0 %v7259
        %7339 = vmatprep.subr.bf16.mxu0 0
        %7340 = vmatpush1.bf16.msra.mxu0 %v7260
        %7341 = vmatprep.mubr.bf16.mxu0 %v7054
        %7342 = vmatmul.mubr.bf16.gmra.mrb[0].mxu0 %v7053
        %v7343 = vpop.f32.mrb[0].mxu0
        %v7344 = vadd.f32 0.0, %v7343
        %v7345 = vpop.f32.mrb[0].mxu0
        %v7346 = vpop.f32.mrb[0].mxu0
        %v7347 = vadd.f32 0.0, %v7346
        %v7348 = vpop.f32.mrb[0].mxu0
        %7349 = vmatprep.mubr.bf16.mxu0 %v7058
        %7350 = vmatmul.mubr.bf16.gmra.mrb[0].mxu0 %v7057
        %v7351 = vpop.f32.mrb[0].mxu0
        %v7352 = vadd.f32 0.0, %v7351
        %v7353 = vpop.f32.mrb[0].mxu0
        %v7354 = vpop.f32.mrb[0].mxu0
        %v7355 = vadd.f32 0.0, %v7354
        %v7356 = vpop.f32.mrb[0].mxu0
        %7357 = vmatprep.mubr.bf16.mxu0 %v7062
        %7358 = vmatmul.mubr.bf16.gmra.mrb[0].mxu0 %v7061
        %v7359 = vpop.f32.mrb[0].mxu0
        %v7360 = vadd.f32 0.0, %v7359
        %v7361 = vpop.f32.mrb[0].mxu0
        %v7362 = vpop.f32.mrb[0].mxu0
        %v7363 = vadd.f32 0.0, %v7362
        %v7364 = vpop.f32.mrb[0].mxu0
        %7365 = vmatprep.mubr.bf16.mxu0 %v7066
        %7366 = vmatmul.mubr.bf16.gmra.mrb[0].mxu0 %v7065
        %v7367 = vpop.f32.mrb[0].mxu0
        %v7368 = vadd.f32 0.0, %v7367
        %v7369 = vpop.f32.mrb[0].mxu0
        %v7370 = vpop.f32.mrb[0].mxu0
        %v7371 = vadd.f32 0.0, %v7370
        %v7372 = vpop.f32.mrb[0].mxu0
        %7373 = vmatprep.mubr.bf16.mxu0 %v7070
        %7374 = vmatmul.mubr.bf16.gmra.mrb[0].mxu0 %v7069
        %v7375 = vpop.f32.mrb[0].mxu0
        %v7376 = vadd.f32 0.0, %v7375
        %v7377 = vpop.f32.mrb[0].mxu0
        %v7378 = vpop.f32.mrb[0].mxu0
        %v7379 = vadd.f32 0.0, %v7378
        %v7380 = vpop.f32.mrb[0].mxu0
        %7381 = vmatprep.mubr.bf16.mxu0 %v7074
        %7382 = vmatmul.mubr.bf16.gmra.mrb[0].mxu0 %v7073
        %v7383 = vpop.f32.mrb[0].mxu0
        %v7384 = vadd.f32 0.0, %v7383
        %v7385 = vpop.f32.mrb[0].mxu0
        %v7386 = vpop.f32.mrb[0].mxu0
        %v7387 = vadd.f32 0.0, %v7386
        %v7388 = vpop.f32.mrb[0].mxu0
        %7389 = vmatprep.mubr.bf16.mxu0 %v7078
        %7390 = vmatmul.mubr.bf16.gmra.mrb[0].mxu0 %v7077
        %v7391 = vpop.f32.mrb[0].mxu0
        %v7392 = vadd.f32 0.0, %v7391
        %v7393 = vpop.f32.mrb[0].mxu0
        %v7394 = vpop.f32.mrb[0].mxu0
        %v7395 = vadd.f32 0.0, %v7394
        %v7396 = vpop.f32.mrb[0].mxu0
        %7397 = vmatprep.mubr.bf16.mxu0 %v7082
        %7398 = vmatmul.mubr.bf16.gmra.mrb[0].mxu0 %v7081
        %v7399 = vpop.f32.mrb[0].mxu0
        %v7400 = vadd.f32 0.0, %v7399
        %v7401 = vpop.f32.mrb[0].mxu0
        %v7402 = vpop.f32.mrb[0].mxu0
        %v7403 = vadd.f32 0.0, %v7402
        %v7404 = vpop.f32.mrb[0].mxu0
        %7405 = vmatprep.mubr.bf16.mxu0 %v7086
        %7406 = vmatmul.mubr.bf16.gmra.mrb[0].mxu0 %v7085
        %v7407 = vpop.f32.mrb[0].mxu0
        %v7408 = vadd.f32 0.0, %v7407
        %v7409 = vpop.f32.mrb[0].mxu0
        %v7410 = vpop.f32.mrb[0].mxu0
        %v7411 = vadd.f32 0.0, %v7410
        %v7412 = vpop.f32.mrb[0].mxu0
        %7413 = vmatprep.mubr.bf16.mxu0 %v7090
        %7414 = vmatmul.mubr.bf16.gmra.mrb[0].mxu0 %v7089
        %v7415 = vpop.f32.mrb[0].mxu0
        %v7416 = vadd.f32 0.0, %v7415
        %v7417 = vpop.f32.mrb[0].mxu0
        %v7418 = vpop.f32.mrb[0].mxu0
        %v7419 = vadd.f32 0.0, %v7418
        %v7420 = vpop.f32.mrb[0].mxu0
        %7421 = vmatprep.mubr.bf16.mxu0 %v7094
        %7422 = vmatmul.mubr.bf16.gmra.mrb[0].mxu0 %v7093
        %v7423 = vpop.f32.mrb[0].mxu0
        %v7424 = vadd.f32 0.0, %v7423
        %v7425 = vpop.f32.mrb[0].mxu0
        %v7426 = vpop.f32.mrb[0].mxu0
        %v7427 = vadd.f32 0.0, %v7426
        %v7428 = vpop.f32.mrb[0].mxu0
        %7429 = vmatprep.mubr.bf16.mxu0 %v7098
        %7430 = vmatmul.mubr.bf16.gmra.mrb[0].mxu0 %v7097
        %v7431 = vpop.f32.mrb[0].mxu0
        %v7432 = vadd.f32 0.0, %v7431
        %v7433 = vpop.f32.mrb[0].mxu0
        %v7434 = vpop.f32.mrb[0].mxu0
        %v7435 = vadd.f32 0.0, %v7434
        %v7436 = vpop.f32.mrb[0].mxu0
        %7437 = vmatprep.mubr.bf16.mxu0 %v7102
        %7438 = vmatmul.mubr.bf16.gmra.mrb[0].mxu0 %v7101
        %v7439 = vpop.f32.mrb[0].mxu0
        %v7440 = vadd.f32 0.0, %v7439
        %v7441 = vpop.f32.mrb[0].mxu0
        %v7442 = vpop.f32.mrb[0].mxu0
        %v7443 = vadd.f32 0.0, %v7442
        %v7444 = vpop.f32.mrb[0].mxu0
        %7445 = vmatprep.mubr.bf16.mxu0 %v7106
        %7446 = vmatmul.mubr.bf16.gmra.mrb[0].mxu0 %v7105
        %v7447 = vpop.f32.mrb[0].mxu0
        %v7448 = vadd.f32 0.0, %v7447
        %v7449 = vpop.f32.mrb[0].mxu0
        %v7450 = vpop.f32.mrb[0].mxu0
        %v7451 = vadd.f32 0.0, %v7450
        %v7452 = vpop.f32.mrb[0].mxu0
        %7453 = vmatprep.mubr.bf16.mxu0 %v7110
        %7454 = vmatmul.mubr.bf16.gmra.mrb[0].mxu0 %v7109
        %v7455 = vpop.f32.mrb[0].mxu0
        %v7456 = vadd.f32 0.0, %v7455
        %v7457 = vpop.f32.mrb[0].mxu0
        %v7458 = vpop.f32.mrb[0].mxu0
        %v7459 = vadd.f32 0.0, %v7458
        %v7460 = vpop.f32.mrb[0].mxu0
        %7461 = vmatprep.mubr.bf16.mxu0 %v7114
        %7462 = vmatmul.mubr.bf16.gmra.mrb[0].mxu0 %v7113
        %v7463 = vpop.f32.mrb[0].mxu0
        %v7464 = vadd.f32 0.0, %v7463
        %v7465 = vpop.f32.mrb[0].mxu0
        %v7466 = vpop.f32.mrb[0].mxu0
        %v7467 = vadd.f32 0.0, %v7466
        %v7468 = vpop.f32.mrb[0].mxu0
        %7469 = vdwg.mxu0
        %7470 = vmatprep.subr.bf16.mxu0 0
        %7471 = vmatpush1.bf16.msra.mxu0 %v7261
        %7472 = vmatprep.subr.bf16.mxu0 0
        %7473 = vmatpush1.bf16.msra.mxu0 %v7262
        %7474 = vmatprep.subr.bf16.mxu0 0
        %7475 = vmatpush1.bf16.msra.mxu0 %v7263
        %7476 = vmatprep.subr.bf16.mxu0 0
        %7477 = vmatpush1.bf16.msra.mxu0 %v7264
        %7478 = vmatprep.subr.bf16.mxu0 0
        %7479 = vmatpush1.bf16.msra.mxu0 %v7265
        %7480 = vmatprep.subr.bf16.mxu0 0
        %7481 = vmatpush1.bf16.msra.mxu0 %v7266
        %7482 = vmatprep.subr.bf16.mxu0 0
        %7483 = vmatpush1.bf16.msra.mxu0 %v7267
        %7484 = vmatprep.subr.bf16.mxu0 0
        %7485 = vmatpush1.bf16.msra.mxu0 %v7268
        %7486 = vmatprep.subr.bf16.mxu0 0
        %7487 = vmatpush1.bf16.msra.mxu0 %v7269
        %7488 = vmatprep.subr.bf16.mxu0 0
        %7489 = vmatpush1.bf16.msra.mxu0 %v7270
        %7490 = vmatprep.subr.bf16.mxu0 0
        %7491 = vmatpush1.bf16.msra.mxu0 %v7271
        %7492 = vmatprep.subr.bf16.mxu0 0
        %7493 = vmatpush1.bf16.msra.mxu0 %v7272
        %7494 = vmatprep.subr.bf16.mxu0 0
        %7495 = vmatpush1.bf16.msra.mxu0 %v7273
        %7496 = vmatprep.subr.bf16.mxu0 0
        %7497 = vmatpush1.bf16.msra.mxu0 %v7274
        %7498 = vmatprep.subr.bf16.mxu0 0
        %7499 = vmatpush1.bf16.msra.mxu0 %v7275
        %7500 = vmatprep.subr.bf16.mxu0 0
        %7501 = vmatpush1.bf16.msra.mxu0 %v7276
        %7502 = vmatprep.mubr.bf16.mxu0 %v7056
        %7503 = vmatmul.mubr.bf16.gmra.mrb[0].mxu0 %v7055
        %v7504 = vpop.f32.mrb[0].mxu0
        %v7505 = vadd.f32 %v7344, %v7504
        %v7506 = vpop.f32.mrb[0].mxu0
        %v7507 = vpop.f32.mrb[0].mxu0
        %v7508 = vadd.f32 %v7347, %v7507
        %v7509 = vpop.f32.mrb[0].mxu0
        %7510 = vmatprep.mubr.bf16.mxu0 %v7060
        %7511 = vmatmul.mubr.bf16.gmra.mrb[0].mxu0 %v7059
        %v7512 = vpop.f32.mrb[0].mxu0
        %v7513 = vadd.f32 %v7352, %v7512
        %v7514 = vpop.f32.mrb[0].mxu0
        %v7515 = vpop.f32.mrb[0].mxu0
        %v7516 = vadd.f32 %v7355, %v7515
        %v7517 = vpop.f32.mrb[0].mxu0
        %7518 = vmatprep.mubr.bf16.mxu0 %v7064
        %7519 = vmatmul.mubr.bf16.gmra.mrb[0].mxu0 %v7063
        %v7520 = vpop.f32.mrb[0].mxu0
        %v7521 = vadd.f32 %v7360, %v7520
        %v7522 = vpop.f32.mrb[0].mxu0
        %v7523 = vpop.f32.mrb[0].mxu0
        %v7524 = vadd.f32 %v7363, %v7523
        %v7525 = vpop.f32.mrb[0].mxu0
        %7526 = vmatprep.mubr.bf16.mxu0 %v7068
        %7527 = vmatmul.mubr.bf16.gmra.mrb[0].mxu0 %v7067
        %v7528 = vpop.f32.mrb[0].mxu0
        %v7529 = vadd.f32 %v7368, %v7528
        %v7530 = vpop.f32.mrb[0].mxu0
        %v7531 = vpop.f32.mrb[0].mxu0
        %v7532 = vadd.f32 %v7371, %v7531
        %v7533 = vpop.f32.mrb[0].mxu0
        %7534 = vmatprep.mubr.bf16.mxu0 %v7072
        %7535 = vmatmul.mubr.bf16.gmra.mrb[0].mxu0 %v7071
        %v7536 = vpop.f32.mrb[0].mxu0
        %v7537 = vadd.f32 %v7376, %v7536
        %v7538 = vpop.f32.mrb[0].mxu0
        %v7539 = vpop.f32.mrb[0].mxu0
        %v7540 = vadd.f32 %v7379, %v7539
        %v7541 = vpop.f32.mrb[0].mxu0
        %7542 = vmatprep.mubr.bf16.mxu0 %v7076
        %7543 = vmatmul.mubr.bf16.gmra.mrb[0].mxu0 %v7075
        %v7544 = vpop.f32.mrb[0].mxu0
        %v7545 = vadd.f32 %v7384, %v7544
        %v7546 = vpop.f32.mrb[0].mxu0
        %v7547 = vpop.f32.mrb[0].mxu0
        %v7548 = vadd.f32 %v7387, %v7547
        %v7549 = vpop.f32.mrb[0].mxu0
        %7550 = vmatprep.mubr.bf16.mxu0 %v7080
        %7551 = vmatmul.mubr.bf16.gmra.mrb[0].mxu0 %v7079
        %v7552 = vpop.f32.mrb[0].mxu0
        %v7553 = vadd.f32 %v7392, %v7552
        %v7554 = vpop.f32.mrb[0].mxu0
        %v7555 = vpop.f32.mrb[0].mxu0
        %v7556 = vadd.f32 %v7395, %v7555
        %v7557 = vpop.f32.mrb[0].mxu0
        %7558 = vmatprep.mubr.bf16.mxu0 %v7084
        %7559 = vmatmul.mubr.bf16.gmra.mrb[0].mxu0 %v7083
        %v7560 = vpop.f32.mrb[0].mxu0
        %v7561 = vadd.f32 %v7400, %v7560
        %v7562 = vpop.f32.mrb[0].mxu0
        %v7563 = vpop.f32.mrb[0].mxu0
        %v7564 = vadd.f32 %v7403, %v7563
        %v7565 = vpop.f32.mrb[0].mxu0
        %7566 = vmatprep.mubr.bf16.mxu0 %v7088
        %7567 = vmatmul.mubr.bf16.gmra.mrb[0].mxu0 %v7087
        %v7568 = vpop.f32.mrb[0].mxu0
        %v7569 = vadd.f32 %v7408, %v7568
        %v7570 = vpop.f32.mrb[0].mxu0
        %v7571 = vpop.f32.mrb[0].mxu0
        %v7572 = vadd.f32 %v7411, %v7571
        %v7573 = vpop.f32.mrb[0].mxu0
        %7574 = vmatprep.mubr.bf16.mxu0 %v7092
        %7575 = vmatmul.mubr.bf16.gmra.mrb[0].mxu0 %v7091
        %v7576 = vpop.f32.mrb[0].mxu0
        %v7577 = vadd.f32 %v7416, %v7576
        %v7578 = vpop.f32.mrb[0].mxu0
        %v7579 = vpop.f32.mrb[0].mxu0
        %v7580 = vadd.f32 %v7419, %v7579
        %v7581 = vpop.f32.mrb[0].mxu0
        %7582 = vmatprep.mubr.bf16.mxu0 %v7096
        %7583 = vmatmul.mubr.bf16.gmra.mrb[0].mxu0 %v7095
        %v7584 = vpop.f32.mrb[0].mxu0
        %v7585 = vadd.f32 %v7424, %v7584
        %v7586 = vpop.f32.mrb[0].mxu0
        %v7587 = vpop.f32.mrb[0].mxu0
        %v7588 = vadd.f32 %v7427, %v7587
        %v7589 = vpop.f32.mrb[0].mxu0
        %7590 = vmatprep.mubr.bf16.mxu0 %v7100
        %7591 = vmatmul.mubr.bf16.gmra.mrb[0].mxu0 %v7099
        %v7592 = vpop.f32.mrb[0].mxu0
        %v7593 = vadd.f32 %v7432, %v7592
        %v7594 = vpop.f32.mrb[0].mxu0
        %v7595 = vpop.f32.mrb[0].mxu0
        %v7596 = vadd.f32 %v7435, %v7595
        %v7597 = vpop.f32.mrb[0].mxu0
        %7598 = vmatprep.mubr.bf16.mxu0 %v7104
        %7599 = vmatmul.mubr.bf16.gmra.mrb[0].mxu0 %v7103
        %v7600 = vpop.f32.mrb[0].mxu0
        %v7601 = vadd.f32 %v7440, %v7600
        %v7602 = vpop.f32.mrb[0].mxu0
        %v7603 = vpop.f32.mrb[0].mxu0
        %v7604 = vadd.f32 %v7443, %v7603
        %v7605 = vpop.f32.mrb[0].mxu0
        %7606 = vmatprep.mubr.bf16.mxu0 %v7108
        %7607 = vmatmul.mubr.bf16.gmra.mrb[0].mxu0 %v7107
        %v7608 = vpop.f32.mrb[0].mxu0
        %v7609 = vadd.f32 %v7448, %v7608
        %v7610 = vpop.f32.mrb[0].mxu0
        %v7611 = vpop.f32.mrb[0].mxu0
        %v7612 = vadd.f32 %v7451, %v7611
        %v7613 = vpop.f32.mrb[0].mxu0
        %7614 = vmatprep.mubr.bf16.mxu0 %v7112
        %7615 = vmatmul.mubr.bf16.gmra.mrb[0].mxu0 %v7111
        %v7616 = vpop.f32.mrb[0].mxu0
        %v7617 = vadd.f32 %v7456, %v7616
        %v7618 = vpop.f32.mrb[0].mxu0
        %v7619 = vpop.f32.mrb[0].mxu0
        %v7620 = vadd.f32 %v7459, %v7619
        %v7621 = vpop.f32.mrb[0].mxu0
        %7622 = vmatprep.mubr.bf16.mxu0 %v7116
        %7623 = vmatmul.mubr.bf16.gmra.mrb[0].mxu0 %v7115
        %v7624 = vpop.f32.mrb[0].mxu0
        %v7625 = vadd.f32 %v7464, %v7624
        %v7626 = vpop.f32.mrb[0].mxu0
        %v7627 = vpop.f32.mrb[0].mxu0
        %v7628 = vadd.f32 %v7467, %v7627
        %v7629 = vpop.f32.mrb[0].mxu0
        %7630 = vdwg.mxu0
        %v7631 = vld [vmem:[%s383] sm:$0x1]
        %v7633 = vlaneseq
        %v7634 = vshrl.u32 %v7633, 7
        %v7635 = vsub.s32 0, %v7634
        %v7636 = vrot.slane %v7631, %v7635
        %v7638 = vmul.f32 %v7505, %v7636
        %v7639 = vmul.f32 %v7508, %v7636
        %v7640 = vmul.f32 %v7513, %v7636
        %v7641 = vmul.f32 %v7516, %v7636
        %v7642 = vmul.f32 %v7521, %v7636
        %v7643 = vmul.f32 %v7524, %v7636
        %v7644 = vmul.f32 %v7529, %v7636
        %v7645 = vmul.f32 %v7532, %v7636
        %v7646 = vmul.f32 %v7537, %v7636
        %v7647 = vmul.f32 %v7540, %v7636
        %v7648 = vmul.f32 %v7545, %v7636
        %v7649 = vmul.f32 %v7548, %v7636
        %v7650 = vmul.f32 %v7553, %v7636
        %v7651 = vmul.f32 %v7556, %v7636
        %v7652 = vmul.f32 %v7561, %v7636
        %v7653 = vmul.f32 %v7564, %v7636
        %v7654 = vmul.f32 %v7569, %v7636
        %v7655 = vmul.f32 %v7572, %v7636
        %v7656 = vmul.f32 %v7577, %v7636
        %v7657 = vmul.f32 %v7580, %v7636
        %v7658 = vmul.f32 %v7585, %v7636
        %v7659 = vmul.f32 %v7588, %v7636
        %v7660 = vmul.f32 %v7593, %v7636
        %v7661 = vmul.f32 %v7596, %v7636
        %v7662 = vmul.f32 %v7601, %v7636
        %v7663 = vmul.f32 %v7604, %v7636
        %v7664 = vmul.f32 %v7609, %v7636
        %v7665 = vmul.f32 %v7612, %v7636
        %v7666 = vmul.f32 %v7617, %v7636
        %v7667 = vmul.f32 %v7620, %v7636
        %v7668 = vmul.f32 %v7625, %v7636
        %v7669 = vmul.f32 %v7628, %v7636
        %v7670 = vld [vmem:[%s391] sm:$0x1]
        %v7672 = vlaneseq
        %v7673 = vshrl.u32 %v7672, 7
        %v7674 = vsub.s32 0, %v7673
        %v7675 = vrot.slane %v7670, %v7674
        %v7677 = vadd.f32 %v7638, %v7675
        %v7678 = vadd.f32 %v7639, %v7675
        %v7679 = vadd.f32 %v7640, %v7675
        %v7680 = vadd.f32 %v7641, %v7675
        %v7681 = vadd.f32 %v7642, %v7675
        %v7682 = vadd.f32 %v7643, %v7675
        %v7683 = vadd.f32 %v7644, %v7675
        %v7684 = vadd.f32 %v7645, %v7675
        %v7685 = vadd.f32 %v7646, %v7675
        %v7686 = vadd.f32 %v7647, %v7675
        %v7687 = vadd.f32 %v7648, %v7675
        %v7688 = vadd.f32 %v7649, %v7675
        %v7689 = vadd.f32 %v7650, %v7675
        %v7690 = vadd.f32 %v7651, %v7675
        %v7691 = vadd.f32 %v7652, %v7675
        %v7692 = vadd.f32 %v7653, %v7675
        %v7693 = vadd.f32 %v7654, %v7675
        %v7694 = vadd.f32 %v7655, %v7675
        %v7695 = vadd.f32 %v7656, %v7675
        %v7696 = vadd.f32 %v7657, %v7675
        %v7697 = vadd.f32 %v7658, %v7675
        %v7698 = vadd.f32 %v7659, %v7675
        %v7699 = vadd.f32 %v7660, %v7675
        %v7700 = vadd.f32 %v7661, %v7675
        %v7701 = vadd.f32 %v7662, %v7675
        %v7702 = vadd.f32 %v7663, %v7675
        %v7703 = vadd.f32 %v7664, %v7675
        %v7704 = vadd.f32 %v7665, %v7675
        %v7705 = vadd.f32 %v7666, %v7675
        %v7706 = vadd.f32 %v7667, %v7675
        %v7707 = vadd.f32 %v7668, %v7675
        %v7708 = vadd.f32 %v7669, %v7675
        %v7709 = vmax.f32 %v7677, 0.0
        %v7710 = vmax.f32 %v7678, 0.0
        %v7711 = vmax.f32 %v7679, 0.0
        %v7712 = vmax.f32 %v7680, 0.0
        %v7713 = vmax.f32 %v7681, 0.0
        %v7714 = vmax.f32 %v7682, 0.0
        %v7715 = vmax.f32 %v7683, 0.0
        %v7716 = vmax.f32 %v7684, 0.0
        %v7717 = vmax.f32 %v7685, 0.0
        %v7718 = vmax.f32 %v7686, 0.0
        %v7719 = vmax.f32 %v7687, 0.0
        %v7720 = vmax.f32 %v7688, 0.0
        %v7721 = vmax.f32 %v7689, 0.0
        %v7722 = vmax.f32 %v7690, 0.0
        %v7723 = vmax.f32 %v7691, 0.0
        %v7724 = vmax.f32 %v7692, 0.0
        %v7725 = vmax.f32 %v7693, 0.0
        %v7726 = vmax.f32 %v7694, 0.0
        %v7727 = vmax.f32 %v7695, 0.0
        %v7728 = vmax.f32 %v7696, 0.0
        %v7729 = vmax.f32 %v7697, 0.0
        %v7730 = vmax.f32 %v7698, 0.0
        %v7731 = vmax.f32 %v7699, 0.0
        %v7732 = vmax.f32 %v7700, 0.0
        %v7733 = vmax.f32 %v7701, 0.0
        %v7734 = vmax.f32 %v7702, 0.0
        %v7735 = vmax.f32 %v7703, 0.0
        %v7736 = vmax.f32 %v7704, 0.0
        %v7737 = vmax.f32 %v7705, 0.0
        %v7738 = vmax.f32 %v7706, 0.0
        %v7739 = vmax.f32 %v7707, 0.0
        %v7740 = vmax.f32 %v7708, 0.0
        %v7741 = vmin.f32 %v7709, 6.0
        %v7742 = vmin.f32 %v7710, 6.0
        %v7743 = vmin.f32 %v7711, 6.0
        %v7744 = vmin.f32 %v7712, 6.0
        %v7745 = vmin.f32 %v7713, 6.0
        %v7746 = vmin.f32 %v7714, 6.0
        %v7747 = vmin.f32 %v7715, 6.0
        %v7748 = vmin.f32 %v7716, 6.0
        %v7749 = vmin.f32 %v7717, 6.0
        %v7750 = vmin.f32 %v7718, 6.0
        %v7751 = vmin.f32 %v7719, 6.0
        %v7752 = vmin.f32 %v7720, 6.0
        %v7753 = vmin.f32 %v7721, 6.0
        %v7754 = vmin.f32 %v7722, 6.0
        %v7755 = vmin.f32 %v7723, 6.0
        %v7756 = vmin.f32 %v7724, 6.0
        %v7757 = vmin.f32 %v7725, 6.0
        %v7758 = vmin.f32 %v7726, 6.0
        %v7759 = vmin.f32 %v7727, 6.0
        %v7760 = vmin.f32 %v7728, 6.0
        %v7761 = vmin.f32 %v7729, 6.0
        %v7762 = vmin.f32 %v7730, 6.0
        %v7763 = vmin.f32 %v7731, 6.0
        %v7764 = vmin.f32 %v7732, 6.0
        %v7765 = vmin.f32 %v7733, 6.0
        %v7766 = vmin.f32 %v7734, 6.0
        %v7767 = vmin.f32 %v7735, 6.0
        %v7768 = vmin.f32 %v7736, 6.0
        %v7769 = vmin.f32 %v7737, 6.0
        %v7770 = vmin.f32 %v7738, 6.0
        %v7771 = vmin.f32 %v7739, 6.0
        %v7772 = vmin.f32 %v7740, 6.0
        %7773 = vst [vmem:[%s429] sm:$0xff] %v7741
        %7774 = vst [vmem:[%s429 + $0x8] sm:$0xff] %v7742
        %7775 = vst [vmem:[%s429 + $0x10] sm:$0xff] %v7743
        %7776 = vst [vmem:[%s429 + $0x18] sm:$0xff] %v7744
        %7777 = vst [vmem:[%s429 + $0x20] sm:$0xff] %v7745
        %7778 = vst [vmem:[%s429 + $0x28] sm:$0xff] %v7746
        %7779 = vst [vmem:[%s429 + $0x30] sm:$0xff] %v7747
        %7780 = vst [vmem:[%s429 + $0x38] sm:$0xff] %v7748
        %7781 = vst [vmem:[%s429 + $0x40] sm:$0xff] %v7749
        %7782 = vst [vmem:[%s429 + $0x48] sm:$0xff] %v7750
        %7783 = vst [vmem:[%s429 + $0x50] sm:$0xff] %v7751
        %7784 = vst [vmem:[%s429 + $0x58] sm:$0xff] %v7752
        %7785 = vst [vmem:[%s429 + $0x60] sm:$0xff] %v7753
        %7786 = vst [vmem:[%s429 + $0x68] sm:$0xff] %v7754
        %7787 = vst [vmem:[%s429 + $0x70] sm:$0xff] %v7755
        %7788 = vst [vmem:[%s429 + $0x78] sm:$0xff] %v7756
        %7789 = vst [vmem:[%s429 + $0x80] sm:$0xff] %v7757
        %7790 = vst [vmem:[%s429 + $0x88] sm:$0xff] %v7758
        %7791 = vst [vmem:[%s429 + $0x90] sm:$0xff] %v7759
        %7792 = vst [vmem:[%s429 + $0x98] sm:$0xff] %v7760
        %7793 = vst [vmem:[%s429 + $0xa0] sm:$0xff] %v7761
        %7794 = vst [vmem:[%s429 + $0xa8] sm:$0xff] %v7762
        %7795 = vst [vmem:[%s429 + $0xb0] sm:$0xff] %v7763
        %7796 = vst [vmem:[%s429 + $0xb8] sm:$0xff] %v7764
        %7797 = vst [vmem:[%s429 + $0xc0] sm:$0xff] %v7765
        %7798 = vst [vmem:[%s429 + $0xc8] sm:$0xff] %v7766
        %7799 = vst [vmem:[%s429 + $0xd0] sm:$0xff] %v7767
        %7800 = vst [vmem:[%s429 + $0xd8] sm:$0xff] %v7768
        %7801 = vst [vmem:[%s429 + $0xe0] sm:$0xff] %v7769
        %7802 = vst [vmem:[%s429 + $0xe8] sm:$0xff] %v7770
        %7803 = vst [vmem:[%s429 + $0xf0] sm:$0xff] %v7771
        %7804 = vst [vmem:[%s429 + $0xf8] sm:$0xff] %v7772
        %s7805 = sand.u32 %s213, 1
        %s7806 = scalar_lea.sflag [#allocation7], %s7805
        %s7807 = sand.u32 %s213, 1
        %s7808 = smul.addr %s7807, 256
        %s7809 = scalar_lea.vmem [#allocation17], %s7808
        // Predicated region
        $region81: #{_lambda_.1} parent=47 // pred_check
          %p7810 = pneg %p223
        $region82: #{_lambda_.1} parent=47 // pred_check_branch
          %7812 = sbr.rel (%p7810) target = $region84
        $region83: #{_lambda_.1} parent=47 // pred_region
          %s7814 = ssub.s32 4096, 4096
          %7815 = vsyncadd %s7806, %s7814
          %s7816 = smul.addr %s33, 96
          %s7817 = sadd.s32 %s34, %s7816
          %s7818 = smul.addr %s7817, 128
          %s7819 = scalar_lea.hbm %s7, %s7818
          %s7820 = sshll.u32 %s7809, 4
          %s7821 = int_to_ptr.vmem [resolvable:$true] %s7820
          %7826 = dma.vmem_to_hbm [thread:$0]  %s7821, 4096, %s7819, %s7806, 128, 384, 8
        $region84: #{_lambda_.1} parent=47 // pred_fallthru
          _
      $region48: #{_lambda_.1} parent=5 // pred_fallthru
        _
      %p7827 = scmp.le.s32.totalorder 2, %s24
      // Predicated region
      $region85: #{_lambda_.1} parent=5 // pred_check
        %p7828 = pneg %p7827
      $region86: #{_lambda_.1} parent=5 // pred_check_branch
        %7830 = sbr.rel (%p7828) target = $region88
      $region87: #{_lambda_.1} parent=5 // pred_region
        %s7831 = ssub.s32 %s24, 2
        // Predicated region
        $region89: #{_lambda_.1} parent=87 // pred_check
          %p7832 = pneg %p229
        $region90: #{_lambda_.1} parent=87 // pred_check_branch
          %7834 = sbr.rel (%p7832) target = $region92
        $region91: #{_lambda_.1} parent=87 // pred_region
          %s7835 = sand.u32 %s214, 1
          %s7836 = scalar_lea.sflag [#allocation7], %s7835
          %s7837 = sand.u32 %s214, 1
          %s7838 = smul.addr %s7837, 256
          %s7839 = scalar_lea.vmem [#allocation17], %s7838
          %7840 = dma.done %s7836, 4096
        $region92: #{_lambda_.1} parent=87 // pred_fallthru
          _
      $region88: #{_lambda_.1} parent=5 // pred_fallthru
        _
    $region6: #{_lambda_.1} parent=1 // loop_footer
      %s28 = sadd.s32 1, %s24
    $region7: #{_lambda_.1} parent=1 // loop_footer_branch
      %23 = sbr.rel target = $region3
    $region8: #{_lambda_.1} parent=1 // loop_exit
      _
    %7841 = vsyncpa [#allocation6], 1
    %s7842 = scalar_lea.sflag [#allocation6], 1
    %7843 = vsyncpa %s7842, 1
    %7844 = vsyncpa [#allocation9], 1
    %7845 = vsyncpa [#allocation12], 1
    %7846 = vsyncpa [#allocation15], 1
    %s7847 = scalar_lea.sflag [#allocation15], 1
    %7848 = vsyncpa %s7847, 1
    %7849 = vsyncpa [#allocation7], 1
    %s7850 = scalar_lea.sflag [#allocation7], 1
    %7851 = vsyncpa %s7850, 1

</llo_original>
